<compile_context>
chip_gen: v7x
topology: tpu7x:2x2x1
jax: 0.10.0
libtpu: 0.0.40
codegen_flags: <defaults>
</compile_context>

<pallas_src>
import numpy as np
import jax
import jax.numpy as jnp
from jax.experimental import pallas as pl
from jax.experimental.pallas import tpu as pltpu

_VMEM = pltpu.MemorySpace.VMEM
_F32 = jnp.float32
_BF16 = jnp.bfloat16


# ---------------------------------------------------------------------------
# Deterministic parameter initialization (shapes from the PyTorch __init__)
# ---------------------------------------------------------------------------
def _uniform(key, shape, fan_in):
    bound = 1.0 / float(fan_in) ** 0.5
    return jax.random.uniform(key, shape, _F32, -bound, bound)


def init_conv(key, oc, ic, kh, kw):
    k1, k2 = jax.random.split(key)
    fan_in = ic * kh * kw
    return {"w": _uniform(k1, (oc, ic, kh, kw), fan_in),
            "b": _uniform(k2, (oc,), fan_in)}


def init_linear(key, n_in, n_out):
    k1, k2 = jax.random.split(key)
    return {"w": _uniform(k1, (n_in, n_out), n_in),
            "b": _uniform(k2, (n_out,), n_in)}


def init_bn(c, eps=1e-5):
    # PyTorch defaults at construction: gamma=1, beta=0, running mean=0, var=1.
    gamma = jnp.ones((c,), _F32)
    beta = jnp.zeros((c,), _F32)
    mean = jnp.zeros((c,), _F32)
    var = jnp.ones((c,), _F32)
    scale = gamma / jnp.sqrt(var + eps)
    shift = beta - mean * scale
    return {"scale": scale, "shift": shift}


def init_lugianet_params(key, n_parrallel=2):
    keys = iter(jax.random.split(key, 32))
    params = {}
    params["res_blocks"] = [
        {"conv": init_conv(next(keys), 2, 2, 3, 3), "bn": init_bn(2)}
        for _ in range(n_parrallel)
    ]
    params["mnist"] = {
        "conv1": init_conv(next(keys), 96, 1, 3, 3), "bn1": init_bn(96),
        "conv2": init_conv(next(keys), 48, 96, 2, 2), "bn2": init_bn(48),
        "conv3": init_conv(next(keys), 32, 48, 2, 2), "bn3": init_bn(32),
        "conv4": init_conv(next(keys), 64, 32, 2, 2), "bn4": init_bn(64),
        "fc1": init_linear(next(keys), 64, 128), "bn5": init_bn(128),
        "fc2": init_linear(next(keys), 128, 64), "bn6": init_bn(64),
        "fc3": init_linear(next(keys), 64, 10),
    }
    params["naive"] = {
        "conv1": init_conv(next(keys), 48, 2, 3, 3), "bn1": init_bn(48),
        "conv2": init_conv(next(keys), 32, 48, 3, 3), "bn2": init_bn(32),
    }
    params["post_naive"] = {
        "fc1": init_linear(next(keys), 128, 16), "bn1": init_bn(16),
        "fc2": init_linear(next(keys), 16, 8),
    }
    params["fc_naive"] = {
        "fc1": init_linear(next(keys), 36, 8), "bn1": init_bn(8),
        "fc2": init_linear(next(keys), 8, 2),
    }
    return params


# ---------------------------------------------------------------------------
# One-time weight packing.
#
# Layout convention inside the kernel: every feature map is a 2-D tile
#   rows  = sample * row_pitch + h        (sublane axis)
#   lanes = w * C + c, zero-padded to a multiple of 128 (lane axis)
# Each conv becomes ONE matmul: the KH row-shifted input windows are lane-
# concatenated (pre-built in the wrapper for the first layers) and multiplied by
# a kh-stacked block-Toeplitz matrix.  2x2 max-pool = the even/odd-column conv
# outputs fused into one matmul, a lane-split max, then 0/1 row-selection
# matmuls for the h-pairs (which also compact away garbage rows).
# Every eval-mode BatchNorm affine is folded into the adjacent linear layer.
# Selection matrices depend on the batch size -> pack once per batch size.
# ---------------------------------------------------------------------------
def pack_lugianet(params, batch_n):
    n = int(batch_n)
    s2 = 2 * n

    def npf(a):
        return np.asarray(a, np.float32)

    def bf(a):
        return jnp.asarray(a, _BF16)

    def f32(a):
        return jnp.asarray(a, _F32)

    def conv_matrix(w, wi_count, wo_list, in_stride, out_pad):
        """(KH*in_stride, out_pad) kh-stacked Toeplitz matrix for one conv.
        Input lane layout per kh block: lane = wi*IC + ic  (wi < wi_count),
        zeros above.  Output lanes: j*OC + oc for j over wo_list, zeros above."""
        oc, icn, khn, kwn = w.shape
        mat = np.zeros((khn * in_stride, out_pad), np.float32)
        for kh in range(khn):
            for j, wo in enumerate(wo_list):
                for kw in range(kwn):
                    wi = wo + kw
                    if wi >= wi_count:
                        continue
                    r0 = kh * in_stride + wi * icn
                    c0 = j * oc
                    mat[r0:r0 + icn, c0:c0 + oc] += w[:, :, kh, kw].T
        return mat

    def conv_matrix_eo(w, wi_count, wo_even, wo_odd, in_stride, out_pad):
        return np.concatenate(
            [conv_matrix(w, wi_count, wo_even, in_stride, out_pad),
             conv_matrix(w, wi_count, wo_odd, in_stride, out_pad)], axis=1)

    def bias_lanes(b, n_pos, out_pad):
        v = np.zeros((1, out_pad), np.float32)
        v[0, :n_pos * b.shape[0]] = np.tile(b, n_pos)
        return v

    def sel(n_out, n_in, idx):
        m = np.zeros((n_out, n_in), np.float32)
        m[np.arange(n_out), np.asarray(idx, np.int64)] = 1.0
        return m

    def pool_sel(n_samp, pitch_in, rows_in, pairs):
        idx_e = [s * pitch_in + 2 * q for s in range(n_samp) for q in range(pairs)]
        idx_o = [i + 1 for i in idx_e]
        return (sel(n_samp * pairs, rows_in, idx_e),
                sel(n_samp * pairs, rows_in, idx_o))

    def fold_in_conv(w, b, scale, shift):
        # Fold the previous layer's per-channel affine (BN) into this conv.
        return (w * scale[None, :, None, None],
                b + np.einsum("oikl,i->o", w, shift))

    def fold_in_fc(w, b, scale, shift):
        return w * scale[:, None], b + shift @ w

    pk = {}

    # ---- ResNeXt blocks: Conv(2->2,3x3,pad1) -> BN -> ReLU (BN folded in) ----
    res_w, res_b = [], []
    for blk in params["res_blocks"]:
        w = npf(blk["conv"]["w"]); b = npf(blk["conv"]["b"])
        s = npf(blk["bn"]["scale"]); t = npf(blk["bn"]["shift"])
        wf = w * s[:, None, None, None]
        bf_ = b * s + t
        res_w.append(bf(conv_matrix(wf, 16, list(range(14)), 32, 28)))
        res_b.append(f32(bias_lanes(bf_, 14, 28)))
    pk["res_w"] = res_w
    pk["res_b"] = res_b

    # ---------------- MnistCNN ----------------
    m = params["mnist"]
    # conv1 1->96 3x3 (14x14 -> 12x12), ReLU, pool -> 6x6
    w1, b1 = npf(m["conv1"]["w"]), npf(m["conv1"]["b"])
    pk["m1_w"] = bf(conv_matrix_eo(w1, 14, [0, 2, 4, 6, 8, 10], [1, 3, 5, 7, 9, 11], 14, 640))
    pk["m1_b"] = f32(bias_lanes(b1, 6, 640))
    se, so = pool_sel(s2, 14, 14 * s2 - 2, 6)
    pk["m1_se"], pk["m1_so"] = bf(se), bf(so)
    # conv2 96->48 2x2 (6x6 -> 5x5), ReLU   [mnist bn1 folded in]
    w2, b2 = fold_in_conv(npf(m["conv2"]["w"]), npf(m["conv2"]["b"]),
                          npf(m["bn1"]["scale"]), npf(m["bn1"]["shift"]))
    pk["m2_w"] = bf(conv_matrix(w2, 6, [0, 1, 2, 3, 4], 640, 256))
    pk["m2_b"] = f32(bias_lanes(b2, 5, 256))
    # conv3 48->32 2x2 (5x5 -> 4x4), ReLU, pool -> 2x2   [bn2 folded in]
    w3, b3 = fold_in_conv(npf(m["conv3"]["w"]), npf(m["conv3"]["b"]),
                          npf(m["bn2"]["scale"]), npf(m["bn2"]["shift"]))
    pk["m3_w"] = bf(conv_matrix_eo(w3, 5, [0, 2], [1, 3], 256, 128))
    pk["m3_b"] = f32(bias_lanes(b3, 2, 128))
    se, so = pool_sel(s2, 6, 6 * s2 - 2, 2)
    pk["m3_se"], pk["m3_so"] = bf(se), bf(so)
    # conv4 32->64 2x2 (2x2 -> 1x1), ReLU   [bn3 folded in]
    w4, b4 = fold_in_conv(npf(m["conv4"]["w"]), npf(m["conv4"]["b"]),
                          npf(m["bn3"]["scale"]), npf(m["bn3"]["shift"]))
    pk["m4_w"] = bf(conv_matrix(w4, 2, [0], 128, 128))
    pk["m4_b"] = f32(bias_lanes(b4, 1, 128))
    pk["mflat"] = bf(sel(s2, 2 * s2 - 1, [2 * u for u in range(s2)]))
    # FC head  [bn4 -> fc1, bn5 -> fc2, bn6 -> fc3]
    f1w, f1b = fold_in_fc(npf(m["fc1"]["w"]), npf(m["fc1"]["b"]),
                          npf(m["bn4"]["scale"]), npf(m["bn4"]["shift"]))
    mf1 = np.zeros((128, 128), np.float32)
    mf1[:64, :] = f1w
    pk["mf1_w"] = bf(mf1); pk["mf1_b"] = f32(f1b.reshape(1, -1))
    f2w, f2b = fold_in_fc(npf(m["fc2"]["w"]), npf(m["fc2"]["b"]),
                          npf(m["bn5"]["scale"]), npf(m["bn5"]["shift"]))
    pk["mf2_w"] = bf(f2w); pk["mf2_b"] = f32(f2b.reshape(1, -1))
    f3w, f3b = fold_in_fc(npf(m["fc3"]["w"]), npf(m["fc3"]["b"]),
                          npf(m["bn6"]["scale"]), npf(m["bn6"]["shift"]))
    pk["mf3_w"] = bf(f3w); pk["mf3_b"] = f32(f3b.reshape(1, -1))

    # ---------------- Naive_net[:11] ----------------
    nv = params["naive"]
    # conv1 2->48 3x3 (14x14 -> 12x12), pool -> 6x6, ReLU
    wn1, bb1 = npf(nv["conv1"]["w"]), npf(nv["conv1"]["b"])
    pk["n1_w"] = bf(conv_matrix_eo(wn1, 14, [0, 2, 4, 6, 8, 10], [1, 3, 5, 7, 9, 11], 28, 384))
    pk["n1_b"] = f32(bias_lanes(bb1, 6, 384))
    se, so = pool_sel(s2, 16, 16 * s2 - 2, 6)
    pk["n1_se"], pk["n1_so"] = bf(se), bf(so)
    # conv2 48->32 3x3 (6x6 -> 4x4), pool -> 2x2, ReLU   [naive bn1 folded in]
    wn2, bb2 = fold_in_conv(npf(nv["conv2"]["w"]), npf(nv["conv2"]["b"]),
                            npf(nv["bn1"]["scale"]), npf(nv["bn1"]["shift"]))
    pk["n2_w"] = bf(conv_matrix_eo(wn2, 6, [0, 2], [1, 3], 384, 128))
    pk["n2_b"] = f32(bias_lanes(bb2, 2, 128))
    se, so = pool_sel(s2, 6, 6 * s2 - 2, 2)
    pk["n2_se"], pk["n2_so"] = bf(se), bf(so)
    pk["nh0"] = bf(sel(s2, 2 * s2, [2 * u for u in range(s2)]))
    pk["nh1"] = bf(sel(s2, 2 * s2, [2 * u + 1 for u in range(s2)]))

    # ---------------- post_naive: Linear(128,16), ReLU, BN, Linear(16,8) ----------------
    # fc1 weight rearranged to the kernel's (h | w,c) lane order; naive bn2 folded in.
    pn = params["post_naive"]
    pw = npf(pn["fc1"]["w"]); pb = npf(pn["fc1"]["b"])
    n2s = npf(nv["bn2"]["scale"]); n2t = npf(nv["bn2"]["shift"])
    pwcat = np.zeros((256, 16), np.float32)
    for h in range(2):
        for w_ in range(2):
            for c in range(32):
                # torch flatten feature index = c*4 + h*2 + w ; kernel lane = 128*h + w*32 + c
                pwcat[128 * h + w_ * 32 + c, :] = pw[c * 4 + h * 2 + w_, :] * n2s[c]
    shift128 = np.array([n2t[f // 4] for f in range(128)], np.float32)
    pk["pn1_w"] = bf(pwcat)
    pk["pn1_b"] = f32((pb + shift128 @ pw).reshape(1, -1))
    pw2, pb2 = fold_in_fc(npf(pn["fc2"]["w"]), npf(pn["fc2"]["b"]),
                          npf(pn["bn1"]["scale"]), npf(pn["bn1"]["shift"]))
    pk["pn2_w"] = bf(pw2); pk["pn2_b"] = f32(pb2.reshape(1, -1))

    # ---------------- FC_naive: Linear(36,8), ReLU, BN, Linear(8,2) ----------------
    fcn = params["fc_naive"]
    w36 = npf(fcn["fc1"]["w"])
    # kernel feature order: [naive(x) 8 | naive(res) 8 | mnist ch0 10 | mnist ch1 10]
    # torch order of the last 20 features is d*2 + ch  -> permute rows 16..35.
    rows = list(range(16)) + [16 + 2 * d for d in range(10)] + [16 + 2 * d + 1 for d in range(10)]
    pk["fc1_w"] = bf(w36[rows, :])
    pk["fc1_b"] = f32(npf(fcn["fc1"]["b"]).reshape(1, -1))
    fw2, fb2 = fold_in_fc(npf(fcn["fc2"]["w"]), npf(fcn["fc2"]["b"]),
                          npf(fcn["bn1"]["scale"]), npf(fcn["bn1"]["shift"]))
    pk["fc2_w"] = bf(fw2); pk["fc2_b"] = f32(fb2.reshape(1, -1))

    pk["fse0"] = bf(sel(n, s2, [2 * i for i in range(n)]))
    pk["fse1"] = bf(sel(n, s2, [2 * i + 1 for i in range(n)]))
    return pk


# ---------------------------------------------------------------------------
# The single fused kernel
# ---------------------------------------------------------------------------
def _make_kernel(n, treedef, n_params):
    s2 = 2 * n

    def kernel(*refs):
        p = jax.tree_util.tree_unflatten(treedef, refs[:n_params])
        a_id = refs[n_params]          # (16N, 28)  f32  x, channels-last, pitch 16
        a_mn3 = refs[n_params + 1]     # (14*2N-2, 42)  bf16  kh-merged mnist conv1 operand
        a_pd3 = refs[n_params + 2]     # (16N-2, 96)    bf16  kh-merged (padded) resblock operand
        out_ref = refs[n_params + 3]   # (N, 2)
        nv_in, m_p1, m_c2, m_p2, n_p1, po_buf = refs[n_params + 4:]

        def dot(a, b):
            return jnp.dot(a.astype(_BF16), b.astype(_BF16),
                           preferred_element_type=_F32)

        def kh_cat(src_ref, r_out, n_kh):
            # lane-concatenate the kh row-shifted windows (128-aligned lane widths)
            return jnp.concatenate([src_ref[kh:kh + r_out, :] for kh in range(n_kh)],
                                   axis=1)

        def pool_relu(acc, half, b_ref, se_ref, so_ref):
            # acc columns: [even-w outputs (half) | odd-w outputs (half)]
            pw = jnp.maximum(acc[:, :half], acc[:, half:])            # 2x1 max over w
            ph = jnp.maximum(dot(se_ref[...], pw), dot(so_ref[...], pw))  # 1x2 max over h + compact
            return jnp.maximum(ph + b_ref[...], 0.0)                  # bias + ReLU

        # ---------------- ResNeXt block: x + sum_b ReLU(BN(conv_b(x))) ----------------
        r_res = 16 * n - 2
        res = a_id[0:r_res, :]
        for w_ref, b_ref in zip(p["res_w"], p["res_b"]):
            res = res + jnp.maximum(dot(a_pd3[...], w_ref[...]) + b_ref[...], 0.0)

        # naive-branch input = [x ; resblock(x)] stacked along batch (2N samples)
        nv_in[0:16 * n, :] = a_id[...]
        nv_in[16 * n:16 * n + r_res, :] = res
        nv_in[16 * s2 - 2:16 * s2, :] = jnp.zeros((2, 28), _F32)   # unwritten tail rows only

        # ------------- MnistCNN on the original input (resblock copy is dead in eval) -------------
        m_p1[...] = pool_relu(dot(a_mn3[...], p["m1_w"][...]), 640,
                              p["m1_b"], p["m1_se"], p["m1_so"])

        r2 = 6 * s2 - 1
        m_c2[...] = jnp.maximum(dot(kh_cat(m_p1, r2, 2), p["m2_w"][...])
                                + p["m2_b"][...], 0.0)

        r3 = 6 * s2 - 2
        m_p2[...] = pool_relu(dot(kh_cat(m_c2, r3, 2), p["m3_w"][...]), 128,
                              p["m3_b"], p["m3_se"], p["m3_so"])

        r4 = 2 * s2 - 1
        c4 = jnp.maximum(dot(kh_cat(m_p2, r4, 2), p["m4_w"][...]) + p["m4_b"][...], 0.0)

        feat = dot(p["mflat"][...], c4)                                   # (2N, 128) flatten
        h1 = jnp.maximum(dot(feat, p["mf1_w"][...]) + p["mf1_b"][...], 0.0)
        h2 = jnp.maximum(dot(h1, p["mf2_w"][...]) + p["mf2_b"][...], 0.0)
        mnist_out = dot(h2, p["mf3_w"][...]) + p["mf3_b"][...]            # (2N, 10)

        # ------------- Naive_net[:11] + post_naive, batched over the 2N samples -------------
        rn1 = 16 * s2 - 2
        accn1 = dot(nv_in[0:rn1, :], p["n1_w"][0:28, :])
        accn1 = accn1 + dot(nv_in[1:1 + rn1, :], p["n1_w"][28:56, :])
        accn1 = accn1 + dot(nv_in[2:2 + rn1, :], p["n1_w"][56:84, :])
        n_p1[...] = pool_relu(accn1, 384, p["n1_b"], p["n1_se"], p["n1_so"])

        rn2 = 6 * s2 - 2
        y2 = pool_relu(dot(kh_cat(n_p1, rn2, 3), p["n2_w"][...]), 128,
                       p["n2_b"], p["n2_se"], p["n2_so"])                 # (2*2N, 128)

        f01 = jnp.concatenate([dot(p["nh0"][...], y2),                    # h=0 features
                               dot(p["nh1"][...], y2)], axis=1)           # h=1 features
        q = jnp.maximum(dot(f01, p["pn1_w"][...]) + p["pn1_b"][...], 0.0)
        po_buf[...] = dot(q, p["pn2_w"][...]) + p["pn2_b"][...]           # (2N, 8)

        # ---------------- final FC_naive head ----------------
        m0 = dot(p["fse0"][...], mnist_out)       # mnist logits, channel-0 samples
        m1 = dot(p["fse1"][...], mnist_out)       # mnist logits, channel-1 samples
        z = (dot(po_buf[0:n, :], p["fc1_w"][0:8, :])
             + dot(po_buf[n:s2, :], p["fc1_w"][8:16, :])
             + dot(m0, p["fc1_w"][16:26, :])
             + dot(m1, p["fc1_w"][26:36, :])
             + p["fc1_b"][...])
        z = jnp.maximum(z, 0.0)
        out_ref[...] = dot(z, p["fc2_w"][...]) + p["fc2_b"][...]

    return kernel


# ---------------------------------------------------------------------------
# Forward wrapper: layout prep (transpose / pad / kh-window concat) + one pallas_call
# ---------------------------------------------------------------------------
def lugianet_forward(packed, x):
    """Eval-mode LugiaNet forward: x (N,2,14,14) -> (N,2)."""
    n = x.shape[0]
    s2 = 2 * n
    assert packed["mflat"].shape[0] == s2, "packed params built for a different batch size"

    x = x.astype(_F32)
    xt = jnp.transpose(x, (0, 2, 3, 1))                                   # (N,14,14,2) channels-last
    a_id = jnp.pad(xt, ((0, 0), (0, 2), (0, 0), (0, 0))).reshape(16 * n, 28)
    a_pad = jnp.pad(xt, ((0, 0), (1, 1), (1, 1), (0, 0))).reshape(16 * n, 32)
    r_res = 16 * n - 2
    a_pd3 = jnp.concatenate([a_pad[kh:kh + r_res] for kh in range(3)],
                            axis=1).astype(_BF16)                         # (16N-2, 96)
    a_mn = x.reshape(s2 * 14, 14)
    r1 = 14 * s2 - 2
    a_mn3 = jnp.concatenate([a_mn[kh:kh + r1] for kh in range(3)],
                            axis=1).astype(_BF16)                         # (14*2N-2, 42)

    leaves, treedef = jax.tree_util.tree_flatten(packed)
    kernel = _make_kernel(n, treedef, len(leaves))

    scratch = [
        pltpu.VMEM((16 * s2, 28), _F32),       # nv_in  [x ; resblock(x)]
        pltpu.VMEM((6 * s2, 640), _F32),       # mnist pool1 (96 ch, 6x6), lane-padded
        pltpu.VMEM((6 * s2 - 1, 256), _F32),   # mnist conv2 (48 ch, 5x5)
        pltpu.VMEM((2 * s2, 128), _F32),       # mnist pool2 (32 ch, 2x2)
        pltpu.VMEM((6 * s2, 384), _F32),       # naive pool1 (48 ch, 6x6)
        pltpu.VMEM((s2, 8), _F32),             # post_naive output
    ]
    n_in = len(leaves) + 3
    return pl.pallas_call(
        kernel,
        out_shape=jax.ShapeDtypeStruct((n, 2), _F32),
        in_specs=[pl.BlockSpec(memory_space=_VMEM)] * n_in,
        out_specs=pl.BlockSpec(memory_space=_VMEM),
        scratch_shapes=scratch,
        compiler_params=pltpu.CompilerParams(vmem_limit_bytes=32 * 1024 * 1024),
    )(*leaves, a_id, a_mn3, a_pd3)


# ---------------------------------------------------------------------------
if __name__ == "__main__":
    key = jax.random.PRNGKey(0)
    pkey, xkey = jax.random.split(key)
    params = init_lugianet_params(pkey, n_parrallel=2)

    N = 4
    x = jax.random.normal(xkey, (N, 2, 14, 14), _F32)      # N x 2 x 14 x 14

    packed = pack_lugianet(params, N)                       # one-time weight repack (bf16)
    fwd = jax.jit(lugianet_forward)
    out = fwd(packed, x)
    jax.block_until_ready(out)
    assert out.shape == (N, 2) and out.dtype == _F32
    assert bool(jnp.all(jnp.isfinite(out)))
    print("KERNEL_OK")
</pallas_src>

<mosaic_0001>
module attributes {stable_mosaic.version = 11 : i64} {
  func.func @kernel(%arg0: memref<1x8xf32, #tpu.memory_space<vmem>>, %arg1: memref<36x8xbf16, #tpu.memory_space<vmem>>, %arg2: memref<1x2xf32, #tpu.memory_space<vmem>>, %arg3: memref<8x2xbf16, #tpu.memory_space<vmem>>, %arg4: memref<4x8xbf16, #tpu.memory_space<vmem>>, %arg5: memref<4x8xbf16, #tpu.memory_space<vmem>>, %arg6: memref<1x640xf32, #tpu.memory_space<vmem>>, %arg7: memref<48x110xbf16, #tpu.memory_space<vmem>>, %arg8: memref<48x110xbf16, #tpu.memory_space<vmem>>, %arg9: memref<42x1280xbf16, #tpu.memory_space<vmem>>, %arg10: memref<1x256xf32, #tpu.memory_space<vmem>>, %arg11: memref<1280x256xbf16, #tpu.memory_space<vmem>>, %arg12: memref<1x128xf32, #tpu.memory_space<vmem>>, %arg13: memref<16x46xbf16, #tpu.memory_space<vmem>>, %arg14: memref<16x46xbf16, #tpu.memory_space<vmem>>, %arg15: memref<512x256xbf16, #tpu.memory_space<vmem>>, %arg16: memref<1x128xf32, #tpu.memory_space<vmem>>, %arg17: memref<256x128xbf16, #tpu.memory_space<vmem>>, %arg18: memref<1x128xf32, #tpu.memory_space<vmem>>, %arg19: memref<128x128xbf16, #tpu.memory_space<vmem>>, %arg20: memref<1x64xf32, #tpu.memory_space<vmem>>, %arg21: memref<128x64xbf16, #tpu.memory_space<vmem>>, %arg22: memref<1x10xf32, #tpu.memory_space<vmem>>, %arg23: memref<64x10xbf16, #tpu.memory_space<vmem>>, %arg24: memref<8x15xbf16, #tpu.memory_space<vmem>>, %arg25: memref<1x384xf32, #tpu.memory_space<vmem>>, %arg26: memref<48x126xbf16, #tpu.memory_space<vmem>>, %arg27: memref<48x126xbf16, #tpu.memory_space<vmem>>, %arg28: memref<84x768xbf16, #tpu.memory_space<vmem>>, %arg29: memref<1x128xf32, #tpu.memory_space<vmem>>, %arg30: memref<16x46xbf16, #tpu.memory_space<vmem>>, %arg31: memref<16x46xbf16, #tpu.memory_space<vmem>>, %arg32: memref<1152x256xbf16, #tpu.memory_space<vmem>>, %arg33: memref<8x16xbf16, #tpu.memory_space<vmem>>, %arg34: memref<8x16xbf16, #tpu.memory_space<vmem>>, %arg35: memref<1x16xf32, #tpu.memory_space<vmem>>, %arg36: memref<256x16xbf16, #tpu.memory_space<vmem>>, %arg37: memref<1x8xf32, #tpu.memory_space<vmem>>, %arg38: memref<16x8xbf16, #tpu.memory_space<vmem>>, %arg39: memref<1x28xf32, #tpu.memory_space<vmem>>, %arg40: memref<1x28xf32, #tpu.memory_space<vmem>>, %arg41: memref<96x28xbf16, #tpu.memory_space<vmem>>, %arg42: memref<96x28xbf16, #tpu.memory_space<vmem>>, %arg43: memref<64x28xf32, #tpu.memory_space<vmem>>, %arg44: memref<110x42xbf16, #tpu.memory_space<vmem>>, %arg45: memref<62x96xbf16, #tpu.memory_space<vmem>>, %arg46: memref<4x2xf32, #tpu.memory_space<vmem>>, %arg47: memref<128x28xf32, #tpu.memory_space<vmem>>, %arg48: memref<48x640xf32, #tpu.memory_space<vmem>>, %arg49: memref<47x256xf32, #tpu.memory_space<vmem>>, %arg50: memref<16x128xf32, #tpu.memory_space<vmem>>, %arg51: memref<48x384xf32, #tpu.memory_space<vmem>>, %arg52: memref<8x8xf32, #tpu.memory_space<vmem>>) attributes {dimension_semantics = [], scalar_prefetch = 0 : i64, scratch_operands = 6 : i64, tpu.core_type = #tpu.core_type<tc>} {
    %c0 = arith.constant 0 : index
    %c0_0 = arith.constant 0 : index
    %0 = vector.load %arg43[%c0, %c0_0] : memref<64x28xf32, #tpu.memory_space<vmem>>, vector<62x28xf32>
    %c0_1 = arith.constant 0 : index
    %c0_2 = arith.constant 0 : index
    %1 = vector.load %arg45[%c0_1, %c0_2] : memref<62x96xbf16, #tpu.memory_space<vmem>>, vector<62x96xbf16>
    %c0_3 = arith.constant 0 : index
    %c0_4 = arith.constant 0 : index
    %2 = vector.load %arg41[%c0_3, %c0_4] : memref<96x28xbf16, #tpu.memory_space<vmem>>, vector<96x28xbf16>
    %cst = arith.constant dense<0.000000e+00> : vector<62x28xf32>
    %3 = tpu.matmul %1, %2, %cst {dimension_numbers = #tpu.dot_dimension_numbers<[1], [0], [0], [1], [0, 0, 1, 1], [], []>} : vector<62x96xbf16>, vector<96x28xbf16>, vector<62x28xf32> -> vector<62x28xf32>
    %c0_5 = arith.constant 0 : index
    %c0_6 = arith.constant 0 : index
    %4 = vector.load %arg39[%c0_5, %c0_6] : memref<1x28xf32, #tpu.memory_space<vmem>>, vector<1x28xf32>
    %5 = vector.broadcast %4 : vector<1x28xf32> to vector<62x28xf32>
    %6 = arith.addf %3, %5 : vector<62x28xf32>
    %cst_7 = arith.constant 0.000000e+00 : f32
    %7 = vector.broadcast %cst_7 : f32 to vector<62x28xf32>
    %8 = arith.maximumf %6, %7 : vector<62x28xf32>
    %9 = arith.addf %0, %8 : vector<62x28xf32>
    %c0_8 = arith.constant 0 : index
    %c0_9 = arith.constant 0 : index
    %10 = vector.load %arg45[%c0_8, %c0_9] : memref<62x96xbf16, #tpu.memory_space<vmem>>, vector<62x96xbf16>
    %c0_10 = arith.constant 0 : index
    %c0_11 = arith.constant 0 : index
    %11 = vector.load %arg42[%c0_10, %c0_11] : memref<96x28xbf16, #tpu.memory_space<vmem>>, vector<96x28xbf16>
    %cst_12 = arith.constant dense<0.000000e+00> : vector<62x28xf32>
    %12 = tpu.matmul %10, %11, %cst_12 {dimension_numbers = #tpu.dot_dimension_numbers<[1], [0], [0], [1], [0, 0, 1, 1], [], []>} : vector<62x96xbf16>, vector<96x28xbf16>, vector<62x28xf32> -> vector<62x28xf32>
    %c0_13 = arith.constant 0 : index
    %c0_14 = arith.constant 0 : index
    %13 = vector.load %arg40[%c0_13, %c0_14] : memref<1x28xf32, #tpu.memory_space<vmem>>, vector<1x28xf32>
    %14 = vector.broadcast %13 : vector<1x28xf32> to vector<62x28xf32>
    %15 = arith.addf %12, %14 : vector<62x28xf32>
    %cst_15 = arith.constant 0.000000e+00 : f32
    %16 = vector.broadcast %cst_15 : f32 to vector<62x28xf32>
    %17 = arith.maximumf %15, %16 : vector<62x28xf32>
    %18 = arith.addf %9, %17 : vector<62x28xf32>
    %c0_16 = arith.constant 0 : index
    %c0_17 = arith.constant 0 : index
    %19 = vector.load %arg43[%c0_16, %c0_17] : memref<64x28xf32, #tpu.memory_space<vmem>>, vector<64x28xf32>
    %c0_18 = arith.constant 0 : index
    %c0_19 = arith.constant 0 : index
    %20 = vector.load %arg47[%c0_18, %c0_19] : memref<128x28xf32, #tpu.memory_space<vmem>>, vector<64x28xf32>
    tpu.vector_store %arg47[%c0_18, %c0_19], %19 {strides = array<i32>} : memref<128x28xf32, #tpu.memory_space<vmem>>, vector<64x28xf32>,
    %c64 = arith.constant 64 : index
    %c0_20 = arith.constant 0 : index
    %21 = vector.load %arg47[%c64, %c0_20] : memref<128x28xf32, #tpu.memory_space<vmem>>, vector<62x28xf32>
    tpu.vector_store %arg47[%c64, %c0_20], %18 {strides = array<i32>} : memref<128x28xf32, #tpu.memory_space<vmem>>, vector<62x28xf32>,
    %cst_21 = arith.constant 0.000000e+00 : f32
    %22 = vector.broadcast %cst_21 : f32 to vector<2x28xf32>
    %c126 = arith.constant 126 : index
    %c0_22 = arith.constant 0 : index
    %23 = vector.load %arg47[%c126, %c0_22] : memref<128x28xf32, #tpu.memory_space<vmem>>, vector<2x28xf32>
    tpu.vector_store %arg47[%c126, %c0_22], %22 {strides = array<i32>} : memref<128x28xf32, #tpu.memory_space<vmem>>, vector<2x28xf32>,
    %c0_23 = arith.constant 0 : index
    %c0_24 = arith.constant 0 : index
    %24 = vector.load %arg44[%c0_23, %c0_24] : memref<110x42xbf16, #tpu.memory_space<vmem>>, vector<110x42xbf16>
    %c0_25 = arith.constant 0 : index
    %c0_26 = arith.constant 0 : index
    %25 = vector.load %arg9[%c0_25, %c0_26] : memref<42x1280xbf16, #tpu.memory_space<vmem>>, vector<42x1280xbf16>
    %cst_27 = arith.constant dense<0.000000e+00> : vector<110x1280xf32>
    %26 = tpu.matmul %24, %25, %cst_27 {dimension_numbers = #tpu.dot_dimension_numbers<[1], [0], [0], [1], [0, 0, 1, 1], [], []>} : vector<110x42xbf16>, vector<42x1280xbf16>, vector<110x1280xf32> -> vector<110x1280xf32>
    %27 = vector.extract_strided_slice %26 {offsets = [0, 0], sizes = [110, 640], strides = [1, 1]} : vector<110x1280xf32> to vector<110x640xf32>
    %28 = vector.extract_strided_slice %26 {offsets = [0, 640], sizes = [110, 640], strides = [1, 1]} : vector<110x1280xf32> to vector<110x640xf32>
    %29 = arith.maximumf %27, %28 : vector<110x640xf32>
    %c0_28 = arith.constant 0 : index
    %c0_29 = arith.constant 0 : index
    %30 = vector.load %arg7[%c0_28, %c0_29] : memref<48x110xbf16, #tpu.memory_space<vmem>>, vector<48x110xbf16>
    %31 = arith.truncf %29 : vector<110x640xf32> to vector<110x640xbf16>
    %cst_30 = arith.constant dense<0.000000e+00> : vector<48x640xf32>
    %32 = tpu.matmul %30, %31, %cst_30 {dimension_numbers = #tpu.dot_dimension_numbers<[1], [0], [0], [1], [0, 0, 1, 1], [], []>} : vector<48x110xbf16>, vector<110x640xbf16>, vector<48x640xf32> -> vector<48x640xf32>
    %c0_31 = arith.constant 0 : index
    %c0_32 = arith.constant 0 : index
    %33 = vector.load %arg8[%c0_31, %c0_32] : memref<48x110xbf16, #tpu.memory_space<vmem>>, vector<48x110xbf16>
    %34 = arith.truncf %29 : vector<110x640xf32> to vector<110x640xbf16>
    %cst_33 = arith.constant dense<0.000000e+00> : vector<48x640xf32>
    %35 = tpu.matmul %33, %34, %cst_33 {dimension_numbers = #tpu.dot_dimension_numbers<[1], [0], [0], [1], [0, 0, 1, 1], [], []>} : vector<48x110xbf16>, vector<110x640xbf16>, vector<48x640xf32> -> vector<48x640xf32>
    %36 = arith.maximumf %32, %35 : vector<48x640xf32>
    %c0_34 = arith.constant 0 : index
    %c0_35 = arith.constant 0 : index
    %37 = vector.load %arg6[%c0_34, %c0_35] : memref<1x640xf32, #tpu.memory_space<vmem>>, vector<1x640xf32>
    %38 = vector.broadcast %37 : vector<1x640xf32> to vector<48x640xf32>
    %39 = arith.addf %36, %38 : vector<48x640xf32>
    %cst_36 = arith.constant 0.000000e+00 : f32
    %40 = vector.broadcast %cst_36 : f32 to vector<48x640xf32>
    %41 = arith.maximumf %39, %40 : vector<48x640xf32>
    %c0_37 = arith.constant 0 : index
    %c0_38 = arith.constant 0 : index
    %42 = vector.load %arg48[%c0_37, %c0_38] : memref<48x640xf32, #tpu.memory_space<vmem>>, vector<48x640xf32>
    tpu.vector_store %arg48[%c0_37, %c0_38], %41 {strides = array<i32>} : memref<48x640xf32, #tpu.memory_space<vmem>>, vector<48x640xf32>,
    %c0_39 = arith.constant 0 : index
    %c0_40 = arith.constant 0 : index
    %43 = vector.load %arg48[%c0_39, %c0_40] : memref<48x640xf32, #tpu.memory_space<vmem>>, vector<47x640xf32>
    %c1 = arith.constant 1 : index
    %c0_41 = arith.constant 0 : index
    %44 = vector.load %arg48[%c1, %c0_41] : memref<48x640xf32, #tpu.memory_space<vmem>>, vector<47x640xf32>
    %45 = tpu.concatenate %43, %44 in 1 : vector<47x640xf32>, vector<47x640xf32> -> vector<47x1280xf32>
    %c0_42 = arith.constant 0 : index
    %c0_43 = arith.constant 0 : index
    %46 = vector.load %arg11[%c0_42, %c0_43] : memref<1280x256xbf16, #tpu.memory_space<vmem>>, vector<1280x256xbf16>
    %47 = arith.truncf %45 : vector<47x1280xf32> to vector<47x1280xbf16>
    %cst_44 = arith.constant dense<0.000000e+00> : vector<47x256xf32>
    %48 = tpu.matmul %47, %46, %cst_44 {dimension_numbers = #tpu.dot_dimension_numbers<[1], [0], [0], [1], [0, 0, 1, 1], [], []>} : vector<47x1280xbf16>, vector<1280x256xbf16>, vector<47x256xf32> -> vector<47x256xf32>
    %c0_45 = arith.constant 0 : index
    %c0_46 = arith.constant 0 : index
    %49 = vector.load %arg10[%c0_45, %c0_46] : memref<1x256xf32, #tpu.memory_space<vmem>>, vector<1x256xf32>
    %50 = vector.broadcast %49 : vector<1x256xf32> to vector<47x256xf32>
    %51 = arith.addf %48, %50 : vector<47x256xf32>
    %cst_47 = arith.constant 0.000000e+00 : f32
    %52 = vector.broadcast %cst_47 : f32 to vector<47x256xf32>
    %53 = arith.maximumf %51, %52 : vector<47x256xf32>
    %c0_48 = arith.constant 0 : index
    %c0_49 = arith.constant 0 : index
    %54 = vector.load %arg49[%c0_48, %c0_49] : memref<47x256xf32, #tpu.memory_space<vmem>>, vector<47x256xf32>
    tpu.vector_store %arg49[%c0_48, %c0_49], %53 {strides = array<i32>} : memref<47x256xf32, #tpu.memory_space<vmem>>, vector<47x256xf32>,
    %c0_50 = arith.constant 0 : index
    %c0_51 = arith.constant 0 : index
    %55 = vector.load %arg49[%c0_50, %c0_51] : memref<47x256xf32, #tpu.memory_space<vmem>>, vector<46x256xf32>
    %c1_52 = arith.constant 1 : index
    %c0_53 = arith.constant 0 : index
    %56 = vector.load %arg49[%c1_52, %c0_53] : memref<47x256xf32, #tpu.memory_space<vmem>>, vector<46x256xf32>
    %57 = tpu.concatenate %55, %56 in 1 : vector<46x256xf32>, vector<46x256xf32> -> vector<46x512xf32>
    %c0_54 = arith.constant 0 : index
    %c0_55 = arith.constant 0 : index
    %58 = vector.load %arg15[%c0_54, %c0_55] : memref<512x256xbf16, #tpu.memory_space<vmem>>, vector<512x256xbf16>
    %59 = arith.truncf %57 : vector<46x512xf32> to vector<46x512xbf16>
    %cst_56 = arith.constant dense<0.000000e+00> : vector<46x256xf32>
    %60 = tpu.matmul %59, %58, %cst_56 {dimension_numbers = #tpu.dot_dimension_numbers<[1], [0], [0], [1], [0, 0, 1, 1], [], []>} : vector<46x512xbf16>, vector<512x256xbf16>, vector<46x256xf32> -> vector<46x256xf32>
    %61 = vector.extract_strided_slice %60 {offsets = [0, 0], sizes = [46, 128], strides = [1, 1]} : vector<46x256xf32> to vector<46x128xf32>
    %62 = vector.extract_strided_slice %60 {offsets = [0, 128], sizes = [46, 128], strides = [1, 1]} : vector<46x256xf32> to vector<46x128xf32>
    %63 = arith.maximumf %61, %62 : vector<46x128xf32>
    %c0_57 = arith.constant 0 : index
    %c0_58 = arith.constant 0 : index
    %64 = vector.load %arg13[%c0_57, %c0_58] : memref<16x46xbf16, #tpu.memory_space<vmem>>, vector<16x46xbf16>
    %65 = arith.truncf %63 : vector<46x128xf32> to vector<46x128xbf16>
    %cst_59 = arith.constant dense<0.000000e+00> : vector<16x128xf32>
    %66 = tpu.matmul %64, %65, %cst_59 {dimension_numbers = #tpu.dot_dimension_numbers<[1], [0], [0], [1], [0, 0, 1, 1], [], []>} : vector<16x46xbf16>, vector<46x128xbf16>, vector<16x128xf32> -> vector<16x128xf32>
    %c0_60 = arith.constant 0 : index
    %c0_61 = arith.constant 0 : index
    %67 = vector.load %arg14[%c0_60, %c0_61] : memref<16x46xbf16, #tpu.memory_space<vmem>>, vector<16x46xbf16>
    %68 = arith.truncf %63 : vector<46x128xf32> to vector<46x128xbf16>
    %cst_62 = arith.constant dense<0.000000e+00> : vector<16x128xf32>
    %69 = tpu.matmul %67, %68, %cst_62 {dimension_numbers = #tpu.dot_dimension_numbers<[1], [0], [0], [1], [0, 0, 1, 1], [], []>} : vector<16x46xbf16>, vector<46x128xbf16>, vector<16x128xf32> -> vector<16x128xf32>
    %70 = arith.maximumf %66, %69 : vector<16x128xf32>
    %c0_63 = arith.constant 0 : index
    %c0_64 = arith.constant 0 : index
    %71 = vector.load %arg12[%c0_63, %c0_64] : memref<1x128xf32, #tpu.memory_space<vmem>>, vector<1x128xf32>
    %72 = vector.broadcast %71 : vector<1x128xf32> to vector<16x128xf32>
    %73 = arith.addf %70, %72 : vector<16x128xf32>
    %cst_65 = arith.constant 0.000000e+00 : f32
    %74 = vector.broadcast %cst_65 : f32 to vector<16x128xf32>
    %75 = arith.maximumf %73, %74 : vector<16x128xf32>
    %c0_66 = arith.constant 0 : index
    %c0_67 = arith.constant 0 : index
    %76 = vector.load %arg50[%c0_66, %c0_67] : memref<16x128xf32, #tpu.memory_space<vmem>>, vector<16x128xf32>
    tpu.vector_store %arg50[%c0_66, %c0_67], %75 {strides = array<i32>} : memref<16x128xf32, #tpu.memory_space<vmem>>, vector<16x128xf32>,
    %c0_68 = arith.constant 0 : index
    %c0_69 = arith.constant 0 : index
    %77 = vector.load %arg50[%c0_68, %c0_69] : memref<16x128xf32, #tpu.memory_space<vmem>>, vector<15x128xf32>
    %c1_70 = arith.constant 1 : index
    %c0_71 = arith.constant 0 : index
    %78 = vector.load %arg50[%c1_70, %c0_71] : memref<16x128xf32, #tpu.memory_space<vmem>>, vector<15x128xf32>
    %79 = tpu.concatenate %77, %78 in 1 : vector<15x128xf32>, vector<15x128xf32> -> vector<15x256xf32>
    %c0_72 = arith.constant 0 : index
    %c0_73 = arith.constant 0 : index
    %80 = vector.load %arg17[%c0_72, %c0_73] : memref<256x128xbf16, #tpu.memory_space<vmem>>, vector<256x128xbf16>
    %81 = arith.truncf %79 : vector<15x256xf32> to vector<15x256xbf16>
    %cst_74 = arith.constant dense<0.000000e+00> : vector<15x128xf32>
    %82 = tpu.matmul %81, %80, %cst_74 {dimension_numbers = #tpu.dot_dimension_numbers<[1], [0], [0], [1], [0, 0, 1, 1], [], []>} : vector<15x256xbf16>, vector<256x128xbf16>, vector<15x128xf32> -> vector<15x128xf32>
    %c0_75 = arith.constant 0 : index
    %c0_76 = arith.constant 0 : index
    %83 = vector.load %arg16[%c0_75, %c0_76] : memref<1x128xf32, #tpu.memory_space<vmem>>, vector<1x128xf32>
    %84 = vector.broadcast %83 : vector<1x128xf32> to vector<15x128xf32>
    %85 = arith.addf %82, %84 : vector<15x128xf32>
    %cst_77 = arith.constant 0.000000e+00 : f32
    %86 = vector.broadcast %cst_77 : f32 to vector<15x128xf32>
    %87 = arith.maximumf %85, %86 : vector<15x128xf32>
    %c0_78 = arith.constant 0 : index
    %c0_79 = arith.constant 0 : index
    %88 = vector.load %arg24[%c0_78, %c0_79] : memref<8x15xbf16, #tpu.memory_space<vmem>>, vector<8x15xbf16>
    %89 = arith.truncf %87 : vector<15x128xf32> to vector<15x128xbf16>
    %cst_80 = arith.constant dense<0.000000e+00> : vector<8x128xf32>
    %90 = tpu.matmul %88, %89, %cst_80 {dimension_numbers = #tpu.dot_dimension_numbers<[1], [0], [0], [1], [0, 0, 1, 1], [], []>} : vector<8x15xbf16>, vector<15x128xbf16>, vector<8x128xf32> -> vector<8x128xf32>
    %c0_81 = arith.constant 0 : index
    %c0_82 = arith.constant 0 : index
    %91 = vector.load %arg19[%c0_81, %c0_82] : memref<128x128xbf16, #tpu.memory_space<vmem>>, vector<128x128xbf16>
    %92 = arith.truncf %90 : vector<8x128xf32> to vector<8x128xbf16>
    %cst_83 = arith.constant dense<0.000000e+00> : vector<8x128xf32>
    %93 = tpu.matmul %92, %91, %cst_83 {dimension_numbers = #tpu.dot_dimension_numbers<[1], [0], [0], [1], [0, 0, 1, 1], [], []>} : vector<8x128xbf16>, vector<128x128xbf16>, vector<8x128xf32> -> vector<8x128xf32>
    %c0_84 = arith.constant 0 : index
    %c0_85 = arith.constant 0 : index
    %94 = vector.load %arg18[%c0_84, %c0_85] : memref<1x128xf32, #tpu.memory_space<vmem>>, vector<1x128xf32>
    %95 = vector.broadcast %94 : vector<1x128xf32> to vector<8x128xf32>
    %96 = arith.addf %93, %95 : vector<8x128xf32>
    %cst_86 = arith.constant 0.000000e+00 : f32
    %97 = vector.broadcast %cst_86 : f32 to vector<8x128xf32>
    %98 = arith.maximumf %96, %97 : vector<8x128xf32>
    %c0_87 = arith.constant 0 : index
    %c0_88 = arith.constant 0 : index
    %99 = vector.load %arg21[%c0_87, %c0_88] : memref<128x64xbf16, #tpu.memory_space<vmem>>, vector<128x64xbf16>
    %100 = arith.truncf %98 : vector<8x128xf32> to vector<8x128xbf16>
    %cst_89 = arith.constant dense<0.000000e+00> : vector<8x64xf32>
    %101 = tpu.matmul %100, %99, %cst_89 {dimension_numbers = #tpu.dot_dimension_numbers<[1], [0], [0], [1], [0, 0, 1, 1], [], []>} : vector<8x128xbf16>, vector<128x64xbf16>, vector<8x64xf32> -> vector<8x64xf32>
    %c0_90 = arith.constant 0 : index
    %c0_91 = arith.constant 0 : index
    %102 = vector.load %arg20[%c0_90, %c0_91] : memref<1x64xf32, #tpu.memory_space<vmem>>, vector<1x64xf32>
    %103 = vector.broadcast %102 : vector<1x64xf32> to vector<8x64xf32>
    %104 = arith.addf %101, %103 : vector<8x64xf32>
    %cst_92 = arith.constant 0.000000e+00 : f32
    %105 = vector.broadcast %cst_92 : f32 to vector<8x64xf32>
    %106 = arith.maximumf %104, %105 : vector<8x64xf32>
    %c0_93 = arith.constant 0 : index
    %c0_94 = arith.constant 0 : index
    %107 = vector.load %arg23[%c0_93, %c0_94] : memref<64x10xbf16, #tpu.memory_space<vmem>>, vector<64x10xbf16>
    %108 = arith.truncf %106 : vector<8x64xf32> to vector<8x64xbf16>
    %cst_95 = arith.constant dense<0.000000e+00> : vector<8x10xf32>
    %109 = tpu.matmul %108, %107, %cst_95 {dimension_numbers = #tpu.dot_dimension_numbers<[1], [0], [0], [1], [0, 0, 1, 1], [], []>} : vector<8x64xbf16>, vector<64x10xbf16>, vector<8x10xf32> -> vector<8x10xf32>
    %c0_96 = arith.constant 0 : index
    %c0_97 = arith.constant 0 : index
    %110 = vector.load %arg22[%c0_96, %c0_97] : memref<1x10xf32, #tpu.memory_space<vmem>>, vector<1x10xf32>
    %111 = vector.broadcast %110 : vector<1x10xf32> to vector<8x10xf32>
    %112 = arith.addf %109, %111 : vector<8x10xf32>
    %c0_98 = arith.constant 0 : index
    %c0_99 = arith.constant 0 : index
    %113 = vector.load %arg47[%c0_98, %c0_99] : memref<128x28xf32, #tpu.memory_space<vmem>>, vector<126x28xf32>
    %c0_100 = arith.constant 0 : index
    %c0_101 = arith.constant 0 : index
    %114 = vector.load %arg28[%c0_100, %c0_101] : memref<84x768xbf16, #tpu.memory_space<vmem>>, vector<28x768xbf16>
    %115 = arith.truncf %113 : vector<126x28xf32> to vector<126x28xbf16>
    %cst_102 = arith.constant dense<0.000000e+00> : vector<126x768xf32>
    %116 = tpu.matmul %115, %114, %cst_102 {dimension_numbers = #tpu.dot_dimension_numbers<[1], [0], [0], [1], [0, 0, 1, 1], [], []>} : vector<126x28xbf16>, vector<28x768xbf16>, vector<126x768xf32> -> vector<126x768xf32>
    %c1_103 = arith.constant 1 : index
    %c0_104 = arith.constant 0 : index
    %117 = vector.load %arg47[%c1_103, %c0_104] : memref<128x28xf32, #tpu.memory_space<vmem>>, vector<126x28xf32>
    %c28 = arith.constant 28 : index
    %c0_105 = arith.constant 0 : index
    %118 = vector.load %arg28[%c28, %c0_105] : memref<84x768xbf16, #tpu.memory_space<vmem>>, vector<28x768xbf16>
    %119 = arith.truncf %117 : vector<126x28xf32> to vector<126x28xbf16>
    %cst_106 = arith.constant dense<0.000000e+00> : vector<126x768xf32>
    %120 = tpu.matmul %119, %118, %cst_106 {dimension_numbers = #tpu.dot_dimension_numbers<[1], [0], [0], [1], [0, 0, 1, 1], [], []>} : vector<126x28xbf16>, vector<28x768xbf16>, vector<126x768xf32> -> vector<126x768xf32>
    %121 = arith.addf %116, %120 : vector<126x768xf32>
    %c2 = arith.constant 2 : index
    %c0_107 = arith.constant 0 : index
    %122 = vector.load %arg47[%c2, %c0_107] : memref<128x28xf32, #tpu.memory_space<vmem>>, vector<126x28xf32>
    %c56 = arith.constant 56 : index
    %c0_108 = arith.constant 0 : index
    %123 = vector.load %arg28[%c56, %c0_108] : memref<84x768xbf16, #tpu.memory_space<vmem>>, vector<28x768xbf16>
    %124 = arith.truncf %122 : vector<126x28xf32> to vector<126x28xbf16>
    %cst_109 = arith.constant dense<0.000000e+00> : vector<126x768xf32>
    %125 = tpu.matmul %124, %123, %cst_109 {dimension_numbers = #tpu.dot_dimension_numbers<[1], [0], [0], [1], [0, 0, 1, 1], [], []>} : vector<126x28xbf16>, vector<28x768xbf16>, vector<126x768xf32> -> vector<126x768xf32>
    %126 = arith.addf %121, %125 : vector<126x768xf32>
    %127 = vector.extract_strided_slice %126 {offsets = [0, 0], sizes = [126, 384], strides = [1, 1]} : vector<126x768xf32> to vector<126x384xf32>
    %128 = vector.extract_strided_slice %126 {offsets = [0, 384], sizes = [126, 384], strides = [1, 1]} : vector<126x768xf32> to vector<126x384xf32>
    %129 = arith.maximumf %127, %128 : vector<126x384xf32>
    %c0_110 = arith.constant 0 : index
    %c0_111 = arith.constant 0 : index
    %130 = vector.load %arg26[%c0_110, %c0_111] : memref<48x126xbf16, #tpu.memory_space<vmem>>, vector<48x126xbf16>
    %131 = arith.truncf %129 : vector<126x384xf32> to vector<126x384xbf16>
    %cst_112 = arith.constant dense<0.000000e+00> : vector<48x384xf32>
    %132 = tpu.matmul %130, %131, %cst_112 {dimension_numbers = #tpu.dot_dimension_numbers<[1], [0], [0], [1], [0, 0, 1, 1], [], []>} : vector<48x126xbf16>, vector<126x384xbf16>, vector<48x384xf32> -> vector<48x384xf32>
    %c0_113 = arith.constant 0 : index
    %c0_114 = arith.constant 0 : index
    %133 = vector.load %arg27[%c0_113, %c0_114] : memref<48x126xbf16, #tpu.memory_space<vmem>>, vector<48x126xbf16>
    %134 = arith.truncf %129 : vector<126x384xf32> to vector<126x384xbf16>
    %cst_115 = arith.constant dense<0.000000e+00> : vector<48x384xf32>
    %135 = tpu.matmul %133, %134, %cst_115 {dimension_numbers = #tpu.dot_dimension_numbers<[1], [0], [0], [1], [0, 0, 1, 1], [], []>} : vector<48x126xbf16>, vector<126x384xbf16>, vector<48x384xf32> -> vector<48x384xf32>
    %136 = arith.maximumf %132, %135 : vector<48x384xf32>
    %c0_116 = arith.constant 0 : index
    %c0_117 = arith.constant 0 : index
    %137 = vector.load %arg25[%c0_116, %c0_117] : memref<1x384xf32, #tpu.memory_space<vmem>>, vector<1x384xf32>
    %138 = vector.broadcast %137 : vector<1x384xf32> to vector<48x384xf32>
    %139 = arith.addf %136, %138 : vector<48x384xf32>
    %cst_118 = arith.constant 0.000000e+00 : f32
    %140 = vector.broadcast %cst_118 : f32 to vector<48x384xf32>
    %141 = arith.maximumf %139, %140 : vector<48x384xf32>
    %c0_119 = arith.constant 0 : index
    %c0_120 = arith.constant 0 : index
    %142 = vector.load %arg51[%c0_119, %c0_120] : memref<48x384xf32, #tpu.memory_space<vmem>>, vector<48x384xf32>
    tpu.vector_store %arg51[%c0_119, %c0_120], %141 {strides = array<i32>} : memref<48x384xf32, #tpu.memory_space<vmem>>, vector<48x384xf32>,
    %c0_121 = arith.constant 0 : index
    %c0_122 = arith.constant 0 : index
    %143 = vector.load %arg51[%c0_121, %c0_122] : memref<48x384xf32, #tpu.memory_space<vmem>>, vector<46x384xf32>
    %c1_123 = arith.constant 1 : index
    %c0_124 = arith.constant 0 : index
    %144 = vector.load %arg51[%c1_123, %c0_124] : memref<48x384xf32, #tpu.memory_space<vmem>>, vector<46x384xf32>
    %c2_125 = arith.constant 2 : index
    %c0_126 = arith.constant 0 : index
    %145 = vector.load %arg51[%c2_125, %c0_126] : memref<48x384xf32, #tpu.memory_space<vmem>>, vector<46x384xf32>
    %146 = tpu.concatenate %143, %144, %145 in 1 : vector<46x384xf32>, vector<46x384xf32>, vector<46x384xf32> -> vector<46x1152xf32>
    %c0_127 = arith.constant 0 : index
    %c0_128 = arith.constant 0 : index
    %147 = vector.load %arg32[%c0_127, %c0_128] : memref<1152x256xbf16, #tpu.memory_space<vmem>>, vector<1152x256xbf16>
    %148 = arith.truncf %146 : vector<46x1152xf32> to vector<46x1152xbf16>
    %cst_129 = arith.constant dense<0.000000e+00> : vector<46x256xf32>
    %149 = tpu.matmul %148, %147, %cst_129 {dimension_numbers = #tpu.dot_dimension_numbers<[1], [0], [0], [1], [0, 0, 1, 1], [], []>} : vector<46x1152xbf16>, vector<1152x256xbf16>, vector<46x256xf32> -> vector<46x256xf32>
    %150 = vector.extract_strided_slice %149 {offsets = [0, 0], sizes = [46, 128], strides = [1, 1]} : vector<46x256xf32> to vector<46x128xf32>
    %151 = vector.extract_strided_slice %149 {offsets = [0, 128], sizes = [46, 128], strides = [1, 1]} : vector<46x256xf32> to vector<46x128xf32>
    %152 = arith.maximumf %150, %151 : vector<46x128xf32>
    %c0_130 = arith.constant 0 : index
    %c0_131 = arith.constant 0 : index
    %153 = vector.load %arg30[%c0_130, %c0_131] : memref<16x46xbf16, #tpu.memory_space<vmem>>, vector<16x46xbf16>
    %154 = arith.truncf %152 : vector<46x128xf32> to vector<46x128xbf16>
    %cst_132 = arith.constant dense<0.000000e+00> : vector<16x128xf32>
    %155 = tpu.matmul %153, %154, %cst_132 {dimension_numbers = #tpu.dot_dimension_numbers<[1], [0], [0], [1], [0, 0, 1, 1], [], []>} : vector<16x46xbf16>, vector<46x128xbf16>, vector<16x128xf32> -> vector<16x128xf32>
    %c0_133 = arith.constant 0 : index
    %c0_134 = arith.constant 0 : index
    %156 = vector.load %arg31[%c0_133, %c0_134] : memref<16x46xbf16, #tpu.memory_space<vmem>>, vector<16x46xbf16>
    %157 = arith.truncf %152 : vector<46x128xf32> to vector<46x128xbf16>
    %cst_135 = arith.constant dense<0.000000e+00> : vector<16x128xf32>
    %158 = tpu.matmul %156, %157, %cst_135 {dimension_numbers = #tpu.dot_dimension_numbers<[1], [0], [0], [1], [0, 0, 1, 1], [], []>} : vector<16x46xbf16>, vector<46x128xbf16>, vector<16x128xf32> -> vector<16x128xf32>
    %159 = arith.maximumf %155, %158 : vector<16x128xf32>
    %c0_136 = arith.constant 0 : index
    %c0_137 = arith.constant 0 : index
    %160 = vector.load %arg29[%c0_136, %c0_137] : memref<1x128xf32, #tpu.memory_space<vmem>>, vector<1x128xf32>
    %161 = vector.broadcast %160 : vector<1x128xf32> to vector<16x128xf32>
    %162 = arith.addf %159, %161 : vector<16x128xf32>
    %cst_138 = arith.constant 0.000000e+00 : f32
    %163 = vector.broadcast %cst_138 : f32 to vector<16x128xf32>
    %164 = arith.maximumf %162, %163 : vector<16x128xf32>
    %c0_139 = arith.constant 0 : index
    %c0_140 = arith.constant 0 : index
    %165 = vector.load %arg33[%c0_139, %c0_140] : memref<8x16xbf16, #tpu.memory_space<vmem>>, vector<8x16xbf16>
    %166 = arith.truncf %164 : vector<16x128xf32> to vector<16x128xbf16>
    %cst_141 = arith.constant dense<0.000000e+00> : vector<8x128xf32>
    %167 = tpu.matmul %165, %166, %cst_141 {dimension_numbers = #tpu.dot_dimension_numbers<[1], [0], [0], [1], [0, 0, 1, 1], [], []>} : vector<8x16xbf16>, vector<16x128xbf16>, vector<8x128xf32> -> vector<8x128xf32>
    %c0_142 = arith.constant 0 : index
    %c0_143 = arith.constant 0 : index
    %168 = vector.load %arg34[%c0_142, %c0_143] : memref<8x16xbf16, #tpu.memory_space<vmem>>, vector<8x16xbf16>
    %169 = arith.truncf %164 : vector<16x128xf32> to vector<16x128xbf16>
    %cst_144 = arith.constant dense<0.000000e+00> : vector<8x128xf32>
    %170 = tpu.matmul %168, %169, %cst_144 {dimension_numbers = #tpu.dot_dimension_numbers<[1], [0], [0], [1], [0, 0, 1, 1], [], []>} : vector<8x16xbf16>, vector<16x128xbf16>, vector<8x128xf32> -> vector<8x128xf32>
    %171 = tpu.concatenate %167, %170 in 1 : vector<8x128xf32>, vector<8x128xf32> -> vector<8x256xf32>
    %c0_145 = arith.constant 0 : index
    %c0_146 = arith.constant 0 : index
    %172 = vector.load %arg36[%c0_145, %c0_146] : memref<256x16xbf16, #tpu.memory_space<vmem>>, vector<256x16xbf16>
    %173 = arith.truncf %171 : vector<8x256xf32> to vector<8x256xbf16>
    %cst_147 = arith.constant dense<0.000000e+00> : vector<8x16xf32>
    %174 = tpu.matmul %173, %172, %cst_147 {dimension_numbers = #tpu.dot_dimension_numbers<[1], [0], [0], [1], [0, 0, 1, 1], [], []>} : vector<8x256xbf16>, vector<256x16xbf16>, vector<8x16xf32> -> vector<8x16xf32>
    %c0_148 = arith.constant 0 : index
    %c0_149 = arith.constant 0 : index
    %175 = vector.load %arg35[%c0_148, %c0_149] : memref<1x16xf32, #tpu.memory_space<vmem>>, vector<1x16xf32>
    %176 = vector.broadcast %175 : vector<1x16xf32> to vector<8x16xf32>
    %177 = arith.addf %174, %176 : vector<8x16xf32>
    %cst_150 = arith.constant 0.000000e+00 : f32
    %178 = vector.broadcast %cst_150 : f32 to vector<8x16xf32>
    %179 = arith.maximumf %177, %178 : vector<8x16xf32>
    %c0_151 = arith.constant 0 : index
    %c0_152 = arith.constant 0 : index
    %180 = vector.load %arg38[%c0_151, %c0_152] : memref<16x8xbf16, #tpu.memory_space<vmem>>, vector<16x8xbf16>
    %181 = arith.truncf %179 : vector<8x16xf32> to vector<8x16xbf16>
    %cst_153 = arith.constant dense<0.000000e+00> : vector<8x8xf32>
    %182 = tpu.matmul %181, %180, %cst_153 {dimension_numbers = #tpu.dot_dimension_numbers<[1], [0], [0], [1], [0, 0, 1, 1], [], []>} : vector<8x16xbf16>, vector<16x8xbf16>, vector<8x8xf32> -> vector<8x8xf32>
    %c0_154 = arith.constant 0 : index
    %c0_155 = arith.constant 0 : index
    %183 = vector.load %arg37[%c0_154, %c0_155] : memref<1x8xf32, #tpu.memory_space<vmem>>, vector<1x8xf32>
    %184 = vector.broadcast %183 : vector<1x8xf32> to vector<8x8xf32>
    %185 = arith.addf %182, %184 : vector<8x8xf32>
    %c0_156 = arith.constant 0 : index
    %c0_157 = arith.constant 0 : index
    %186 = vector.load %arg52[%c0_156, %c0_157] : memref<8x8xf32, #tpu.memory_space<vmem>>, vector<8x8xf32>
    tpu.vector_store %arg52[%c0_156, %c0_157], %185 {strides = array<i32>} : memref<8x8xf32, #tpu.memory_space<vmem>>, vector<8x8xf32>,
    %c0_158 = arith.constant 0 : index
    %c0_159 = arith.constant 0 : index
    %187 = vector.load %arg4[%c0_158, %c0_159] : memref<4x8xbf16, #tpu.memory_space<vmem>>, vector<4x8xbf16>
    %188 = arith.truncf %112 : vector<8x10xf32> to vector<8x10xbf16>
    %cst_160 = arith.constant dense<0.000000e+00> : vector<4x10xf32>
    %189 = tpu.matmul %187, %188, %cst_160 {dimension_numbers = #tpu.dot_dimension_numbers<[1], [0], [0], [1], [0, 0, 1, 1], [], []>} : vector<4x8xbf16>, vector<8x10xbf16>, vector<4x10xf32> -> vector<4x10xf32>
    %c0_161 = arith.constant 0 : index
    %c0_162 = arith.constant 0 : index
    %190 = vector.load %arg5[%c0_161, %c0_162] : memref<4x8xbf16, #tpu.memory_space<vmem>>, vector<4x8xbf16>
    %191 = arith.truncf %112 : vector<8x10xf32> to vector<8x10xbf16>
    %cst_163 = arith.constant dense<0.000000e+00> : vector<4x10xf32>
    %192 = tpu.matmul %190, %191, %cst_163 {dimension_numbers = #tpu.dot_dimension_numbers<[1], [0], [0], [1], [0, 0, 1, 1], [], []>} : vector<4x8xbf16>, vector<8x10xbf16>, vector<4x10xf32> -> vector<4x10xf32>
    %c0_164 = arith.constant 0 : index
    %c0_165 = arith.constant 0 : index
    %193 = vector.load %arg52[%c0_164, %c0_165] : memref<8x8xf32, #tpu.memory_space<vmem>>, vector<4x8xf32>
    %c0_166 = arith.constant 0 : index
    %c0_167 = arith.constant 0 : index
    %194 = vector.load %arg1[%c0_166, %c0_167] : memref<36x8xbf16, #tpu.memory_space<vmem>>, vector<8x8xbf16>
    %195 = arith.truncf %193 : vector<4x8xf32> to vector<4x8xbf16>
    %cst_168 = arith.constant dense<0.000000e+00> : vector<4x8xf32>
    %196 = tpu.matmul %195, %194, %cst_168 {dimension_numbers = #tpu.dot_dimension_numbers<[1], [0], [0], [1], [0, 0, 1, 1], [], []>} : vector<4x8xbf16>, vector<8x8xbf16>, vector<4x8xf32> -> vector<4x8xf32>
    %c4 = arith.constant 4 : index
    %c0_169 = arith.constant 0 : index
    %197 = vector.load %arg52[%c4, %c0_169] : memref<8x8xf32, #tpu.memory_space<vmem>>, vector<4x8xf32>
    %c8 = arith.constant 8 : index
    %c0_170 = arith.constant 0 : index
    %198 = vector.load %arg1[%c8, %c0_170] : memref<36x8xbf16, #tpu.memory_space<vmem>>, vector<8x8xbf16>
    %199 = arith.truncf %197 : vector<4x8xf32> to vector<4x8xbf16>
    %cst_171 = arith.constant dense<0.000000e+00> : vector<4x8xf32>
    %200 = tpu.matmul %199, %198, %cst_171 {dimension_numbers = #tpu.dot_dimension_numbers<[1], [0], [0], [1], [0, 0, 1, 1], [], []>} : vector<4x8xbf16>, vector<8x8xbf16>, vector<4x8xf32> -> vector<4x8xf32>
    %201 = arith.addf %196, %200 : vector<4x8xf32>
    %c16 = arith.constant 16 : index
    %c0_172 = arith.constant 0 : index
    %202 = vector.load %arg1[%c16, %c0_172] : memref<36x8xbf16, #tpu.memory_space<vmem>>, vector<10x8xbf16>
    %203 = arith.truncf %189 : vector<4x10xf32> to vector<4x10xbf16>
    %cst_173 = arith.constant dense<0.000000e+00> : vector<4x8xf32>
    %204 = tpu.matmul %203, %202, %cst_173 {dimension_numbers = #tpu.dot_dimension_numbers<[1], [0], [0], [1], [0, 0, 1, 1], [], []>} : vector<4x10xbf16>, vector<10x8xbf16>, vector<4x8xf32> -> vector<4x8xf32>
    %205 = arith.addf %201, %204 : vector<4x8xf32>
    %c26 = arith.constant 26 : index
    %c0_174 = arith.constant 0 : index
    %206 = vector.load %arg1[%c26, %c0_174] : memref<36x8xbf16, #tpu.memory_space<vmem>>, vector<10x8xbf16>
    %207 = arith.truncf %192 : vector<4x10xf32> to vector<4x10xbf16>
    %cst_175 = arith.constant dense<0.000000e+00> : vector<4x8xf32>
    %208 = tpu.matmul %207, %206, %cst_175 {dimension_numbers = #tpu.dot_dimension_numbers<[1], [0], [0], [1], [0, 0, 1, 1], [], []>} : vector<4x10xbf16>, vector<10x8xbf16>, vector<4x8xf32> -> vector<4x8xf32>
    %209 = arith.addf %205, %208 : vector<4x8xf32>
    %c0_176 = arith.constant 0 : index
    %c0_177 = arith.constant 0 : index
    %210 = vector.load %arg0[%c0_176, %c0_177] : memref<1x8xf32, #tpu.memory_space<vmem>>, vector<1x8xf32>
    %211 = vector.broadcast %210 : vector<1x8xf32> to vector<4x8xf32>
    %212 = arith.addf %209, %211 : vector<4x8xf32>
    %cst_178 = arith.constant 0.000000e+00 : f32
    %213 = vector.broadcast %cst_178 : f32 to vector<4x8xf32>
    %214 = arith.maximumf %212, %213 : vector<4x8xf32>
    %c0_179 = arith.constant 0 : index
    %c0_180 = arith.constant 0 : index
    %215 = vector.load %arg3[%c0_179, %c0_180] : memref<8x2xbf16, #tpu.memory_space<vmem>>, vector<8x2xbf16>
    %216 = arith.truncf %214 : vector<4x8xf32> to vector<4x8xbf16>
    %cst_181 = arith.constant dense<0.000000e+00> : vector<4x2xf32>
    %217 = tpu.matmul %216, %215, %cst_181 {dimension_numbers = #tpu.dot_dimension_numbers<[1], [0], [0], [1], [0, 0, 1, 1], [], []>} : vector<4x8xbf16>, vector<8x2xbf16>, vector<4x2xf32> -> vector<4x2xf32>
    %c0_182 = arith.constant 0 : index
    %c0_183 = arith.constant 0 : index
    %218 = vector.load %arg2[%c0_182, %c0_183] : memref<1x2xf32, #tpu.memory_space<vmem>>, vector<1x2xf32>
    %219 = vector.broadcast %218 : vector<1x2xf32> to vector<4x2xf32>
    %220 = arith.addf %217, %219 : vector<4x2xf32>
    %c0_184 = arith.constant 0 : index
    %c0_185 = arith.constant 0 : index
    %221 = vector.load %arg46[%c0_184, %c0_185] : memref<4x2xf32, #tpu.memory_space<vmem>>, vector<4x2xf32>
    tpu.vector_store %arg46[%c0_184, %c0_185], %220 {strides = array<i32>} : memref<4x2xf32, #tpu.memory_space<vmem>>, vector<4x2xf32>,
    return
  }
}

</mosaic_0001>

<llo_original>
// kernel: lugianet_forward.1
$region0: #{lugianet_forward.1}
  #allocation0 [shape = 'u32[]', space=smem, size = 0x4, offset = 0x4, fixed_abs, tag = 'smem constant byte address 0x4 - core index']
  #allocation1 [shape = 'u32[144,128]{1,0:T(1,128)}', space=vmem, size = 0x12000, scoped, tag = 'internal scratch']
  #allocation2 [shape = 'f32[128,28]{1,0:T(8,128)}', space=vmem, size = 0x10000, scoped, tag = 'scratch operand']
  #allocation3 [shape = 'f32[48,640]{1,0:T(8,128)}', space=vmem, size = 0x1e000, scoped, tag = 'scratch operand']
  #allocation4 [shape = 'f32[47,256]{1,0:T(8,128)}', space=vmem, size = 0xc000, scoped, tag = 'scratch operand']
  #allocation5 [shape = 'f32[16,128]{1,0:T(8,128)}', space=vmem, size = 0x2000, scoped, tag = 'scratch operand']
  #allocation6 [shape = 'f32[48,384]{1,0:T(8,128)}', space=vmem, size = 0x12000, scoped, tag = 'scratch operand']
  #allocation7 [shape = 'f32[8,8]{1,0:T(8,128)}', space=vmem, size = 0x1000, scoped, tag = 'scratch operand']
  %s0 = inlined_call_operand.smem [shape: u32[47], index: -1, kind: input, shape index: {}]
  %s1 = sld [smem:[%s0]]
  %s2 = scalar_lea.smem %s0, 1
  %s3 = sld [smem:[%s2]]
  %s4 = scalar_lea.smem %s0, 2
  %s5 = sld [smem:[%s4]]
  %s6 = scalar_lea.smem %s0, 3
  %s7 = sld [smem:[%s6]]
  %s8 = scalar_lea.smem %s0, 4
  %s9 = sld [smem:[%s8]]
  %s10 = scalar_lea.smem %s0, 5
  %s11 = sld [smem:[%s10]]
  %s12 = scalar_lea.smem %s0, 6
  %s13 = sld [smem:[%s12]]
  %s14 = scalar_lea.smem %s0, 7
  %s15 = sld [smem:[%s14]]
  %s16 = scalar_lea.smem %s0, 8
  %s17 = sld [smem:[%s16]]
  %s18 = scalar_lea.smem %s0, 9
  %s19 = sld [smem:[%s18]]
  %s20 = scalar_lea.smem %s0, 10
  %s21 = sld [smem:[%s20]]
  %s22 = scalar_lea.smem %s0, 11
  %s23 = sld [smem:[%s22]]
  %s24 = scalar_lea.smem %s0, 12
  %s25 = sld [smem:[%s24]]
  %s26 = scalar_lea.smem %s0, 13
  %s27 = sld [smem:[%s26]]
  %s28 = scalar_lea.smem %s0, 14
  %s29 = sld [smem:[%s28]]
  %s30 = scalar_lea.smem %s0, 15
  %s31 = sld [smem:[%s30]]
  %s32 = scalar_lea.smem %s0, 16
  %s33 = sld [smem:[%s32]]
  %s34 = scalar_lea.smem %s0, 17
  %s35 = sld [smem:[%s34]]
  %s36 = scalar_lea.smem %s0, 18
  %s37 = sld [smem:[%s36]]
  %s38 = scalar_lea.smem %s0, 19
  %s39 = sld [smem:[%s38]]
  %s40 = scalar_lea.smem %s0, 20
  %s41 = sld [smem:[%s40]]
  %s42 = scalar_lea.smem %s0, 21
  %s43 = sld [smem:[%s42]]
  %s44 = scalar_lea.smem %s0, 22
  %s45 = sld [smem:[%s44]]
  %s46 = scalar_lea.smem %s0, 23
  %s47 = sld [smem:[%s46]]
  %s48 = scalar_lea.smem %s0, 24
  %s49 = sld [smem:[%s48]]
  %s50 = scalar_lea.smem %s0, 25
  %s51 = sld [smem:[%s50]]
  %s52 = scalar_lea.smem %s0, 26
  %s53 = sld [smem:[%s52]]
  %s54 = scalar_lea.smem %s0, 27
  %s55 = sld [smem:[%s54]]
  %s56 = scalar_lea.smem %s0, 28
  %s57 = sld [smem:[%s56]]
  %s58 = scalar_lea.smem %s0, 29
  %s59 = sld [smem:[%s58]]
  %s60 = scalar_lea.smem %s0, 30
  %s61 = sld [smem:[%s60]]
  %s62 = scalar_lea.smem %s0, 31
  %s63 = sld [smem:[%s62]]
  %s64 = scalar_lea.smem %s0, 32
  %s65 = sld [smem:[%s64]]
  %s66 = scalar_lea.smem %s0, 33
  %s67 = sld [smem:[%s66]]
  %s68 = scalar_lea.smem %s0, 34
  %s69 = sld [smem:[%s68]]
  %s70 = scalar_lea.smem %s0, 35
  %s71 = sld [smem:[%s70]]
  %s72 = scalar_lea.smem %s0, 36
  %s73 = sld [smem:[%s72]]
  %s74 = scalar_lea.smem %s0, 37
  %s75 = sld [smem:[%s74]]
  %s76 = scalar_lea.smem %s0, 38
  %s77 = sld [smem:[%s76]]
  %s78 = scalar_lea.smem %s0, 39
  %s79 = sld [smem:[%s78]]
  %s80 = scalar_lea.smem %s0, 40
  %s81 = sld [smem:[%s80]]
  %s82 = scalar_lea.smem %s0, 41
  %s83 = sld [smem:[%s82]]
  %s84 = scalar_lea.smem %s0, 42
  %s85 = sld [smem:[%s84]]
  %s86 = scalar_lea.smem %s0, 43
  %s87 = sld [smem:[%s86]]
  %s88 = scalar_lea.smem %s0, 44
  %s89 = sld [smem:[%s88]]
  %s90 = scalar_lea.smem %s0, 45
  %s91 = sld [smem:[%s90]]
  %s92 = scalar_lea.smem %s0, 46
  %s93 = sld [smem:[%s92]]
  %s94 = sld [smem:[#allocation0]]
  $region318: #{lugianet_forward.1} parent=0
    _
  %s96 = ssub.s32 1, %s94
  %s97 = scalar_select 0, %s96, %s94
  $region1: #{lugianet_forward.1} parent=0
    #allocation8 [shape = 'u8[512]{0}', space=vmem, size = 0x400, scoped, tag = 'input window, operand 0, single buffered']
    #allocation9 [shape = 's32[1]{0}', space=sflag, size = 0x4, scoped, tag = 'scoped memory for lugianet_forward.1']
    #allocation10 [shape = 'u8[512]{0}', space=vmem, size = 0x400, scoped, tag = 'input window, operand 2, single buffered']
    #allocation11 [shape = 's32[1]{0}', space=sflag, size = 0x4, scoped, tag = 'scoped memory for lugianet_forward.1']
    #allocation12 [shape = 'u8[1024]{0}', space=vmem, size = 0x400, scoped, tag = 'input window, operand 5, single buffered']
    #allocation13 [shape = 'u8[12288]{0}', space=vmem, size = 0x3000, scoped, tag = 'input window, operand 7, single buffered']
    #allocation14 [shape = 's32[1]{0}', space=sflag, size = 0x4, scoped, tag = 'scoped memory for lugianet_forward.1']
    #allocation15 [shape = 'u8[12288]{0}', space=vmem, size = 0x3000, scoped, tag = 'input window, operand 8, single buffered']
    #allocation16 [shape = 'u8[122880]{0}', space=vmem, size = 0x1e000, scoped, tag = 'input window, operand 9, single buffered']
    #allocation17 [shape = 's32[1]{0}', space=sflag, size = 0x4, scoped, tag = 'scoped memory for lugianet_forward.1']
    #allocation18 [shape = 'u8[1024]{0}', space=vmem, size = 0x400, scoped, tag = 'input window, operand 10, single buffered']
    #allocation19 [shape = 'u8[512]{0}', space=vmem, size = 0x400, scoped, tag = 'input window, operand 12, single buffered']
    #allocation20 [shape = 's32[1]{0}', space=sflag, size = 0x4, scoped, tag = 'scoped memory for lugianet_forward.1']
    #allocation21 [shape = 'u8[4096]{0}', space=vmem, size = 0x1000, scoped, tag = 'input window, operand 13, single buffered']
    #allocation22 [shape = 'u8[4096]{0}', space=vmem, size = 0x1000, scoped, tag = 'input window, operand 14, single buffered']
    #allocation23 [shape = 's32[1]{0}', space=sflag, size = 0x4, scoped, tag = 'scoped memory for lugianet_forward.1']
    #allocation24 [shape = 'u8[262144]{0}', space=vmem, size = 0x40000, scoped, tag = 'input window, operand 15, single buffered']
    #allocation25 [shape = 'u8[512]{0}', space=vmem, size = 0x400, scoped, tag = 'input window, operand 16, single buffered']
    #allocation26 [shape = 's32[1]{0}', space=sflag, size = 0x4, scoped, tag = 'scoped memory for lugianet_forward.1']
    #allocation27 [shape = 'u8[65536]{0}', space=vmem, size = 0x10000, scoped, tag = 'input window, operand 17, single buffered']
    #allocation28 [shape = 'u8[512]{0}', space=vmem, size = 0x400, scoped, tag = 'input window, operand 18, single buffered']
    #allocation29 [shape = 's32[1]{0}', space=sflag, size = 0x4, scoped, tag = 'scoped memory for lugianet_forward.1']
    #allocation30 [shape = 'u8[32768]{0}', space=vmem, size = 0x8000, scoped, tag = 'input window, operand 19, single buffered']
    #allocation31 [shape = 'u8[512]{0}', space=vmem, size = 0x400, scoped, tag = 'input window, operand 20, single buffered']
    #allocation32 [shape = 's32[1]{0}', space=sflag, size = 0x4, scoped, tag = 'scoped memory for lugianet_forward.1']
    #allocation33 [shape = 'u8[512]{0}', space=vmem, size = 0x400, scoped, tag = 'input window, operand 22, single buffered']
    #allocation34 [shape = 'u8[2048]{0}', space=vmem, size = 0x800, scoped, tag = 'input window, operand 24, single buffered']
    #allocation35 [shape = 's32[1]{0}', space=sflag, size = 0x4, scoped, tag = 'scoped memory for lugianet_forward.1']
    #allocation36 [shape = 'u8[1536]{0}', space=vmem, size = 0x800, scoped, tag = 'input window, operand 25, single buffered']
    #allocation37 [shape = 'u8[12288]{0}', space=vmem, size = 0x3000, scoped, tag = 'input window, operand 26, single buffered']
    #allocation38 [shape = 's32[1]{0}', space=sflag, size = 0x4, scoped, tag = 'scoped memory for lugianet_forward.1']
    #allocation39 [shape = 'u8[12288]{0}', space=vmem, size = 0x3000, scoped, tag = 'input window, operand 27, single buffered']
    #allocation40 [shape = 'u8[135168]{0}', space=vmem, size = 0x21000, scoped, tag = 'input window, operand 28, single buffered']
    #allocation41 [shape = 's32[1]{0}', space=sflag, size = 0x4, scoped, tag = 'scoped memory for lugianet_forward.1']
    #allocation42 [shape = 'u8[512]{0}', space=vmem, size = 0x400, scoped, tag = 'input window, operand 29, single buffered']
    #allocation43 [shape = 'u8[4096]{0}', space=vmem, size = 0x1000, scoped, tag = 'input window, operand 30, single buffered']
    #allocation44 [shape = 's32[1]{0}', space=sflag, size = 0x4, scoped, tag = 'scoped memory for lugianet_forward.1']
    #allocation45 [shape = 'u8[4096]{0}', space=vmem, size = 0x1000, scoped, tag = 'input window, operand 31, single buffered']
    #allocation46 [shape = 'u8[2048]{0}', space=vmem, size = 0x800, scoped, tag = 'input window, operand 33, single buffered']
    #allocation47 [shape = 's32[1]{0}', space=sflag, size = 0x4, scoped, tag = 'scoped memory for lugianet_forward.1']
    #allocation48 [shape = 'u8[2048]{0}', space=vmem, size = 0x800, scoped, tag = 'input window, operand 34, single buffered']
    #allocation49 [shape = 'u8[512]{0}', space=vmem, size = 0x400, scoped, tag = 'input window, operand 35, single buffered']
    #allocation50 [shape = 's32[1]{0}', space=sflag, size = 0x4, scoped, tag = 'scoped memory for lugianet_forward.1']
    #allocation51 [shape = 'u8[512]{0}', space=vmem, size = 0x400, scoped, tag = 'input window, operand 37, single buffered']
    #allocation52 [shape = 'u8[512]{0}', space=vmem, size = 0x400, scoped, tag = 'input window, operand 39, single buffered']
    #allocation53 [shape = 's32[1]{0}', space=sflag, size = 0x4, scoped, tag = 'scoped memory for lugianet_forward.1']
    #allocation54 [shape = 'u8[512]{0}', space=vmem, size = 0x400, scoped, tag = 'input window, operand 40, single buffered']
    %98 = vsyncpa [#allocation9], 0
    %99 = vsyncpa [#allocation11], 0
    %100 = vsyncpa [#allocation14], 0
    %101 = vsyncpa [#allocation17], 0
    %102 = vsyncpa [#allocation20], 0
    %103 = vsyncpa [#allocation23], 0
    %104 = vsyncpa [#allocation26], 0
    %105 = vsyncpa [#allocation29], 0
    %106 = vsyncpa [#allocation32], 0
    %107 = vsyncpa [#allocation35], 0
    %108 = vsyncpa [#allocation38], 0
    %109 = vsyncpa [#allocation41], 0
    %110 = vsyncpa [#allocation44], 0
    %111 = vsyncpa [#allocation47], 0
    %112 = vsyncpa [#allocation50], 0
    %113 = vsyncpa [#allocation53], 0
    // Predicated region
    $region2: #{lugianet_forward.1} parent=1 // pred_check
      _
    $region3: #{lugianet_forward.1} parent=1 // pred_check_branch
      %115 = sbr.rel (0) target = $region5
    $region4: #{lugianet_forward.1} parent=1 // pred_region
      %s117 = ssub.s32 16, 16
      %118 = vsyncadd [#allocation9], %s117
      %s120 = sshll.u32 [#allocation8], 4
      %s121 = int_to_ptr.vmem [resolvable:$true] %s120
      %123 = dma.hbm_to_vmem [thread:$0]  %s1, 16, %s121, [#allocation9]
    $region5: #{lugianet_forward.1} parent=1 // pred_fallthru
      _
    // Predicated region
    $region6: #{lugianet_forward.1} parent=1 // pred_check
      _
    $region7: #{lugianet_forward.1} parent=1 // pred_check_branch
      %125 = sbr.rel (0) target = $region9
    $region8: #{lugianet_forward.1} parent=1 // pred_region
      _
    $region9: #{lugianet_forward.1} parent=1 // pred_fallthru
      _
    // Predicated region
    $region10: #{lugianet_forward.1} parent=1 // pred_check
      _
    $region11: #{lugianet_forward.1} parent=1 // pred_check_branch
      %127 = sbr.rel (0) target = $region13
    $region12: #{lugianet_forward.1} parent=1 // pred_region
      %s129 = ssub.s32 16, 16
      %130 = vsyncadd [#allocation11], %s129
      %s132 = sshll.u32 [#allocation10], 4
      %s133 = int_to_ptr.vmem [resolvable:$true] %s132
      %135 = dma.hbm_to_vmem [thread:$0]  %s5, 16, %s133, [#allocation11]
    $region13: #{lugianet_forward.1} parent=1 // pred_fallthru
      _
    // Predicated region
    $region14: #{lugianet_forward.1} parent=1 // pred_check
      _
    $region15: #{lugianet_forward.1} parent=1 // pred_check_branch
      %137 = sbr.rel (0) target = $region17
    $region16: #{lugianet_forward.1} parent=1 // pred_region
      _
    $region17: #{lugianet_forward.1} parent=1 // pred_fallthru
      _
    // Predicated region
    $region18: #{lugianet_forward.1} parent=1 // pred_check
      _
    $region19: #{lugianet_forward.1} parent=1 // pred_check_branch
      %139 = sbr.rel (0) target = $region21
    $region20: #{lugianet_forward.1} parent=1 // pred_region
      _
    $region21: #{lugianet_forward.1} parent=1 // pred_fallthru
      _
    // Predicated region
    $region22: #{lugianet_forward.1} parent=1 // pred_check
      _
    $region23: #{lugianet_forward.1} parent=1 // pred_check_branch
      %141 = sbr.rel (0) target = $region25
    $region24: #{lugianet_forward.1} parent=1 // pred_region
      %s143 = ssub.s32 32, 32
      %144 = vsyncadd [#allocation11], %s143
      %s146 = sshll.u32 [#allocation12], 4
      %s147 = int_to_ptr.vmem [resolvable:$true] %s146
      %149 = dma.hbm_to_vmem [thread:$0]  %s11, 32, %s147, [#allocation11]
    $region25: #{lugianet_forward.1} parent=1 // pred_fallthru
      _
    // Predicated region
    $region26: #{lugianet_forward.1} parent=1 // pred_check
      _
    $region27: #{lugianet_forward.1} parent=1 // pred_check_branch
      %151 = sbr.rel (0) target = $region29
    $region28: #{lugianet_forward.1} parent=1 // pred_region
      _
    $region29: #{lugianet_forward.1} parent=1 // pred_fallthru
      _
    // Predicated region
    $region30: #{lugianet_forward.1} parent=1 // pred_check
      _
    $region31: #{lugianet_forward.1} parent=1 // pred_check_branch
      %153 = sbr.rel (0) target = $region33
    $region32: #{lugianet_forward.1} parent=1 // pred_region
      %s155 = ssub.s32 384, 384
      %156 = vsyncadd [#allocation14], %s155
      %s157 = sshll.u32 [#allocation13], 4
      %s158 = int_to_ptr.vmem [resolvable:$true] %s157
      %163 = dma.hbm_to_vmem [thread:$0]  %s15, 384, %s158, [#allocation14], 64, 64, 4
    $region33: #{lugianet_forward.1} parent=1 // pred_fallthru
      _
    // Predicated region
    $region34: #{lugianet_forward.1} parent=1 // pred_check
      _
    $region35: #{lugianet_forward.1} parent=1 // pred_check_branch
      %165 = sbr.rel (0) target = $region37
    $region36: #{lugianet_forward.1} parent=1 // pred_region
      %s167 = ssub.s32 384, 384
      %168 = vsyncadd [#allocation14], %s167
      %s169 = sshll.u32 [#allocation15], 4
      %s170 = int_to_ptr.vmem [resolvable:$true] %s169
      %175 = dma.hbm_to_vmem [thread:$0]  %s17, 384, %s170, [#allocation14], 64, 64, 4
    $region37: #{lugianet_forward.1} parent=1 // pred_fallthru
      _
    // Predicated region
    $region38: #{lugianet_forward.1} parent=1 // pred_check
      _
    $region39: #{lugianet_forward.1} parent=1 // pred_check_branch
      %177 = sbr.rel (0) target = $region41
    $region40: #{lugianet_forward.1} parent=1 // pred_region
      %s179 = ssub.s32 3840, 3840
      %180 = vsyncadd [#allocation17], %s179
      %s181 = sshll.u32 [#allocation16], 4
      %s182 = int_to_ptr.vmem [resolvable:$true] %s181
      %187 = dma.hbm_to_vmem [thread:$0]  %s19, 3840, %s182, [#allocation17], 640, 640, 40
    $region41: #{lugianet_forward.1} parent=1 // pred_fallthru
      _
    // Predicated region
    $region42: #{lugianet_forward.1} parent=1 // pred_check
      _
    $region43: #{lugianet_forward.1} parent=1 // pred_check_branch
      %189 = sbr.rel (0) target = $region45
    $region44: #{lugianet_forward.1} parent=1 // pred_region
      %s191 = ssub.s32 32, 32
      %192 = vsyncadd [#allocation17], %s191
      %s194 = sshll.u32 [#allocation18], 4
      %s195 = int_to_ptr.vmem [resolvable:$true] %s194
      %197 = dma.hbm_to_vmem [thread:$0]  %s21, 32, %s195, [#allocation17]
    $region45: #{lugianet_forward.1} parent=1 // pred_fallthru
      _
    // Predicated region
    $region46: #{lugianet_forward.1} parent=1 // pred_check
      _
    $region47: #{lugianet_forward.1} parent=1 // pred_check_branch
      %199 = sbr.rel (0) target = $region49
    $region48: #{lugianet_forward.1} parent=1 // pred_region
      _
    $region49: #{lugianet_forward.1} parent=1 // pred_fallthru
      _
    // Predicated region
    $region50: #{lugianet_forward.1} parent=1 // pred_check
      _
    $region51: #{lugianet_forward.1} parent=1 // pred_check_branch
      %201 = sbr.rel (0) target = $region53
    $region52: #{lugianet_forward.1} parent=1 // pred_region
      %s203 = ssub.s32 16, 16
      %204 = vsyncadd [#allocation20], %s203
      %s206 = sshll.u32 [#allocation19], 4
      %s207 = int_to_ptr.vmem [resolvable:$true] %s206
      %209 = dma.hbm_to_vmem [thread:$0]  %s25, 16, %s207, [#allocation20]
    $region53: #{lugianet_forward.1} parent=1 // pred_fallthru
      _
    // Predicated region
    $region54: #{lugianet_forward.1} parent=1 // pred_check
      _
    $region55: #{lugianet_forward.1} parent=1 // pred_check_branch
      %211 = sbr.rel (0) target = $region57
    $region56: #{lugianet_forward.1} parent=1 // pred_region
      %s213 = ssub.s32 128, 128
      %214 = vsyncadd [#allocation20], %s213
      %s215 = sshll.u32 [#allocation21], 4
      %s216 = int_to_ptr.vmem [resolvable:$true] %s215
      %221 = dma.hbm_to_vmem [thread:$0]  %s27, 128, %s216, [#allocation20], 64, 64, 4
    $region57: #{lugianet_forward.1} parent=1 // pred_fallthru
      _
    // Predicated region
    $region58: #{lugianet_forward.1} parent=1 // pred_check
      _
    $region59: #{lugianet_forward.1} parent=1 // pred_check_branch
      %223 = sbr.rel (0) target = $region61
    $region60: #{lugianet_forward.1} parent=1 // pred_region
      %s225 = ssub.s32 128, 128
      %226 = vsyncadd [#allocation23], %s225
      %s227 = sshll.u32 [#allocation22], 4
      %s228 = int_to_ptr.vmem [resolvable:$true] %s227
      %233 = dma.hbm_to_vmem [thread:$0]  %s29, 128, %s228, [#allocation23], 64, 64, 4
    $region61: #{lugianet_forward.1} parent=1 // pred_fallthru
      _
    // Predicated region
    $region62: #{lugianet_forward.1} parent=1 // pred_check
      _
    $region63: #{lugianet_forward.1} parent=1 // pred_check_branch
      %235 = sbr.rel (0) target = $region65
    $region64: #{lugianet_forward.1} parent=1 // pred_region
      %s237 = ssub.s32 8192, 8192
      %238 = vsyncadd [#allocation23], %s237
      %s239 = sshll.u32 [#allocation24], 4
      %s240 = int_to_ptr.vmem [resolvable:$true] %s239
      %245 = dma.hbm_to_vmem [thread:$0]  %s31, 8192, %s240, [#allocation23], 128, 128, 8
    $region65: #{lugianet_forward.1} parent=1 // pred_fallthru
      _
    // Predicated region
    $region66: #{lugianet_forward.1} parent=1 // pred_check
      _
    $region67: #{lugianet_forward.1} parent=1 // pred_check_branch
      %247 = sbr.rel (0) target = $region69
    $region68: #{lugianet_forward.1} parent=1 // pred_region
      %s249 = ssub.s32 16, 16
      %250 = vsyncadd [#allocation26], %s249
      %s252 = sshll.u32 [#allocation25], 4
      %s253 = int_to_ptr.vmem [resolvable:$true] %s252
      %255 = dma.hbm_to_vmem [thread:$0]  %s33, 16, %s253, [#allocation26]
    $region69: #{lugianet_forward.1} parent=1 // pred_fallthru
      _
    // Predicated region
    $region70: #{lugianet_forward.1} parent=1 // pred_check
      _
    $region71: #{lugianet_forward.1} parent=1 // pred_check_branch
      %257 = sbr.rel (0) target = $region73
    $region72: #{lugianet_forward.1} parent=1 // pred_region
      %s259 = ssub.s32 2048, 2048
      %260 = vsyncadd [#allocation26], %s259
      %s261 = sshll.u32 [#allocation27], 4
      %s262 = int_to_ptr.vmem [resolvable:$true] %s261
      %267 = dma.hbm_to_vmem [thread:$0]  %s35, 2048, %s262, [#allocation26], 64, 64, 4
    $region73: #{lugianet_forward.1} parent=1 // pred_fallthru
      _
    // Predicated region
    $region74: #{lugianet_forward.1} parent=1 // pred_check
      _
    $region75: #{lugianet_forward.1} parent=1 // pred_check_branch
      %269 = sbr.rel (0) target = $region77
    $region76: #{lugianet_forward.1} parent=1 // pred_region
      %s271 = ssub.s32 16, 16
      %272 = vsyncadd [#allocation29], %s271
      %s274 = sshll.u32 [#allocation28], 4
      %s275 = int_to_ptr.vmem [resolvable:$true] %s274
      %277 = dma.hbm_to_vmem [thread:$0]  %s37, 16, %s275, [#allocation29]
    $region77: #{lugianet_forward.1} parent=1 // pred_fallthru
      _
    // Predicated region
    $region78: #{lugianet_forward.1} parent=1 // pred_check
      _
    $region79: #{lugianet_forward.1} parent=1 // pred_check_branch
      %279 = sbr.rel (0) target = $region81
    $region80: #{lugianet_forward.1} parent=1 // pred_region
      %s281 = ssub.s32 1024, 1024
      %282 = vsyncadd [#allocation29], %s281
      %s283 = sshll.u32 [#allocation30], 4
      %s284 = int_to_ptr.vmem [resolvable:$true] %s283
      %289 = dma.hbm_to_vmem [thread:$0]  %s39, 1024, %s284, [#allocation29], 64, 64, 4
    $region81: #{lugianet_forward.1} parent=1 // pred_fallthru
      _
    // Predicated region
    $region82: #{lugianet_forward.1} parent=1 // pred_check
      _
    $region83: #{lugianet_forward.1} parent=1 // pred_check_branch
      %291 = sbr.rel (0) target = $region85
    $region84: #{lugianet_forward.1} parent=1 // pred_region
      %s293 = ssub.s32 16, 16
      %294 = vsyncadd [#allocation32], %s293
      %s296 = sshll.u32 [#allocation31], 4
      %s297 = int_to_ptr.vmem [resolvable:$true] %s296
      %299 = dma.hbm_to_vmem [thread:$0]  %s41, 16, %s297, [#allocation32]
    $region85: #{lugianet_forward.1} parent=1 // pred_fallthru
      _
    // Predicated region
    $region86: #{lugianet_forward.1} parent=1 // pred_check
      _
    $region87: #{lugianet_forward.1} parent=1 // pred_check_branch
      %301 = sbr.rel (0) target = $region89
    $region88: #{lugianet_forward.1} parent=1 // pred_region
      _
    $region89: #{lugianet_forward.1} parent=1 // pred_fallthru
      _
    // Predicated region
    $region90: #{lugianet_forward.1} parent=1 // pred_check
      _
    $region91: #{lugianet_forward.1} parent=1 // pred_check_branch
      %303 = sbr.rel (0) target = $region93
    $region92: #{lugianet_forward.1} parent=1 // pred_region
      %s305 = ssub.s32 16, 16
      %306 = vsyncadd [#allocation32], %s305
      %s308 = sshll.u32 [#allocation33], 4
      %s309 = int_to_ptr.vmem [resolvable:$true] %s308
      %311 = dma.hbm_to_vmem [thread:$0]  %s45, 16, %s309, [#allocation32]
    $region93: #{lugianet_forward.1} parent=1 // pred_fallthru
      _
    // Predicated region
    $region94: #{lugianet_forward.1} parent=1 // pred_check
      _
    $region95: #{lugianet_forward.1} parent=1 // pred_check_branch
      %313 = sbr.rel (0) target = $region97
    $region96: #{lugianet_forward.1} parent=1 // pred_region
      _
    $region97: #{lugianet_forward.1} parent=1 // pred_fallthru
      _
    // Predicated region
    $region98: #{lugianet_forward.1} parent=1 // pred_check
      _
    $region99: #{lugianet_forward.1} parent=1 // pred_check_branch
      %315 = sbr.rel (0) target = $region101
    $region100: #{lugianet_forward.1} parent=1 // pred_region
      %s317 = ssub.s32 64, 64
      %318 = vsyncadd [#allocation35], %s317
      %s320 = sshll.u32 [#allocation34], 4
      %s321 = int_to_ptr.vmem [resolvable:$true] %s320
      %323 = dma.hbm_to_vmem [thread:$0]  %s49, 64, %s321, [#allocation35]
    $region101: #{lugianet_forward.1} parent=1 // pred_fallthru
      _
    // Predicated region
    $region102: #{lugianet_forward.1} parent=1 // pred_check
      _
    $region103: #{lugianet_forward.1} parent=1 // pred_check_branch
      %325 = sbr.rel (0) target = $region105
    $region104: #{lugianet_forward.1} parent=1 // pred_region
      %s327 = ssub.s32 48, 48
      %328 = vsyncadd [#allocation35], %s327
      %s330 = sshll.u32 [#allocation36], 4
      %s331 = int_to_ptr.vmem [resolvable:$true] %s330
      %333 = dma.hbm_to_vmem [thread:$0]  %s51, 48, %s331, [#allocation35]
    $region105: #{lugianet_forward.1} parent=1 // pred_fallthru
      _
    // Predicated region
    $region106: #{lugianet_forward.1} parent=1 // pred_check
      _
    $region107: #{lugianet_forward.1} parent=1 // pred_check_branch
      %335 = sbr.rel (0) target = $region109
    $region108: #{lugianet_forward.1} parent=1 // pred_region
      %s337 = ssub.s32 384, 384
      %338 = vsyncadd [#allocation38], %s337
      %s339 = sshll.u32 [#allocation37], 4
      %s340 = int_to_ptr.vmem [resolvable:$true] %s339
      %345 = dma.hbm_to_vmem [thread:$0]  %s53, 384, %s340, [#allocation38], 64, 64, 4
    $region109: #{lugianet_forward.1} parent=1 // pred_fallthru
      _
    // Predicated region
    $region110: #{lugianet_forward.1} parent=1 // pred_check
      _
    $region111: #{lugianet_forward.1} parent=1 // pred_check_branch
      %347 = sbr.rel (0) target = $region113
    $region112: #{lugianet_forward.1} parent=1 // pred_region
      %s349 = ssub.s32 384, 384
      %350 = vsyncadd [#allocation38], %s349
      %s351 = sshll.u32 [#allocation39], 4
      %s352 = int_to_ptr.vmem [resolvable:$true] %s351
      %357 = dma.hbm_to_vmem [thread:$0]  %s55, 384, %s352, [#allocation38], 64, 64, 4
    $region113: #{lugianet_forward.1} parent=1 // pred_fallthru
      _
    // Predicated region
    $region114: #{lugianet_forward.1} parent=1 // pred_check
      _
    $region115: #{lugianet_forward.1} parent=1 // pred_check_branch
      %359 = sbr.rel (0) target = $region117
    $region116: #{lugianet_forward.1} parent=1 // pred_region
      %s361 = ssub.s32 4224, 4224
      %362 = vsyncadd [#allocation41], %s361
      %s363 = sshll.u32 [#allocation40], 4
      %s364 = int_to_ptr.vmem [resolvable:$true] %s363
      %369 = dma.hbm_to_vmem [thread:$0]  %s57, 4224, %s364, [#allocation41], 384, 384, 24
    $region117: #{lugianet_forward.1} parent=1 // pred_fallthru
      _
    // Predicated region
    $region118: #{lugianet_forward.1} parent=1 // pred_check
      _
    $region119: #{lugianet_forward.1} parent=1 // pred_check_branch
      %371 = sbr.rel (0) target = $region121
    $region120: #{lugianet_forward.1} parent=1 // pred_region
      %s373 = ssub.s32 16, 16
      %374 = vsyncadd [#allocation41], %s373
      %s376 = sshll.u32 [#allocation42], 4
      %s377 = int_to_ptr.vmem [resolvable:$true] %s376
      %379 = dma.hbm_to_vmem [thread:$0]  %s59, 16, %s377, [#allocation41]
    $region121: #{lugianet_forward.1} parent=1 // pred_fallthru
      _
    // Predicated region
    $region122: #{lugianet_forward.1} parent=1 // pred_check
      _
    $region123: #{lugianet_forward.1} parent=1 // pred_check_branch
      %381 = sbr.rel (0) target = $region125
    $region124: #{lugianet_forward.1} parent=1 // pred_region
      %s383 = ssub.s32 128, 128
      %384 = vsyncadd [#allocation44], %s383
      %s385 = sshll.u32 [#allocation43], 4
      %s386 = int_to_ptr.vmem [resolvable:$true] %s385
      %391 = dma.hbm_to_vmem [thread:$0]  %s61, 128, %s386, [#allocation44], 64, 64, 4
    $region125: #{lugianet_forward.1} parent=1 // pred_fallthru
      _
    // Predicated region
    $region126: #{lugianet_forward.1} parent=1 // pred_check
      _
    $region127: #{lugianet_forward.1} parent=1 // pred_check_branch
      %393 = sbr.rel (0) target = $region129
    $region128: #{lugianet_forward.1} parent=1 // pred_region
      %s395 = ssub.s32 128, 128
      %396 = vsyncadd [#allocation44], %s395
      %s397 = sshll.u32 [#allocation45], 4
      %s398 = int_to_ptr.vmem [resolvable:$true] %s397
      %403 = dma.hbm_to_vmem [thread:$0]  %s63, 128, %s398, [#allocation44], 64, 64, 4
    $region129: #{lugianet_forward.1} parent=1 // pred_fallthru
      _
    // Predicated region
    $region130: #{lugianet_forward.1} parent=1 // pred_check
      _
    $region131: #{lugianet_forward.1} parent=1 // pred_check_branch
      %405 = sbr.rel (0) target = $region133
    $region132: #{lugianet_forward.1} parent=1 // pred_region
      _
    $region133: #{lugianet_forward.1} parent=1 // pred_fallthru
      _
    // Predicated region
    $region134: #{lugianet_forward.1} parent=1 // pred_check
      _
    $region135: #{lugianet_forward.1} parent=1 // pred_check_branch
      %407 = sbr.rel (0) target = $region137
    $region136: #{lugianet_forward.1} parent=1 // pred_region
      %s409 = ssub.s32 64, 64
      %410 = vsyncadd [#allocation47], %s409
      %s412 = sshll.u32 [#allocation46], 4
      %s413 = int_to_ptr.vmem [resolvable:$true] %s412
      %415 = dma.hbm_to_vmem [thread:$0]  %s67, 64, %s413, [#allocation47]
    $region137: #{lugianet_forward.1} parent=1 // pred_fallthru
      _
    // Predicated region
    $region138: #{lugianet_forward.1} parent=1 // pred_check
      _
    $region139: #{lugianet_forward.1} parent=1 // pred_check_branch
      %417 = sbr.rel (0) target = $region141
    $region140: #{lugianet_forward.1} parent=1 // pred_region
      %s419 = ssub.s32 64, 64
      %420 = vsyncadd [#allocation47], %s419
      %s422 = sshll.u32 [#allocation48], 4
      %s423 = int_to_ptr.vmem [resolvable:$true] %s422
      %425 = dma.hbm_to_vmem [thread:$0]  %s69, 64, %s423, [#allocation47]
    $region141: #{lugianet_forward.1} parent=1 // pred_fallthru
      _
    // Predicated region
    $region142: #{lugianet_forward.1} parent=1 // pred_check
      _
    $region143: #{lugianet_forward.1} parent=1 // pred_check_branch
      %427 = sbr.rel (0) target = $region145
    $region144: #{lugianet_forward.1} parent=1 // pred_region
      %s429 = ssub.s32 16, 16
      %430 = vsyncadd [#allocation50], %s429
      %s432 = sshll.u32 [#allocation49], 4
      %s433 = int_to_ptr.vmem [resolvable:$true] %s432
      %435 = dma.hbm_to_vmem [thread:$0]  %s71, 16, %s433, [#allocation50]
    $region145: #{lugianet_forward.1} parent=1 // pred_fallthru
      _
    // Predicated region
    $region146: #{lugianet_forward.1} parent=1 // pred_check
      _
    $region147: #{lugianet_forward.1} parent=1 // pred_check_branch
      %437 = sbr.rel (0) target = $region149
    $region148: #{lugianet_forward.1} parent=1 // pred_region
      _
    $region149: #{lugianet_forward.1} parent=1 // pred_fallthru
      _
    // Predicated region
    $region150: #{lugianet_forward.1} parent=1 // pred_check
      _
    $region151: #{lugianet_forward.1} parent=1 // pred_check_branch
      %439 = sbr.rel (0) target = $region153
    $region152: #{lugianet_forward.1} parent=1 // pred_region
      %s441 = ssub.s32 16, 16
      %442 = vsyncadd [#allocation50], %s441
      %s444 = sshll.u32 [#allocation51], 4
      %s445 = int_to_ptr.vmem [resolvable:$true] %s444
      %447 = dma.hbm_to_vmem [thread:$0]  %s75, 16, %s445, [#allocation50]
    $region153: #{lugianet_forward.1} parent=1 // pred_fallthru
      _
    // Predicated region
    $region154: #{lugianet_forward.1} parent=1 // pred_check
      _
    $region155: #{lugianet_forward.1} parent=1 // pred_check_branch
      %449 = sbr.rel (0) target = $region157
    $region156: #{lugianet_forward.1} parent=1 // pred_region
      _
    $region157: #{lugianet_forward.1} parent=1 // pred_fallthru
      _
    // Predicated region
    $region158: #{lugianet_forward.1} parent=1 // pred_check
      _
    $region159: #{lugianet_forward.1} parent=1 // pred_check_branch
      %451 = sbr.rel (0) target = $region161
    $region160: #{lugianet_forward.1} parent=1 // pred_region
      %s453 = ssub.s32 16, 16
      %454 = vsyncadd [#allocation53], %s453
      %s456 = sshll.u32 [#allocation52], 4
      %s457 = int_to_ptr.vmem [resolvable:$true] %s456
      %459 = dma.hbm_to_vmem [thread:$0]  %s79, 16, %s457, [#allocation53]
    $region161: #{lugianet_forward.1} parent=1 // pred_fallthru
      _
    // Predicated region
    $region162: #{lugianet_forward.1} parent=1 // pred_check
      _
    $region163: #{lugianet_forward.1} parent=1 // pred_check_branch
      %461 = sbr.rel (0) target = $region165
    $region164: #{lugianet_forward.1} parent=1 // pred_region
      %s463 = ssub.s32 16, 16
      %464 = vsyncadd [#allocation53], %s463
      %s466 = sshll.u32 [#allocation54], 4
      %s467 = int_to_ptr.vmem [resolvable:$true] %s466
      %469 = dma.hbm_to_vmem [thread:$0]  %s81, 16, %s467, [#allocation53]
    $region165: #{lugianet_forward.1} parent=1 // pred_fallthru
      _
    // Predicated region
    $region166: #{lugianet_forward.1} parent=1 // pred_check
      _
    $region167: #{lugianet_forward.1} parent=1 // pred_check_branch
      %471 = sbr.rel (0) target = $region169
    $region168: #{lugianet_forward.1} parent=1 // pred_region
      _
    $region169: #{lugianet_forward.1} parent=1 // pred_fallthru
      _
    // Predicated region
    $region170: #{lugianet_forward.1} parent=1 // pred_check
      _
    $region171: #{lugianet_forward.1} parent=1 // pred_check_branch
      %473 = sbr.rel (0) target = $region173
    $region172: #{lugianet_forward.1} parent=1 // pred_region
      _
    $region173: #{lugianet_forward.1} parent=1 // pred_fallthru
      _
    // Predicated region
    $region174: #{lugianet_forward.1} parent=1 // pred_check
      _
    $region175: #{lugianet_forward.1} parent=1 // pred_check_branch
      %475 = sbr.rel (0) target = $region177
    $region176: #{lugianet_forward.1} parent=1 // pred_region
      _
    $region177: #{lugianet_forward.1} parent=1 // pred_fallthru
      _
    // Predicated region
    $region178: #{lugianet_forward.1} parent=1 // pred_check
      _
    $region179: #{lugianet_forward.1} parent=1 // pred_check_branch
      %477 = sbr.rel (0) target = $region181
    $region180: #{lugianet_forward.1} parent=1 // pred_region
      _
    $region181: #{lugianet_forward.1} parent=1 // pred_fallthru
      _
    // Predicated region
    $region182: #{lugianet_forward.1} parent=1 // pred_check
      _
    $region183: #{lugianet_forward.1} parent=1 // pred_check_branch
      %479 = sbr.rel (0) target = $region185
    $region184: #{lugianet_forward.1} parent=1 // pred_region
      _
    $region185: #{lugianet_forward.1} parent=1 // pred_fallthru
      _
    // Predicated region
    $region186: #{lugianet_forward.1} parent=1 // pred_check
      _
    $region187: #{lugianet_forward.1} parent=1 // pred_check_branch
      %481 = sbr.rel (0) target = $region189
    $region188: #{lugianet_forward.1} parent=1 // pred_region
      %482 = dma.done [#allocation9], 16
    $region189: #{lugianet_forward.1} parent=1 // pred_fallthru
      _
    // Predicated region
    $region190: #{lugianet_forward.1} parent=1 // pred_check
      _
    $region191: #{lugianet_forward.1} parent=1 // pred_check_branch
      %484 = sbr.rel (0) target = $region193
    $region192: #{lugianet_forward.1} parent=1 // pred_region
      %485 = dma.done [#allocation11], 16
    $region193: #{lugianet_forward.1} parent=1 // pred_fallthru
      _
    // Predicated region
    $region194: #{lugianet_forward.1} parent=1 // pred_check
      _
    $region195: #{lugianet_forward.1} parent=1 // pred_check_branch
      %487 = sbr.rel (0) target = $region197
    $region196: #{lugianet_forward.1} parent=1 // pred_region
      %488 = dma.done [#allocation11], 32
    $region197: #{lugianet_forward.1} parent=1 // pred_fallthru
      _
    // Predicated region
    $region198: #{lugianet_forward.1} parent=1 // pred_check
      _
    $region199: #{lugianet_forward.1} parent=1 // pred_check_branch
      %490 = sbr.rel (0) target = $region201
    $region200: #{lugianet_forward.1} parent=1 // pred_region
      %491 = dma.done [#allocation14], 384
    $region201: #{lugianet_forward.1} parent=1 // pred_fallthru
      _
    // Predicated region
    $region202: #{lugianet_forward.1} parent=1 // pred_check
      _
    $region203: #{lugianet_forward.1} parent=1 // pred_check_branch
      %493 = sbr.rel (0) target = $region205
    $region204: #{lugianet_forward.1} parent=1 // pred_region
      %494 = dma.done [#allocation14], 384
    $region205: #{lugianet_forward.1} parent=1 // pred_fallthru
      _
    // Predicated region
    $region206: #{lugianet_forward.1} parent=1 // pred_check
      _
    $region207: #{lugianet_forward.1} parent=1 // pred_check_branch
      %496 = sbr.rel (0) target = $region209
    $region208: #{lugianet_forward.1} parent=1 // pred_region
      %497 = dma.done [#allocation17], 3840
    $region209: #{lugianet_forward.1} parent=1 // pred_fallthru
      _
    // Predicated region
    $region210: #{lugianet_forward.1} parent=1 // pred_check
      _
    $region211: #{lugianet_forward.1} parent=1 // pred_check_branch
      %499 = sbr.rel (0) target = $region213
    $region212: #{lugianet_forward.1} parent=1 // pred_region
      %500 = dma.done [#allocation17], 32
    $region213: #{lugianet_forward.1} parent=1 // pred_fallthru
      _
    // Predicated region
    $region214: #{lugianet_forward.1} parent=1 // pred_check
      _
    $region215: #{lugianet_forward.1} parent=1 // pred_check_branch
      %502 = sbr.rel (0) target = $region217
    $region216: #{lugianet_forward.1} parent=1 // pred_region
      %503 = dma.done [#allocation20], 16
    $region217: #{lugianet_forward.1} parent=1 // pred_fallthru
      _
    // Predicated region
    $region218: #{lugianet_forward.1} parent=1 // pred_check
      _
    $region219: #{lugianet_forward.1} parent=1 // pred_check_branch
      %505 = sbr.rel (0) target = $region221
    $region220: #{lugianet_forward.1} parent=1 // pred_region
      %506 = dma.done [#allocation20], 128
    $region221: #{lugianet_forward.1} parent=1 // pred_fallthru
      _
    // Predicated region
    $region222: #{lugianet_forward.1} parent=1 // pred_check
      _
    $region223: #{lugianet_forward.1} parent=1 // pred_check_branch
      %508 = sbr.rel (0) target = $region225
    $region224: #{lugianet_forward.1} parent=1 // pred_region
      %509 = dma.done [#allocation23], 128
    $region225: #{lugianet_forward.1} parent=1 // pred_fallthru
      _
    // Predicated region
    $region226: #{lugianet_forward.1} parent=1 // pred_check
      _
    $region227: #{lugianet_forward.1} parent=1 // pred_check_branch
      %511 = sbr.rel (0) target = $region229
    $region228: #{lugianet_forward.1} parent=1 // pred_region
      %512 = dma.done [#allocation23], 8192
    $region229: #{lugianet_forward.1} parent=1 // pred_fallthru
      _
    // Predicated region
    $region230: #{lugianet_forward.1} parent=1 // pred_check
      _
    $region231: #{lugianet_forward.1} parent=1 // pred_check_branch
      %514 = sbr.rel (0) target = $region233
    $region232: #{lugianet_forward.1} parent=1 // pred_region
      %515 = dma.done [#allocation26], 16
    $region233: #{lugianet_forward.1} parent=1 // pred_fallthru
      _
    // Predicated region
    $region234: #{lugianet_forward.1} parent=1 // pred_check
      _
    $region235: #{lugianet_forward.1} parent=1 // pred_check_branch
      %517 = sbr.rel (0) target = $region237
    $region236: #{lugianet_forward.1} parent=1 // pred_region
      %518 = dma.done [#allocation26], 2048
    $region237: #{lugianet_forward.1} parent=1 // pred_fallthru
      _
    // Predicated region
    $region238: #{lugianet_forward.1} parent=1 // pred_check
      _
    $region239: #{lugianet_forward.1} parent=1 // pred_check_branch
      %520 = sbr.rel (0) target = $region241
    $region240: #{lugianet_forward.1} parent=1 // pred_region
      %521 = dma.done [#allocation29], 16
    $region241: #{lugianet_forward.1} parent=1 // pred_fallthru
      _
    // Predicated region
    $region242: #{lugianet_forward.1} parent=1 // pred_check
      _
    $region243: #{lugianet_forward.1} parent=1 // pred_check_branch
      %523 = sbr.rel (0) target = $region245
    $region244: #{lugianet_forward.1} parent=1 // pred_region
      %524 = dma.done [#allocation29], 1024
    $region245: #{lugianet_forward.1} parent=1 // pred_fallthru
      _
    // Predicated region
    $region246: #{lugianet_forward.1} parent=1 // pred_check
      _
    $region247: #{lugianet_forward.1} parent=1 // pred_check_branch
      %526 = sbr.rel (0) target = $region249
    $region248: #{lugianet_forward.1} parent=1 // pred_region
      %527 = dma.done [#allocation32], 16
    $region249: #{lugianet_forward.1} parent=1 // pred_fallthru
      _
    // Predicated region
    $region250: #{lugianet_forward.1} parent=1 // pred_check
      _
    $region251: #{lugianet_forward.1} parent=1 // pred_check_branch
      %529 = sbr.rel (0) target = $region253
    $region252: #{lugianet_forward.1} parent=1 // pred_region
      %530 = dma.done [#allocation32], 16
    $region253: #{lugianet_forward.1} parent=1 // pred_fallthru
      _
    // Predicated region
    $region254: #{lugianet_forward.1} parent=1 // pred_check
      _
    $region255: #{lugianet_forward.1} parent=1 // pred_check_branch
      %532 = sbr.rel (0) target = $region257
    $region256: #{lugianet_forward.1} parent=1 // pred_region
      %533 = dma.done [#allocation35], 64
    $region257: #{lugianet_forward.1} parent=1 // pred_fallthru
      _
    // Predicated region
    $region258: #{lugianet_forward.1} parent=1 // pred_check
      _
    $region259: #{lugianet_forward.1} parent=1 // pred_check_branch
      %535 = sbr.rel (0) target = $region261
    $region260: #{lugianet_forward.1} parent=1 // pred_region
      %536 = dma.done [#allocation35], 48
    $region261: #{lugianet_forward.1} parent=1 // pred_fallthru
      _
    // Predicated region
    $region262: #{lugianet_forward.1} parent=1 // pred_check
      _
    $region263: #{lugianet_forward.1} parent=1 // pred_check_branch
      %538 = sbr.rel (0) target = $region265
    $region264: #{lugianet_forward.1} parent=1 // pred_region
      %539 = dma.done [#allocation38], 384
    $region265: #{lugianet_forward.1} parent=1 // pred_fallthru
      _
    // Predicated region
    $region266: #{lugianet_forward.1} parent=1 // pred_check
      _
    $region267: #{lugianet_forward.1} parent=1 // pred_check_branch
      %541 = sbr.rel (0) target = $region269
    $region268: #{lugianet_forward.1} parent=1 // pred_region
      %542 = dma.done [#allocation38], 384
    $region269: #{lugianet_forward.1} parent=1 // pred_fallthru
      _
    // Predicated region
    $region270: #{lugianet_forward.1} parent=1 // pred_check
      _
    $region271: #{lugianet_forward.1} parent=1 // pred_check_branch
      %544 = sbr.rel (0) target = $region273
    $region272: #{lugianet_forward.1} parent=1 // pred_region
      %545 = dma.done [#allocation41], 4224
    $region273: #{lugianet_forward.1} parent=1 // pred_fallthru
      _
    // Predicated region
    $region274: #{lugianet_forward.1} parent=1 // pred_check
      _
    $region275: #{lugianet_forward.1} parent=1 // pred_check_branch
      %547 = sbr.rel (0) target = $region277
    $region276: #{lugianet_forward.1} parent=1 // pred_region
      %548 = dma.done [#allocation41], 16
    $region277: #{lugianet_forward.1} parent=1 // pred_fallthru
      _
    // Predicated region
    $region278: #{lugianet_forward.1} parent=1 // pred_check
      _
    $region279: #{lugianet_forward.1} parent=1 // pred_check_branch
      %550 = sbr.rel (0) target = $region281
    $region280: #{lugianet_forward.1} parent=1 // pred_region
      %551 = dma.done [#allocation44], 128
    $region281: #{lugianet_forward.1} parent=1 // pred_fallthru
      _
    // Predicated region
    $region282: #{lugianet_forward.1} parent=1 // pred_check
      _
    $region283: #{lugianet_forward.1} parent=1 // pred_check_branch
      %553 = sbr.rel (0) target = $region285
    $region284: #{lugianet_forward.1} parent=1 // pred_region
      %554 = dma.done [#allocation44], 128
    $region285: #{lugianet_forward.1} parent=1 // pred_fallthru
      _
    // Predicated region
    $region286: #{lugianet_forward.1} parent=1 // pred_check
      _
    $region287: #{lugianet_forward.1} parent=1 // pred_check_branch
      %556 = sbr.rel (0) target = $region289
    $region288: #{lugianet_forward.1} parent=1 // pred_region
      %557 = dma.done [#allocation47], 64
    $region289: #{lugianet_forward.1} parent=1 // pred_fallthru
      _
    // Predicated region
    $region290: #{lugianet_forward.1} parent=1 // pred_check
      _
    $region291: #{lugianet_forward.1} parent=1 // pred_check_branch
      %559 = sbr.rel (0) target = $region293
    $region292: #{lugianet_forward.1} parent=1 // pred_region
      %560 = dma.done [#allocation47], 64
    $region293: #{lugianet_forward.1} parent=1 // pred_fallthru
      _
    // Predicated region
    $region294: #{lugianet_forward.1} parent=1 // pred_check
      _
    $region295: #{lugianet_forward.1} parent=1 // pred_check_branch
      %562 = sbr.rel (0) target = $region297
    $region296: #{lugianet_forward.1} parent=1 // pred_region
      %563 = dma.done [#allocation50], 16
    $region297: #{lugianet_forward.1} parent=1 // pred_fallthru
      _
    // Predicated region
    $region298: #{lugianet_forward.1} parent=1 // pred_check
      _
    $region299: #{lugianet_forward.1} parent=1 // pred_check_branch
      %565 = sbr.rel (0) target = $region301
    $region300: #{lugianet_forward.1} parent=1 // pred_region
      %566 = dma.done [#allocation50], 16
    $region301: #{lugianet_forward.1} parent=1 // pred_fallthru
      _
    // Predicated region
    $region302: #{lugianet_forward.1} parent=1 // pred_check
      _
    $region303: #{lugianet_forward.1} parent=1 // pred_check_branch
      %568 = sbr.rel (0) target = $region305
    $region304: #{lugianet_forward.1} parent=1 // pred_region
      %569 = dma.done [#allocation53], 16
    $region305: #{lugianet_forward.1} parent=1 // pred_fallthru
      _
    // Predicated region
    $region306: #{lugianet_forward.1} parent=1 // pred_check
      _
    $region307: #{lugianet_forward.1} parent=1 // pred_check_branch
      %571 = sbr.rel (0) target = $region309
    $region308: #{lugianet_forward.1} parent=1 // pred_region
      %572 = dma.done [#allocation53], 16
    $region309: #{lugianet_forward.1} parent=1 // pred_fallthru
      _
    %v574 = vld [vmem:[%s87] sm:$0xff]
    %v575 = vld [vmem:[%s87 + $0x8] sm:$0xff]
    %v576 = vld [vmem:[%s87 + $0x10] sm:$0xff]
    %v577 = vld [vmem:[%s87 + $0x18] sm:$0xff]
    %v578 = vld [vmem:[%s87 + $0x20] sm:$0xff]
    %v579 = vld [vmem:[%s87 + $0x28] sm:$0xff]
    %v580 = vld [vmem:[%s87 + $0x30] sm:$0xff]
    %v581 = vld [vmem:[%s87 + $0x38] sm:$0x3f]
    %v582 = vld [vmem:[%s91] sm:$0xf]
    %v583 = vld [vmem:[%s91 + $0x4] sm:$0xf]
    %v584 = vld [vmem:[%s91 + $0x8] sm:$0xf]
    %v585 = vld [vmem:[%s91 + $0xc] sm:$0xf]
    %v586 = vld [vmem:[%s91 + $0x10] sm:$0xf]
    %v587 = vld [vmem:[%s91 + $0x14] sm:$0xf]
    %v588 = vld [vmem:[%s91 + $0x18] sm:$0xf]
    %v589 = vld [vmem:[%s91 + $0x1c] sm:$0x7]
    %v590 = vld [vmem:[%s83] sm:$0xf]
    %v591 = vld [vmem:[%s83 + $0x4] sm:$0xf]
    %v592 = vld [vmem:[%s83 + $0x8] sm:$0xf]
    %v593 = vld [vmem:[%s83 + $0xc] sm:$0xf]
    %v594 = vld [vmem:[%s83 + $0x10] sm:$0xf]
    %v595 = vld [vmem:[%s83 + $0x14] sm:$0xf]
    %v596 = vld [vmem:[%s83 + $0x18] sm:$0xf]
    %v597 = vld [vmem:[%s83 + $0x1c] sm:$0xf]
    %v598 = vld [vmem:[%s83 + $0x20] sm:$0xf]
    %v599 = vld [vmem:[%s83 + $0x24] sm:$0xf]
    %v600 = vld [vmem:[%s83 + $0x28] sm:$0xf]
    %v601 = vld [vmem:[%s83 + $0x2c] sm:$0xf]
    %v602 = vld [vmem:[#allocation52] sm:$0x1]
    %v604 = vlaneseq
    %v605 = vshrl.u32 %v604, 7
    %v606 = vsub.s32 0, %v605
    %v607 = vrot.slane %v602, %v606
    %v617 = vunpack.c.l.b16 %v582
    %v618 = vunpack.c.l.b16 %v583
    %v619 = vunpack.c.l.b16 %v584
    %v620 = vunpack.c.l.b16 %v585
    %v621 = vunpack.c.l.b16 %v586
    %v622 = vunpack.c.l.b16 %v587
    %v623 = vunpack.c.l.b16 %v588
    %v624 = vunpack.c.l.b16 %v589
    %v625 = vpack.c.b16 %v618, %v617
    %v626 = vpack.c.b16 %v620, %v619
    %v627 = vpack.c.b16 %v622, %v621
    %v628 = vpack.c.b16 %v624, %v623
    %v641 = vunpack.c.l.b16 %v590
    %v642 = vunpack.c.l.b16 %v591
    %v643 = vunpack.c.l.b16 %v592
    %v644 = vunpack.c.l.b16 %v593
    %v645 = vunpack.c.l.b16 %v594
    %v646 = vunpack.c.l.b16 %v595
    %v647 = vunpack.c.l.b16 %v596
    %v648 = vunpack.c.l.b16 %v597
    %v649 = vunpack.c.l.b16 %v598
    %v650 = vunpack.c.l.b16 %v599
    %v651 = vunpack.c.l.b16 %v600
    %v652 = vunpack.c.l.b16 %v601
    %v653 = vpack.c.b16 %v642, %v641
    %v654 = vpack.c.b16 %v644, %v643
    %v655 = vpack.c.b16 %v646, %v645
    %v656 = vpack.c.b16 %v648, %v647
    %v657 = vpack.c.b16 %v650, %v649
    %v658 = vpack.c.b16 %v652, %v651
    %vm665 = vcmask 785408
    %v667 = vsel %vm665, %v625, 0
    %v670 = vsel %vm665, %v626, 0
    %v673 = vsel %vm665, %v627, 0
    %v676 = vsel %vm665, %v628, 0
    %678 = vmatprep.subr.bf16.mxu0 0
    %679 = vmatpush1.bf16.msra.mxu0 %v653
    %680 = vmatprep.subr.bf16.mxu0 0
    %681 = vmatpush1.bf16.msra.mxu0 %v654
    %682 = vmatprep.subr.bf16.mxu0 0
    %683 = vmatpush1.bf16.msra.mxu0 %v655
    %684 = vmatprep.subr.bf16.mxu0 0
    %685 = vmatpush1.bf16.msra.mxu0 %v656
    %686 = vmatprep.subr.bf16.mxu0 0
    %687 = vmatpush1.bf16.msra.mxu0 %v657
    %688 = vmatprep.subr.bf16.mxu0 0
    %689 = vmatpush1.bf16.msra.mxu0 %v658
    %690 = vmatprep.subr.bf16.mxu0 0
    %691 = vmatpush1.bf16.msra.mxu0 0
    %692 = vmatprep.subr.bf16.mxu0 0
    %693 = vmatpush1.bf16.msra.mxu0 0
    %694 = vmatprep.subr.bf16.mxu0 0
    %695 = vmatpush1.bf16.msra.mxu0 0
    %696 = vmatprep.subr.bf16.mxu0 0
    %697 = vmatpush1.bf16.msra.mxu0 0
    %698 = vmatprep.subr.bf16.mxu0 0
    %699 = vmatpush1.bf16.msra.mxu0 0
    %700 = vmatprep.subr.bf16.mxu0 0
    %701 = vmatpush1.bf16.msra.mxu0 0
    %702 = vmatprep.subr.bf16.mxu0 0
    %703 = vmatpush1.bf16.msra.mxu0 0
    %704 = vmatprep.subr.bf16.mxu0 0
    %705 = vmatpush1.bf16.msra.mxu0 0
    %706 = vmatprep.subr.bf16.mxu0 0
    %707 = vmatpush1.bf16.msra.mxu0 0
    %708 = vmatprep.subr.bf16.mxu0 0
    %709 = vmatpush1.bf16.msra.mxu0 0
    %710 = vmatprep.mubr.bf16.mxu0 0
    %711 = vmatmul.mubr.bf16.gmra.mrb[0].mxu0 %v667
    %v712 = vpop.f32.mrb[0].mxu0
    %v713 = vadd.f32 %v607, %v712
    %v714 = vpop.f32.mrb[0].mxu0
    %v715 = vpop.f32.mrb[0].mxu0
    %v716 = vadd.f32 %v607, %v715
    %v717 = vpop.f32.mrb[0].mxu0
    %718 = vmatprep.mubr.bf16.mxu0 0
    %719 = vmatmul.mubr.bf16.gmra.mrb[0].mxu0 %v670
    %v720 = vpop.f32.mrb[0].mxu0
    %v721 = vadd.f32 %v607, %v720
    %v722 = vpop.f32.mrb[0].mxu0
    %v723 = vpop.f32.mrb[0].mxu0
    %v724 = vadd.f32 %v607, %v723
    %v725 = vpop.f32.mrb[0].mxu0
    %726 = vmatprep.mubr.bf16.mxu0 0
    %727 = vmatmul.mubr.bf16.gmra.mrb[0].mxu0 %v673
    %v728 = vpop.f32.mrb[0].mxu0
    %v729 = vadd.f32 %v607, %v728
    %v730 = vpop.f32.mrb[0].mxu0
    %v731 = vpop.f32.mrb[0].mxu0
    %v732 = vadd.f32 %v607, %v731
    %v733 = vpop.f32.mrb[0].mxu0
    %734 = vmatprep.mubr.bf16.mxu0 0
    %735 = vmatmul.mubr.bf16.gmra.mrb[0].mxu0 %v676
    %v736 = vpop.f32.mrb[0].mxu0
    %v737 = vadd.f32 %v607, %v736
    %v738 = vpop.f32.mrb[0].mxu0
    %v739 = vpop.f32.mrb[0].mxu0
    %v740 = vadd.f32 %v607, %v739
    %v741 = vpop.f32.mrb[0].mxu0
    %742 = vdwg.mxu0
    %v743 = vmax.f32 %v713, 0.0
    %v744 = vmax.f32 %v716, 0.0
    %v745 = vmax.f32 %v721, 0.0
    %v746 = vmax.f32 %v724, 0.0
    %v747 = vmax.f32 %v729, 0.0
    %v748 = vmax.f32 %v732, 0.0
    %v749 = vmax.f32 %v737, 0.0
    %v750 = vmax.f32 %v740, 0.0
    %v751 = vadd.f32 %v574, %v743
    %v752 = vadd.f32 %v575, %v744
    %v753 = vadd.f32 %v576, %v745
    %v754 = vadd.f32 %v577, %v746
    %v755 = vadd.f32 %v578, %v747
    %v756 = vadd.f32 %v579, %v748
    %v757 = vadd.f32 %v580, %v749
    %v758 = vadd.f32 %v581, %v750
    %v759 = vld [vmem:[%s85] sm:$0xf]
    %v760 = vld [vmem:[%s85 + $0x4] sm:$0xf]
    %v761 = vld [vmem:[%s85 + $0x8] sm:$0xf]
    %v762 = vld [vmem:[%s85 + $0xc] sm:$0xf]
    %v763 = vld [vmem:[%s85 + $0x10] sm:$0xf]
    %v764 = vld [vmem:[%s85 + $0x14] sm:$0xf]
    %v765 = vld [vmem:[%s85 + $0x18] sm:$0xf]
    %v766 = vld [vmem:[%s85 + $0x1c] sm:$0xf]
    %v767 = vld [vmem:[%s85 + $0x20] sm:$0xf]
    %v768 = vld [vmem:[%s85 + $0x24] sm:$0xf]
    %v769 = vld [vmem:[%s85 + $0x28] sm:$0xf]
    %v770 = vld [vmem:[%s85 + $0x2c] sm:$0xf]
    %v771 = vld [vmem:[#allocation54] sm:$0x1]
    %v773 = vlaneseq
    %v774 = vshrl.u32 %v773, 7
    %v775 = vsub.s32 0, %v774
    %v776 = vrot.slane %v771, %v775
    %v790 = vunpack.c.l.b16 %v759
    %v791 = vunpack.c.l.b16 %v760
    %v792 = vunpack.c.l.b16 %v761
    %v793 = vunpack.c.l.b16 %v762
    %v794 = vunpack.c.l.b16 %v763
    %v795 = vunpack.c.l.b16 %v764
    %v796 = vunpack.c.l.b16 %v765
    %v797 = vunpack.c.l.b16 %v766
    %v798 = vunpack.c.l.b16 %v767
    %v799 = vunpack.c.l.b16 %v768
    %v800 = vunpack.c.l.b16 %v769
    %v801 = vunpack.c.l.b16 %v770
    %v802 = vpack.c.b16 %v791, %v790
    %v803 = vpack.c.b16 %v793, %v792
    %v804 = vpack.c.b16 %v795, %v794
    %v805 = vpack.c.b16 %v797, %v796
    %v806 = vpack.c.b16 %v799, %v798
    %v807 = vpack.c.b16 %v801, %v800
    %814 = vmatprep.subr.bf16.mxu0 0
    %815 = vmatpush1.bf16.msra.mxu0 %v802
    %816 = vmatprep.subr.bf16.mxu0 0
    %817 = vmatpush1.bf16.msra.mxu0 %v803
    %818 = vmatprep.subr.bf16.mxu0 0
    %819 = vmatpush1.bf16.msra.mxu0 %v804
    %820 = vmatprep.subr.bf16.mxu0 0
    %821 = vmatpush1.bf16.msra.mxu0 %v805
    %822 = vmatprep.subr.bf16.mxu0 0
    %823 = vmatpush1.bf16.msra.mxu0 %v806
    %824 = vmatprep.subr.bf16.mxu0 0
    %825 = vmatpush1.bf16.msra.mxu0 %v807
    %826 = vmatprep.subr.bf16.mxu0 0
    %827 = vmatpush1.bf16.msra.mxu0 0
    %828 = vmatprep.subr.bf16.mxu0 0
    %829 = vmatpush1.bf16.msra.mxu0 0
    %830 = vmatprep.subr.bf16.mxu0 0
    %831 = vmatpush1.bf16.msra.mxu0 0
    %832 = vmatprep.subr.bf16.mxu0 0
    %833 = vmatpush1.bf16.msra.mxu0 0
    %834 = vmatprep.subr.bf16.mxu0 0
    %835 = vmatpush1.bf16.msra.mxu0 0
    %836 = vmatprep.subr.bf16.mxu0 0
    %837 = vmatpush1.bf16.msra.mxu0 0
    %838 = vmatprep.subr.bf16.mxu0 0
    %839 = vmatpush1.bf16.msra.mxu0 0
    %840 = vmatprep.subr.bf16.mxu0 0
    %841 = vmatpush1.bf16.msra.mxu0 0
    %842 = vmatprep.subr.bf16.mxu0 0
    %843 = vmatpush1.bf16.msra.mxu0 0
    %844 = vmatprep.subr.bf16.mxu0 0
    %845 = vmatpush1.bf16.msra.mxu0 0
    %846 = vmatprep.mubr.bf16.mxu0 0
    %847 = vmatmul.mubr.bf16.gmra.mrb[0].mxu0 %v667
    %v848 = vpop.f32.mrb[0].mxu0
    %v849 = vadd.f32 %v776, %v848
    %v850 = vpop.f32.mrb[0].mxu0
    %v851 = vpop.f32.mrb[0].mxu0
    %v852 = vadd.f32 %v776, %v851
    %v853 = vpop.f32.mrb[0].mxu0
    %854 = vmatprep.mubr.bf16.mxu0 0
    %855 = vmatmul.mubr.bf16.gmra.mrb[0].mxu0 %v670
    %v856 = vpop.f32.mrb[0].mxu0
    %v857 = vadd.f32 %v776, %v856
    %v858 = vpop.f32.mrb[0].mxu0
    %v859 = vpop.f32.mrb[0].mxu0
    %v860 = vadd.f32 %v776, %v859
    %v861 = vpop.f32.mrb[0].mxu0
    %862 = vmatprep.mubr.bf16.mxu0 0
    %863 = vmatmul.mubr.bf16.gmra.mrb[0].mxu0 %v673
    %v864 = vpop.f32.mrb[0].mxu0
    %v865 = vadd.f32 %v776, %v864
    %v866 = vpop.f32.mrb[0].mxu0
    %v867 = vpop.f32.mrb[0].mxu0
    %v868 = vadd.f32 %v776, %v867
    %v869 = vpop.f32.mrb[0].mxu0
    %870 = vmatprep.mubr.bf16.mxu0 0
    %871 = vmatmul.mubr.bf16.gmra.mrb[0].mxu0 %v676
    %v872 = vpop.f32.mrb[0].mxu0
    %v873 = vadd.f32 %v776, %v872
    %v874 = vpop.f32.mrb[0].mxu0
    %v875 = vpop.f32.mrb[0].mxu0
    %v876 = vadd.f32 %v776, %v875
    %v877 = vpop.f32.mrb[0].mxu0
    %878 = vdwg.mxu0
    %v879 = vmax.f32 %v849, 0.0
    %v880 = vmax.f32 %v852, 0.0
    %v881 = vmax.f32 %v857, 0.0
    %v882 = vmax.f32 %v860, 0.0
    %v883 = vmax.f32 %v865, 0.0
    %v884 = vmax.f32 %v868, 0.0
    %v885 = vmax.f32 %v873, 0.0
    %v886 = vmax.f32 %v876, 0.0
    %v887 = vadd.f32 %v751, %v879
    %v888 = vadd.f32 %v752, %v880
    %v889 = vadd.f32 %v753, %v881
    %v890 = vadd.f32 %v754, %v882
    %v891 = vadd.f32 %v755, %v883
    %v892 = vadd.f32 %v756, %v884
    %v893 = vadd.f32 %v757, %v885
    %v894 = vadd.f32 %v758, %v886
    %v895 = vld [vmem:[%s87] sm:$0xff]
    %v896 = vld [vmem:[%s87 + $0x8] sm:$0xff]
    %v897 = vld [vmem:[%s87 + $0x10] sm:$0xff]
    %v898 = vld [vmem:[%s87 + $0x18] sm:$0xff]
    %v899 = vld [vmem:[%s87 + $0x20] sm:$0xff]
    %v900 = vld [vmem:[%s87 + $0x28] sm:$0xff]
    %v901 = vld [vmem:[%s87 + $0x30] sm:$0xff]
    %v902 = vld [vmem:[%s87 + $0x38] sm:$0xff]
    %vm903 = vcmask 228352
    %904 = vst.msk [vmem:[#allocation2] sm:$0xff] %vm903, %v895
    %905 = vst.msk [vmem:[#allocation2 + $0x8] sm:$0xff] %vm903, %v896
    %906 = vst.msk [vmem:[#allocation2 + $0x10] sm:$0xff] %vm903, %v897
    %907 = vst.msk [vmem:[#allocation2 + $0x18] sm:$0xff] %vm903, %v898
    %908 = vst.msk [vmem:[#allocation2 + $0x20] sm:$0xff] %vm903, %v899
    %909 = vst.msk [vmem:[#allocation2 + $0x28] sm:$0xff] %vm903, %v900
    %910 = vst.msk [vmem:[#allocation2 + $0x30] sm:$0xff] %vm903, %v901
    %911 = vst.msk [vmem:[#allocation2 + $0x38] sm:$0xff] %vm903, %v902
    %912 = vst.msk [vmem:[#allocation2 + $0x40] sm:$0xff] %vm903, %v887
    %913 = vst.msk [vmem:[#allocation2 + $0x48] sm:$0xff] %vm903, %v888
    %914 = vst.msk [vmem:[#allocation2 + $0x50] sm:$0xff] %vm903, %v889
    %915 = vst.msk [vmem:[#allocation2 + $0x58] sm:$0xff] %vm903, %v890
    %916 = vst.msk [vmem:[#allocation2 + $0x60] sm:$0xff] %vm903, %v891
    %917 = vst.msk [vmem:[#allocation2 + $0x68] sm:$0xff] %vm903, %v892
    %918 = vst.msk [vmem:[#allocation2 + $0x70] sm:$0xff] %vm903, %v893
    %vm919 = vcmask 226304
    %920 = vst.msk [vmem:[#allocation2 + $0x78] sm:$0x3f] %vm919, %v894
    %vm921 = vcmask 222208
    %922 = vst.msk [vmem:[#allocation2 + $0x7e] sm:$0x3] %vm921, 0.0
    %v923 = vld [vmem:[%s89] sm:$0xf]
    %v924 = vld [vmem:[%s89 + $0x4] sm:$0xf]
    %v925 = vld [vmem:[%s89 + $0x8] sm:$0xf]
    %v926 = vld [vmem:[%s89 + $0xc] sm:$0xf]
    %v927 = vld [vmem:[%s89 + $0x10] sm:$0xf]
    %v928 = vld [vmem:[%s89 + $0x14] sm:$0xf]
    %v929 = vld [vmem:[%s89 + $0x18] sm:$0xf]
    %v930 = vld [vmem:[%s89 + $0x1c] sm:$0xf]
    %v931 = vld [vmem:[%s89 + $0x20] sm:$0xf]
    %v932 = vld [vmem:[%s89 + $0x24] sm:$0xf]
    %v933 = vld [vmem:[%s89 + $0x28] sm:$0xf]
    %v934 = vld [vmem:[%s89 + $0x2c] sm:$0xf]
    %v935 = vld [vmem:[%s89 + $0x30] sm:$0xf]
    %v936 = vld [vmem:[%s89 + $0x34] sm:$0x7]
    %v937 = vld [vmem:[#allocation16] sm:$0xff]
    %v938 = vld [vmem:[#allocation16 + $0x8] sm:$0xff]
    %v939 = vld [vmem:[#allocation16 + $0x10] sm:$0xff]
    %v940 = vld [vmem:[#allocation16 + $0x18] sm:$0xff]
    %v941 = vld [vmem:[#allocation16 + $0x20] sm:$0xff]
    %v942 = vld [vmem:[#allocation16 + $0x28] sm:$0xff]
    %v943 = vld [vmem:[#allocation16 + $0x30] sm:$0xff]
    %v944 = vld [vmem:[#allocation16 + $0x38] sm:$0xff]
    %v945 = vld [vmem:[#allocation16 + $0x40] sm:$0xff]
    %v946 = vld [vmem:[#allocation16 + $0x48] sm:$0xff]
    %v947 = vld [vmem:[#allocation16 + $0x50] sm:$0xff]
    %v948 = vld [vmem:[#allocation16 + $0x58] sm:$0xff]
    %v949 = vld [vmem:[#allocation16 + $0x60] sm:$0xff]
    %v950 = vld [vmem:[#allocation16 + $0x68] sm:$0xff]
    %v951 = vld [vmem:[#allocation16 + $0x70] sm:$0xff]
    %v952 = vld [vmem:[#allocation16 + $0x78] sm:$0xff]
    %v953 = vld [vmem:[#allocation16 + $0x80] sm:$0xff]
    %v954 = vld [vmem:[#allocation16 + $0x88] sm:$0xff]
    %v955 = vld [vmem:[#allocation16 + $0x90] sm:$0xff]
    %v956 = vld [vmem:[#allocation16 + $0x98] sm:$0xff]
    %v957 = vld [vmem:[#allocation16 + $0xa0] sm:$0xff]
    %v958 = vld [vmem:[#allocation16 + $0xa8] sm:$0xff]
    %v959 = vld [vmem:[#allocation16 + $0xb0] sm:$0xff]
    %v960 = vld [vmem:[#allocation16 + $0xb8] sm:$0xff]
    %v961 = vld [vmem:[#allocation16 + $0xc0] sm:$0xff]
    %v962 = vld [vmem:[#allocation16 + $0xc8] sm:$0x11]
    %v963 = vld [vmem:[#allocation16 + $0xd0] sm:$0x11]
    %v964 = vld [vmem:[#allocation16 + $0xd8] sm:$0x11]
    %v965 = vld [vmem:[#allocation16 + $0xe0] sm:$0x11]
    %v966 = vld [vmem:[#allocation16 + $0xe8] sm:$0x11]
    %v981 = vunpack.c.l.b16 %v923
    %v982 = vunpack.c.l.b16 %v924
    %v983 = vunpack.c.l.b16 %v925
    %v984 = vunpack.c.l.b16 %v926
    %v985 = vunpack.c.l.b16 %v927
    %v986 = vunpack.c.l.b16 %v928
    %v987 = vunpack.c.l.b16 %v929
    %v988 = vunpack.c.l.b16 %v930
    %v989 = vunpack.c.l.b16 %v931
    %v990 = vunpack.c.l.b16 %v932
    %v991 = vunpack.c.l.b16 %v933
    %v992 = vunpack.c.l.b16 %v934
    %v993 = vunpack.c.l.b16 %v935
    %v994 = vunpack.c.l.b16 %v936
    %v995 = vpack.c.b16 %v982, %v981
    %v996 = vpack.c.b16 %v984, %v983
    %v997 = vpack.c.b16 %v986, %v985
    %v998 = vpack.c.b16 %v988, %v987
    %v999 = vpack.c.b16 %v990, %v989
    %v1000 = vpack.c.b16 %v992, %v991
    %v1001 = vpack.c.b16 %v994, %v993
    %v1032 = vunpack.c.l.b16 %v937
    %v1033 = vunpack.c.h.b16 %v937
    %v1034 = vunpack.c.l.b16 %v938
    %v1035 = vunpack.c.h.b16 %v938
    %v1036 = vunpack.c.l.b16 %v939
    %v1037 = vunpack.c.h.b16 %v939
    %v1038 = vunpack.c.l.b16 %v940
    %v1039 = vunpack.c.h.b16 %v940
    %v1040 = vunpack.c.l.b16 %v941
    %v1041 = vunpack.c.h.b16 %v941
    %v1042 = vunpack.c.l.b16 %v942
    %v1043 = vunpack.c.h.b16 %v942
    %v1044 = vunpack.c.l.b16 %v943
    %v1045 = vunpack.c.h.b16 %v943
    %v1046 = vunpack.c.l.b16 %v944
    %v1047 = vunpack.c.h.b16 %v944
    %v1048 = vunpack.c.l.b16 %v945
    %v1049 = vunpack.c.h.b16 %v945
    %v1050 = vunpack.c.l.b16 %v946
    %v1051 = vunpack.c.h.b16 %v946
    %v1052 = vunpack.c.l.b16 %v947
    %v1053 = vunpack.c.h.b16 %v947
    %v1054 = vunpack.c.l.b16 %v948
    %v1055 = vunpack.c.h.b16 %v948
    %v1056 = vunpack.c.l.b16 %v949
    %v1057 = vunpack.c.h.b16 %v949
    %v1058 = vunpack.c.l.b16 %v950
    %v1059 = vunpack.c.h.b16 %v950
    %v1060 = vunpack.c.l.b16 %v951
    %v1061 = vunpack.c.h.b16 %v951
    %v1062 = vunpack.c.l.b16 %v952
    %v1063 = vunpack.c.h.b16 %v952
    %v1064 = vunpack.c.l.b16 %v953
    %v1065 = vunpack.c.h.b16 %v953
    %v1066 = vunpack.c.l.b16 %v954
    %v1067 = vunpack.c.h.b16 %v954
    %v1068 = vunpack.c.l.b16 %v955
    %v1069 = vunpack.c.h.b16 %v955
    %v1070 = vunpack.c.l.b16 %v956
    %v1071 = vunpack.c.h.b16 %v956
    %v1072 = vunpack.c.l.b16 %v957
    %v1073 = vunpack.c.h.b16 %v957
    %v1074 = vunpack.c.l.b16 %v958
    %v1075 = vunpack.c.h.b16 %v958
    %v1076 = vunpack.c.l.b16 %v959
    %v1077 = vunpack.c.h.b16 %v959
    %v1078 = vunpack.c.l.b16 %v960
    %v1079 = vunpack.c.h.b16 %v960
    %v1080 = vunpack.c.l.b16 %v961
    %v1081 = vunpack.c.h.b16 %v961
    %v1082 = vunpack.c.l.b16 %v962
    %v1083 = vunpack.c.h.b16 %v962
    %v1084 = vunpack.c.l.b16 %v963
    %v1085 = vunpack.c.h.b16 %v963
    %v1086 = vunpack.c.l.b16 %v964
    %v1087 = vunpack.c.h.b16 %v964
    %v1088 = vunpack.c.l.b16 %v965
    %v1089 = vunpack.c.h.b16 %v965
    %v1090 = vunpack.c.l.b16 %v966
    %v1091 = vunpack.c.h.b16 %v966
    %v1092 = vpack.c.b16 %v1042, %v1032
    %v1093 = vpack.c.b16 %v1043, %v1033
    %v1094 = vpack.c.b16 %v1044, %v1034
    %v1095 = vpack.c.b16 %v1045, %v1035
    %v1096 = vpack.c.b16 %v1046, %v1036
    %v1097 = vpack.c.b16 %v1047, %v1037
    %v1098 = vpack.c.b16 %v1048, %v1038
    %v1099 = vpack.c.b16 %v1049, %v1039
    %v1100 = vpack.c.b16 %v1050, %v1040
    %v1101 = vpack.c.b16 %v1051, %v1041
    %v1102 = vpack.c.b16 %v1062, %v1052
    %v1103 = vpack.c.b16 %v1063, %v1053
    %v1104 = vpack.c.b16 %v1064, %v1054
    %v1105 = vpack.c.b16 %v1065, %v1055
    %v1106 = vpack.c.b16 %v1066, %v1056
    %v1107 = vpack.c.b16 %v1067, %v1057
    %v1108 = vpack.c.b16 %v1068, %v1058
    %v1109 = vpack.c.b16 %v1069, %v1059
    %v1110 = vpack.c.b16 %v1070, %v1060
    %v1111 = vpack.c.b16 %v1071, %v1061
    %v1112 = vpack.c.b16 %v1082, %v1072
    %v1113 = vpack.c.b16 %v1083, %v1073
    %v1114 = vpack.c.b16 %v1084, %v1074
    %v1115 = vpack.c.b16 %v1085, %v1075
    %v1116 = vpack.c.b16 %v1086, %v1076
    %v1117 = vpack.c.b16 %v1087, %v1077
    %v1118 = vpack.c.b16 %v1088, %v1078
    %v1119 = vpack.c.b16 %v1089, %v1079
    %v1120 = vpack.c.b16 %v1090, %v1080
    %v1121 = vpack.c.b16 %v1091, %v1081
    %vm1142 = vcmask 343040
    %v1144 = vsel %vm1142, %v995, 0
    %v1147 = vsel %vm1142, %v996, 0
    %v1150 = vsel %vm1142, %v997, 0
    %v1153 = vsel %vm1142, %v998, 0
    %v1156 = vsel %vm1142, %v999, 0
    %v1159 = vsel %vm1142, %v1000, 0
    %v1162 = vsel %vm1142, %v1001, 0
    %vm1164 = vcmask 1044480
    %v1166 = vsel %vm1164, %v1112, 0
    %v1169 = vsel %vm1164, %v1113, 0
    %v1172 = vsel %vm1164, %v1114, 0
    %v1175 = vsel %vm1164, %v1115, 0
    %v1178 = vsel %vm1164, %v1116, 0
    %v1181 = vsel %vm1164, %v1117, 0
    %v1184 = vsel %vm1164, %v1118, 0
    %v1187 = vsel %vm1164, %v1119, 0
    %v1190 = vsel %vm1164, %v1120, 0
    %v1193 = vsel %vm1164, %v1121, 0
    %1195 = vmatprep.subr.bf16.mxu0 %v1093
    %1196 = vmatpush1.bf16.msra.mxu0 %v1092
    %1197 = vmatprep.subr.bf16.mxu0 %v1103
    %1198 = vmatpush1.bf16.msra.mxu0 %v1102
    %1199 = vmatprep.subr.bf16.mxu0 %v1169
    %1200 = vmatpush1.bf16.msra.mxu0 %v1166
    %1201 = vmatprep.subr.bf16.mxu0 0
    %1202 = vmatpush1.bf16.msra.mxu0 0
    %1203 = vmatprep.subr.bf16.mxu0 0
    %1204 = vmatpush1.bf16.msra.mxu0 0
    %1205 = vmatprep.subr.bf16.mxu0 0
    %1206 = vmatpush1.bf16.msra.mxu0 0
    %1207 = vmatprep.subr.bf16.mxu0 0
    %1208 = vmatpush1.bf16.msra.mxu0 0
    %1209 = vmatprep.subr.bf16.mxu0 0
    %1210 = vmatpush1.bf16.msra.mxu0 0
    %1211 = vmatprep.subr.bf16.mxu0 0
    %1212 = vmatpush1.bf16.msra.mxu0 0
    %1213 = vmatprep.subr.bf16.mxu0 0
    %1214 = vmatpush1.bf16.msra.mxu0 0
    %1215 = vmatprep.subr.bf16.mxu0 0
    %1216 = vmatpush1.bf16.msra.mxu0 0
    %1217 = vmatprep.subr.bf16.mxu0 0
    %1218 = vmatpush1.bf16.msra.mxu0 0
    %1219 = vmatprep.subr.bf16.mxu0 0
    %1220 = vmatpush1.bf16.msra.mxu0 0
    %1221 = vmatprep.subr.bf16.mxu0 0
    %1222 = vmatpush1.bf16.msra.mxu0 0
    %1223 = vmatprep.subr.bf16.mxu0 0
    %1224 = vmatpush1.bf16.msra.mxu0 0
    %1225 = vmatprep.subr.bf16.mxu0 0
    %1226 = vmatpush1.bf16.msra.mxu0 0
    %1227 = vmatprep.mubr.bf16.mxu0 0
    %1228 = vmatmul.mubr.bf16.gmra.mrb[0].mxu0 %v1144
    %v1229 = vpop.f32.mrb[0].mxu0
    %v1230 = vadd.f32 0.0, %v1229
    %v1231 = vpop.f32.mrb[0].mxu0
    %v1232 = vadd.f32 0.0, %v1231
    %v1233 = vpop.f32.mrb[0].mxu0
    %v1234 = vadd.f32 0.0, %v1233
    %v1235 = vpop.f32.mrb[0].mxu0
    %v1236 = vadd.f32 0.0, %v1235
    %1237 = vmatprep.mubr.bf16.mxu0 0
    %1238 = vmatmul.mubr.bf16.gmra.mrb[0].mxu0 %v1147
    %v1239 = vpop.f32.mrb[0].mxu0
    %v1240 = vadd.f32 0.0, %v1239
    %v1241 = vpop.f32.mrb[0].mxu0
    %v1242 = vadd.f32 0.0, %v1241
    %v1243 = vpop.f32.mrb[0].mxu0
    %v1244 = vadd.f32 0.0, %v1243
    %v1245 = vpop.f32.mrb[0].mxu0
    %v1246 = vadd.f32 0.0, %v1245
    %1247 = vmatprep.mubr.bf16.mxu0 0
    %1248 = vmatmul.mubr.bf16.gmra.mrb[0].mxu0 %v1150
    %v1249 = vpop.f32.mrb[0].mxu0
    %v1250 = vadd.f32 0.0, %v1249
    %v1251 = vpop.f32.mrb[0].mxu0
    %v1252 = vadd.f32 0.0, %v1251
    %v1253 = vpop.f32.mrb[0].mxu0
    %v1254 = vadd.f32 0.0, %v1253
    %v1255 = vpop.f32.mrb[0].mxu0
    %v1256 = vadd.f32 0.0, %v1255
    %1257 = vmatprep.mubr.bf16.mxu0 0
    %1258 = vmatmul.mubr.bf16.gmra.mrb[0].mxu0 %v1153
    %v1259 = vpop.f32.mrb[0].mxu0
    %v1260 = vadd.f32 0.0, %v1259
    %v1261 = vpop.f32.mrb[0].mxu0
    %v1262 = vadd.f32 0.0, %v1261
    %v1263 = vpop.f32.mrb[0].mxu0
    %v1264 = vadd.f32 0.0, %v1263
    %v1265 = vpop.f32.mrb[0].mxu0
    %v1266 = vadd.f32 0.0, %v1265
    %1267 = vmatprep.mubr.bf16.mxu0 0
    %1268 = vmatmul.mubr.bf16.gmra.mrb[0].mxu0 %v1156
    %v1269 = vpop.f32.mrb[0].mxu0
    %v1270 = vadd.f32 0.0, %v1269
    %v1271 = vpop.f32.mrb[0].mxu0
    %v1272 = vadd.f32 0.0, %v1271
    %v1273 = vpop.f32.mrb[0].mxu0
    %v1274 = vadd.f32 0.0, %v1273
    %v1275 = vpop.f32.mrb[0].mxu0
    %v1276 = vadd.f32 0.0, %v1275
    %1277 = vmatprep.mubr.bf16.mxu0 0
    %1278 = vmatmul.mubr.bf16.gmra.mrb[0].mxu0 %v1159
    %v1279 = vpop.f32.mrb[0].mxu0
    %v1280 = vadd.f32 0.0, %v1279
    %v1281 = vpop.f32.mrb[0].mxu0
    %v1282 = vadd.f32 0.0, %v1281
    %v1283 = vpop.f32.mrb[0].mxu0
    %v1284 = vadd.f32 0.0, %v1283
    %v1285 = vpop.f32.mrb[0].mxu0
    %v1286 = vadd.f32 0.0, %v1285
    %1287 = vmatprep.mubr.bf16.mxu0 0
    %1288 = vmatmul.mubr.bf16.gmra.mrb[0].mxu0 %v1162
    %v1289 = vpop.f32.mrb[0].mxu0
    %v1290 = vadd.f32 0.0, %v1289
    %v1291 = vpop.f32.mrb[0].mxu0
    %v1292 = vadd.f32 0.0, %v1291
    %v1293 = vpop.f32.mrb[0].mxu0
    %v1294 = vadd.f32 0.0, %v1293
    %v1295 = vpop.f32.mrb[0].mxu0
    %v1296 = vadd.f32 0.0, %v1295
    %1297 = vdwg.mxu0
    %1298 = vmatprep.subr.bf16.mxu0 %v1095
    %1299 = vmatpush1.bf16.msra.mxu0 %v1094
    %1300 = vmatprep.subr.bf16.mxu0 %v1105
    %1301 = vmatpush1.bf16.msra.mxu0 %v1104
    %1302 = vmatprep.subr.bf16.mxu0 %v1175
    %1303 = vmatpush1.bf16.msra.mxu0 %v1172
    %1304 = vmatprep.subr.bf16.mxu0 0
    %1305 = vmatpush1.bf16.msra.mxu0 0
    %1306 = vmatprep.subr.bf16.mxu0 0
    %1307 = vmatpush1.bf16.msra.mxu0 0
    %1308 = vmatprep.subr.bf16.mxu0 0
    %1309 = vmatpush1.bf16.msra.mxu0 0
    %1310 = vmatprep.subr.bf16.mxu0 0
    %1311 = vmatpush1.bf16.msra.mxu0 0
    %1312 = vmatprep.subr.bf16.mxu0 0
    %1313 = vmatpush1.bf16.msra.mxu0 0
    %1314 = vmatprep.subr.bf16.mxu0 0
    %1315 = vmatpush1.bf16.msra.mxu0 0
    %1316 = vmatprep.subr.bf16.mxu0 0
    %1317 = vmatpush1.bf16.msra.mxu0 0
    %1318 = vmatprep.subr.bf16.mxu0 0
    %1319 = vmatpush1.bf16.msra.mxu0 0
    %1320 = vmatprep.subr.bf16.mxu0 0
    %1321 = vmatpush1.bf16.msra.mxu0 0
    %1322 = vmatprep.subr.bf16.mxu0 0
    %1323 = vmatpush1.bf16.msra.mxu0 0
    %1324 = vmatprep.subr.bf16.mxu0 0
    %1325 = vmatpush1.bf16.msra.mxu0 0
    %1326 = vmatprep.subr.bf16.mxu0 0
    %1327 = vmatpush1.bf16.msra.mxu0 0
    %1328 = vmatprep.subr.bf16.mxu0 0
    %1329 = vmatpush1.bf16.msra.mxu0 0
    %1330 = vmatprep.mubr.bf16.mxu0 0
    %1331 = vmatmul.mubr.bf16.gmra.mrb[0].mxu0 %v1144
    %v1332 = vpop.f32.mrb[0].mxu0
    %v1333 = vadd.f32 0.0, %v1332
    %v1334 = vpop.f32.mrb[0].mxu0
    %v1335 = vadd.f32 0.0, %v1334
    %v1336 = vpop.f32.mrb[0].mxu0
    %v1337 = vadd.f32 0.0, %v1336
    %v1338 = vpop.f32.mrb[0].mxu0
    %v1339 = vadd.f32 0.0, %v1338
    %1340 = vmatprep.mubr.bf16.mxu0 0
    %1341 = vmatmul.mubr.bf16.gmra.mrb[0].mxu0 %v1147
    %v1342 = vpop.f32.mrb[0].mxu0
    %v1343 = vadd.f32 0.0, %v1342
    %v1344 = vpop.f32.mrb[0].mxu0
    %v1345 = vadd.f32 0.0, %v1344
    %v1346 = vpop.f32.mrb[0].mxu0
    %v1347 = vadd.f32 0.0, %v1346
    %v1348 = vpop.f32.mrb[0].mxu0
    %v1349 = vadd.f32 0.0, %v1348
    %1350 = vmatprep.mubr.bf16.mxu0 0
    %1351 = vmatmul.mubr.bf16.gmra.mrb[0].mxu0 %v1150
    %v1352 = vpop.f32.mrb[0].mxu0
    %v1353 = vadd.f32 0.0, %v1352
    %v1354 = vpop.f32.mrb[0].mxu0
    %v1355 = vadd.f32 0.0, %v1354
    %v1356 = vpop.f32.mrb[0].mxu0
    %v1357 = vadd.f32 0.0, %v1356
    %v1358 = vpop.f32.mrb[0].mxu0
    %v1359 = vadd.f32 0.0, %v1358
    %1360 = vmatprep.mubr.bf16.mxu0 0
    %1361 = vmatmul.mubr.bf16.gmra.mrb[0].mxu0 %v1153
    %v1362 = vpop.f32.mrb[0].mxu0
    %v1363 = vadd.f32 0.0, %v1362
    %v1364 = vpop.f32.mrb[0].mxu0
    %v1365 = vadd.f32 0.0, %v1364
    %v1366 = vpop.f32.mrb[0].mxu0
    %v1367 = vadd.f32 0.0, %v1366
    %v1368 = vpop.f32.mrb[0].mxu0
    %v1369 = vadd.f32 0.0, %v1368
    %1370 = vmatprep.mubr.bf16.mxu0 0
    %1371 = vmatmul.mubr.bf16.gmra.mrb[0].mxu0 %v1156
    %v1372 = vpop.f32.mrb[0].mxu0
    %v1373 = vadd.f32 0.0, %v1372
    %v1374 = vpop.f32.mrb[0].mxu0
    %v1375 = vadd.f32 0.0, %v1374
    %v1376 = vpop.f32.mrb[0].mxu0
    %v1377 = vadd.f32 0.0, %v1376
    %v1378 = vpop.f32.mrb[0].mxu0
    %v1379 = vadd.f32 0.0, %v1378
    %1380 = vmatprep.mubr.bf16.mxu0 0
    %1381 = vmatmul.mubr.bf16.gmra.mrb[0].mxu0 %v1159
    %v1382 = vpop.f32.mrb[0].mxu0
    %v1383 = vadd.f32 0.0, %v1382
    %v1384 = vpop.f32.mrb[0].mxu0
    %v1385 = vadd.f32 0.0, %v1384
    %v1386 = vpop.f32.mrb[0].mxu0
    %v1387 = vadd.f32 0.0, %v1386
    %v1388 = vpop.f32.mrb[0].mxu0
    %v1389 = vadd.f32 0.0, %v1388
    %1390 = vmatprep.mubr.bf16.mxu0 0
    %1391 = vmatmul.mubr.bf16.gmra.mrb[0].mxu0 %v1162
    %v1392 = vpop.f32.mrb[0].mxu0
    %v1393 = vadd.f32 0.0, %v1392
    %v1394 = vpop.f32.mrb[0].mxu0
    %v1395 = vadd.f32 0.0, %v1394
    %v1396 = vpop.f32.mrb[0].mxu0
    %v1397 = vadd.f32 0.0, %v1396
    %v1398 = vpop.f32.mrb[0].mxu0
    %v1399 = vadd.f32 0.0, %v1398
    %1400 = vdwg.mxu0
    %1401 = vmatprep.subr.bf16.mxu0 %v1097
    %1402 = vmatpush1.bf16.msra.mxu0 %v1096
    %1403 = vmatprep.subr.bf16.mxu0 %v1107
    %1404 = vmatpush1.bf16.msra.mxu0 %v1106
    %1405 = vmatprep.subr.bf16.mxu0 %v1181
    %1406 = vmatpush1.bf16.msra.mxu0 %v1178
    %1407 = vmatprep.subr.bf16.mxu0 0
    %1408 = vmatpush1.bf16.msra.mxu0 0
    %1409 = vmatprep.subr.bf16.mxu0 0
    %1410 = vmatpush1.bf16.msra.mxu0 0
    %1411 = vmatprep.subr.bf16.mxu0 0
    %1412 = vmatpush1.bf16.msra.mxu0 0
    %1413 = vmatprep.subr.bf16.mxu0 0
    %1414 = vmatpush1.bf16.msra.mxu0 0
    %1415 = vmatprep.subr.bf16.mxu0 0
    %1416 = vmatpush1.bf16.msra.mxu0 0
    %1417 = vmatprep.subr.bf16.mxu0 0
    %1418 = vmatpush1.bf16.msra.mxu0 0
    %1419 = vmatprep.subr.bf16.mxu0 0
    %1420 = vmatpush1.bf16.msra.mxu0 0
    %1421 = vmatprep.subr.bf16.mxu0 0
    %1422 = vmatpush1.bf16.msra.mxu0 0
    %1423 = vmatprep.subr.bf16.mxu0 0
    %1424 = vmatpush1.bf16.msra.mxu0 0
    %1425 = vmatprep.subr.bf16.mxu0 0
    %1426 = vmatpush1.bf16.msra.mxu0 0
    %1427 = vmatprep.subr.bf16.mxu0 0
    %1428 = vmatpush1.bf16.msra.mxu0 0
    %1429 = vmatprep.subr.bf16.mxu0 0
    %1430 = vmatpush1.bf16.msra.mxu0 0
    %1431 = vmatprep.subr.bf16.mxu0 0
    %1432 = vmatpush1.bf16.msra.mxu0 0
    %1433 = vmatprep.mubr.bf16.mxu0 0
    %1434 = vmatmul.mubr.bf16.gmra.mrb[0].mxu0 %v1144
    %v1435 = vpop.f32.mrb[0].mxu0
    %v1436 = vadd.f32 0.0, %v1435
    %v1437 = vpop.f32.mrb[0].mxu0
    %v1438 = vadd.f32 0.0, %v1437
    %v1439 = vpop.f32.mrb[0].mxu0
    %v1440 = vadd.f32 0.0, %v1439
    %v1441 = vpop.f32.mrb[0].mxu0
    %v1442 = vadd.f32 0.0, %v1441
    %1443 = vmatprep.mubr.bf16.mxu0 0
    %1444 = vmatmul.mubr.bf16.gmra.mrb[0].mxu0 %v1147
    %v1445 = vpop.f32.mrb[0].mxu0
    %v1446 = vadd.f32 0.0, %v1445
    %v1447 = vpop.f32.mrb[0].mxu0
    %v1448 = vadd.f32 0.0, %v1447
    %v1449 = vpop.f32.mrb[0].mxu0
    %v1450 = vadd.f32 0.0, %v1449
    %v1451 = vpop.f32.mrb[0].mxu0
    %v1452 = vadd.f32 0.0, %v1451
    %1453 = vmatprep.mubr.bf16.mxu0 0
    %1454 = vmatmul.mubr.bf16.gmra.mrb[0].mxu0 %v1150
    %v1455 = vpop.f32.mrb[0].mxu0
    %v1456 = vadd.f32 0.0, %v1455
    %v1457 = vpop.f32.mrb[0].mxu0
    %v1458 = vadd.f32 0.0, %v1457
    %v1459 = vpop.f32.mrb[0].mxu0
    %v1460 = vadd.f32 0.0, %v1459
    %v1461 = vpop.f32.mrb[0].mxu0
    %v1462 = vadd.f32 0.0, %v1461
    %1463 = vmatprep.mubr.bf16.mxu0 0
    %1464 = vmatmul.mubr.bf16.gmra.mrb[0].mxu0 %v1153
    %v1465 = vpop.f32.mrb[0].mxu0
    %v1466 = vadd.f32 0.0, %v1465
    %v1467 = vpop.f32.mrb[0].mxu0
    %v1468 = vadd.f32 0.0, %v1467
    %v1469 = vpop.f32.mrb[0].mxu0
    %v1470 = vadd.f32 0.0, %v1469
    %v1471 = vpop.f32.mrb[0].mxu0
    %v1472 = vadd.f32 0.0, %v1471
    %1473 = vmatprep.mubr.bf16.mxu0 0
    %1474 = vmatmul.mubr.bf16.gmra.mrb[0].mxu0 %v1156
    %v1475 = vpop.f32.mrb[0].mxu0
    %v1476 = vadd.f32 0.0, %v1475
    %v1477 = vpop.f32.mrb[0].mxu0
    %v1478 = vadd.f32 0.0, %v1477
    %v1479 = vpop.f32.mrb[0].mxu0
    %v1480 = vadd.f32 0.0, %v1479
    %v1481 = vpop.f32.mrb[0].mxu0
    %v1482 = vadd.f32 0.0, %v1481
    %1483 = vmatprep.mubr.bf16.mxu0 0
    %1484 = vmatmul.mubr.bf16.gmra.mrb[0].mxu0 %v1159
    %v1485 = vpop.f32.mrb[0].mxu0
    %v1486 = vadd.f32 0.0, %v1485
    %v1487 = vpop.f32.mrb[0].mxu0
    %v1488 = vadd.f32 0.0, %v1487
    %v1489 = vpop.f32.mrb[0].mxu0
    %v1490 = vadd.f32 0.0, %v1489
    %v1491 = vpop.f32.mrb[0].mxu0
    %v1492 = vadd.f32 0.0, %v1491
    %1493 = vmatprep.mubr.bf16.mxu0 0
    %1494 = vmatmul.mubr.bf16.gmra.mrb[0].mxu0 %v1162
    %v1495 = vpop.f32.mrb[0].mxu0
    %v1496 = vadd.f32 0.0, %v1495
    %v1497 = vpop.f32.mrb[0].mxu0
    %v1498 = vadd.f32 0.0, %v1497
    %v1499 = vpop.f32.mrb[0].mxu0
    %v1500 = vadd.f32 0.0, %v1499
    %v1501 = vpop.f32.mrb[0].mxu0
    %v1502 = vadd.f32 0.0, %v1501
    %1503 = vdwg.mxu0
    %1504 = vmatprep.subr.bf16.mxu0 %v1099
    %1505 = vmatpush1.bf16.msra.mxu0 %v1098
    %1506 = vmatprep.subr.bf16.mxu0 %v1109
    %1507 = vmatpush1.bf16.msra.mxu0 %v1108
    %1508 = vmatprep.subr.bf16.mxu0 %v1187
    %1509 = vmatpush1.bf16.msra.mxu0 %v1184
    %1510 = vmatprep.subr.bf16.mxu0 0
    %1511 = vmatpush1.bf16.msra.mxu0 0
    %1512 = vmatprep.subr.bf16.mxu0 0
    %1513 = vmatpush1.bf16.msra.mxu0 0
    %1514 = vmatprep.subr.bf16.mxu0 0
    %1515 = vmatpush1.bf16.msra.mxu0 0
    %1516 = vmatprep.subr.bf16.mxu0 0
    %1517 = vmatpush1.bf16.msra.mxu0 0
    %1518 = vmatprep.subr.bf16.mxu0 0
    %1519 = vmatpush1.bf16.msra.mxu0 0
    %1520 = vmatprep.subr.bf16.mxu0 0
    %1521 = vmatpush1.bf16.msra.mxu0 0
    %1522 = vmatprep.subr.bf16.mxu0 0
    %1523 = vmatpush1.bf16.msra.mxu0 0
    %1524 = vmatprep.subr.bf16.mxu0 0
    %1525 = vmatpush1.bf16.msra.mxu0 0
    %1526 = vmatprep.subr.bf16.mxu0 0
    %1527 = vmatpush1.bf16.msra.mxu0 0
    %1528 = vmatprep.subr.bf16.mxu0 0
    %1529 = vmatpush1.bf16.msra.mxu0 0
    %1530 = vmatprep.subr.bf16.mxu0 0
    %1531 = vmatpush1.bf16.msra.mxu0 0
    %1532 = vmatprep.subr.bf16.mxu0 0
    %1533 = vmatpush1.bf16.msra.mxu0 0
    %1534 = vmatprep.subr.bf16.mxu0 0
    %1535 = vmatpush1.bf16.msra.mxu0 0
    %1536 = vmatprep.mubr.bf16.mxu0 0
    %1537 = vmatmul.mubr.bf16.gmra.mrb[0].mxu0 %v1144
    %v1538 = vpop.f32.mrb[0].mxu0
    %v1539 = vadd.f32 0.0, %v1538
    %v1540 = vpop.f32.mrb[0].mxu0
    %v1541 = vadd.f32 0.0, %v1540
    %v1542 = vpop.f32.mrb[0].mxu0
    %v1543 = vadd.f32 0.0, %v1542
    %v1544 = vpop.f32.mrb[0].mxu0
    %v1545 = vadd.f32 0.0, %v1544
    %1546 = vmatprep.mubr.bf16.mxu0 0
    %1547 = vmatmul.mubr.bf16.gmra.mrb[0].mxu0 %v1147
    %v1548 = vpop.f32.mrb[0].mxu0
    %v1549 = vadd.f32 0.0, %v1548
    %v1550 = vpop.f32.mrb[0].mxu0
    %v1551 = vadd.f32 0.0, %v1550
    %v1552 = vpop.f32.mrb[0].mxu0
    %v1553 = vadd.f32 0.0, %v1552
    %v1554 = vpop.f32.mrb[0].mxu0
    %v1555 = vadd.f32 0.0, %v1554
    %1556 = vmatprep.mubr.bf16.mxu0 0
    %1557 = vmatmul.mubr.bf16.gmra.mrb[0].mxu0 %v1150
    %v1558 = vpop.f32.mrb[0].mxu0
    %v1559 = vadd.f32 0.0, %v1558
    %v1560 = vpop.f32.mrb[0].mxu0
    %v1561 = vadd.f32 0.0, %v1560
    %v1562 = vpop.f32.mrb[0].mxu0
    %v1563 = vadd.f32 0.0, %v1562
    %v1564 = vpop.f32.mrb[0].mxu0
    %v1565 = vadd.f32 0.0, %v1564
    %1566 = vmatprep.mubr.bf16.mxu0 0
    %1567 = vmatmul.mubr.bf16.gmra.mrb[0].mxu0 %v1153
    %v1568 = vpop.f32.mrb[0].mxu0
    %v1569 = vadd.f32 0.0, %v1568
    %v1570 = vpop.f32.mrb[0].mxu0
    %v1571 = vadd.f32 0.0, %v1570
    %v1572 = vpop.f32.mrb[0].mxu0
    %v1573 = vadd.f32 0.0, %v1572
    %v1574 = vpop.f32.mrb[0].mxu0
    %v1575 = vadd.f32 0.0, %v1574
    %1576 = vmatprep.mubr.bf16.mxu0 0
    %1577 = vmatmul.mubr.bf16.gmra.mrb[0].mxu0 %v1156
    %v1578 = vpop.f32.mrb[0].mxu0
    %v1579 = vadd.f32 0.0, %v1578
    %v1580 = vpop.f32.mrb[0].mxu0
    %v1581 = vadd.f32 0.0, %v1580
    %v1582 = vpop.f32.mrb[0].mxu0
    %v1583 = vadd.f32 0.0, %v1582
    %v1584 = vpop.f32.mrb[0].mxu0
    %v1585 = vadd.f32 0.0, %v1584
    %1586 = vmatprep.mubr.bf16.mxu0 0
    %1587 = vmatmul.mubr.bf16.gmra.mrb[0].mxu0 %v1159
    %v1588 = vpop.f32.mrb[0].mxu0
    %v1589 = vadd.f32 0.0, %v1588
    %v1590 = vpop.f32.mrb[0].mxu0
    %v1591 = vadd.f32 0.0, %v1590
    %v1592 = vpop.f32.mrb[0].mxu0
    %v1593 = vadd.f32 0.0, %v1592
    %v1594 = vpop.f32.mrb[0].mxu0
    %v1595 = vadd.f32 0.0, %v1594
    %1596 = vmatprep.mubr.bf16.mxu0 0
    %1597 = vmatmul.mubr.bf16.gmra.mrb[0].mxu0 %v1162
    %v1598 = vpop.f32.mrb[0].mxu0
    %v1599 = vadd.f32 0.0, %v1598
    %v1600 = vpop.f32.mrb[0].mxu0
    %v1601 = vadd.f32 0.0, %v1600
    %v1602 = vpop.f32.mrb[0].mxu0
    %v1603 = vadd.f32 0.0, %v1602
    %v1604 = vpop.f32.mrb[0].mxu0
    %v1605 = vadd.f32 0.0, %v1604
    %1606 = vdwg.mxu0
    %1607 = vmatprep.subr.bf16.mxu0 %v1101
    %1608 = vmatpush1.bf16.msra.mxu0 %v1100
    %1609 = vmatprep.subr.bf16.mxu0 %v1111
    %1610 = vmatpush1.bf16.msra.mxu0 %v1110
    %1611 = vmatprep.subr.bf16.mxu0 %v1193
    %1612 = vmatpush1.bf16.msra.mxu0 %v1190
    %1613 = vmatprep.subr.bf16.mxu0 0
    %1614 = vmatpush1.bf16.msra.mxu0 0
    %1615 = vmatprep.subr.bf16.mxu0 0
    %1616 = vmatpush1.bf16.msra.mxu0 0
    %1617 = vmatprep.subr.bf16.mxu0 0
    %1618 = vmatpush1.bf16.msra.mxu0 0
    %1619 = vmatprep.subr.bf16.mxu0 0
    %1620 = vmatpush1.bf16.msra.mxu0 0
    %1621 = vmatprep.subr.bf16.mxu0 0
    %1622 = vmatpush1.bf16.msra.mxu0 0
    %1623 = vmatprep.subr.bf16.mxu0 0
    %1624 = vmatpush1.bf16.msra.mxu0 0
    %1625 = vmatprep.subr.bf16.mxu0 0
    %1626 = vmatpush1.bf16.msra.mxu0 0
    %1627 = vmatprep.subr.bf16.mxu0 0
    %1628 = vmatpush1.bf16.msra.mxu0 0
    %1629 = vmatprep.subr.bf16.mxu0 0
    %1630 = vmatpush1.bf16.msra.mxu0 0
    %1631 = vmatprep.subr.bf16.mxu0 0
    %1632 = vmatpush1.bf16.msra.mxu0 0
    %1633 = vmatprep.subr.bf16.mxu0 0
    %1634 = vmatpush1.bf16.msra.mxu0 0
    %1635 = vmatprep.subr.bf16.mxu0 0
    %1636 = vmatpush1.bf16.msra.mxu0 0
    %1637 = vmatprep.subr.bf16.mxu0 0
    %1638 = vmatpush1.bf16.msra.mxu0 0
    %1639 = vmatprep.mubr.bf16.mxu0 0
    %1640 = vmatmul.mubr.bf16.gmra.mrb[0].mxu0 %v1144
    %v1641 = vpop.f32.mrb[0].mxu0
    %v1642 = vadd.f32 0.0, %v1641
    %v1643 = vpop.f32.mrb[0].mxu0
    %v1644 = vadd.f32 0.0, %v1643
    %v1645 = vpop.f32.mrb[0].mxu0
    %v1646 = vadd.f32 0.0, %v1645
    %v1647 = vpop.f32.mrb[0].mxu0
    %v1648 = vadd.f32 0.0, %v1647
    %1649 = vmatprep.mubr.bf16.mxu0 0
    %1650 = vmatmul.mubr.bf16.gmra.mrb[0].mxu0 %v1147
    %v1651 = vpop.f32.mrb[0].mxu0
    %v1652 = vadd.f32 0.0, %v1651
    %v1653 = vpop.f32.mrb[0].mxu0
    %v1654 = vadd.f32 0.0, %v1653
    %v1655 = vpop.f32.mrb[0].mxu0
    %v1656 = vadd.f32 0.0, %v1655
    %v1657 = vpop.f32.mrb[0].mxu0
    %v1658 = vadd.f32 0.0, %v1657
    %1659 = vmatprep.mubr.bf16.mxu0 0
    %1660 = vmatmul.mubr.bf16.gmra.mrb[0].mxu0 %v1150
    %v1661 = vpop.f32.mrb[0].mxu0
    %v1662 = vadd.f32 0.0, %v1661
    %v1663 = vpop.f32.mrb[0].mxu0
    %v1664 = vadd.f32 0.0, %v1663
    %v1665 = vpop.f32.mrb[0].mxu0
    %v1666 = vadd.f32 0.0, %v1665
    %v1667 = vpop.f32.mrb[0].mxu0
    %v1668 = vadd.f32 0.0, %v1667
    %1669 = vmatprep.mubr.bf16.mxu0 0
    %1670 = vmatmul.mubr.bf16.gmra.mrb[0].mxu0 %v1153
    %v1671 = vpop.f32.mrb[0].mxu0
    %v1672 = vadd.f32 0.0, %v1671
    %v1673 = vpop.f32.mrb[0].mxu0
    %v1674 = vadd.f32 0.0, %v1673
    %v1675 = vpop.f32.mrb[0].mxu0
    %v1676 = vadd.f32 0.0, %v1675
    %v1677 = vpop.f32.mrb[0].mxu0
    %v1678 = vadd.f32 0.0, %v1677
    %1679 = vmatprep.mubr.bf16.mxu0 0
    %1680 = vmatmul.mubr.bf16.gmra.mrb[0].mxu0 %v1156
    %v1681 = vpop.f32.mrb[0].mxu0
    %v1682 = vadd.f32 0.0, %v1681
    %v1683 = vpop.f32.mrb[0].mxu0
    %v1684 = vadd.f32 0.0, %v1683
    %v1685 = vpop.f32.mrb[0].mxu0
    %v1686 = vadd.f32 0.0, %v1685
    %v1687 = vpop.f32.mrb[0].mxu0
    %v1688 = vadd.f32 0.0, %v1687
    %1689 = vmatprep.mubr.bf16.mxu0 0
    %1690 = vmatmul.mubr.bf16.gmra.mrb[0].mxu0 %v1159
    %v1691 = vpop.f32.mrb[0].mxu0
    %v1692 = vadd.f32 0.0, %v1691
    %v1693 = vpop.f32.mrb[0].mxu0
    %v1694 = vadd.f32 0.0, %v1693
    %v1695 = vpop.f32.mrb[0].mxu0
    %v1696 = vadd.f32 0.0, %v1695
    %v1697 = vpop.f32.mrb[0].mxu0
    %v1698 = vadd.f32 0.0, %v1697
    %1699 = vmatprep.mubr.bf16.mxu0 0
    %1700 = vmatmul.mubr.bf16.gmra.mrb[0].mxu0 %v1162
    %v1701 = vpop.f32.mrb[0].mxu0
    %v1702 = vadd.f32 0.0, %v1701
    %v1703 = vpop.f32.mrb[0].mxu0
    %v1704 = vadd.f32 0.0, %v1703
    %v1705 = vpop.f32.mrb[0].mxu0
    %v1706 = vadd.f32 0.0, %v1705
    %v1707 = vpop.f32.mrb[0].mxu0
    %v1708 = vadd.f32 0.0, %v1707
    %1709 = vdwg.mxu0
    %v1710 = vmax.f32 %v1230, %v1438
    %v1711 = vmax.f32 %v1232, %v1539
    %v1712 = vmax.f32 %v1333, %v1541
    %v1713 = vmax.f32 %v1335, %v1642
    %v1714 = vmax.f32 %v1436, %v1644
    %v1715 = vmax.f32 %v1234, %v1442
    %v1716 = vmax.f32 %v1236, %v1543
    %v1717 = vmax.f32 %v1337, %v1545
    %v1718 = vmax.f32 %v1339, %v1646
    %v1719 = vmax.f32 %v1440, %v1648
    %v1720 = vmax.f32 %v1240, %v1448
    %v1721 = vmax.f32 %v1242, %v1549
    %v1722 = vmax.f32 %v1343, %v1551
    %v1723 = vmax.f32 %v1345, %v1652
    %v1724 = vmax.f32 %v1446, %v1654
    %v1725 = vmax.f32 %v1244, %v1452
    %v1726 = vmax.f32 %v1246, %v1553
    %v1727 = vmax.f32 %v1347, %v1555
    %v1728 = vmax.f32 %v1349, %v1656
    %v1729 = vmax.f32 %v1450, %v1658
    %v1730 = vmax.f32 %v1250, %v1458
    %v1731 = vmax.f32 %v1252, %v1559
    %v1732 = vmax.f32 %v1353, %v1561
    %v1733 = vmax.f32 %v1355, %v1662
    %v1734 = vmax.f32 %v1456, %v1664
    %v1735 = vmax.f32 %v1254, %v1462
    %v1736 = vmax.f32 %v1256, %v1563
    %v1737 = vmax.f32 %v1357, %v1565
    %v1738 = vmax.f32 %v1359, %v1666
    %v1739 = vmax.f32 %v1460, %v1668
    %v1740 = vmax.f32 %v1260, %v1468
    %v1741 = vmax.f32 %v1262, %v1569
    %v1742 = vmax.f32 %v1363, %v1571
    %v1743 = vmax.f32 %v1365, %v1672
    %v1744 = vmax.f32 %v1466, %v1674
    %v1745 = vmax.f32 %v1264, %v1472
    %v1746 = vmax.f32 %v1266, %v1573
    %v1747 = vmax.f32 %v1367, %v1575
    %v1748 = vmax.f32 %v1369, %v1676
    %v1749 = vmax.f32 %v1470, %v1678
    %v1750 = vmax.f32 %v1270, %v1478
    %v1751 = vmax.f32 %v1272, %v1579
    %v1752 = vmax.f32 %v1373, %v1581
    %v1753 = vmax.f32 %v1375, %v1682
    %v1754 = vmax.f32 %v1476, %v1684
    %v1755 = vmax.f32 %v1274, %v1482
    %v1756 = vmax.f32 %v1276, %v1583
    %v1757 = vmax.f32 %v1377, %v1585
    %v1758 = vmax.f32 %v1379, %v1686
    %v1759 = vmax.f32 %v1480, %v1688
    %v1760 = vmax.f32 %v1280, %v1488
    %v1761 = vmax.f32 %v1282, %v1589
    %v1762 = vmax.f32 %v1383, %v1591
    %v1763 = vmax.f32 %v1385, %v1692
    %v1764 = vmax.f32 %v1486, %v1694
    %v1765 = vmax.f32 %v1284, %v1492
    %v1766 = vmax.f32 %v1286, %v1593
    %v1767 = vmax.f32 %v1387, %v1595
    %v1768 = vmax.f32 %v1389, %v1696
    %v1769 = vmax.f32 %v1490, %v1698
    %v1770 = vmax.f32 %v1290, %v1498
    %v1771 = vmax.f32 %v1292, %v1599
    %v1772 = vmax.f32 %v1393, %v1601
    %v1773 = vmax.f32 %v1395, %v1702
    %v1774 = vmax.f32 %v1496, %v1704
    %v1775 = vmax.f32 %v1294, %v1502
    %v1776 = vmax.f32 %v1296, %v1603
    %v1777 = vmax.f32 %v1397, %v1605
    %v1778 = vmax.f32 %v1399, %v1706
    %v1779 = vmax.f32 %v1500, %v1708
    %v1780 = vld [vmem:[#allocation13] sm:$0xf]
    %v1781 = vld [vmem:[#allocation13 + $0x4] sm:$0xf]
    %v1782 = vld [vmem:[#allocation13 + $0x8] sm:$0xf]
    %v1783 = vld [vmem:[#allocation13 + $0xc] sm:$0xf]
    %v1784 = vld [vmem:[#allocation13 + $0x10] sm:$0xf]
    %v1785 = vld [vmem:[#allocation13 + $0x14] sm:$0xf]
    %v1786 = vpack.c.bf16 %v1715, %v1710
    %v1787 = vpack.c.bf16 %v1716, %v1711
    %v1788 = vpack.c.bf16 %v1717, %v1712
    %v1789 = vpack.c.bf16 %v1718, %v1713
    %v1790 = vpack.c.bf16 %v1719, %v1714
    %v1791 = vpack.c.bf16 %v1725, %v1720
    %v1792 = vpack.c.bf16 %v1726, %v1721
    %v1793 = vpack.c.bf16 %v1727, %v1722
    %v1794 = vpack.c.bf16 %v1728, %v1723
    %v1795 = vpack.c.bf16 %v1729, %v1724
    %v1796 = vpack.c.bf16 %v1735, %v1730
    %v1797 = vpack.c.bf16 %v1736, %v1731
    %v1798 = vpack.c.bf16 %v1737, %v1732
    %v1799 = vpack.c.bf16 %v1738, %v1733
    %v1800 = vpack.c.bf16 %v1739, %v1734
    %v1801 = vpack.c.bf16 %v1745, %v1740
    %v1802 = vpack.c.bf16 %v1746, %v1741
    %v1803 = vpack.c.bf16 %v1747, %v1742
    %v1804 = vpack.c.bf16 %v1748, %v1743
    %v1805 = vpack.c.bf16 %v1749, %v1744
    %v1806 = vpack.c.bf16 %v1755, %v1750
    %v1807 = vpack.c.bf16 %v1756, %v1751
    %v1808 = vpack.c.bf16 %v1757, %v1752
    %v1809 = vpack.c.bf16 %v1758, %v1753
    %v1810 = vpack.c.bf16 %v1759, %v1754
    %v1811 = vpack.c.bf16 %v1765, %v1760
    %v1812 = vpack.c.bf16 %v1766, %v1761
    %v1813 = vpack.c.bf16 %v1767, %v1762
    %v1814 = vpack.c.bf16 %v1768, %v1763
    %v1815 = vpack.c.bf16 %v1769, %v1764
    %v1816 = vpack.c.bf16 %v1775, %v1770
    %v1817 = vpack.c.bf16 %v1776, %v1771
    %v1818 = vpack.c.bf16 %v1777, %v1772
    %v1819 = vpack.c.bf16 %v1778, %v1773
    %v1820 = vpack.c.bf16 %v1779, %v1774
    %v1827 = vunpack.c.l.b16 %v1780
    %v1828 = vunpack.c.l.b16 %v1781
    %v1829 = vunpack.c.l.b16 %v1782
    %v1830 = vunpack.c.l.b16 %v1783
    %v1831 = vunpack.c.l.b16 %v1784
    %v1832 = vunpack.c.l.b16 %v1785
    %v1833 = vpack.c.b16 %v1828, %v1827
    %v1834 = vpack.c.b16 %v1830, %v1829
    %v1835 = vpack.c.b16 %v1832, %v1831
    %vm1836 = vcmask 900096
    %v1838 = vsel %vm1836, %v1833, 0
    %v1841 = vsel %vm1836, %v1834, 0
    %v1844 = vsel %vm1836, %v1835, 0
    %vm1846 = vcmask 1046528
    %v1848 = vsel %vm1846, %v1816, 0
    %v1851 = vsel %vm1846, %v1817, 0
    %v1854 = vsel %vm1846, %v1818, 0
    %v1857 = vsel %vm1846, %v1819, 0
    %v1860 = vsel %vm1846, %v1820, 0
    %1862 = vmatprep.subr.bf16.mxu0 %v1787
    %1863 = vmatpush1.bf16.msra.mxu0 %v1786
    %1864 = vmatprep.subr.bf16.mxu0 %v1792
    %1865 = vmatpush1.bf16.msra.mxu0 %v1791
    %1866 = vmatprep.subr.bf16.mxu0 %v1797
    %1867 = vmatpush1.bf16.msra.mxu0 %v1796
    %1868 = vmatprep.subr.bf16.mxu0 %v1802
    %1869 = vmatpush1.bf16.msra.mxu0 %v1801
    %1870 = vmatprep.subr.bf16.mxu0 %v1807
    %1871 = vmatpush1.bf16.msra.mxu0 %v1806
    %1872 = vmatprep.subr.bf16.mxu0 %v1812
    %1873 = vmatpush1.bf16.msra.mxu0 %v1811
    %1874 = vmatprep.subr.bf16.mxu0 %v1851
    %1875 = vmatpush1.bf16.msra.mxu0 %v1848
    %1876 = vmatprep.subr.bf16.mxu0 0
    %1877 = vmatpush1.bf16.msra.mxu0 0
    %1878 = vmatprep.subr.bf16.mxu0 0
    %1879 = vmatpush1.bf16.msra.mxu0 0
    %1880 = vmatprep.subr.bf16.mxu0 0
    %1881 = vmatpush1.bf16.msra.mxu0 0
    %1882 = vmatprep.subr.bf16.mxu0 0
    %1883 = vmatpush1.bf16.msra.mxu0 0
    %1884 = vmatprep.subr.bf16.mxu0 0
    %1885 = vmatpush1.bf16.msra.mxu0 0
    %1886 = vmatprep.subr.bf16.mxu0 0
    %1887 = vmatpush1.bf16.msra.mxu0 0
    %1888 = vmatprep.subr.bf16.mxu0 0
    %1889 = vmatpush1.bf16.msra.mxu0 0
    %1890 = vmatprep.subr.bf16.mxu0 0
    %1891 = vmatpush1.bf16.msra.mxu0 0
    %1892 = vmatprep.subr.bf16.mxu0 0
    %1893 = vmatpush1.bf16.msra.mxu0 0
    %1894 = vmatprep.mubr.bf16.mxu0 0
    %1895 = vmatmul.mubr.bf16.gmra.mrb[0].mxu0 %v1838
    %v1896 = vpop.f32.mrb[0].mxu0
    %v1897 = vadd.f32 0.0, %v1896
    %v1898 = vpop.f32.mrb[0].mxu0
    %v1899 = vadd.f32 0.0, %v1898
    %v1900 = vpop.f32.mrb[0].mxu0
    %v1901 = vadd.f32 0.0, %v1900
    %v1902 = vpop.f32.mrb[0].mxu0
    %v1903 = vadd.f32 0.0, %v1902
    %1904 = vmatprep.mubr.bf16.mxu0 0
    %1905 = vmatmul.mubr.bf16.gmra.mrb[0].mxu0 %v1841
    %v1906 = vpop.f32.mrb[0].mxu0
    %v1907 = vadd.f32 0.0, %v1906
    %v1908 = vpop.f32.mrb[0].mxu0
    %v1909 = vadd.f32 0.0, %v1908
    %v1910 = vpop.f32.mrb[0].mxu0
    %v1911 = vadd.f32 0.0, %v1910
    %v1912 = vpop.f32.mrb[0].mxu0
    %v1913 = vadd.f32 0.0, %v1912
    %1914 = vmatprep.mubr.bf16.mxu0 0
    %1915 = vmatmul.mubr.bf16.gmra.mrb[0].mxu0 %v1844
    %v1916 = vpop.f32.mrb[0].mxu0
    %v1917 = vadd.f32 0.0, %v1916
    %v1918 = vpop.f32.mrb[0].mxu0
    %v1919 = vadd.f32 0.0, %v1918
    %v1920 = vpop.f32.mrb[0].mxu0
    %v1921 = vadd.f32 0.0, %v1920
    %v1922 = vpop.f32.mrb[0].mxu0
    %v1923 = vadd.f32 0.0, %v1922
    %1924 = vdwg.mxu0
    %1925 = vmatprep.subr.bf16.mxu0 %v1789
    %1926 = vmatpush1.bf16.msra.mxu0 %v1788
    %1927 = vmatprep.subr.bf16.mxu0 %v1794
    %1928 = vmatpush1.bf16.msra.mxu0 %v1793
    %1929 = vmatprep.subr.bf16.mxu0 %v1799
    %1930 = vmatpush1.bf16.msra.mxu0 %v1798
    %1931 = vmatprep.subr.bf16.mxu0 %v1804
    %1932 = vmatpush1.bf16.msra.mxu0 %v1803
    %1933 = vmatprep.subr.bf16.mxu0 %v1809
    %1934 = vmatpush1.bf16.msra.mxu0 %v1808
    %1935 = vmatprep.subr.bf16.mxu0 %v1814
    %1936 = vmatpush1.bf16.msra.mxu0 %v1813
    %1937 = vmatprep.subr.bf16.mxu0 %v1857
    %1938 = vmatpush1.bf16.msra.mxu0 %v1854
    %1939 = vmatprep.subr.bf16.mxu0 0
    %1940 = vmatpush1.bf16.msra.mxu0 0
    %1941 = vmatprep.subr.bf16.mxu0 0
    %1942 = vmatpush1.bf16.msra.mxu0 0
    %1943 = vmatprep.subr.bf16.mxu0 0
    %1944 = vmatpush1.bf16.msra.mxu0 0
    %1945 = vmatprep.subr.bf16.mxu0 0
    %1946 = vmatpush1.bf16.msra.mxu0 0
    %1947 = vmatprep.subr.bf16.mxu0 0
    %1948 = vmatpush1.bf16.msra.mxu0 0
    %1949 = vmatprep.subr.bf16.mxu0 0
    %1950 = vmatpush1.bf16.msra.mxu0 0
    %1951 = vmatprep.subr.bf16.mxu0 0
    %1952 = vmatpush1.bf16.msra.mxu0 0
    %1953 = vmatprep.subr.bf16.mxu0 0
    %1954 = vmatpush1.bf16.msra.mxu0 0
    %1955 = vmatprep.subr.bf16.mxu0 0
    %1956 = vmatpush1.bf16.msra.mxu0 0
    %1957 = vmatprep.mubr.bf16.mxu0 0
    %1958 = vmatmul.mubr.bf16.gmra.mrb[0].mxu0 %v1838
    %v1959 = vpop.f32.mrb[0].mxu0
    %v1960 = vadd.f32 0.0, %v1959
    %v1961 = vpop.f32.mrb[0].mxu0
    %v1962 = vadd.f32 0.0, %v1961
    %v1963 = vpop.f32.mrb[0].mxu0
    %v1964 = vadd.f32 0.0, %v1963
    %v1965 = vpop.f32.mrb[0].mxu0
    %v1966 = vadd.f32 0.0, %v1965
    %1967 = vmatprep.mubr.bf16.mxu0 0
    %1968 = vmatmul.mubr.bf16.gmra.mrb[0].mxu0 %v1841
    %v1969 = vpop.f32.mrb[0].mxu0
    %v1970 = vadd.f32 0.0, %v1969
    %v1971 = vpop.f32.mrb[0].mxu0
    %v1972 = vadd.f32 0.0, %v1971
    %v1973 = vpop.f32.mrb[0].mxu0
    %v1974 = vadd.f32 0.0, %v1973
    %v1975 = vpop.f32.mrb[0].mxu0
    %v1976 = vadd.f32 0.0, %v1975
    %1977 = vmatprep.mubr.bf16.mxu0 0
    %1978 = vmatmul.mubr.bf16.gmra.mrb[0].mxu0 %v1844
    %v1979 = vpop.f32.mrb[0].mxu0
    %v1980 = vadd.f32 0.0, %v1979
    %v1981 = vpop.f32.mrb[0].mxu0
    %v1982 = vadd.f32 0.0, %v1981
    %v1983 = vpop.f32.mrb[0].mxu0
    %v1984 = vadd.f32 0.0, %v1983
    %v1985 = vpop.f32.mrb[0].mxu0
    %v1986 = vadd.f32 0.0, %v1985
    %1987 = vdwg.mxu0
    %1988 = vmatprep.subr.bf16.mxu0 0
    %1989 = vmatpush1.bf16.msra.mxu0 %v1790
    %1990 = vmatprep.subr.bf16.mxu0 0
    %1991 = vmatpush1.bf16.msra.mxu0 %v1795
    %1992 = vmatprep.subr.bf16.mxu0 0
    %1993 = vmatpush1.bf16.msra.mxu0 %v1800
    %1994 = vmatprep.subr.bf16.mxu0 0
    %1995 = vmatpush1.bf16.msra.mxu0 %v1805
    %1996 = vmatprep.subr.bf16.mxu0 0
    %1997 = vmatpush1.bf16.msra.mxu0 %v1810
    %1998 = vmatprep.subr.bf16.mxu0 0
    %1999 = vmatpush1.bf16.msra.mxu0 %v1815
    %2000 = vmatprep.subr.bf16.mxu0 0
    %2001 = vmatpush1.bf16.msra.mxu0 %v1860
    %2002 = vmatprep.subr.bf16.mxu0 0
    %2003 = vmatpush1.bf16.msra.mxu0 0
    %2004 = vmatprep.subr.bf16.mxu0 0
    %2005 = vmatpush1.bf16.msra.mxu0 0
    %2006 = vmatprep.subr.bf16.mxu0 0
    %2007 = vmatpush1.bf16.msra.mxu0 0
    %2008 = vmatprep.subr.bf16.mxu0 0
    %2009 = vmatpush1.bf16.msra.mxu0 0
    %2010 = vmatprep.subr.bf16.mxu0 0
    %2011 = vmatpush1.bf16.msra.mxu0 0
    %2012 = vmatprep.subr.bf16.mxu0 0
    %2013 = vmatpush1.bf16.msra.mxu0 0
    %2014 = vmatprep.subr.bf16.mxu0 0
    %2015 = vmatpush1.bf16.msra.mxu0 0
    %2016 = vmatprep.subr.bf16.mxu0 0
    %2017 = vmatpush1.bf16.msra.mxu0 0
    %2018 = vmatprep.subr.bf16.mxu0 0
    %2019 = vmatpush1.bf16.msra.mxu0 0
    %2020 = vmatprep.mubr.bf16.mxu0 0
    %2021 = vmatmul.mubr.bf16.gmra.mrb[0].mxu0 %v1838
    %v2022 = vpop.f32.mrb[0].mxu0
    %v2023 = vadd.f32 0.0, %v2022
    %v2024 = vpop.f32.mrb[0].mxu0
    %v2025 = vpop.f32.mrb[0].mxu0
    %v2026 = vadd.f32 0.0, %v2025
    %v2027 = vpop.f32.mrb[0].mxu0
    %2028 = vmatprep.mubr.bf16.mxu0 0
    %2029 = vmatmul.mubr.bf16.gmra.mrb[0].mxu0 %v1841
    %v2030 = vpop.f32.mrb[0].mxu0
    %v2031 = vadd.f32 0.0, %v2030
    %v2032 = vpop.f32.mrb[0].mxu0
    %v2033 = vpop.f32.mrb[0].mxu0
    %v2034 = vadd.f32 0.0, %v2033
    %v2035 = vpop.f32.mrb[0].mxu0
    %2036 = vmatprep.mubr.bf16.mxu0 0
    %2037 = vmatmul.mubr.bf16.gmra.mrb[0].mxu0 %v1844
    %v2038 = vpop.f32.mrb[0].mxu0
    %v2039 = vadd.f32 0.0, %v2038
    %v2040 = vpop.f32.mrb[0].mxu0
    %v2041 = vpop.f32.mrb[0].mxu0
    %v2042 = vadd.f32 0.0, %v2041
    %v2043 = vpop.f32.mrb[0].mxu0
    %2044 = vdwg.mxu0
    %v2045 = vld [vmem:[#allocation15] sm:$0xf]
    %v2046 = vld [vmem:[#allocation15 + $0x4] sm:$0xf]
    %v2047 = vld [vmem:[#allocation15 + $0x8] sm:$0xf]
    %v2048 = vld [vmem:[#allocation15 + $0xc] sm:$0xf]
    %v2049 = vld [vmem:[#allocation15 + $0x10] sm:$0xf]
    %v2050 = vld [vmem:[#allocation15 + $0x14] sm:$0xf]
    %v2057 = vunpack.c.l.b16 %v2045
    %v2058 = vunpack.c.l.b16 %v2046
    %v2059 = vunpack.c.l.b16 %v2047
    %v2060 = vunpack.c.l.b16 %v2048
    %v2061 = vunpack.c.l.b16 %v2049
    %v2062 = vunpack.c.l.b16 %v2050
    %v2063 = vpack.c.b16 %v2058, %v2057
    %v2064 = vpack.c.b16 %v2060, %v2059
    %v2065 = vpack.c.b16 %v2062, %v2061
    %v2067 = vsel %vm1836, %v2063, 0
    %v2070 = vsel %vm1836, %v2064, 0
    %v2073 = vsel %vm1836, %v2065, 0
    %2075 = vmatprep.subr.bf16.mxu0 %v1787
    %2076 = vmatpush1.bf16.msra.mxu0 %v1786
    %2077 = vmatprep.subr.bf16.mxu0 %v1792
    %2078 = vmatpush1.bf16.msra.mxu0 %v1791
    %2079 = vmatprep.subr.bf16.mxu0 %v1797
    %2080 = vmatpush1.bf16.msra.mxu0 %v1796
    %2081 = vmatprep.subr.bf16.mxu0 %v1802
    %2082 = vmatpush1.bf16.msra.mxu0 %v1801
    %2083 = vmatprep.subr.bf16.mxu0 %v1807
    %2084 = vmatpush1.bf16.msra.mxu0 %v1806
    %2085 = vmatprep.subr.bf16.mxu0 %v1812
    %2086 = vmatpush1.bf16.msra.mxu0 %v1811
    %2087 = vmatprep.subr.bf16.mxu0 %v1851
    %2088 = vmatpush1.bf16.msra.mxu0 %v1848
    %2089 = vmatprep.subr.bf16.mxu0 0
    %2090 = vmatpush1.bf16.msra.mxu0 0
    %2091 = vmatprep.subr.bf16.mxu0 0
    %2092 = vmatpush1.bf16.msra.mxu0 0
    %2093 = vmatprep.subr.bf16.mxu0 0
    %2094 = vmatpush1.bf16.msra.mxu0 0
    %2095 = vmatprep.subr.bf16.mxu0 0
    %2096 = vmatpush1.bf16.msra.mxu0 0
    %2097 = vmatprep.subr.bf16.mxu0 0
    %2098 = vmatpush1.bf16.msra.mxu0 0
    %2099 = vmatprep.subr.bf16.mxu0 0
    %2100 = vmatpush1.bf16.msra.mxu0 0
    %2101 = vmatprep.subr.bf16.mxu0 0
    %2102 = vmatpush1.bf16.msra.mxu0 0
    %2103 = vmatprep.subr.bf16.mxu0 0
    %2104 = vmatpush1.bf16.msra.mxu0 0
    %2105 = vmatprep.subr.bf16.mxu0 0
    %2106 = vmatpush1.bf16.msra.mxu0 0
    %2107 = vmatprep.mubr.bf16.mxu0 0
    %2108 = vmatmul.mubr.bf16.gmra.mrb[0].mxu0 %v2067
    %v2109 = vpop.f32.mrb[0].mxu0
    %v2110 = vadd.f32 0.0, %v2109
    %v2111 = vpop.f32.mrb[0].mxu0
    %v2112 = vadd.f32 0.0, %v2111
    %v2113 = vpop.f32.mrb[0].mxu0
    %v2114 = vadd.f32 0.0, %v2113
    %v2115 = vpop.f32.mrb[0].mxu0
    %v2116 = vadd.f32 0.0, %v2115
    %2117 = vmatprep.mubr.bf16.mxu0 0
    %2118 = vmatmul.mubr.bf16.gmra.mrb[0].mxu0 %v2070
    %v2119 = vpop.f32.mrb[0].mxu0
    %v2120 = vadd.f32 0.0, %v2119
    %v2121 = vpop.f32.mrb[0].mxu0
    %v2122 = vadd.f32 0.0, %v2121
    %v2123 = vpop.f32.mrb[0].mxu0
    %v2124 = vadd.f32 0.0, %v2123
    %v2125 = vpop.f32.mrb[0].mxu0
    %v2126 = vadd.f32 0.0, %v2125
    %2127 = vmatprep.mubr.bf16.mxu0 0
    %2128 = vmatmul.mubr.bf16.gmra.mrb[0].mxu0 %v2073
    %v2129 = vpop.f32.mrb[0].mxu0
    %v2130 = vadd.f32 0.0, %v2129
    %v2131 = vpop.f32.mrb[0].mxu0
    %v2132 = vadd.f32 0.0, %v2131
    %v2133 = vpop.f32.mrb[0].mxu0
    %v2134 = vadd.f32 0.0, %v2133
    %v2135 = vpop.f32.mrb[0].mxu0
    %v2136 = vadd.f32 0.0, %v2135
    %2137 = vdwg.mxu0
    %2138 = vmatprep.subr.bf16.mxu0 %v1789
    %2139 = vmatpush1.bf16.msra.mxu0 %v1788
    %2140 = vmatprep.subr.bf16.mxu0 %v1794
    %2141 = vmatpush1.bf16.msra.mxu0 %v1793
    %2142 = vmatprep.subr.bf16.mxu0 %v1799
    %2143 = vmatpush1.bf16.msra.mxu0 %v1798
    %2144 = vmatprep.subr.bf16.mxu0 %v1804
    %2145 = vmatpush1.bf16.msra.mxu0 %v1803
    %2146 = vmatprep.subr.bf16.mxu0 %v1809
    %2147 = vmatpush1.bf16.msra.mxu0 %v1808
    %2148 = vmatprep.subr.bf16.mxu0 %v1814
    %2149 = vmatpush1.bf16.msra.mxu0 %v1813
    %2150 = vmatprep.subr.bf16.mxu0 %v1857
    %2151 = vmatpush1.bf16.msra.mxu0 %v1854
    %2152 = vmatprep.subr.bf16.mxu0 0
    %2153 = vmatpush1.bf16.msra.mxu0 0
    %2154 = vmatprep.subr.bf16.mxu0 0
    %2155 = vmatpush1.bf16.msra.mxu0 0
    %2156 = vmatprep.subr.bf16.mxu0 0
    %2157 = vmatpush1.bf16.msra.mxu0 0
    %2158 = vmatprep.subr.bf16.mxu0 0
    %2159 = vmatpush1.bf16.msra.mxu0 0
    %2160 = vmatprep.subr.bf16.mxu0 0
    %2161 = vmatpush1.bf16.msra.mxu0 0
    %2162 = vmatprep.subr.bf16.mxu0 0
    %2163 = vmatpush1.bf16.msra.mxu0 0
    %2164 = vmatprep.subr.bf16.mxu0 0
    %2165 = vmatpush1.bf16.msra.mxu0 0
    %2166 = vmatprep.subr.bf16.mxu0 0
    %2167 = vmatpush1.bf16.msra.mxu0 0
    %2168 = vmatprep.subr.bf16.mxu0 0
    %2169 = vmatpush1.bf16.msra.mxu0 0
    %2170 = vmatprep.mubr.bf16.mxu0 0
    %2171 = vmatmul.mubr.bf16.gmra.mrb[0].mxu0 %v2067
    %v2172 = vpop.f32.mrb[0].mxu0
    %v2173 = vadd.f32 0.0, %v2172
    %v2174 = vpop.f32.mrb[0].mxu0
    %v2175 = vadd.f32 0.0, %v2174
    %v2176 = vpop.f32.mrb[0].mxu0
    %v2177 = vadd.f32 0.0, %v2176
    %v2178 = vpop.f32.mrb[0].mxu0
    %v2179 = vadd.f32 0.0, %v2178
    %2180 = vmatprep.mubr.bf16.mxu0 0
    %2181 = vmatmul.mubr.bf16.gmra.mrb[0].mxu0 %v2070
    %v2182 = vpop.f32.mrb[0].mxu0
    %v2183 = vadd.f32 0.0, %v2182
    %v2184 = vpop.f32.mrb[0].mxu0
    %v2185 = vadd.f32 0.0, %v2184
    %v2186 = vpop.f32.mrb[0].mxu0
    %v2187 = vadd.f32 0.0, %v2186
    %v2188 = vpop.f32.mrb[0].mxu0
    %v2189 = vadd.f32 0.0, %v2188
    %2190 = vmatprep.mubr.bf16.mxu0 0
    %2191 = vmatmul.mubr.bf16.gmra.mrb[0].mxu0 %v2073
    %v2192 = vpop.f32.mrb[0].mxu0
    %v2193 = vadd.f32 0.0, %v2192
    %v2194 = vpop.f32.mrb[0].mxu0
    %v2195 = vadd.f32 0.0, %v2194
    %v2196 = vpop.f32.mrb[0].mxu0
    %v2197 = vadd.f32 0.0, %v2196
    %v2198 = vpop.f32.mrb[0].mxu0
    %v2199 = vadd.f32 0.0, %v2198
    %2200 = vdwg.mxu0
    %2201 = vmatprep.subr.bf16.mxu0 0
    %2202 = vmatpush1.bf16.msra.mxu0 %v1790
    %2203 = vmatprep.subr.bf16.mxu0 0
    %2204 = vmatpush1.bf16.msra.mxu0 %v1795
    %2205 = vmatprep.subr.bf16.mxu0 0
    %2206 = vmatpush1.bf16.msra.mxu0 %v1800
    %2207 = vmatprep.subr.bf16.mxu0 0
    %2208 = vmatpush1.bf16.msra.mxu0 %v1805
    %2209 = vmatprep.subr.bf16.mxu0 0
    %2210 = vmatpush1.bf16.msra.mxu0 %v1810
    %2211 = vmatprep.subr.bf16.mxu0 0
    %2212 = vmatpush1.bf16.msra.mxu0 %v1815
    %2213 = vmatprep.subr.bf16.mxu0 0
    %2214 = vmatpush1.bf16.msra.mxu0 %v1860
    %2215 = vmatprep.subr.bf16.mxu0 0
    %2216 = vmatpush1.bf16.msra.mxu0 0
    %2217 = vmatprep.subr.bf16.mxu0 0
    %2218 = vmatpush1.bf16.msra.mxu0 0
    %2219 = vmatprep.subr.bf16.mxu0 0
    %2220 = vmatpush1.bf16.msra.mxu0 0
    %2221 = vmatprep.subr.bf16.mxu0 0
    %2222 = vmatpush1.bf16.msra.mxu0 0
    %2223 = vmatprep.subr.bf16.mxu0 0
    %2224 = vmatpush1.bf16.msra.mxu0 0
    %2225 = vmatprep.subr.bf16.mxu0 0
    %2226 = vmatpush1.bf16.msra.mxu0 0
    %2227 = vmatprep.subr.bf16.mxu0 0
    %2228 = vmatpush1.bf16.msra.mxu0 0
    %2229 = vmatprep.subr.bf16.mxu0 0
    %2230 = vmatpush1.bf16.msra.mxu0 0
    %2231 = vmatprep.subr.bf16.mxu0 0
    %2232 = vmatpush1.bf16.msra.mxu0 0
    %2233 = vmatprep.mubr.bf16.mxu0 0
    %2234 = vmatmul.mubr.bf16.gmra.mrb[0].mxu0 %v2067
    %v2235 = vpop.f32.mrb[0].mxu0
    %v2236 = vadd.f32 0.0, %v2235
    %v2237 = vpop.f32.mrb[0].mxu0
    %v2238 = vpop.f32.mrb[0].mxu0
    %v2239 = vadd.f32 0.0, %v2238
    %v2240 = vpop.f32.mrb[0].mxu0
    %2241 = vmatprep.mubr.bf16.mxu0 0
    %2242 = vmatmul.mubr.bf16.gmra.mrb[0].mxu0 %v2070
    %v2243 = vpop.f32.mrb[0].mxu0
    %v2244 = vadd.f32 0.0, %v2243
    %v2245 = vpop.f32.mrb[0].mxu0
    %v2246 = vpop.f32.mrb[0].mxu0
    %v2247 = vadd.f32 0.0, %v2246
    %v2248 = vpop.f32.mrb[0].mxu0
    %2249 = vmatprep.mubr.bf16.mxu0 0
    %2250 = vmatmul.mubr.bf16.gmra.mrb[0].mxu0 %v2073
    %v2251 = vpop.f32.mrb[0].mxu0
    %v2252 = vadd.f32 0.0, %v2251
    %v2253 = vpop.f32.mrb[0].mxu0
    %v2254 = vpop.f32.mrb[0].mxu0
    %v2255 = vadd.f32 0.0, %v2254
    %v2256 = vpop.f32.mrb[0].mxu0
    %2257 = vdwg.mxu0
    %v2258 = vmax.f32 %v1897, %v2110
    %v2259 = vmax.f32 %v1899, %v2112
    %v2260 = vmax.f32 %v1960, %v2173
    %v2261 = vmax.f32 %v1962, %v2175
    %v2262 = vmax.f32 %v2023, %v2236
    %v2263 = vmax.f32 %v1901, %v2114
    %v2264 = vmax.f32 %v1903, %v2116
    %v2265 = vmax.f32 %v1964, %v2177
    %v2266 = vmax.f32 %v1966, %v2179
    %v2267 = vmax.f32 %v2026, %v2239
    %v2268 = vmax.f32 %v1907, %v2120
    %v2269 = vmax.f32 %v1909, %v2122
    %v2270 = vmax.f32 %v1970, %v2183
    %v2271 = vmax.f32 %v1972, %v2185
    %v2272 = vmax.f32 %v2031, %v2244
    %v2273 = vmax.f32 %v1911, %v2124
    %v2274 = vmax.f32 %v1913, %v2126
    %v2275 = vmax.f32 %v1974, %v2187
    %v2276 = vmax.f32 %v1976, %v2189
    %v2277 = vmax.f32 %v2034, %v2247
    %v2278 = vmax.f32 %v1917, %v2130
    %v2279 = vmax.f32 %v1919, %v2132
    %v2280 = vmax.f32 %v1980, %v2193
    %v2281 = vmax.f32 %v1982, %v2195
    %v2282 = vmax.f32 %v2039, %v2252
    %v2283 = vmax.f32 %v1921, %v2134
    %v2284 = vmax.f32 %v1923, %v2136
    %v2285 = vmax.f32 %v1984, %v2197
    %v2286 = vmax.f32 %v1986, %v2199
    %v2287 = vmax.f32 %v2042, %v2255
    %v2288 = vld [vmem:[%s13] sm:$0x1f]
    %v2290 = vlaneseq
    %v2291 = vshrl.u32 %v2290, 7
    %v2292 = vsub.s32 0, %v2291
    %v2293 = vrot.slane %v2288, %v2292
    %v2294 = vlaneseq
    %v2295 = vshrl.u32 %v2294, 7
    %v2296 = vsub.s32 1, %v2295
    %v2297 = vrot.slane %v2288, %v2296
    %v2298 = vlaneseq
    %v2299 = vshrl.u32 %v2298, 7
    %v2300 = vsub.s32 2, %v2299
    %v2301 = vrot.slane %v2288, %v2300
    %v2302 = vlaneseq
    %v2303 = vshrl.u32 %v2302, 7
    %v2304 = vsub.s32 3, %v2303
    %v2305 = vrot.slane %v2288, %v2304
    %v2306 = vlaneseq
    %v2307 = vshrl.u32 %v2306, 7
    %v2308 = vsub.s32 4, %v2307
    %v2309 = vrot.slane %v2288, %v2308
    %v2315 = vadd.f32 %v2258, %v2293
    %v2316 = vadd.f32 %v2259, %v2297
    %v2317 = vadd.f32 %v2260, %v2301
    %v2318 = vadd.f32 %v2261, %v2305
    %v2319 = vadd.f32 %v2262, %v2309
    %v2320 = vadd.f32 %v2263, %v2293
    %v2321 = vadd.f32 %v2264, %v2297
    %v2322 = vadd.f32 %v2265, %v2301
    %v2323 = vadd.f32 %v2266, %v2305
    %v2324 = vadd.f32 %v2267, %v2309
    %v2325 = vadd.f32 %v2268, %v2293
    %v2326 = vadd.f32 %v2269, %v2297
    %v2327 = vadd.f32 %v2270, %v2301
    %v2328 = vadd.f32 %v2271, %v2305
    %v2329 = vadd.f32 %v2272, %v2309
    %v2330 = vadd.f32 %v2273, %v2293
    %v2331 = vadd.f32 %v2274, %v2297
    %v2332 = vadd.f32 %v2275, %v2301
    %v2333 = vadd.f32 %v2276, %v2305
    %v2334 = vadd.f32 %v2277, %v2309
    %v2335 = vadd.f32 %v2278, %v2293
    %v2336 = vadd.f32 %v2279, %v2297
    %v2337 = vadd.f32 %v2280, %v2301
    %v2338 = vadd.f32 %v2281, %v2305
    %v2339 = vadd.f32 %v2282, %v2309
    %v2340 = vadd.f32 %v2283, %v2293
    %v2341 = vadd.f32 %v2284, %v2297
    %v2342 = vadd.f32 %v2285, %v2301
    %v2343 = vadd.f32 %v2286, %v2305
    %v2344 = vadd.f32 %v2287, %v2309
    %v2345 = vmax.f32 %v2315, 0.0
    %v2346 = vmax.f32 %v2316, 0.0
    %v2347 = vmax.f32 %v2317, 0.0
    %v2348 = vmax.f32 %v2318, 0.0
    %v2349 = vmax.f32 %v2319, 0.0
    %v2350 = vmax.f32 %v2320, 0.0
    %v2351 = vmax.f32 %v2321, 0.0
    %v2352 = vmax.f32 %v2322, 0.0
    %v2353 = vmax.f32 %v2323, 0.0
    %v2354 = vmax.f32 %v2324, 0.0
    %v2355 = vmax.f32 %v2325, 0.0
    %v2356 = vmax.f32 %v2326, 0.0
    %v2357 = vmax.f32 %v2327, 0.0
    %v2358 = vmax.f32 %v2328, 0.0
    %v2359 = vmax.f32 %v2329, 0.0
    %v2360 = vmax.f32 %v2330, 0.0
    %v2361 = vmax.f32 %v2331, 0.0
    %v2362 = vmax.f32 %v2332, 0.0
    %v2363 = vmax.f32 %v2333, 0.0
    %v2364 = vmax.f32 %v2334, 0.0
    %v2365 = vmax.f32 %v2335, 0.0
    %v2366 = vmax.f32 %v2336, 0.0
    %v2367 = vmax.f32 %v2337, 0.0
    %v2368 = vmax.f32 %v2338, 0.0
    %v2369 = vmax.f32 %v2339, 0.0
    %v2370 = vmax.f32 %v2340, 0.0
    %v2371 = vmax.f32 %v2341, 0.0
    %v2372 = vmax.f32 %v2342, 0.0
    %v2373 = vmax.f32 %v2343, 0.0
    %v2374 = vmax.f32 %v2344, 0.0
    %2375 = vst [vmem:[#allocation3] sm:$0xff] %v2345
    %2376 = vst [vmem:[#allocation3 + $0x8] sm:$0xff] %v2346
    %2377 = vst [vmem:[#allocation3 + $0x10] sm:$0xff] %v2347
    %2378 = vst [vmem:[#allocation3 + $0x18] sm:$0xff] %v2348
    %2379 = vst [vmem:[#allocation3 + $0x20] sm:$0xff] %v2349
    %2380 = vst [vmem:[#allocation3 + $0x28] sm:$0xff] %v2350
    %2381 = vst [vmem:[#allocation3 + $0x30] sm:$0xff] %v2351
    %2382 = vst [vmem:[#allocation3 + $0x38] sm:$0xff] %v2352
    %2383 = vst [vmem:[#allocation3 + $0x40] sm:$0xff] %v2353
    %2384 = vst [vmem:[#allocation3 + $0x48] sm:$0xff] %v2354
    %2385 = vst [vmem:[#allocation3 + $0x50] sm:$0xff] %v2355
    %2386 = vst [vmem:[#allocation3 + $0x58] sm:$0xff] %v2356
    %2387 = vst [vmem:[#allocation3 + $0x60] sm:$0xff] %v2357
    %2388 = vst [vmem:[#allocation3 + $0x68] sm:$0xff] %v2358
    %2389 = vst [vmem:[#allocation3 + $0x70] sm:$0xff] %v2359
    %2390 = vst [vmem:[#allocation3 + $0x78] sm:$0xff] %v2360
    %2391 = vst [vmem:[#allocation3 + $0x80] sm:$0xff] %v2361
    %2392 = vst [vmem:[#allocation3 + $0x88] sm:$0xff] %v2362
    %2393 = vst [vmem:[#allocation3 + $0x90] sm:$0xff] %v2363
    %2394 = vst [vmem:[#allocation3 + $0x98] sm:$0xff] %v2364
    %2395 = vst [vmem:[#allocation3 + $0xa0] sm:$0xff] %v2365
    %2396 = vst [vmem:[#allocation3 + $0xa8] sm:$0xff] %v2366
    %2397 = vst [vmem:[#allocation3 + $0xb0] sm:$0xff] %v2367
    %2398 = vst [vmem:[#allocation3 + $0xb8] sm:$0xff] %v2368
    %2399 = vst [vmem:[#allocation3 + $0xc0] sm:$0xff] %v2369
    %2400 = vst [vmem:[#allocation3 + $0xc8] sm:$0xff] %v2370
    %2401 = vst [vmem:[#allocation3 + $0xd0] sm:$0xff] %v2371
    %2402 = vst [vmem:[#allocation3 + $0xd8] sm:$0xff] %v2372
    %2403 = vst [vmem:[#allocation3 + $0xe0] sm:$0xff] %v2373
    %2404 = vst [vmem:[#allocation3 + $0xe8] sm:$0xff] %v2374
    %v2405 = vld [vmem:[#allocation3] sm:$0xff]
    %v2406 = vld [vmem:[#allocation3 + $0x8] sm:$0xff]
    %v2407 = vld [vmem:[#allocation3 + $0x10] sm:$0xff]
    %v2408 = vld [vmem:[#allocation3 + $0x18] sm:$0xff]
    %v2409 = vld [vmem:[#allocation3 + $0x20] sm:$0xff]
    %v2410 = vld [vmem:[#allocation3 + $0x28] sm:$0xff]
    %v2411 = vld [vmem:[#allocation3 + $0x30] sm:$0xff]
    %v2412 = vld [vmem:[#allocation3 + $0x38] sm:$0xff]
    %v2413 = vld [vmem:[#allocation3 + $0x40] sm:$0xff]
    %v2414 = vld [vmem:[#allocation3 + $0x48] sm:$0xff]
    %v2415 = vld [vmem:[#allocation3 + $0x50] sm:$0xff]
    %v2416 = vld [vmem:[#allocation3 + $0x58] sm:$0xff]
    %v2417 = vld [vmem:[#allocation3 + $0x60] sm:$0xff]
    %v2418 = vld [vmem:[#allocation3 + $0x68] sm:$0xff]
    %v2419 = vld [vmem:[#allocation3 + $0x70] sm:$0xff]
    %v2420 = vld [vmem:[#allocation3 + $0x78] sm:$0xff]
    %v2421 = vld [vmem:[#allocation3 + $0x80] sm:$0xff]
    %v2422 = vld [vmem:[#allocation3 + $0x88] sm:$0xff]
    %v2423 = vld [vmem:[#allocation3 + $0x90] sm:$0xff]
    %v2424 = vld [vmem:[#allocation3 + $0x98] sm:$0xff]
    %v2425 = vld [vmem:[#allocation3 + $0xa0] sm:$0xff]
    %v2426 = vld [vmem:[#allocation3 + $0xa8] sm:$0xff]
    %v2427 = vld [vmem:[#allocation3 + $0xb0] sm:$0xff]
    %v2428 = vld [vmem:[#allocation3 + $0xb8] sm:$0xff]
    %v2429 = vld [vmem:[#allocation3 + $0xc0] sm:$0xff]
    %v2430 = vld [vmem:[#allocation3 + $0xc8] sm:$0x7f]
    %v2431 = vld [vmem:[#allocation3 + $0xd0] sm:$0x7f]
    %v2432 = vld [vmem:[#allocation3 + $0xd8] sm:$0x7f]
    %v2433 = vld [vmem:[#allocation3 + $0xe0] sm:$0x7f]
    %v2434 = vld [vmem:[#allocation3 + $0xe8] sm:$0x7f]
    %v2435 = vld [vmem:[#allocation3] sm:$0xfe]
    %v2436 = vld [vmem:[#allocation3 + $0x8] sm:$0xfe]
    %v2437 = vld [vmem:[#allocation3 + $0x10] sm:$0xfe]
    %v2438 = vld [vmem:[#allocation3 + $0x18] sm:$0xfe]
    %v2439 = vld [vmem:[#allocation3 + $0x20] sm:$0xfe]
    %v2440 = vld [vmem:[#allocation3 + $0xc8] sm:$0xff]
    %v2441 = vld [vmem:[#allocation3 + $0xd0] sm:$0xff]
    %v2442 = vld [vmem:[#allocation3 + $0xd8] sm:$0xff]
    %v2443 = vld [vmem:[#allocation3 + $0xe0] sm:$0xff]
    %v2444 = vld [vmem:[#allocation3 + $0xe8] sm:$0xff]
    %v2475 = vrot.slane %v2435, 1
    %v2476 = vrot.slane %v2410, 1
    %v2477 = vsel %vm1846, %v2475, %v2476
    %v2478 = vrot.slane %v2436, 1
    %v2479 = vrot.slane %v2411, 1
    %v2480 = vsel %vm1846, %v2478, %v2479
    %v2481 = vrot.slane %v2437, 1
    %v2482 = vrot.slane %v2412, 1
    %v2483 = vsel %vm1846, %v2481, %v2482
    %v2484 = vrot.slane %v2438, 1
    %v2485 = vrot.slane %v2413, 1
    %v2486 = vsel %vm1846, %v2484, %v2485
    %v2487 = vrot.slane %v2439, 1
    %v2488 = vrot.slane %v2414, 1
    %v2489 = vsel %vm1846, %v2487, %v2488
    %v2490 = vrot.slane %v2415, 1
    %v2491 = vsel %vm1846, %v2476, %v2490
    %v2492 = vrot.slane %v2416, 1
    %v2493 = vsel %vm1846, %v2479, %v2492
    %v2494 = vrot.slane %v2417, 1
    %v2495 = vsel %vm1846, %v2482, %v2494
    %v2496 = vrot.slane %v2418, 1
    %v2497 = vsel %vm1846, %v2485, %v2496
    %v2498 = vrot.slane %v2419, 1
    %v2499 = vsel %vm1846, %v2488, %v2498
    %v2500 = vrot.slane %v2420, 1
    %v2501 = vsel %vm1846, %v2490, %v2500
    %v2502 = vrot.slane %v2421, 1
    %v2503 = vsel %vm1846, %v2492, %v2502
    %v2504 = vrot.slane %v2422, 1
    %v2505 = vsel %vm1846, %v2494, %v2504
    %v2506 = vrot.slane %v2423, 1
    %v2507 = vsel %vm1846, %v2496, %v2506
    %v2508 = vrot.slane %v2424, 1
    %v2509 = vsel %vm1846, %v2498, %v2508
    %v2510 = vrot.slane %v2425, 1
    %v2511 = vsel %vm1846, %v2500, %v2510
    %v2512 = vrot.slane %v2426, 1
    %v2513 = vsel %vm1846, %v2502, %v2512
    %v2514 = vrot.slane %v2427, 1
    %v2515 = vsel %vm1846, %v2504, %v2514
    %v2516 = vrot.slane %v2428, 1
    %v2517 = vsel %vm1846, %v2506, %v2516
    %v2518 = vrot.slane %v2429, 1
    %v2519 = vsel %vm1846, %v2508, %v2518
    %v2520 = vrot.slane %v2440, 1
    %v2521 = vsel %vm1846, %v2510, %v2520
    %v2522 = vrot.slane %v2441, 1
    %v2523 = vsel %vm1846, %v2512, %v2522
    %v2524 = vrot.slane %v2442, 1
    %v2525 = vsel %vm1846, %v2514, %v2524
    %v2526 = vrot.slane %v2443, 1
    %v2527 = vsel %vm1846, %v2516, %v2526
    %v2528 = vrot.slane %v2444, 1
    %v2529 = vsel %vm1846, %v2518, %v2528
    %v2560 = vld [vmem:[%s23] sm:$0xff]
    %v2561 = vld [vmem:[%s23 + $0x8] sm:$0xff]
    %v2562 = vld [vmem:[%s23 + $0x10] sm:$0xff]
    %v2563 = vld [vmem:[%s23 + $0x18] sm:$0xff]
    %v2564 = vld [vmem:[%s23 + $0x20] sm:$0xff]
    %v2565 = vld [vmem:[%s23 + $0x28] sm:$0xff]
    %v2566 = vld [vmem:[%s23 + $0x30] sm:$0xff]
    %v2567 = vld [vmem:[%s23 + $0x38] sm:$0xff]
    %v2568 = vld [vmem:[%s23 + $0x40] sm:$0xff]
    %v2569 = vld [vmem:[%s23 + $0x48] sm:$0xff]
    %v2570 = vld [vmem:[%s23 + $0x50] sm:$0xff]
    %v2571 = vld [vmem:[%s23 + $0x58] sm:$0xff]
    %v2572 = vld [vmem:[%s23 + $0x60] sm:$0xff]
    %v2573 = vld [vmem:[%s23 + $0x68] sm:$0xff]
    %v2574 = vld [vmem:[%s23 + $0x70] sm:$0xff]
    %v2575 = vld [vmem:[%s23 + $0x78] sm:$0xff]
    %v2576 = vld [vmem:[%s23 + $0x80] sm:$0xff]
    %v2577 = vld [vmem:[%s23 + $0x88] sm:$0xff]
    %v2578 = vld [vmem:[%s23 + $0x90] sm:$0xff]
    %v2579 = vld [vmem:[%s23 + $0x98] sm:$0xff]
    %v2580 = vld [vmem:[%s23 + $0xa0] sm:$0xff]
    %v2581 = vld [vmem:[%s23 + $0xa8] sm:$0xff]
    %v2582 = vld [vmem:[%s23 + $0xb0] sm:$0xff]
    %v2583 = vld [vmem:[%s23 + $0xb8] sm:$0xff]
    %v2584 = vld [vmem:[%s23 + $0xc0] sm:$0xff]
    %v2585 = vld [vmem:[%s23 + $0xc8] sm:$0xff]
    %v2586 = vld [vmem:[%s23 + $0xd0] sm:$0xff]
    %v2587 = vld [vmem:[%s23 + $0xd8] sm:$0xff]
    %v2588 = vld [vmem:[%s23 + $0xe0] sm:$0xff]
    %v2589 = vld [vmem:[%s23 + $0xe8] sm:$0xff]
    %v2590 = vld [vmem:[%s23 + $0xf0] sm:$0xff]
    %v2591 = vld [vmem:[%s23 + $0xf8] sm:$0xff]
    %v2592 = vld [vmem:[%s23 + $0x100] sm:$0xff]
    %v2593 = vld [vmem:[%s23 + $0x108] sm:$0xff]
    %v2594 = vld [vmem:[%s23 + $0x110] sm:$0xff]
    %v2595 = vld [vmem:[%s23 + $0x118] sm:$0xff]
    %v2596 = vld [vmem:[%s23 + $0x120] sm:$0xff]
    %v2597 = vld [vmem:[%s23 + $0x128] sm:$0xff]
    %v2598 = vld [vmem:[%s23 + $0x130] sm:$0xff]
    %v2599 = vld [vmem:[%s23 + $0x138] sm:$0xff]
    %v2600 = vld [vmem:[%s23 + $0x140] sm:$0xff]
    %v2601 = vld [vmem:[%s23 + $0x148] sm:$0xff]
    %v2602 = vld [vmem:[%s23 + $0x150] sm:$0xff]
    %v2603 = vld [vmem:[%s23 + $0x158] sm:$0xff]
    %v2604 = vld [vmem:[%s23 + $0x160] sm:$0xff]
    %v2605 = vld [vmem:[%s23 + $0x168] sm:$0xff]
    %v2606 = vld [vmem:[%s23 + $0x170] sm:$0xff]
    %v2607 = vld [vmem:[%s23 + $0x178] sm:$0xff]
    %v2608 = vld [vmem:[%s23 + $0x180] sm:$0xff]
    %v2609 = vld [vmem:[%s23 + $0x188] sm:$0xff]
    %v2610 = vld [vmem:[%s23 + $0x190] sm:$0xff]
    %v2611 = vld [vmem:[%s23 + $0x198] sm:$0xff]
    %v2612 = vld [vmem:[%s23 + $0x1a0] sm:$0xff]
    %v2613 = vld [vmem:[%s23 + $0x1a8] sm:$0xff]
    %v2614 = vld [vmem:[%s23 + $0x1b0] sm:$0xff]
    %v2615 = vld [vmem:[%s23 + $0x1b8] sm:$0xff]
    %v2616 = vld [vmem:[%s23 + $0x1c0] sm:$0xff]
    %v2617 = vld [vmem:[%s23 + $0x1c8] sm:$0xff]
    %v2618 = vld [vmem:[%s23 + $0x1d0] sm:$0xff]
    %v2619 = vld [vmem:[%s23 + $0x1d8] sm:$0xff]
    %v2620 = vld [vmem:[%s23 + $0x1e0] sm:$0xff]
    %v2621 = vld [vmem:[%s23 + $0x1e8] sm:$0xff]
    %v2622 = vld [vmem:[%s23 + $0x1f0] sm:$0xff]
    %v2623 = vld [vmem:[%s23 + $0x1f8] sm:$0xff]
    %v2624 = vld [vmem:[%s23 + $0x200] sm:$0xff]
    %v2625 = vld [vmem:[%s23 + $0x208] sm:$0xff]
    %v2626 = vld [vmem:[%s23 + $0x210] sm:$0xff]
    %v2627 = vld [vmem:[%s23 + $0x218] sm:$0xff]
    %v2628 = vld [vmem:[%s23 + $0x220] sm:$0xff]
    %v2629 = vld [vmem:[%s23 + $0x228] sm:$0xff]
    %v2630 = vld [vmem:[%s23 + $0x230] sm:$0xff]
    %v2631 = vld [vmem:[%s23 + $0x238] sm:$0xff]
    %v2632 = vld [vmem:[%s23 + $0x240] sm:$0xff]
    %v2633 = vld [vmem:[%s23 + $0x248] sm:$0xff]
    %v2634 = vld [vmem:[%s23 + $0x250] sm:$0xff]
    %v2635 = vld [vmem:[%s23 + $0x258] sm:$0xff]
    %v2636 = vld [vmem:[%s23 + $0x260] sm:$0xff]
    %v2637 = vld [vmem:[%s23 + $0x268] sm:$0xff]
    %v2638 = vld [vmem:[%s23 + $0x270] sm:$0xff]
    %v2639 = vld [vmem:[%s23 + $0x278] sm:$0xff]
    %v2640 = vld [vmem:[%s23 + $0x280] sm:$0xff]
    %v2641 = vld [vmem:[%s23 + $0x288] sm:$0xff]
    %v2642 = vld [vmem:[%s23 + $0x290] sm:$0xff]
    %v2643 = vld [vmem:[%s23 + $0x298] sm:$0xff]
    %v2644 = vld [vmem:[%s23 + $0x2a0] sm:$0xff]
    %v2645 = vld [vmem:[%s23 + $0x2a8] sm:$0xff]
    %v2646 = vld [vmem:[%s23 + $0x2b0] sm:$0xff]
    %v2647 = vld [vmem:[%s23 + $0x2b8] sm:$0xff]
    %v2648 = vld [vmem:[%s23 + $0x2c0] sm:$0xff]
    %v2649 = vld [vmem:[%s23 + $0x2c8] sm:$0xff]
    %v2650 = vld [vmem:[%s23 + $0x2d0] sm:$0xff]
    %v2651 = vld [vmem:[%s23 + $0x2d8] sm:$0xff]
    %v2652 = vld [vmem:[%s23 + $0x2e0] sm:$0xff]
    %v2653 = vld [vmem:[%s23 + $0x2e8] sm:$0xff]
    %v2654 = vld [vmem:[%s23 + $0x2f0] sm:$0xff]
    %v2655 = vld [vmem:[%s23 + $0x2f8] sm:$0xff]
    %v2656 = vld [vmem:[%s23 + $0x300] sm:$0xff]
    %v2657 = vld [vmem:[%s23 + $0x308] sm:$0xff]
    %v2658 = vld [vmem:[%s23 + $0x310] sm:$0xff]
    %v2659 = vld [vmem:[%s23 + $0x318] sm:$0xff]
    %v2660 = vld [vmem:[%s23 + $0x320] sm:$0xff]
    %v2661 = vld [vmem:[%s23 + $0x328] sm:$0xff]
    %v2662 = vld [vmem:[%s23 + $0x330] sm:$0xff]
    %v2663 = vld [vmem:[%s23 + $0x338] sm:$0xff]
    %v2664 = vld [vmem:[%s23 + $0x340] sm:$0xff]
    %v2665 = vld [vmem:[%s23 + $0x348] sm:$0xff]
    %v2666 = vld [vmem:[%s23 + $0x350] sm:$0xff]
    %v2667 = vld [vmem:[%s23 + $0x358] sm:$0xff]
    %v2668 = vld [vmem:[%s23 + $0x360] sm:$0xff]
    %v2669 = vld [vmem:[%s23 + $0x368] sm:$0xff]
    %v2670 = vld [vmem:[%s23 + $0x370] sm:$0xff]
    %v2671 = vld [vmem:[%s23 + $0x378] sm:$0xff]
    %v2672 = vld [vmem:[%s23 + $0x380] sm:$0xff]
    %v2673 = vld [vmem:[%s23 + $0x388] sm:$0xff]
    %v2674 = vld [vmem:[%s23 + $0x390] sm:$0xff]
    %v2675 = vld [vmem:[%s23 + $0x398] sm:$0xff]
    %v2676 = vld [vmem:[%s23 + $0x3a0] sm:$0xff]
    %v2677 = vld [vmem:[%s23 + $0x3a8] sm:$0xff]
    %v2678 = vld [vmem:[%s23 + $0x3b0] sm:$0xff]
    %v2679 = vld [vmem:[%s23 + $0x3b8] sm:$0xff]
    %v2680 = vld [vmem:[%s23 + $0x3c0] sm:$0xff]
    %v2681 = vld [vmem:[%s23 + $0x3c8] sm:$0xff]
    %v2682 = vld [vmem:[%s23 + $0x3d0] sm:$0xff]
    %v2683 = vld [vmem:[%s23 + $0x3d8] sm:$0xff]
    %v2684 = vld [vmem:[%s23 + $0x3e0] sm:$0xff]
    %v2685 = vld [vmem:[%s23 + $0x3e8] sm:$0xff]
    %v2686 = vld [vmem:[%s23 + $0x3f0] sm:$0xff]
    %v2687 = vld [vmem:[%s23 + $0x3f8] sm:$0xff]
    %v2688 = vld [vmem:[%s23 + $0x400] sm:$0xff]
    %v2689 = vld [vmem:[%s23 + $0x408] sm:$0xff]
    %v2690 = vld [vmem:[%s23 + $0x410] sm:$0xff]
    %v2691 = vld [vmem:[%s23 + $0x418] sm:$0xff]
    %v2692 = vld [vmem:[%s23 + $0x420] sm:$0xff]
    %v2693 = vld [vmem:[%s23 + $0x428] sm:$0xff]
    %v2694 = vld [vmem:[%s23 + $0x430] sm:$0xff]
    %v2695 = vld [vmem:[%s23 + $0x438] sm:$0xff]
    %v2696 = vld [vmem:[%s23 + $0x440] sm:$0xff]
    %v2697 = vld [vmem:[%s23 + $0x448] sm:$0xff]
    %v2698 = vld [vmem:[%s23 + $0x450] sm:$0xff]
    %v2699 = vld [vmem:[%s23 + $0x458] sm:$0xff]
    %v2700 = vld [vmem:[%s23 + $0x460] sm:$0xff]
    %v2701 = vld [vmem:[%s23 + $0x468] sm:$0xff]
    %v2702 = vld [vmem:[%s23 + $0x470] sm:$0xff]
    %v2703 = vld [vmem:[%s23 + $0x478] sm:$0xff]
    %v2704 = vld [vmem:[%s23 + $0x480] sm:$0xff]
    %v2705 = vld [vmem:[%s23 + $0x488] sm:$0xff]
    %v2706 = vld [vmem:[%s23 + $0x490] sm:$0xff]
    %v2707 = vld [vmem:[%s23 + $0x498] sm:$0xff]
    %v2708 = vld [vmem:[%s23 + $0x4a0] sm:$0xff]
    %v2709 = vld [vmem:[%s23 + $0x4a8] sm:$0xff]
    %v2710 = vld [vmem:[%s23 + $0x4b0] sm:$0xff]
    %v2711 = vld [vmem:[%s23 + $0x4b8] sm:$0xff]
    %v2712 = vld [vmem:[%s23 + $0x4c0] sm:$0xff]
    %v2713 = vld [vmem:[%s23 + $0x4c8] sm:$0xff]
    %v2714 = vld [vmem:[%s23 + $0x4d0] sm:$0xff]
    %v2715 = vld [vmem:[%s23 + $0x4d8] sm:$0xff]
    %v2716 = vld [vmem:[%s23 + $0x4e0] sm:$0xff]
    %v2717 = vld [vmem:[%s23 + $0x4e8] sm:$0xff]
    %v2718 = vld [vmem:[%s23 + $0x4f0] sm:$0xff]
    %v2719 = vld [vmem:[%s23 + $0x4f8] sm:$0xff]
    %v2720 = vpack.c.bf16 %v2410, %v2405
    %v2721 = vpack.c.bf16 %v2411, %v2406
    %v2722 = vpack.c.bf16 %v2412, %v2407
    %v2723 = vpack.c.bf16 %v2413, %v2408
    %v2724 = vpack.c.bf16 %v2414, %v2409
    %v2725 = vpack.c.bf16 %v2491, %v2477
    %v2726 = vpack.c.bf16 %v2493, %v2480
    %v2727 = vpack.c.bf16 %v2495, %v2483
    %v2728 = vpack.c.bf16 %v2497, %v2486
    %v2729 = vpack.c.bf16 %v2499, %v2489
    %v2730 = vpack.c.bf16 %v2420, %v2415
    %v2731 = vpack.c.bf16 %v2421, %v2416
    %v2732 = vpack.c.bf16 %v2422, %v2417
    %v2733 = vpack.c.bf16 %v2423, %v2418
    %v2734 = vpack.c.bf16 %v2424, %v2419
    %v2735 = vpack.c.bf16 %v2511, %v2501
    %v2736 = vpack.c.bf16 %v2513, %v2503
    %v2737 = vpack.c.bf16 %v2515, %v2505
    %v2738 = vpack.c.bf16 %v2517, %v2507
    %v2739 = vpack.c.bf16 %v2519, %v2509
    %v2740 = vpack.c.bf16 %v2430, %v2425
    %v2741 = vpack.c.bf16 %v2431, %v2426
    %v2742 = vpack.c.bf16 %v2432, %v2427
    %v2743 = vpack.c.bf16 %v2433, %v2428
    %v2744 = vpack.c.bf16 %v2434, %v2429
    %v2745 = vpack.c.bf16 %v2520, %v2521
    %v2746 = vpack.c.bf16 %v2522, %v2523
    %v2747 = vpack.c.bf16 %v2524, %v2525
    %v2748 = vpack.c.bf16 %v2526, %v2527
    %v2749 = vpack.c.bf16 %v2528, %v2529
    %v2750 = vld [vmem:[#allocation18] sm:$0x3]
    %v2752 = vlaneseq
    %v2753 = vshrl.u32 %v2752, 7
    %v2754 = vsub.s32 0, %v2753
    %v2755 = vrot.slane %v2750, %v2754
    %v2756 = vlaneseq
    %v2757 = vshrl.u32 %v2756, 7
    %v2758 = vsub.s32 1, %v2757
    %v2759 = vrot.slane %v2750, %v2758
    %v2922 = vunpack.c.l.b16 %v2560
    %v2923 = vunpack.c.h.b16 %v2560
    %v2924 = vunpack.c.l.b16 %v2561
    %v2925 = vunpack.c.h.b16 %v2561
    %v2926 = vunpack.c.l.b16 %v2562
    %v2927 = vunpack.c.h.b16 %v2562
    %v2928 = vunpack.c.l.b16 %v2563
    %v2929 = vunpack.c.h.b16 %v2563
    %v2930 = vunpack.c.l.b16 %v2564
    %v2931 = vunpack.c.h.b16 %v2564
    %v2932 = vunpack.c.l.b16 %v2565
    %v2933 = vunpack.c.h.b16 %v2565
    %v2934 = vunpack.c.l.b16 %v2566
    %v2935 = vunpack.c.h.b16 %v2566
    %v2936 = vunpack.c.l.b16 %v2567
    %v2937 = vunpack.c.h.b16 %v2567
    %v2938 = vunpack.c.l.b16 %v2568
    %v2939 = vunpack.c.h.b16 %v2568
    %v2940 = vunpack.c.l.b16 %v2569
    %v2941 = vunpack.c.h.b16 %v2569
    %v2942 = vunpack.c.l.b16 %v2570
    %v2943 = vunpack.c.h.b16 %v2570
    %v2944 = vunpack.c.l.b16 %v2571
    %v2945 = vunpack.c.h.b16 %v2571
    %v2946 = vunpack.c.l.b16 %v2572
    %v2947 = vunpack.c.h.b16 %v2572
    %v2948 = vunpack.c.l.b16 %v2573
    %v2949 = vunpack.c.h.b16 %v2573
    %v2950 = vunpack.c.l.b16 %v2574
    %v2951 = vunpack.c.h.b16 %v2574
    %v2952 = vunpack.c.l.b16 %v2575
    %v2953 = vunpack.c.h.b16 %v2575
    %v2954 = vunpack.c.l.b16 %v2576
    %v2955 = vunpack.c.h.b16 %v2576
    %v2956 = vunpack.c.l.b16 %v2577
    %v2957 = vunpack.c.h.b16 %v2577
    %v2958 = vunpack.c.l.b16 %v2578
    %v2959 = vunpack.c.h.b16 %v2578
    %v2960 = vunpack.c.l.b16 %v2579
    %v2961 = vunpack.c.h.b16 %v2579
    %v2962 = vunpack.c.l.b16 %v2580
    %v2963 = vunpack.c.h.b16 %v2580
    %v2964 = vunpack.c.l.b16 %v2581
    %v2965 = vunpack.c.h.b16 %v2581
    %v2966 = vunpack.c.l.b16 %v2582
    %v2967 = vunpack.c.h.b16 %v2582
    %v2968 = vunpack.c.l.b16 %v2583
    %v2969 = vunpack.c.h.b16 %v2583
    %v2970 = vunpack.c.l.b16 %v2584
    %v2971 = vunpack.c.h.b16 %v2584
    %v2972 = vunpack.c.l.b16 %v2585
    %v2973 = vunpack.c.h.b16 %v2585
    %v2974 = vunpack.c.l.b16 %v2586
    %v2975 = vunpack.c.h.b16 %v2586
    %v2976 = vunpack.c.l.b16 %v2587
    %v2977 = vunpack.c.h.b16 %v2587
    %v2978 = vunpack.c.l.b16 %v2588
    %v2979 = vunpack.c.h.b16 %v2588
    %v2980 = vunpack.c.l.b16 %v2589
    %v2981 = vunpack.c.h.b16 %v2589
    %v2982 = vunpack.c.l.b16 %v2590
    %v2983 = vunpack.c.h.b16 %v2590
    %v2984 = vunpack.c.l.b16 %v2591
    %v2985 = vunpack.c.h.b16 %v2591
    %v2986 = vunpack.c.l.b16 %v2592
    %v2987 = vunpack.c.h.b16 %v2592
    %v2988 = vunpack.c.l.b16 %v2593
    %v2989 = vunpack.c.h.b16 %v2593
    %v2990 = vunpack.c.l.b16 %v2594
    %v2991 = vunpack.c.h.b16 %v2594
    %v2992 = vunpack.c.l.b16 %v2595
    %v2993 = vunpack.c.h.b16 %v2595
    %v2994 = vunpack.c.l.b16 %v2596
    %v2995 = vunpack.c.h.b16 %v2596
    %v2996 = vunpack.c.l.b16 %v2597
    %v2997 = vunpack.c.h.b16 %v2597
    %v2998 = vunpack.c.l.b16 %v2598
    %v2999 = vunpack.c.h.b16 %v2598
    %v3000 = vunpack.c.l.b16 %v2599
    %v3001 = vunpack.c.h.b16 %v2599
    %v3002 = vunpack.c.l.b16 %v2600
    %v3003 = vunpack.c.h.b16 %v2600
    %v3004 = vunpack.c.l.b16 %v2601
    %v3005 = vunpack.c.h.b16 %v2601
    %v3006 = vunpack.c.l.b16 %v2602
    %v3007 = vunpack.c.h.b16 %v2602
    %v3008 = vunpack.c.l.b16 %v2603
    %v3009 = vunpack.c.h.b16 %v2603
    %v3010 = vunpack.c.l.b16 %v2604
    %v3011 = vunpack.c.h.b16 %v2604
    %v3012 = vunpack.c.l.b16 %v2605
    %v3013 = vunpack.c.h.b16 %v2605
    %v3014 = vunpack.c.l.b16 %v2606
    %v3015 = vunpack.c.h.b16 %v2606
    %v3016 = vunpack.c.l.b16 %v2607
    %v3017 = vunpack.c.h.b16 %v2607
    %v3018 = vunpack.c.l.b16 %v2608
    %v3019 = vunpack.c.h.b16 %v2608
    %v3020 = vunpack.c.l.b16 %v2609
    %v3021 = vunpack.c.h.b16 %v2609
    %v3022 = vunpack.c.l.b16 %v2610
    %v3023 = vunpack.c.h.b16 %v2610
    %v3024 = vunpack.c.l.b16 %v2611
    %v3025 = vunpack.c.h.b16 %v2611
    %v3026 = vunpack.c.l.b16 %v2612
    %v3027 = vunpack.c.h.b16 %v2612
    %v3028 = vunpack.c.l.b16 %v2613
    %v3029 = vunpack.c.h.b16 %v2613
    %v3030 = vunpack.c.l.b16 %v2614
    %v3031 = vunpack.c.h.b16 %v2614
    %v3032 = vunpack.c.l.b16 %v2615
    %v3033 = vunpack.c.h.b16 %v2615
    %v3034 = vunpack.c.l.b16 %v2616
    %v3035 = vunpack.c.h.b16 %v2616
    %v3036 = vunpack.c.l.b16 %v2617
    %v3037 = vunpack.c.h.b16 %v2617
    %v3038 = vunpack.c.l.b16 %v2618
    %v3039 = vunpack.c.h.b16 %v2618
    %v3040 = vunpack.c.l.b16 %v2619
    %v3041 = vunpack.c.h.b16 %v2619
    %v3042 = vunpack.c.l.b16 %v2620
    %v3043 = vunpack.c.h.b16 %v2620
    %v3044 = vunpack.c.l.b16 %v2621
    %v3045 = vunpack.c.h.b16 %v2621
    %v3046 = vunpack.c.l.b16 %v2622
    %v3047 = vunpack.c.h.b16 %v2622
    %v3048 = vunpack.c.l.b16 %v2623
    %v3049 = vunpack.c.h.b16 %v2623
    %v3050 = vunpack.c.l.b16 %v2624
    %v3051 = vunpack.c.h.b16 %v2624
    %v3052 = vunpack.c.l.b16 %v2625
    %v3053 = vunpack.c.h.b16 %v2625
    %v3054 = vunpack.c.l.b16 %v2626
    %v3055 = vunpack.c.h.b16 %v2626
    %v3056 = vunpack.c.l.b16 %v2627
    %v3057 = vunpack.c.h.b16 %v2627
    %v3058 = vunpack.c.l.b16 %v2628
    %v3059 = vunpack.c.h.b16 %v2628
    %v3060 = vunpack.c.l.b16 %v2629
    %v3061 = vunpack.c.h.b16 %v2629
    %v3062 = vunpack.c.l.b16 %v2630
    %v3063 = vunpack.c.h.b16 %v2630
    %v3064 = vunpack.c.l.b16 %v2631
    %v3065 = vunpack.c.h.b16 %v2631
    %v3066 = vunpack.c.l.b16 %v2632
    %v3067 = vunpack.c.h.b16 %v2632
    %v3068 = vunpack.c.l.b16 %v2633
    %v3069 = vunpack.c.h.b16 %v2633
    %v3070 = vunpack.c.l.b16 %v2634
    %v3071 = vunpack.c.h.b16 %v2634
    %v3072 = vunpack.c.l.b16 %v2635
    %v3073 = vunpack.c.h.b16 %v2635
    %v3074 = vunpack.c.l.b16 %v2636
    %v3075 = vunpack.c.h.b16 %v2636
    %v3076 = vunpack.c.l.b16 %v2637
    %v3077 = vunpack.c.h.b16 %v2637
    %v3078 = vunpack.c.l.b16 %v2638
    %v3079 = vunpack.c.h.b16 %v2638
    %v3080 = vunpack.c.l.b16 %v2639
    %v3081 = vunpack.c.h.b16 %v2639
    %v3082 = vunpack.c.l.b16 %v2640
    %v3083 = vunpack.c.h.b16 %v2640
    %v3084 = vunpack.c.l.b16 %v2641
    %v3085 = vunpack.c.h.b16 %v2641
    %v3086 = vunpack.c.l.b16 %v2642
    %v3087 = vunpack.c.h.b16 %v2642
    %v3088 = vunpack.c.l.b16 %v2643
    %v3089 = vunpack.c.h.b16 %v2643
    %v3090 = vunpack.c.l.b16 %v2644
    %v3091 = vunpack.c.h.b16 %v2644
    %v3092 = vunpack.c.l.b16 %v2645
    %v3093 = vunpack.c.h.b16 %v2645
    %v3094 = vunpack.c.l.b16 %v2646
    %v3095 = vunpack.c.h.b16 %v2646
    %v3096 = vunpack.c.l.b16 %v2647
    %v3097 = vunpack.c.h.b16 %v2647
    %v3098 = vunpack.c.l.b16 %v2648
    %v3099 = vunpack.c.h.b16 %v2648
    %v3100 = vunpack.c.l.b16 %v2649
    %v3101 = vunpack.c.h.b16 %v2649
    %v3102 = vunpack.c.l.b16 %v2650
    %v3103 = vunpack.c.h.b16 %v2650
    %v3104 = vunpack.c.l.b16 %v2651
    %v3105 = vunpack.c.h.b16 %v2651
    %v3106 = vunpack.c.l.b16 %v2652
    %v3107 = vunpack.c.h.b16 %v2652
    %v3108 = vunpack.c.l.b16 %v2653
    %v3109 = vunpack.c.h.b16 %v2653
    %v3110 = vunpack.c.l.b16 %v2654
    %v3111 = vunpack.c.h.b16 %v2654
    %v3112 = vunpack.c.l.b16 %v2655
    %v3113 = vunpack.c.h.b16 %v2655
    %v3114 = vunpack.c.l.b16 %v2656
    %v3115 = vunpack.c.h.b16 %v2656
    %v3116 = vunpack.c.l.b16 %v2657
    %v3117 = vunpack.c.h.b16 %v2657
    %v3118 = vunpack.c.l.b16 %v2658
    %v3119 = vunpack.c.h.b16 %v2658
    %v3120 = vunpack.c.l.b16 %v2659
    %v3121 = vunpack.c.h.b16 %v2659
    %v3122 = vunpack.c.l.b16 %v2660
    %v3123 = vunpack.c.h.b16 %v2660
    %v3124 = vunpack.c.l.b16 %v2661
    %v3125 = vunpack.c.h.b16 %v2661
    %v3126 = vunpack.c.l.b16 %v2662
    %v3127 = vunpack.c.h.b16 %v2662
    %v3128 = vunpack.c.l.b16 %v2663
    %v3129 = vunpack.c.h.b16 %v2663
    %v3130 = vunpack.c.l.b16 %v2664
    %v3131 = vunpack.c.h.b16 %v2664
    %v3132 = vunpack.c.l.b16 %v2665
    %v3133 = vunpack.c.h.b16 %v2665
    %v3134 = vunpack.c.l.b16 %v2666
    %v3135 = vunpack.c.h.b16 %v2666
    %v3136 = vunpack.c.l.b16 %v2667
    %v3137 = vunpack.c.h.b16 %v2667
    %v3138 = vunpack.c.l.b16 %v2668
    %v3139 = vunpack.c.h.b16 %v2668
    %v3140 = vunpack.c.l.b16 %v2669
    %v3141 = vunpack.c.h.b16 %v2669
    %v3142 = vunpack.c.l.b16 %v2670
    %v3143 = vunpack.c.h.b16 %v2670
    %v3144 = vunpack.c.l.b16 %v2671
    %v3145 = vunpack.c.h.b16 %v2671
    %v3146 = vunpack.c.l.b16 %v2672
    %v3147 = vunpack.c.h.b16 %v2672
    %v3148 = vunpack.c.l.b16 %v2673
    %v3149 = vunpack.c.h.b16 %v2673
    %v3150 = vunpack.c.l.b16 %v2674
    %v3151 = vunpack.c.h.b16 %v2674
    %v3152 = vunpack.c.l.b16 %v2675
    %v3153 = vunpack.c.h.b16 %v2675
    %v3154 = vunpack.c.l.b16 %v2676
    %v3155 = vunpack.c.h.b16 %v2676
    %v3156 = vunpack.c.l.b16 %v2677
    %v3157 = vunpack.c.h.b16 %v2677
    %v3158 = vunpack.c.l.b16 %v2678
    %v3159 = vunpack.c.h.b16 %v2678
    %v3160 = vunpack.c.l.b16 %v2679
    %v3161 = vunpack.c.h.b16 %v2679
    %v3162 = vunpack.c.l.b16 %v2680
    %v3163 = vunpack.c.h.b16 %v2680
    %v3164 = vunpack.c.l.b16 %v2681
    %v3165 = vunpack.c.h.b16 %v2681
    %v3166 = vunpack.c.l.b16 %v2682
    %v3167 = vunpack.c.h.b16 %v2682
    %v3168 = vunpack.c.l.b16 %v2683
    %v3169 = vunpack.c.h.b16 %v2683
    %v3170 = vunpack.c.l.b16 %v2684
    %v3171 = vunpack.c.h.b16 %v2684
    %v3172 = vunpack.c.l.b16 %v2685
    %v3173 = vunpack.c.h.b16 %v2685
    %v3174 = vunpack.c.l.b16 %v2686
    %v3175 = vunpack.c.h.b16 %v2686
    %v3176 = vunpack.c.l.b16 %v2687
    %v3177 = vunpack.c.h.b16 %v2687
    %v3178 = vunpack.c.l.b16 %v2688
    %v3179 = vunpack.c.h.b16 %v2688
    %v3180 = vunpack.c.l.b16 %v2689
    %v3181 = vunpack.c.h.b16 %v2689
    %v3182 = vunpack.c.l.b16 %v2690
    %v3183 = vunpack.c.h.b16 %v2690
    %v3184 = vunpack.c.l.b16 %v2691
    %v3185 = vunpack.c.h.b16 %v2691
    %v3186 = vunpack.c.l.b16 %v2692
    %v3187 = vunpack.c.h.b16 %v2692
    %v3188 = vunpack.c.l.b16 %v2693
    %v3189 = vunpack.c.h.b16 %v2693
    %v3190 = vunpack.c.l.b16 %v2694
    %v3191 = vunpack.c.h.b16 %v2694
    %v3192 = vunpack.c.l.b16 %v2695
    %v3193 = vunpack.c.h.b16 %v2695
    %v3194 = vunpack.c.l.b16 %v2696
    %v3195 = vunpack.c.h.b16 %v2696
    %v3196 = vunpack.c.l.b16 %v2697
    %v3197 = vunpack.c.h.b16 %v2697
    %v3198 = vunpack.c.l.b16 %v2698
    %v3199 = vunpack.c.h.b16 %v2698
    %v3200 = vunpack.c.l.b16 %v2699
    %v3201 = vunpack.c.h.b16 %v2699
    %v3202 = vunpack.c.l.b16 %v2700
    %v3203 = vunpack.c.h.b16 %v2700
    %v3204 = vunpack.c.l.b16 %v2701
    %v3205 = vunpack.c.h.b16 %v2701
    %v3206 = vunpack.c.l.b16 %v2702
    %v3207 = vunpack.c.h.b16 %v2702
    %v3208 = vunpack.c.l.b16 %v2703
    %v3209 = vunpack.c.h.b16 %v2703
    %v3210 = vunpack.c.l.b16 %v2704
    %v3211 = vunpack.c.h.b16 %v2704
    %v3212 = vunpack.c.l.b16 %v2705
    %v3213 = vunpack.c.h.b16 %v2705
    %v3214 = vunpack.c.l.b16 %v2706
    %v3215 = vunpack.c.h.b16 %v2706
    %v3216 = vunpack.c.l.b16 %v2707
    %v3217 = vunpack.c.h.b16 %v2707
    %v3218 = vunpack.c.l.b16 %v2708
    %v3219 = vunpack.c.h.b16 %v2708
    %v3220 = vunpack.c.l.b16 %v2709
    %v3221 = vunpack.c.h.b16 %v2709
    %v3222 = vunpack.c.l.b16 %v2710
    %v3223 = vunpack.c.h.b16 %v2710
    %v3224 = vunpack.c.l.b16 %v2711
    %v3225 = vunpack.c.h.b16 %v2711
    %v3226 = vunpack.c.l.b16 %v2712
    %v3227 = vunpack.c.h.b16 %v2712
    %v3228 = vunpack.c.l.b16 %v2713
    %v3229 = vunpack.c.h.b16 %v2713
    %v3230 = vunpack.c.l.b16 %v2714
    %v3231 = vunpack.c.h.b16 %v2714
    %v3232 = vunpack.c.l.b16 %v2715
    %v3233 = vunpack.c.h.b16 %v2715
    %v3234 = vunpack.c.l.b16 %v2716
    %v3235 = vunpack.c.h.b16 %v2716
    %v3236 = vunpack.c.l.b16 %v2717
    %v3237 = vunpack.c.h.b16 %v2717
    %v3238 = vunpack.c.l.b16 %v2718
    %v3239 = vunpack.c.h.b16 %v2718
    %v3240 = vunpack.c.l.b16 %v2719
    %v3241 = vunpack.c.h.b16 %v2719
    %v3242 = vpack.c.b16 %v2924, %v2922
    %v3243 = vpack.c.b16 %v2925, %v2923
    %v3244 = vpack.c.b16 %v2928, %v2926
    %v3245 = vpack.c.b16 %v2929, %v2927
    %v3246 = vpack.c.b16 %v2932, %v2930
    %v3247 = vpack.c.b16 %v2933, %v2931
    %v3248 = vpack.c.b16 %v2936, %v2934
    %v3249 = vpack.c.b16 %v2937, %v2935
    %v3250 = vpack.c.b16 %v2940, %v2938
    %v3251 = vpack.c.b16 %v2941, %v2939
    %v3252 = vpack.c.b16 %v2944, %v2942
    %v3253 = vpack.c.b16 %v2945, %v2943
    %v3254 = vpack.c.b16 %v2948, %v2946
    %v3255 = vpack.c.b16 %v2949, %v2947
    %v3256 = vpack.c.b16 %v2952, %v2950
    %v3257 = vpack.c.b16 %v2953, %v2951
    %v3258 = vpack.c.b16 %v2956, %v2954
    %v3259 = vpack.c.b16 %v2957, %v2955
    %v3260 = vpack.c.b16 %v2960, %v2958
    %v3261 = vpack.c.b16 %v2961, %v2959
    %v3262 = vpack.c.b16 %v2964, %v2962
    %v3263 = vpack.c.b16 %v2965, %v2963
    %v3264 = vpack.c.b16 %v2968, %v2966
    %v3265 = vpack.c.b16 %v2969, %v2967
    %v3266 = vpack.c.b16 %v2972, %v2970
    %v3267 = vpack.c.b16 %v2973, %v2971
    %v3268 = vpack.c.b16 %v2976, %v2974
    %v3269 = vpack.c.b16 %v2977, %v2975
    %v3270 = vpack.c.b16 %v2980, %v2978
    %v3271 = vpack.c.b16 %v2981, %v2979
    %v3272 = vpack.c.b16 %v2984, %v2982
    %v3273 = vpack.c.b16 %v2985, %v2983
    %v3274 = vpack.c.b16 %v2988, %v2986
    %v3275 = vpack.c.b16 %v2989, %v2987
    %v3276 = vpack.c.b16 %v2992, %v2990
    %v3277 = vpack.c.b16 %v2993, %v2991
    %v3278 = vpack.c.b16 %v2996, %v2994
    %v3279 = vpack.c.b16 %v2997, %v2995
    %v3280 = vpack.c.b16 %v3000, %v2998
    %v3281 = vpack.c.b16 %v3001, %v2999
    %v3282 = vpack.c.b16 %v3004, %v3002
    %v3283 = vpack.c.b16 %v3005, %v3003
    %v3284 = vpack.c.b16 %v3008, %v3006
    %v3285 = vpack.c.b16 %v3009, %v3007
    %v3286 = vpack.c.b16 %v3012, %v3010
    %v3287 = vpack.c.b16 %v3013, %v3011
    %v3288 = vpack.c.b16 %v3016, %v3014
    %v3289 = vpack.c.b16 %v3017, %v3015
    %v3290 = vpack.c.b16 %v3020, %v3018
    %v3291 = vpack.c.b16 %v3021, %v3019
    %v3292 = vpack.c.b16 %v3024, %v3022
    %v3293 = vpack.c.b16 %v3025, %v3023
    %v3294 = vpack.c.b16 %v3028, %v3026
    %v3295 = vpack.c.b16 %v3029, %v3027
    %v3296 = vpack.c.b16 %v3032, %v3030
    %v3297 = vpack.c.b16 %v3033, %v3031
    %v3298 = vpack.c.b16 %v3036, %v3034
    %v3299 = vpack.c.b16 %v3037, %v3035
    %v3300 = vpack.c.b16 %v3040, %v3038
    %v3301 = vpack.c.b16 %v3041, %v3039
    %v3302 = vpack.c.b16 %v3044, %v3042
    %v3303 = vpack.c.b16 %v3045, %v3043
    %v3304 = vpack.c.b16 %v3048, %v3046
    %v3305 = vpack.c.b16 %v3049, %v3047
    %v3306 = vpack.c.b16 %v3052, %v3050
    %v3307 = vpack.c.b16 %v3053, %v3051
    %v3308 = vpack.c.b16 %v3056, %v3054
    %v3309 = vpack.c.b16 %v3057, %v3055
    %v3310 = vpack.c.b16 %v3060, %v3058
    %v3311 = vpack.c.b16 %v3061, %v3059
    %v3312 = vpack.c.b16 %v3064, %v3062
    %v3313 = vpack.c.b16 %v3065, %v3063
    %v3314 = vpack.c.b16 %v3068, %v3066
    %v3315 = vpack.c.b16 %v3069, %v3067
    %v3316 = vpack.c.b16 %v3072, %v3070
    %v3317 = vpack.c.b16 %v3073, %v3071
    %v3318 = vpack.c.b16 %v3076, %v3074
    %v3319 = vpack.c.b16 %v3077, %v3075
    %v3320 = vpack.c.b16 %v3080, %v3078
    %v3321 = vpack.c.b16 %v3081, %v3079
    %v3322 = vpack.c.b16 %v3084, %v3082
    %v3323 = vpack.c.b16 %v3085, %v3083
    %v3324 = vpack.c.b16 %v3088, %v3086
    %v3325 = vpack.c.b16 %v3089, %v3087
    %v3326 = vpack.c.b16 %v3092, %v3090
    %v3327 = vpack.c.b16 %v3093, %v3091
    %v3328 = vpack.c.b16 %v3096, %v3094
    %v3329 = vpack.c.b16 %v3097, %v3095
    %v3330 = vpack.c.b16 %v3100, %v3098
    %v3331 = vpack.c.b16 %v3101, %v3099
    %v3332 = vpack.c.b16 %v3104, %v3102
    %v3333 = vpack.c.b16 %v3105, %v3103
    %v3334 = vpack.c.b16 %v3108, %v3106
    %v3335 = vpack.c.b16 %v3109, %v3107
    %v3336 = vpack.c.b16 %v3112, %v3110
    %v3337 = vpack.c.b16 %v3113, %v3111
    %v3338 = vpack.c.b16 %v3116, %v3114
    %v3339 = vpack.c.b16 %v3117, %v3115
    %v3340 = vpack.c.b16 %v3120, %v3118
    %v3341 = vpack.c.b16 %v3121, %v3119
    %v3342 = vpack.c.b16 %v3124, %v3122
    %v3343 = vpack.c.b16 %v3125, %v3123
    %v3344 = vpack.c.b16 %v3128, %v3126
    %v3345 = vpack.c.b16 %v3129, %v3127
    %v3346 = vpack.c.b16 %v3132, %v3130
    %v3347 = vpack.c.b16 %v3133, %v3131
    %v3348 = vpack.c.b16 %v3136, %v3134
    %v3349 = vpack.c.b16 %v3137, %v3135
    %v3350 = vpack.c.b16 %v3140, %v3138
    %v3351 = vpack.c.b16 %v3141, %v3139
    %v3352 = vpack.c.b16 %v3144, %v3142
    %v3353 = vpack.c.b16 %v3145, %v3143
    %v3354 = vpack.c.b16 %v3148, %v3146
    %v3355 = vpack.c.b16 %v3149, %v3147
    %v3356 = vpack.c.b16 %v3152, %v3150
    %v3357 = vpack.c.b16 %v3153, %v3151
    %v3358 = vpack.c.b16 %v3156, %v3154
    %v3359 = vpack.c.b16 %v3157, %v3155
    %v3360 = vpack.c.b16 %v3160, %v3158
    %v3361 = vpack.c.b16 %v3161, %v3159
    %v3362 = vpack.c.b16 %v3164, %v3162
    %v3363 = vpack.c.b16 %v3165, %v3163
    %v3364 = vpack.c.b16 %v3168, %v3166
    %v3365 = vpack.c.b16 %v3169, %v3167
    %v3366 = vpack.c.b16 %v3172, %v3170
    %v3367 = vpack.c.b16 %v3173, %v3171
    %v3368 = vpack.c.b16 %v3176, %v3174
    %v3369 = vpack.c.b16 %v3177, %v3175
    %v3370 = vpack.c.b16 %v3180, %v3178
    %v3371 = vpack.c.b16 %v3181, %v3179
    %v3372 = vpack.c.b16 %v3184, %v3182
    %v3373 = vpack.c.b16 %v3185, %v3183
    %v3374 = vpack.c.b16 %v3188, %v3186
    %v3375 = vpack.c.b16 %v3189, %v3187
    %v3376 = vpack.c.b16 %v3192, %v3190
    %v3377 = vpack.c.b16 %v3193, %v3191
    %v3378 = vpack.c.b16 %v3196, %v3194
    %v3379 = vpack.c.b16 %v3197, %v3195
    %v3380 = vpack.c.b16 %v3200, %v3198
    %v3381 = vpack.c.b16 %v3201, %v3199
    %v3382 = vpack.c.b16 %v3204, %v3202
    %v3383 = vpack.c.b16 %v3205, %v3203
    %v3384 = vpack.c.b16 %v3208, %v3206
    %v3385 = vpack.c.b16 %v3209, %v3207
    %v3386 = vpack.c.b16 %v3212, %v3210
    %v3387 = vpack.c.b16 %v3213, %v3211
    %v3388 = vpack.c.b16 %v3216, %v3214
    %v3389 = vpack.c.b16 %v3217, %v3215
    %v3390 = vpack.c.b16 %v3220, %v3218
    %v3391 = vpack.c.b16 %v3221, %v3219
    %v3392 = vpack.c.b16 %v3224, %v3222
    %v3393 = vpack.c.b16 %v3225, %v3223
    %v3394 = vpack.c.b16 %v3228, %v3226
    %v3395 = vpack.c.b16 %v3229, %v3227
    %v3396 = vpack.c.b16 %v3232, %v3230
    %v3397 = vpack.c.b16 %v3233, %v3231
    %v3398 = vpack.c.b16 %v3236, %v3234
    %v3399 = vpack.c.b16 %v3237, %v3235
    %v3400 = vpack.c.b16 %v3240, %v3238
    %v3401 = vpack.c.b16 %v3241, %v3239
    %3562 = vmatprep.subr.bf16.mxu0 %v3243
    %3563 = vmatpush1.bf16.msra.mxu0 %v3242
    %3564 = vmatprep.subr.bf16.mxu0 %v3245
    %3565 = vmatpush1.bf16.msra.mxu0 %v3244
    %3566 = vmatprep.subr.bf16.mxu0 %v3247
    %3567 = vmatpush1.bf16.msra.mxu0 %v3246
    %3568 = vmatprep.subr.bf16.mxu0 %v3249
    %3569 = vmatpush1.bf16.msra.mxu0 %v3248
    %3570 = vmatprep.subr.bf16.mxu0 %v3251
    %3571 = vmatpush1.bf16.msra.mxu0 %v3250
    %3572 = vmatprep.subr.bf16.mxu0 %v3253
    %3573 = vmatpush1.bf16.msra.mxu0 %v3252
    %3574 = vmatprep.subr.bf16.mxu0 %v3255
    %3575 = vmatpush1.bf16.msra.mxu0 %v3254
    %3576 = vmatprep.subr.bf16.mxu0 %v3257
    %3577 = vmatpush1.bf16.msra.mxu0 %v3256
    %3578 = vmatprep.subr.bf16.mxu0 %v3259
    %3579 = vmatpush1.bf16.msra.mxu0 %v3258
    %3580 = vmatprep.subr.bf16.mxu0 %v3261
    %3581 = vmatpush1.bf16.msra.mxu0 %v3260
    %3582 = vmatprep.subr.bf16.mxu0 %v3263
    %3583 = vmatpush1.bf16.msra.mxu0 %v3262
    %3584 = vmatprep.subr.bf16.mxu0 %v3265
    %3585 = vmatpush1.bf16.msra.mxu0 %v3264
    %3586 = vmatprep.subr.bf16.mxu0 %v3267
    %3587 = vmatpush1.bf16.msra.mxu0 %v3266
    %3588 = vmatprep.subr.bf16.mxu0 %v3269
    %3589 = vmatpush1.bf16.msra.mxu0 %v3268
    %3590 = vmatprep.subr.bf16.mxu0 %v3271
    %3591 = vmatpush1.bf16.msra.mxu0 %v3270
    %3592 = vmatprep.subr.bf16.mxu0 %v3273
    %3593 = vmatpush1.bf16.msra.mxu0 %v3272
    %3594 = vmatprep.mubr.bf16.mxu0 %v2721
    %3595 = vmatmul.mubr.bf16.gmra.mrb[0].mxu0 %v2720
    %v3596 = vpop.f32.mrb[0].mxu0
    %v3597 = vadd.f32 %v2755, %v3596
    %v3598 = vpop.f32.mrb[0].mxu0
    %v3599 = vadd.f32 %v2759, %v3598
    %v3600 = vpop.f32.mrb[0].mxu0
    %v3601 = vadd.f32 %v2755, %v3600
    %v3602 = vpop.f32.mrb[0].mxu0
    %v3603 = vadd.f32 %v2759, %v3602
    %3604 = vmatprep.mubr.bf16.mxu0 %v2731
    %3605 = vmatmul.mubr.bf16.gmra.mrb[0].mxu0 %v2730
    %v3606 = vpop.f32.mrb[0].mxu0
    %v3607 = vadd.f32 %v2755, %v3606
    %v3608 = vpop.f32.mrb[0].mxu0
    %v3609 = vadd.f32 %v2759, %v3608
    %v3610 = vpop.f32.mrb[0].mxu0
    %v3611 = vadd.f32 %v2755, %v3610
    %v3612 = vpop.f32.mrb[0].mxu0
    %v3613 = vadd.f32 %v2759, %v3612
    %3614 = vmatprep.mubr.bf16.mxu0 %v2741
    %3615 = vmatmul.mubr.bf16.gmra.mrb[0].mxu0 %v2740
    %v3616 = vpop.f32.mrb[0].mxu0
    %v3617 = vadd.f32 %v2755, %v3616
    %v3618 = vpop.f32.mrb[0].mxu0
    %v3619 = vadd.f32 %v2759, %v3618
    %v3620 = vpop.f32.mrb[0].mxu0
    %v3621 = vadd.f32 %v2755, %v3620
    %v3622 = vpop.f32.mrb[0].mxu0
    %v3623 = vadd.f32 %v2759, %v3622
    %3624 = vdwg.mxu0
    %3625 = vmatprep.subr.bf16.mxu0 %v3275
    %3626 = vmatpush1.bf16.msra.mxu0 %v3274
    %3627 = vmatprep.subr.bf16.mxu0 %v3277
    %3628 = vmatpush1.bf16.msra.mxu0 %v3276
    %3629 = vmatprep.subr.bf16.mxu0 %v3279
    %3630 = vmatpush1.bf16.msra.mxu0 %v3278
    %3631 = vmatprep.subr.bf16.mxu0 %v3281
    %3632 = vmatpush1.bf16.msra.mxu0 %v3280
    %3633 = vmatprep.subr.bf16.mxu0 %v3283
    %3634 = vmatpush1.bf16.msra.mxu0 %v3282
    %3635 = vmatprep.subr.bf16.mxu0 %v3285
    %3636 = vmatpush1.bf16.msra.mxu0 %v3284
    %3637 = vmatprep.subr.bf16.mxu0 %v3287
    %3638 = vmatpush1.bf16.msra.mxu0 %v3286
    %3639 = vmatprep.subr.bf16.mxu0 %v3289
    %3640 = vmatpush1.bf16.msra.mxu0 %v3288
    %3641 = vmatprep.subr.bf16.mxu0 %v3291
    %3642 = vmatpush1.bf16.msra.mxu0 %v3290
    %3643 = vmatprep.subr.bf16.mxu0 %v3293
    %3644 = vmatpush1.bf16.msra.mxu0 %v3292
    %3645 = vmatprep.subr.bf16.mxu0 %v3295
    %3646 = vmatpush1.bf16.msra.mxu0 %v3294
    %3647 = vmatprep.subr.bf16.mxu0 %v3297
    %3648 = vmatpush1.bf16.msra.mxu0 %v3296
    %3649 = vmatprep.subr.bf16.mxu0 %v3299
    %3650 = vmatpush1.bf16.msra.mxu0 %v3298
    %3651 = vmatprep.subr.bf16.mxu0 %v3301
    %3652 = vmatpush1.bf16.msra.mxu0 %v3300
    %3653 = vmatprep.subr.bf16.mxu0 %v3303
    %3654 = vmatpush1.bf16.msra.mxu0 %v3302
    %3655 = vmatprep.subr.bf16.mxu0 %v3305
    %3656 = vmatpush1.bf16.msra.mxu0 %v3304
    %3657 = vmatprep.mubr.bf16.mxu0 %v2723
    %3658 = vmatmul.mubr.bf16.gmra.mrb[0].mxu0 %v2722
    %v3659 = vpop.f32.mrb[0].mxu0
    %v3660 = vadd.f32 %v3597, %v3659
    %v3661 = vpop.f32.mrb[0].mxu0
    %v3662 = vadd.f32 %v3599, %v3661
    %v3663 = vpop.f32.mrb[0].mxu0
    %v3664 = vadd.f32 %v3601, %v3663
    %v3665 = vpop.f32.mrb[0].mxu0
    %v3666 = vadd.f32 %v3603, %v3665
    %3667 = vmatprep.mubr.bf16.mxu0 %v2733
    %3668 = vmatmul.mubr.bf16.gmra.mrb[0].mxu0 %v2732
    %v3669 = vpop.f32.mrb[0].mxu0
    %v3670 = vadd.f32 %v3607, %v3669
    %v3671 = vpop.f32.mrb[0].mxu0
    %v3672 = vadd.f32 %v3609, %v3671
    %v3673 = vpop.f32.mrb[0].mxu0
    %v3674 = vadd.f32 %v3611, %v3673
    %v3675 = vpop.f32.mrb[0].mxu0
    %v3676 = vadd.f32 %v3613, %v3675
    %3677 = vmatprep.mubr.bf16.mxu0 %v2743
    %3678 = vmatmul.mubr.bf16.gmra.mrb[0].mxu0 %v2742
    %v3679 = vpop.f32.mrb[0].mxu0
    %v3680 = vadd.f32 %v3617, %v3679
    %v3681 = vpop.f32.mrb[0].mxu0
    %v3682 = vadd.f32 %v3619, %v3681
    %v3683 = vpop.f32.mrb[0].mxu0
    %v3684 = vadd.f32 %v3621, %v3683
    %v3685 = vpop.f32.mrb[0].mxu0
    %v3686 = vadd.f32 %v3623, %v3685
    %3687 = vdwg.mxu0
    %3688 = vmatprep.subr.bf16.mxu0 %v3307
    %3689 = vmatpush1.bf16.msra.mxu0 %v3306
    %3690 = vmatprep.subr.bf16.mxu0 %v3309
    %3691 = vmatpush1.bf16.msra.mxu0 %v3308
    %3692 = vmatprep.subr.bf16.mxu0 %v3311
    %3693 = vmatpush1.bf16.msra.mxu0 %v3310
    %3694 = vmatprep.subr.bf16.mxu0 %v3313
    %3695 = vmatpush1.bf16.msra.mxu0 %v3312
    %3696 = vmatprep.subr.bf16.mxu0 %v3315
    %3697 = vmatpush1.bf16.msra.mxu0 %v3314
    %3698 = vmatprep.subr.bf16.mxu0 %v3317
    %3699 = vmatpush1.bf16.msra.mxu0 %v3316
    %3700 = vmatprep.subr.bf16.mxu0 %v3319
    %3701 = vmatpush1.bf16.msra.mxu0 %v3318
    %3702 = vmatprep.subr.bf16.mxu0 %v3321
    %3703 = vmatpush1.bf16.msra.mxu0 %v3320
    %3704 = vmatprep.subr.bf16.mxu0 %v3323
    %3705 = vmatpush1.bf16.msra.mxu0 %v3322
    %3706 = vmatprep.subr.bf16.mxu0 %v3325
    %3707 = vmatpush1.bf16.msra.mxu0 %v3324
    %3708 = vmatprep.subr.bf16.mxu0 %v3327
    %3709 = vmatpush1.bf16.msra.mxu0 %v3326
    %3710 = vmatprep.subr.bf16.mxu0 %v3329
    %3711 = vmatpush1.bf16.msra.mxu0 %v3328
    %3712 = vmatprep.subr.bf16.mxu0 %v3331
    %3713 = vmatpush1.bf16.msra.mxu0 %v3330
    %3714 = vmatprep.subr.bf16.mxu0 %v3333
    %3715 = vmatpush1.bf16.msra.mxu0 %v3332
    %3716 = vmatprep.subr.bf16.mxu0 %v3335
    %3717 = vmatpush1.bf16.msra.mxu0 %v3334
    %3718 = vmatprep.subr.bf16.mxu0 %v3337
    %3719 = vmatpush1.bf16.msra.mxu0 %v3336
    %3720 = vmatprep.mubr.bf16.mxu0 %v2725
    %3721 = vmatmul.mubr.bf16.gmra.mrb[0].mxu0 %v2724
    %v3722 = vpop.f32.mrb[0].mxu0
    %v3723 = vadd.f32 %v3660, %v3722
    %v3724 = vpop.f32.mrb[0].mxu0
    %v3725 = vadd.f32 %v3662, %v3724
    %v3726 = vpop.f32.mrb[0].mxu0
    %v3727 = vadd.f32 %v3664, %v3726
    %v3728 = vpop.f32.mrb[0].mxu0
    %v3729 = vadd.f32 %v3666, %v3728
    %3730 = vmatprep.mubr.bf16.mxu0 %v2735
    %3731 = vmatmul.mubr.bf16.gmra.mrb[0].mxu0 %v2734
    %v3732 = vpop.f32.mrb[0].mxu0
    %v3733 = vadd.f32 %v3670, %v3732
    %v3734 = vpop.f32.mrb[0].mxu0
    %v3735 = vadd.f32 %v3672, %v3734
    %v3736 = vpop.f32.mrb[0].mxu0
    %v3737 = vadd.f32 %v3674, %v3736
    %v3738 = vpop.f32.mrb[0].mxu0
    %v3739 = vadd.f32 %v3676, %v3738
    %3740 = vmatprep.mubr.bf16.mxu0 %v2745
    %3741 = vmatmul.mubr.bf16.gmra.mrb[0].mxu0 %v2744
    %v3742 = vpop.f32.mrb[0].mxu0
    %v3743 = vadd.f32 %v3680, %v3742
    %v3744 = vpop.f32.mrb[0].mxu0
    %v3745 = vadd.f32 %v3682, %v3744
    %v3746 = vpop.f32.mrb[0].mxu0
    %v3747 = vadd.f32 %v3684, %v3746
    %v3748 = vpop.f32.mrb[0].mxu0
    %v3749 = vadd.f32 %v3686, %v3748
    %3750 = vdwg.mxu0
    %3751 = vmatprep.subr.bf16.mxu0 %v3339
    %3752 = vmatpush1.bf16.msra.mxu0 %v3338
    %3753 = vmatprep.subr.bf16.mxu0 %v3341
    %3754 = vmatpush1.bf16.msra.mxu0 %v3340
    %3755 = vmatprep.subr.bf16.mxu0 %v3343
    %3756 = vmatpush1.bf16.msra.mxu0 %v3342
    %3757 = vmatprep.subr.bf16.mxu0 %v3345
    %3758 = vmatpush1.bf16.msra.mxu0 %v3344
    %3759 = vmatprep.subr.bf16.mxu0 %v3347
    %3760 = vmatpush1.bf16.msra.mxu0 %v3346
    %3761 = vmatprep.subr.bf16.mxu0 %v3349
    %3762 = vmatpush1.bf16.msra.mxu0 %v3348
    %3763 = vmatprep.subr.bf16.mxu0 %v3351
    %3764 = vmatpush1.bf16.msra.mxu0 %v3350
    %3765 = vmatprep.subr.bf16.mxu0 %v3353
    %3766 = vmatpush1.bf16.msra.mxu0 %v3352
    %3767 = vmatprep.subr.bf16.mxu0 %v3355
    %3768 = vmatpush1.bf16.msra.mxu0 %v3354
    %3769 = vmatprep.subr.bf16.mxu0 %v3357
    %3770 = vmatpush1.bf16.msra.mxu0 %v3356
    %3771 = vmatprep.subr.bf16.mxu0 %v3359
    %3772 = vmatpush1.bf16.msra.mxu0 %v3358
    %3773 = vmatprep.subr.bf16.mxu0 %v3361
    %3774 = vmatpush1.bf16.msra.mxu0 %v3360
    %3775 = vmatprep.subr.bf16.mxu0 %v3363
    %3776 = vmatpush1.bf16.msra.mxu0 %v3362
    %3777 = vmatprep.subr.bf16.mxu0 %v3365
    %3778 = vmatpush1.bf16.msra.mxu0 %v3364
    %3779 = vmatprep.subr.bf16.mxu0 %v3367
    %3780 = vmatpush1.bf16.msra.mxu0 %v3366
    %3781 = vmatprep.subr.bf16.mxu0 %v3369
    %3782 = vmatpush1.bf16.msra.mxu0 %v3368
    %3783 = vmatprep.mubr.bf16.mxu0 %v2727
    %3784 = vmatmul.mubr.bf16.gmra.mrb[0].mxu0 %v2726
    %v3785 = vpop.f32.mrb[0].mxu0
    %v3786 = vadd.f32 %v3723, %v3785
    %v3787 = vpop.f32.mrb[0].mxu0
    %v3788 = vadd.f32 %v3725, %v3787
    %v3789 = vpop.f32.mrb[0].mxu0
    %v3790 = vadd.f32 %v3727, %v3789
    %v3791 = vpop.f32.mrb[0].mxu0
    %v3792 = vadd.f32 %v3729, %v3791
    %3793 = vmatprep.mubr.bf16.mxu0 %v2737
    %3794 = vmatmul.mubr.bf16.gmra.mrb[0].mxu0 %v2736
    %v3795 = vpop.f32.mrb[0].mxu0
    %v3796 = vadd.f32 %v3733, %v3795
    %v3797 = vpop.f32.mrb[0].mxu0
    %v3798 = vadd.f32 %v3735, %v3797
    %v3799 = vpop.f32.mrb[0].mxu0
    %v3800 = vadd.f32 %v3737, %v3799
    %v3801 = vpop.f32.mrb[0].mxu0
    %v3802 = vadd.f32 %v3739, %v3801
    %3803 = vmatprep.mubr.bf16.mxu0 %v2747
    %3804 = vmatmul.mubr.bf16.gmra.mrb[0].mxu0 %v2746
    %v3805 = vpop.f32.mrb[0].mxu0
    %v3806 = vadd.f32 %v3743, %v3805
    %v3807 = vpop.f32.mrb[0].mxu0
    %v3808 = vadd.f32 %v3745, %v3807
    %v3809 = vpop.f32.mrb[0].mxu0
    %v3810 = vadd.f32 %v3747, %v3809
    %v3811 = vpop.f32.mrb[0].mxu0
    %v3812 = vadd.f32 %v3749, %v3811
    %3813 = vdwg.mxu0
    %3814 = vmatprep.subr.bf16.mxu0 %v3371
    %3815 = vmatpush1.bf16.msra.mxu0 %v3370
    %3816 = vmatprep.subr.bf16.mxu0 %v3373
    %3817 = vmatpush1.bf16.msra.mxu0 %v3372
    %3818 = vmatprep.subr.bf16.mxu0 %v3375
    %3819 = vmatpush1.bf16.msra.mxu0 %v3374
    %3820 = vmatprep.subr.bf16.mxu0 %v3377
    %3821 = vmatpush1.bf16.msra.mxu0 %v3376
    %3822 = vmatprep.subr.bf16.mxu0 %v3379
    %3823 = vmatpush1.bf16.msra.mxu0 %v3378
    %3824 = vmatprep.subr.bf16.mxu0 %v3381
    %3825 = vmatpush1.bf16.msra.mxu0 %v3380
    %3826 = vmatprep.subr.bf16.mxu0 %v3383
    %3827 = vmatpush1.bf16.msra.mxu0 %v3382
    %3828 = vmatprep.subr.bf16.mxu0 %v3385
    %3829 = vmatpush1.bf16.msra.mxu0 %v3384
    %3830 = vmatprep.subr.bf16.mxu0 %v3387
    %3831 = vmatpush1.bf16.msra.mxu0 %v3386
    %3832 = vmatprep.subr.bf16.mxu0 %v3389
    %3833 = vmatpush1.bf16.msra.mxu0 %v3388
    %3834 = vmatprep.subr.bf16.mxu0 %v3391
    %3835 = vmatpush1.bf16.msra.mxu0 %v3390
    %3836 = vmatprep.subr.bf16.mxu0 %v3393
    %3837 = vmatpush1.bf16.msra.mxu0 %v3392
    %3838 = vmatprep.subr.bf16.mxu0 %v3395
    %3839 = vmatpush1.bf16.msra.mxu0 %v3394
    %3840 = vmatprep.subr.bf16.mxu0 %v3397
    %3841 = vmatpush1.bf16.msra.mxu0 %v3396
    %3842 = vmatprep.subr.bf16.mxu0 %v3399
    %3843 = vmatpush1.bf16.msra.mxu0 %v3398
    %3844 = vmatprep.subr.bf16.mxu0 %v3401
    %3845 = vmatpush1.bf16.msra.mxu0 %v3400
    %3846 = vmatprep.mubr.bf16.mxu0 %v2729
    %3847 = vmatmul.mubr.bf16.gmra.mrb[0].mxu0 %v2728
    %v3848 = vpop.f32.mrb[0].mxu0
    %v3849 = vadd.f32 %v3786, %v3848
    %v3850 = vpop.f32.mrb[0].mxu0
    %v3851 = vadd.f32 %v3788, %v3850
    %v3852 = vpop.f32.mrb[0].mxu0
    %v3853 = vadd.f32 %v3790, %v3852
    %v3854 = vpop.f32.mrb[0].mxu0
    %v3855 = vadd.f32 %v3792, %v3854
    %3856 = vmatprep.mubr.bf16.mxu0 %v2739
    %3857 = vmatmul.mubr.bf16.gmra.mrb[0].mxu0 %v2738
    %v3858 = vpop.f32.mrb[0].mxu0
    %v3859 = vadd.f32 %v3796, %v3858
    %v3860 = vpop.f32.mrb[0].mxu0
    %v3861 = vadd.f32 %v3798, %v3860
    %v3862 = vpop.f32.mrb[0].mxu0
    %v3863 = vadd.f32 %v3800, %v3862
    %v3864 = vpop.f32.mrb[0].mxu0
    %v3865 = vadd.f32 %v3802, %v3864
    %3866 = vmatprep.mubr.bf16.mxu0 %v2749
    %3867 = vmatmul.mubr.bf16.gmra.mrb[0].mxu0 %v2748
    %v3868 = vpop.f32.mrb[0].mxu0
    %v3869 = vadd.f32 %v3806, %v3868
    %v3870 = vpop.f32.mrb[0].mxu0
    %v3871 = vadd.f32 %v3808, %v3870
    %v3872 = vpop.f32.mrb[0].mxu0
    %v3873 = vadd.f32 %v3810, %v3872
    %v3874 = vpop.f32.mrb[0].mxu0
    %v3875 = vadd.f32 %v3812, %v3874
    %3876 = vdwg.mxu0
    %v3877 = vmax.f32 %v3849, 0.0
    %v3878 = vmax.f32 %v3851, 0.0
    %v3879 = vmax.f32 %v3853, 0.0
    %v3880 = vmax.f32 %v3855, 0.0
    %v3881 = vmax.f32 %v3859, 0.0
    %v3882 = vmax.f32 %v3861, 0.0
    %v3883 = vmax.f32 %v3863, 0.0
    %v3884 = vmax.f32 %v3865, 0.0
    %v3885 = vmax.f32 %v3869, 0.0
    %v3886 = vmax.f32 %v3871, 0.0
    %v3887 = vmax.f32 %v3873, 0.0
    %v3888 = vmax.f32 %v3875, 0.0
    %3889 = vst [vmem:[#allocation4] sm:$0xff] %v3877
    %3890 = vst [vmem:[#allocation4 + $0x8] sm:$0xff] %v3878
    %3891 = vst [vmem:[#allocation4 + $0x10] sm:$0xff] %v3879
    %3892 = vst [vmem:[#allocation4 + $0x18] sm:$0xff] %v3880
    %3893 = vst [vmem:[#allocation4 + $0x20] sm:$0xff] %v3881
    %3894 = vst [vmem:[#allocation4 + $0x28] sm:$0xff] %v3882
    %3895 = vst [vmem:[#allocation4 + $0x30] sm:$0xff] %v3883
    %3896 = vst [vmem:[#allocation4 + $0x38] sm:$0xff] %v3884
    %3897 = vst [vmem:[#allocation4 + $0x40] sm:$0xff] %v3885
    %3898 = vst [vmem:[#allocation4 + $0x48] sm:$0xff] %v3886
    %3899 = vst [vmem:[#allocation4 + $0x50] sm:$0x7f] %v3887
    %3900 = vst [vmem:[#allocation4 + $0x58] sm:$0x7f] %v3888
    %v3901 = vld [vmem:[#allocation4] sm:$0xff]
    %v3902 = vld [vmem:[#allocation4 + $0x8] sm:$0xff]
    %v3903 = vld [vmem:[#allocation4 + $0x10] sm:$0xff]
    %v3904 = vld [vmem:[#allocation4 + $0x18] sm:$0xff]
    %v3905 = vld [vmem:[#allocation4 + $0x20] sm:$0xff]
    %v3906 = vld [vmem:[#allocation4 + $0x28] sm:$0xff]
    %v3907 = vld [vmem:[#allocation4 + $0x30] sm:$0xff]
    %v3908 = vld [vmem:[#allocation4 + $0x38] sm:$0xff]
    %v3909 = vld [vmem:[#allocation4 + $0x40] sm:$0xff]
    %v3910 = vld [vmem:[#allocation4 + $0x48] sm:$0xff]
    %v3911 = vld [vmem:[#allocation4 + $0x50] sm:$0x3f]
    %v3912 = vld [vmem:[#allocation4 + $0x58] sm:$0x3f]
    %v3913 = vld [vmem:[#allocation4] sm:$0xfe]
    %v3914 = vld [vmem:[#allocation4 + $0x8] sm:$0xfe]
    %v3915 = vld [vmem:[#allocation4 + $0x50] sm:$0x7f]
    %v3916 = vld [vmem:[#allocation4 + $0x58] sm:$0x7f]
    %v3929 = vrot.slane %v3913, 1
    %v3930 = vrot.slane %v3903, 1
    %v3931 = vsel %vm1846, %v3929, %v3930
    %v3932 = vrot.slane %v3914, 1
    %v3933 = vrot.slane %v3904, 1
    %v3934 = vsel %vm1846, %v3932, %v3933
    %v3935 = vrot.slane %v3905, 1
    %v3936 = vsel %vm1846, %v3930, %v3935
    %v3937 = vrot.slane %v3906, 1
    %v3938 = vsel %vm1846, %v3933, %v3937
    %v3939 = vrot.slane %v3907, 1
    %v3940 = vsel %vm1846, %v3935, %v3939
    %v3941 = vrot.slane %v3908, 1
    %v3942 = vsel %vm1846, %v3937, %v3941
    %v3943 = vrot.slane %v3909, 1
    %v3944 = vsel %vm1846, %v3939, %v3943
    %v3945 = vrot.slane %v3910, 1
    %v3946 = vsel %vm1846, %v3941, %v3945
    %v3947 = vrot.slane %v3915, 1
    %v3948 = vsel %vm1846, %v3943, %v3947
    %v3949 = vrot.slane %v3916, 1
    %v3950 = vsel %vm1846, %v3945, %v3949
    %v3963 = vld [vmem:[#allocation24] sm:$0xff]
    %v3964 = vld [vmem:[#allocation24 + $0x8] sm:$0xff]
    %v3965 = vld [vmem:[#allocation24 + $0x10] sm:$0xff]
    %v3966 = vld [vmem:[#allocation24 + $0x18] sm:$0xff]
    %v3967 = vld [vmem:[#allocation24 + $0x20] sm:$0xff]
    %v3968 = vld [vmem:[#allocation24 + $0x28] sm:$0xff]
    %v3969 = vld [vmem:[#allocation24 + $0x30] sm:$0xff]
    %v3970 = vld [vmem:[#allocation24 + $0x38] sm:$0xff]
    %v3971 = vld [vmem:[#allocation24 + $0x40] sm:$0xff]
    %v3972 = vld [vmem:[#allocation24 + $0x48] sm:$0xff]
    %v3973 = vld [vmem:[#allocation24 + $0x50] sm:$0xff]
    %v3974 = vld [vmem:[#allocation24 + $0x58] sm:$0xff]
    %v3975 = vld [vmem:[#allocation24 + $0x60] sm:$0xff]
    %v3976 = vld [vmem:[#allocation24 + $0x68] sm:$0xff]
    %v3977 = vld [vmem:[#allocation24 + $0x70] sm:$0xff]
    %v3978 = vld [vmem:[#allocation24 + $0x78] sm:$0xff]
    %v3979 = vld [vmem:[#allocation24 + $0x80] sm:$0xff]
    %v3980 = vld [vmem:[#allocation24 + $0x88] sm:$0xff]
    %v3981 = vld [vmem:[#allocation24 + $0x90] sm:$0xff]
    %v3982 = vld [vmem:[#allocation24 + $0x98] sm:$0xff]
    %v3983 = vld [vmem:[#allocation24 + $0xa0] sm:$0xff]
    %v3984 = vld [vmem:[#allocation24 + $0xa8] sm:$0xff]
    %v3985 = vld [vmem:[#allocation24 + $0xb0] sm:$0xff]
    %v3986 = vld [vmem:[#allocation24 + $0xb8] sm:$0xff]
    %v3987 = vld [vmem:[#allocation24 + $0xc0] sm:$0xff]
    %v3988 = vld [vmem:[#allocation24 + $0xc8] sm:$0xff]
    %v3989 = vld [vmem:[#allocation24 + $0xd0] sm:$0xff]
    %v3990 = vld [vmem:[#allocation24 + $0xd8] sm:$0xff]
    %v3991 = vld [vmem:[#allocation24 + $0xe0] sm:$0xff]
    %v3992 = vld [vmem:[#allocation24 + $0xe8] sm:$0xff]
    %v3993 = vld [vmem:[#allocation24 + $0xf0] sm:$0xff]
    %v3994 = vld [vmem:[#allocation24 + $0xf8] sm:$0xff]
    %v3995 = vld [vmem:[#allocation24 + $0x100] sm:$0xff]
    %v3996 = vld [vmem:[#allocation24 + $0x108] sm:$0xff]
    %v3997 = vld [vmem:[#allocation24 + $0x110] sm:$0xff]
    %v3998 = vld [vmem:[#allocation24 + $0x118] sm:$0xff]
    %v3999 = vld [vmem:[#allocation24 + $0x120] sm:$0xff]
    %v4000 = vld [vmem:[#allocation24 + $0x128] sm:$0xff]
    %v4001 = vld [vmem:[#allocation24 + $0x130] sm:$0xff]
    %v4002 = vld [vmem:[#allocation24 + $0x138] sm:$0xff]
    %v4003 = vld [vmem:[#allocation24 + $0x140] sm:$0xff]
    %v4004 = vld [vmem:[#allocation24 + $0x148] sm:$0xff]
    %v4005 = vld [vmem:[#allocation24 + $0x150] sm:$0xff]
    %v4006 = vld [vmem:[#allocation24 + $0x158] sm:$0xff]
    %v4007 = vld [vmem:[#allocation24 + $0x160] sm:$0xff]
    %v4008 = vld [vmem:[#allocation24 + $0x168] sm:$0xff]
    %v4009 = vld [vmem:[#allocation24 + $0x170] sm:$0xff]
    %v4010 = vld [vmem:[#allocation24 + $0x178] sm:$0xff]
    %v4011 = vld [vmem:[#allocation24 + $0x180] sm:$0xff]
    %v4012 = vld [vmem:[#allocation24 + $0x188] sm:$0xff]
    %v4013 = vld [vmem:[#allocation24 + $0x190] sm:$0xff]
    %v4014 = vld [vmem:[#allocation24 + $0x198] sm:$0xff]
    %v4015 = vld [vmem:[#allocation24 + $0x1a0] sm:$0xff]
    %v4016 = vld [vmem:[#allocation24 + $0x1a8] sm:$0xff]
    %v4017 = vld [vmem:[#allocation24 + $0x1b0] sm:$0xff]
    %v4018 = vld [vmem:[#allocation24 + $0x1b8] sm:$0xff]
    %v4019 = vld [vmem:[#allocation24 + $0x1c0] sm:$0xff]
    %v4020 = vld [vmem:[#allocation24 + $0x1c8] sm:$0xff]
    %v4021 = vld [vmem:[#allocation24 + $0x1d0] sm:$0xff]
    %v4022 = vld [vmem:[#allocation24 + $0x1d8] sm:$0xff]
    %v4023 = vld [vmem:[#allocation24 + $0x1e0] sm:$0xff]
    %v4024 = vld [vmem:[#allocation24 + $0x1e8] sm:$0xff]
    %v4025 = vld [vmem:[#allocation24 + $0x1f0] sm:$0xff]
    %v4026 = vld [vmem:[#allocation24 + $0x1f8] sm:$0xff]
    %v4027 = vpack.c.bf16 %v3903, %v3901
    %v4028 = vpack.c.bf16 %v3904, %v3902
    %v4029 = vpack.c.bf16 %v3936, %v3931
    %v4030 = vpack.c.bf16 %v3938, %v3934
    %v4031 = vpack.c.bf16 %v3907, %v3905
    %v4032 = vpack.c.bf16 %v3908, %v3906
    %v4033 = vpack.c.bf16 %v3944, %v3940
    %v4034 = vpack.c.bf16 %v3946, %v3942
    %v4035 = vpack.c.bf16 %v3911, %v3909
    %v4036 = vpack.c.bf16 %v3912, %v3910
    %v4037 = vpack.c.bf16 %v3947, %v3948
    %v4038 = vpack.c.bf16 %v3949, %v3950
    %v4103 = vunpack.c.l.b16 %v3963
    %v4104 = vunpack.c.h.b16 %v3963
    %v4105 = vunpack.c.l.b16 %v3964
    %v4106 = vunpack.c.h.b16 %v3964
    %v4107 = vunpack.c.l.b16 %v3965
    %v4108 = vunpack.c.h.b16 %v3965
    %v4109 = vunpack.c.l.b16 %v3966
    %v4110 = vunpack.c.h.b16 %v3966
    %v4111 = vunpack.c.l.b16 %v3967
    %v4112 = vunpack.c.h.b16 %v3967
    %v4113 = vunpack.c.l.b16 %v3968
    %v4114 = vunpack.c.h.b16 %v3968
    %v4115 = vunpack.c.l.b16 %v3969
    %v4116 = vunpack.c.h.b16 %v3969
    %v4117 = vunpack.c.l.b16 %v3970
    %v4118 = vunpack.c.h.b16 %v3970
    %v4119 = vunpack.c.l.b16 %v3971
    %v4120 = vunpack.c.h.b16 %v3971
    %v4121 = vunpack.c.l.b16 %v3972
    %v4122 = vunpack.c.h.b16 %v3972
    %v4123 = vunpack.c.l.b16 %v3973
    %v4124 = vunpack.c.h.b16 %v3973
    %v4125 = vunpack.c.l.b16 %v3974
    %v4126 = vunpack.c.h.b16 %v3974
    %v4127 = vunpack.c.l.b16 %v3975
    %v4128 = vunpack.c.h.b16 %v3975
    %v4129 = vunpack.c.l.b16 %v3976
    %v4130 = vunpack.c.h.b16 %v3976
    %v4131 = vunpack.c.l.b16 %v3977
    %v4132 = vunpack.c.h.b16 %v3977
    %v4133 = vunpack.c.l.b16 %v3978
    %v4134 = vunpack.c.h.b16 %v3978
    %v4135 = vunpack.c.l.b16 %v3979
    %v4136 = vunpack.c.h.b16 %v3979
    %v4137 = vunpack.c.l.b16 %v3980
    %v4138 = vunpack.c.h.b16 %v3980
    %v4139 = vunpack.c.l.b16 %v3981
    %v4140 = vunpack.c.h.b16 %v3981
    %v4141 = vunpack.c.l.b16 %v3982
    %v4142 = vunpack.c.h.b16 %v3982
    %v4143 = vunpack.c.l.b16 %v3983
    %v4144 = vunpack.c.h.b16 %v3983
    %v4145 = vunpack.c.l.b16 %v3984
    %v4146 = vunpack.c.h.b16 %v3984
    %v4147 = vunpack.c.l.b16 %v3985
    %v4148 = vunpack.c.h.b16 %v3985
    %v4149 = vunpack.c.l.b16 %v3986
    %v4150 = vunpack.c.h.b16 %v3986
    %v4151 = vunpack.c.l.b16 %v3987
    %v4152 = vunpack.c.h.b16 %v3987
    %v4153 = vunpack.c.l.b16 %v3988
    %v4154 = vunpack.c.h.b16 %v3988
    %v4155 = vunpack.c.l.b16 %v3989
    %v4156 = vunpack.c.h.b16 %v3989
    %v4157 = vunpack.c.l.b16 %v3990
    %v4158 = vunpack.c.h.b16 %v3990
    %v4159 = vunpack.c.l.b16 %v3991
    %v4160 = vunpack.c.h.b16 %v3991
    %v4161 = vunpack.c.l.b16 %v3992
    %v4162 = vunpack.c.h.b16 %v3992
    %v4163 = vunpack.c.l.b16 %v3993
    %v4164 = vunpack.c.h.b16 %v3993
    %v4165 = vunpack.c.l.b16 %v3994
    %v4166 = vunpack.c.h.b16 %v3994
    %v4167 = vunpack.c.l.b16 %v3995
    %v4168 = vunpack.c.h.b16 %v3995
    %v4169 = vunpack.c.l.b16 %v3996
    %v4170 = vunpack.c.h.b16 %v3996
    %v4171 = vunpack.c.l.b16 %v3997
    %v4172 = vunpack.c.h.b16 %v3997
    %v4173 = vunpack.c.l.b16 %v3998
    %v4174 = vunpack.c.h.b16 %v3998
    %v4175 = vunpack.c.l.b16 %v3999
    %v4176 = vunpack.c.h.b16 %v3999
    %v4177 = vunpack.c.l.b16 %v4000
    %v4178 = vunpack.c.h.b16 %v4000
    %v4179 = vunpack.c.l.b16 %v4001
    %v4180 = vunpack.c.h.b16 %v4001
    %v4181 = vunpack.c.l.b16 %v4002
    %v4182 = vunpack.c.h.b16 %v4002
    %v4183 = vunpack.c.l.b16 %v4003
    %v4184 = vunpack.c.h.b16 %v4003
    %v4185 = vunpack.c.l.b16 %v4004
    %v4186 = vunpack.c.h.b16 %v4004
    %v4187 = vunpack.c.l.b16 %v4005
    %v4188 = vunpack.c.h.b16 %v4005
    %v4189 = vunpack.c.l.b16 %v4006
    %v4190 = vunpack.c.h.b16 %v4006
    %v4191 = vunpack.c.l.b16 %v4007
    %v4192 = vunpack.c.h.b16 %v4007
    %v4193 = vunpack.c.l.b16 %v4008
    %v4194 = vunpack.c.h.b16 %v4008
    %v4195 = vunpack.c.l.b16 %v4009
    %v4196 = vunpack.c.h.b16 %v4009
    %v4197 = vunpack.c.l.b16 %v4010
    %v4198 = vunpack.c.h.b16 %v4010
    %v4199 = vunpack.c.l.b16 %v4011
    %v4200 = vunpack.c.h.b16 %v4011
    %v4201 = vunpack.c.l.b16 %v4012
    %v4202 = vunpack.c.h.b16 %v4012
    %v4203 = vunpack.c.l.b16 %v4013
    %v4204 = vunpack.c.h.b16 %v4013
    %v4205 = vunpack.c.l.b16 %v4014
    %v4206 = vunpack.c.h.b16 %v4014
    %v4207 = vunpack.c.l.b16 %v4015
    %v4208 = vunpack.c.h.b16 %v4015
    %v4209 = vunpack.c.l.b16 %v4016
    %v4210 = vunpack.c.h.b16 %v4016
    %v4211 = vunpack.c.l.b16 %v4017
    %v4212 = vunpack.c.h.b16 %v4017
    %v4213 = vunpack.c.l.b16 %v4018
    %v4214 = vunpack.c.h.b16 %v4018
    %v4215 = vunpack.c.l.b16 %v4019
    %v4216 = vunpack.c.h.b16 %v4019
    %v4217 = vunpack.c.l.b16 %v4020
    %v4218 = vunpack.c.h.b16 %v4020
    %v4219 = vunpack.c.l.b16 %v4021
    %v4220 = vunpack.c.h.b16 %v4021
    %v4221 = vunpack.c.l.b16 %v4022
    %v4222 = vunpack.c.h.b16 %v4022
    %v4223 = vunpack.c.l.b16 %v4023
    %v4224 = vunpack.c.h.b16 %v4023
    %v4225 = vunpack.c.l.b16 %v4024
    %v4226 = vunpack.c.h.b16 %v4024
    %v4227 = vunpack.c.l.b16 %v4025
    %v4228 = vunpack.c.h.b16 %v4025
    %v4229 = vunpack.c.l.b16 %v4026
    %v4230 = vunpack.c.h.b16 %v4026
    %v4231 = vpack.c.b16 %v4105, %v4103
    %v4232 = vpack.c.b16 %v4106, %v4104
    %v4233 = vpack.c.b16 %v4109, %v4107
    %v4234 = vpack.c.b16 %v4110, %v4108
    %v4235 = vpack.c.b16 %v4113, %v4111
    %v4236 = vpack.c.b16 %v4114, %v4112
    %v4237 = vpack.c.b16 %v4117, %v4115
    %v4238 = vpack.c.b16 %v4118, %v4116
    %v4239 = vpack.c.b16 %v4121, %v4119
    %v4240 = vpack.c.b16 %v4122, %v4120
    %v4241 = vpack.c.b16 %v4125, %v4123
    %v4242 = vpack.c.b16 %v4126, %v4124
    %v4243 = vpack.c.b16 %v4129, %v4127
    %v4244 = vpack.c.b16 %v4130, %v4128
    %v4245 = vpack.c.b16 %v4133, %v4131
    %v4246 = vpack.c.b16 %v4134, %v4132
    %v4247 = vpack.c.b16 %v4137, %v4135
    %v4248 = vpack.c.b16 %v4138, %v4136
    %v4249 = vpack.c.b16 %v4141, %v4139
    %v4250 = vpack.c.b16 %v4142, %v4140
    %v4251 = vpack.c.b16 %v4145, %v4143
    %v4252 = vpack.c.b16 %v4146, %v4144
    %v4253 = vpack.c.b16 %v4149, %v4147
    %v4254 = vpack.c.b16 %v4150, %v4148
    %v4255 = vpack.c.b16 %v4153, %v4151
    %v4256 = vpack.c.b16 %v4154, %v4152
    %v4257 = vpack.c.b16 %v4157, %v4155
    %v4258 = vpack.c.b16 %v4158, %v4156
    %v4259 = vpack.c.b16 %v4161, %v4159
    %v4260 = vpack.c.b16 %v4162, %v4160
    %v4261 = vpack.c.b16 %v4165, %v4163
    %v4262 = vpack.c.b16 %v4166, %v4164
    %v4263 = vpack.c.b16 %v4169, %v4167
    %v4264 = vpack.c.b16 %v4170, %v4168
    %v4265 = vpack.c.b16 %v4173, %v4171
    %v4266 = vpack.c.b16 %v4174, %v4172
    %v4267 = vpack.c.b16 %v4177, %v4175
    %v4268 = vpack.c.b16 %v4178, %v4176
    %v4269 = vpack.c.b16 %v4181, %v4179
    %v4270 = vpack.c.b16 %v4182, %v4180
    %v4271 = vpack.c.b16 %v4185, %v4183
    %v4272 = vpack.c.b16 %v4186, %v4184
    %v4273 = vpack.c.b16 %v4189, %v4187
    %v4274 = vpack.c.b16 %v4190, %v4188
    %v4275 = vpack.c.b16 %v4193, %v4191
    %v4276 = vpack.c.b16 %v4194, %v4192
    %v4277 = vpack.c.b16 %v4197, %v4195
    %v4278 = vpack.c.b16 %v4198, %v4196
    %v4279 = vpack.c.b16 %v4201, %v4199
    %v4280 = vpack.c.b16 %v4202, %v4200
    %v4281 = vpack.c.b16 %v4205, %v4203
    %v4282 = vpack.c.b16 %v4206, %v4204
    %v4283 = vpack.c.b16 %v4209, %v4207
    %v4284 = vpack.c.b16 %v4210, %v4208
    %v4285 = vpack.c.b16 %v4213, %v4211
    %v4286 = vpack.c.b16 %v4214, %v4212
    %v4287 = vpack.c.b16 %v4217, %v4215
    %v4288 = vpack.c.b16 %v4218, %v4216
    %v4289 = vpack.c.b16 %v4221, %v4219
    %v4290 = vpack.c.b16 %v4222, %v4220
    %v4291 = vpack.c.b16 %v4225, %v4223
    %v4292 = vpack.c.b16 %v4226, %v4224
    %v4293 = vpack.c.b16 %v4229, %v4227
    %v4294 = vpack.c.b16 %v4230, %v4228
    %4359 = vmatprep.subr.bf16.mxu0 %v4232
    %4360 = vmatpush1.bf16.msra.mxu0 %v4231
    %4361 = vmatprep.subr.bf16.mxu0 %v4234
    %4362 = vmatpush1.bf16.msra.mxu0 %v4233
    %4363 = vmatprep.subr.bf16.mxu0 %v4236
    %4364 = vmatpush1.bf16.msra.mxu0 %v4235
    %4365 = vmatprep.subr.bf16.mxu0 %v4238
    %4366 = vmatpush1.bf16.msra.mxu0 %v4237
    %4367 = vmatprep.subr.bf16.mxu0 %v4240
    %4368 = vmatpush1.bf16.msra.mxu0 %v4239
    %4369 = vmatprep.subr.bf16.mxu0 %v4242
    %4370 = vmatpush1.bf16.msra.mxu0 %v4241
    %4371 = vmatprep.subr.bf16.mxu0 %v4244
    %4372 = vmatpush1.bf16.msra.mxu0 %v4243
    %4373 = vmatprep.subr.bf16.mxu0 %v4246
    %4374 = vmatpush1.bf16.msra.mxu0 %v4245
    %4375 = vmatprep.subr.bf16.mxu0 %v4248
    %4376 = vmatpush1.bf16.msra.mxu0 %v4247
    %4377 = vmatprep.subr.bf16.mxu0 %v4250
    %4378 = vmatpush1.bf16.msra.mxu0 %v4249
    %4379 = vmatprep.subr.bf16.mxu0 %v4252
    %4380 = vmatpush1.bf16.msra.mxu0 %v4251
    %4381 = vmatprep.subr.bf16.mxu0 %v4254
    %4382 = vmatpush1.bf16.msra.mxu0 %v4253
    %4383 = vmatprep.subr.bf16.mxu0 %v4256
    %4384 = vmatpush1.bf16.msra.mxu0 %v4255
    %4385 = vmatprep.subr.bf16.mxu0 %v4258
    %4386 = vmatpush1.bf16.msra.mxu0 %v4257
    %4387 = vmatprep.subr.bf16.mxu0 %v4260
    %4388 = vmatpush1.bf16.msra.mxu0 %v4259
    %4389 = vmatprep.subr.bf16.mxu0 %v4262
    %4390 = vmatpush1.bf16.msra.mxu0 %v4261
    %4391 = vmatprep.mubr.bf16.mxu0 %v4028
    %4392 = vmatmul.mubr.bf16.gmra.mrb[0].mxu0 %v4027
    %v4393 = vpop.f32.mrb[0].mxu0
    %v4394 = vadd.f32 0.0, %v4393
    %v4395 = vpop.f32.mrb[0].mxu0
    %v4396 = vadd.f32 0.0, %v4395
    %v4397 = vpop.f32.mrb[0].mxu0
    %v4398 = vadd.f32 0.0, %v4397
    %v4399 = vpop.f32.mrb[0].mxu0
    %v4400 = vadd.f32 0.0, %v4399
    %4401 = vmatprep.mubr.bf16.mxu0 %v4032
    %4402 = vmatmul.mubr.bf16.gmra.mrb[0].mxu0 %v4031
    %v4403 = vpop.f32.mrb[0].mxu0
    %v4404 = vadd.f32 0.0, %v4403
    %v4405 = vpop.f32.mrb[0].mxu0
    %v4406 = vadd.f32 0.0, %v4405
    %v4407 = vpop.f32.mrb[0].mxu0
    %v4408 = vadd.f32 0.0, %v4407
    %v4409 = vpop.f32.mrb[0].mxu0
    %v4410 = vadd.f32 0.0, %v4409
    %4411 = vmatprep.mubr.bf16.mxu0 %v4036
    %4412 = vmatmul.mubr.bf16.gmra.mrb[0].mxu0 %v4035
    %v4413 = vpop.f32.mrb[0].mxu0
    %v4414 = vadd.f32 0.0, %v4413
    %v4415 = vpop.f32.mrb[0].mxu0
    %v4416 = vadd.f32 0.0, %v4415
    %v4417 = vpop.f32.mrb[0].mxu0
    %v4418 = vadd.f32 0.0, %v4417
    %v4419 = vpop.f32.mrb[0].mxu0
    %v4420 = vadd.f32 0.0, %v4419
    %4421 = vdwg.mxu0
    %4422 = vmatprep.subr.bf16.mxu0 %v4264
    %4423 = vmatpush1.bf16.msra.mxu0 %v4263
    %4424 = vmatprep.subr.bf16.mxu0 %v4266
    %4425 = vmatpush1.bf16.msra.mxu0 %v4265
    %4426 = vmatprep.subr.bf16.mxu0 %v4268
    %4427 = vmatpush1.bf16.msra.mxu0 %v4267
    %4428 = vmatprep.subr.bf16.mxu0 %v4270
    %4429 = vmatpush1.bf16.msra.mxu0 %v4269
    %4430 = vmatprep.subr.bf16.mxu0 %v4272
    %4431 = vmatpush1.bf16.msra.mxu0 %v4271
    %4432 = vmatprep.subr.bf16.mxu0 %v4274
    %4433 = vmatpush1.bf16.msra.mxu0 %v4273
    %4434 = vmatprep.subr.bf16.mxu0 %v4276
    %4435 = vmatpush1.bf16.msra.mxu0 %v4275
    %4436 = vmatprep.subr.bf16.mxu0 %v4278
    %4437 = vmatpush1.bf16.msra.mxu0 %v4277
    %4438 = vmatprep.subr.bf16.mxu0 %v4280
    %4439 = vmatpush1.bf16.msra.mxu0 %v4279
    %4440 = vmatprep.subr.bf16.mxu0 %v4282
    %4441 = vmatpush1.bf16.msra.mxu0 %v4281
    %4442 = vmatprep.subr.bf16.mxu0 %v4284
    %4443 = vmatpush1.bf16.msra.mxu0 %v4283
    %4444 = vmatprep.subr.bf16.mxu0 %v4286
    %4445 = vmatpush1.bf16.msra.mxu0 %v4285
    %4446 = vmatprep.subr.bf16.mxu0 %v4288
    %4447 = vmatpush1.bf16.msra.mxu0 %v4287
    %4448 = vmatprep.subr.bf16.mxu0 %v4290
    %4449 = vmatpush1.bf16.msra.mxu0 %v4289
    %4450 = vmatprep.subr.bf16.mxu0 %v4292
    %4451 = vmatpush1.bf16.msra.mxu0 %v4291
    %4452 = vmatprep.subr.bf16.mxu0 %v4294
    %4453 = vmatpush1.bf16.msra.mxu0 %v4293
    %4454 = vmatprep.mubr.bf16.mxu0 %v4030
    %4455 = vmatmul.mubr.bf16.gmra.mrb[0].mxu0 %v4029
    %v4456 = vpop.f32.mrb[0].mxu0
    %v4457 = vadd.f32 %v4394, %v4456
    %v4458 = vpop.f32.mrb[0].mxu0
    %v4459 = vadd.f32 %v4396, %v4458
    %v4460 = vpop.f32.mrb[0].mxu0
    %v4461 = vadd.f32 %v4398, %v4460
    %v4462 = vpop.f32.mrb[0].mxu0
    %v4463 = vadd.f32 %v4400, %v4462
    %4464 = vmatprep.mubr.bf16.mxu0 %v4034
    %4465 = vmatmul.mubr.bf16.gmra.mrb[0].mxu0 %v4033
    %v4466 = vpop.f32.mrb[0].mxu0
    %v4467 = vadd.f32 %v4404, %v4466
    %v4468 = vpop.f32.mrb[0].mxu0
    %v4469 = vadd.f32 %v4406, %v4468
    %v4470 = vpop.f32.mrb[0].mxu0
    %v4471 = vadd.f32 %v4408, %v4470
    %v4472 = vpop.f32.mrb[0].mxu0
    %v4473 = vadd.f32 %v4410, %v4472
    %4474 = vmatprep.mubr.bf16.mxu0 %v4038
    %4475 = vmatmul.mubr.bf16.gmra.mrb[0].mxu0 %v4037
    %v4476 = vpop.f32.mrb[0].mxu0
    %v4477 = vadd.f32 %v4414, %v4476
    %v4478 = vpop.f32.mrb[0].mxu0
    %v4479 = vadd.f32 %v4416, %v4478
    %v4480 = vpop.f32.mrb[0].mxu0
    %v4481 = vadd.f32 %v4418, %v4480
    %v4482 = vpop.f32.mrb[0].mxu0
    %v4483 = vadd.f32 %v4420, %v4482
    %4484 = vdwg.mxu0
    %v4485 = vmax.f32 %v4457, %v4459
    %v4486 = vmax.f32 %v4461, %v4463
    %v4487 = vmax.f32 %v4467, %v4469
    %v4488 = vmax.f32 %v4471, %v4473
    %v4489 = vmax.f32 %v4477, %v4479
    %v4490 = vmax.f32 %v4481, %v4483
    %v4491 = vld [vmem:[#allocation21] sm:$0xf]
    %v4492 = vld [vmem:[#allocation21 + $0x4] sm:$0xf]
    %v4493 = vpack.c.bf16 %v4486, %v4485
    %v4494 = vpack.c.bf16 %v4488, %v4487
    %v4495 = vpack.c.bf16 %v4490, %v4489
    %v4498 = vunpack.c.l.b16 %v4491
    %v4499 = vunpack.c.l.b16 %v4492
    %v4500 = vpack.c.b16 %v4499, %v4498
    %vm4501 = vcmask 375808
    %v4503 = vsel %vm4501, %v4500, 0
    %v4506 = vsel %vm1846, %v4495, 0
    %4508 = vmatprep.subr.bf16.mxu0 0
    %4509 = vmatpush1.bf16.msra.mxu0 %v4493
    %4510 = vmatprep.subr.bf16.mxu0 0
    %4511 = vmatpush1.bf16.msra.mxu0 %v4494
    %4512 = vmatprep.subr.bf16.mxu0 0
    %4513 = vmatpush1.bf16.msra.mxu0 %v4506
    %4514 = vmatprep.subr.bf16.mxu0 0
    %4515 = vmatpush1.bf16.msra.mxu0 0
    %4516 = vmatprep.subr.bf16.mxu0 0
    %4517 = vmatpush1.bf16.msra.mxu0 0
    %4518 = vmatprep.subr.bf16.mxu0 0
    %4519 = vmatpush1.bf16.msra.mxu0 0
    %4520 = vmatprep.subr.bf16.mxu0 0
    %4521 = vmatpush1.bf16.msra.mxu0 0
    %4522 = vmatprep.subr.bf16.mxu0 0
    %4523 = vmatpush1.bf16.msra.mxu0 0
    %4524 = vmatprep.subr.bf16.mxu0 0
    %4525 = vmatpush1.bf16.msra.mxu0 0
    %4526 = vmatprep.subr.bf16.mxu0 0
    %4527 = vmatpush1.bf16.msra.mxu0 0
    %4528 = vmatprep.subr.bf16.mxu0 0
    %4529 = vmatpush1.bf16.msra.mxu0 0
    %4530 = vmatprep.subr.bf16.mxu0 0
    %4531 = vmatpush1.bf16.msra.mxu0 0
    %4532 = vmatprep.subr.bf16.mxu0 0
    %4533 = vmatpush1.bf16.msra.mxu0 0
    %4534 = vmatprep.subr.bf16.mxu0 0
    %4535 = vmatpush1.bf16.msra.mxu0 0
    %4536 = vmatprep.subr.bf16.mxu0 0
    %4537 = vmatpush1.bf16.msra.mxu0 0
    %4538 = vmatprep.subr.bf16.mxu0 0
    %4539 = vmatpush1.bf16.msra.mxu0 0
    %4540 = vmatprep.mubr.bf16.mxu0 0
    %4541 = vmatmul.mubr.bf16.gmra.mrb[0].mxu0 %v4503
    %v4542 = vpop.f32.mrb[0].mxu0
    %v4543 = vadd.f32 0.0, %v4542
    %v4544 = vpop.f32.mrb[0].mxu0
    %v4545 = vpop.f32.mrb[0].mxu0
    %v4546 = vadd.f32 0.0, %v4545
    %v4547 = vpop.f32.mrb[0].mxu0
    %4548 = vdwg.mxu0
    %v4549 = vld [vmem:[#allocation22] sm:$0xf]
    %v4550 = vld [vmem:[#allocation22 + $0x4] sm:$0xf]
    %v4553 = vunpack.c.l.b16 %v4549
    %v4554 = vunpack.c.l.b16 %v4550
    %v4555 = vpack.c.b16 %v4554, %v4553
    %v4557 = vsel %vm4501, %v4555, 0
    %4559 = vmatprep.subr.bf16.mxu0 0
    %4560 = vmatpush1.bf16.msra.mxu0 %v4493
    %4561 = vmatprep.subr.bf16.mxu0 0
    %4562 = vmatpush1.bf16.msra.mxu0 %v4494
    %4563 = vmatprep.subr.bf16.mxu0 0
    %4564 = vmatpush1.bf16.msra.mxu0 %v4506
    %4565 = vmatprep.subr.bf16.mxu0 0
    %4566 = vmatpush1.bf16.msra.mxu0 0
    %4567 = vmatprep.subr.bf16.mxu0 0
    %4568 = vmatpush1.bf16.msra.mxu0 0
    %4569 = vmatprep.subr.bf16.mxu0 0
    %4570 = vmatpush1.bf16.msra.mxu0 0
    %4571 = vmatprep.subr.bf16.mxu0 0
    %4572 = vmatpush1.bf16.msra.mxu0 0
    %4573 = vmatprep.subr.bf16.mxu0 0
    %4574 = vmatpush1.bf16.msra.mxu0 0
    %4575 = vmatprep.subr.bf16.mxu0 0
    %4576 = vmatpush1.bf16.msra.mxu0 0
    %4577 = vmatprep.subr.bf16.mxu0 0
    %4578 = vmatpush1.bf16.msra.mxu0 0
    %4579 = vmatprep.subr.bf16.mxu0 0
    %4580 = vmatpush1.bf16.msra.mxu0 0
    %4581 = vmatprep.subr.bf16.mxu0 0
    %4582 = vmatpush1.bf16.msra.mxu0 0
    %4583 = vmatprep.subr.bf16.mxu0 0
    %4584 = vmatpush1.bf16.msra.mxu0 0
    %4585 = vmatprep.subr.bf16.mxu0 0
    %4586 = vmatpush1.bf16.msra.mxu0 0
    %4587 = vmatprep.subr.bf16.mxu0 0
    %4588 = vmatpush1.bf16.msra.mxu0 0
    %4589 = vmatprep.subr.bf16.mxu0 0
    %4590 = vmatpush1.bf16.msra.mxu0 0
    %4591 = vmatprep.mubr.bf16.mxu0 0
    %4592 = vmatmul.mubr.bf16.gmra.mrb[0].mxu0 %v4557
    %v4593 = vpop.f32.mrb[0].mxu0
    %v4594 = vadd.f32 0.0, %v4593
    %v4595 = vpop.f32.mrb[0].mxu0
    %v4596 = vpop.f32.mrb[0].mxu0
    %v4597 = vadd.f32 0.0, %v4596
    %v4598 = vpop.f32.mrb[0].mxu0
    %4599 = vdwg.mxu0
    %v4600 = vmax.f32 %v4543, %v4594
    %v4601 = vmax.f32 %v4546, %v4597
    %v4602 = vld [vmem:[#allocation19] sm:$0x1]
    %v4604 = vlaneseq
    %v4605 = vshrl.u32 %v4604, 7
    %v4606 = vsub.s32 0, %v4605
    %v4607 = vrot.slane %v4602, %v4606
    %v4609 = vadd.f32 %v4600, %v4607
    %v4610 = vadd.f32 %v4601, %v4607
    %v4611 = vmax.f32 %v4609, 0.0
    %v4612 = vmax.f32 %v4610, 0.0
    %4613 = vst [vmem:[#allocation5] sm:$0xff] %v4611
    %4614 = vst [vmem:[#allocation5 + $0x8] sm:$0xff] %v4612
    %v4615 = vld [vmem:[#allocation5] sm:$0xff]
    %v4616 = vld [vmem:[#allocation5 + $0x8] sm:$0x7f]
    %v4617 = vld [vmem:[#allocation5 + $0x1] sm:$0xff]
    %v4618 = vld [vmem:[#allocation5 + $0x9] sm:$0x7f]
    %v4619 = vld [vmem:[#allocation27] sm:$0xf]
    %v4620 = vld [vmem:[#allocation27 + $0x4] sm:$0xf]
    %v4621 = vld [vmem:[#allocation27 + $0x8] sm:$0xf]
    %v4622 = vld [vmem:[#allocation27 + $0xc] sm:$0xf]
    %v4623 = vld [vmem:[#allocation27 + $0x10] sm:$0xf]
    %v4624 = vld [vmem:[#allocation27 + $0x14] sm:$0xf]
    %v4625 = vld [vmem:[#allocation27 + $0x18] sm:$0xf]
    %v4626 = vld [vmem:[#allocation27 + $0x1c] sm:$0xf]
    %v4627 = vld [vmem:[#allocation27 + $0x20] sm:$0xf]
    %v4628 = vld [vmem:[#allocation27 + $0x24] sm:$0xf]
    %v4629 = vld [vmem:[#allocation27 + $0x28] sm:$0xf]
    %v4630 = vld [vmem:[#allocation27 + $0x2c] sm:$0xf]
    %v4631 = vld [vmem:[#allocation27 + $0x30] sm:$0xf]
    %v4632 = vld [vmem:[#allocation27 + $0x34] sm:$0xf]
    %v4633 = vld [vmem:[#allocation27 + $0x38] sm:$0xf]
    %v4634 = vld [vmem:[#allocation27 + $0x3c] sm:$0xf]
    %v4635 = vld [vmem:[#allocation27 + $0x40] sm:$0xf]
    %v4636 = vld [vmem:[#allocation27 + $0x44] sm:$0xf]
    %v4637 = vld [vmem:[#allocation27 + $0x48] sm:$0xf]
    %v4638 = vld [vmem:[#allocation27 + $0x4c] sm:$0xf]
    %v4639 = vld [vmem:[#allocation27 + $0x50] sm:$0xf]
    %v4640 = vld [vmem:[#allocation27 + $0x54] sm:$0xf]
    %v4641 = vld [vmem:[#allocation27 + $0x58] sm:$0xf]
    %v4642 = vld [vmem:[#allocation27 + $0x5c] sm:$0xf]
    %v4643 = vld [vmem:[#allocation27 + $0x60] sm:$0xf]
    %v4644 = vld [vmem:[#allocation27 + $0x64] sm:$0xf]
    %v4645 = vld [vmem:[#allocation27 + $0x68] sm:$0xf]
    %v4646 = vld [vmem:[#allocation27 + $0x6c] sm:$0xf]
    %v4647 = vld [vmem:[#allocation27 + $0x70] sm:$0xf]
    %v4648 = vld [vmem:[#allocation27 + $0x74] sm:$0xf]
    %v4649 = vld [vmem:[#allocation27 + $0x78] sm:$0xf]
    %v4650 = vld [vmem:[#allocation27 + $0x7c] sm:$0xf]
    %v4651 = vpack.c.bf16 %v4616, %v4615
    %v4652 = vpack.c.bf16 %v4618, %v4617
    %v4653 = vld [vmem:[#allocation25] sm:$0x1]
    %v4655 = vlaneseq
    %v4656 = vshrl.u32 %v4655, 7
    %v4657 = vsub.s32 0, %v4656
    %v4658 = vrot.slane %v4653, %v4657
    %v4692 = vunpack.c.l.b16 %v4619
    %v4693 = vunpack.c.l.b16 %v4620
    %v4694 = vunpack.c.l.b16 %v4621
    %v4695 = vunpack.c.l.b16 %v4622
    %v4696 = vunpack.c.l.b16 %v4623
    %v4697 = vunpack.c.l.b16 %v4624
    %v4698 = vunpack.c.l.b16 %v4625
    %v4699 = vunpack.c.l.b16 %v4626
    %v4700 = vunpack.c.l.b16 %v4627
    %v4701 = vunpack.c.l.b16 %v4628
    %v4702 = vunpack.c.l.b16 %v4629
    %v4703 = vunpack.c.l.b16 %v4630
    %v4704 = vunpack.c.l.b16 %v4631
    %v4705 = vunpack.c.l.b16 %v4632
    %v4706 = vunpack.c.l.b16 %v4633
    %v4707 = vunpack.c.l.b16 %v4634
    %v4708 = vunpack.c.l.b16 %v4635
    %v4709 = vunpack.c.l.b16 %v4636
    %v4710 = vunpack.c.l.b16 %v4637
    %v4711 = vunpack.c.l.b16 %v4638
    %v4712 = vunpack.c.l.b16 %v4639
    %v4713 = vunpack.c.l.b16 %v4640
    %v4714 = vunpack.c.l.b16 %v4641
    %v4715 = vunpack.c.l.b16 %v4642
    %v4716 = vunpack.c.l.b16 %v4643
    %v4717 = vunpack.c.l.b16 %v4644
    %v4718 = vunpack.c.l.b16 %v4645
    %v4719 = vunpack.c.l.b16 %v4646
    %v4720 = vunpack.c.l.b16 %v4647
    %v4721 = vunpack.c.l.b16 %v4648
    %v4722 = vunpack.c.l.b16 %v4649
    %v4723 = vunpack.c.l.b16 %v4650
    %v4724 = vpack.c.b16 %v4693, %v4692
    %v4725 = vpack.c.b16 %v4695, %v4694
    %v4726 = vpack.c.b16 %v4697, %v4696
    %v4727 = vpack.c.b16 %v4699, %v4698
    %v4728 = vpack.c.b16 %v4701, %v4700
    %v4729 = vpack.c.b16 %v4703, %v4702
    %v4730 = vpack.c.b16 %v4705, %v4704
    %v4731 = vpack.c.b16 %v4707, %v4706
    %v4732 = vpack.c.b16 %v4709, %v4708
    %v4733 = vpack.c.b16 %v4711, %v4710
    %v4734 = vpack.c.b16 %v4713, %v4712
    %v4735 = vpack.c.b16 %v4715, %v4714
    %v4736 = vpack.c.b16 %v4717, %v4716
    %v4737 = vpack.c.b16 %v4719, %v4718
    %v4738 = vpack.c.b16 %v4721, %v4720
    %v4739 = vpack.c.b16 %v4723, %v4722
    %4756 = vmatprep.subr.bf16.mxu0 0
    %4757 = vmatpush1.bf16.msra.mxu0 %v4724
    %4758 = vmatprep.subr.bf16.mxu0 0
    %4759 = vmatpush1.bf16.msra.mxu0 %v4725
    %4760 = vmatprep.subr.bf16.mxu0 0
    %4761 = vmatpush1.bf16.msra.mxu0 %v4726
    %4762 = vmatprep.subr.bf16.mxu0 0
    %4763 = vmatpush1.bf16.msra.mxu0 %v4727
    %4764 = vmatprep.subr.bf16.mxu0 0
    %4765 = vmatpush1.bf16.msra.mxu0 %v4728
    %4766 = vmatprep.subr.bf16.mxu0 0
    %4767 = vmatpush1.bf16.msra.mxu0 %v4729
    %4768 = vmatprep.subr.bf16.mxu0 0
    %4769 = vmatpush1.bf16.msra.mxu0 %v4730
    %4770 = vmatprep.subr.bf16.mxu0 0
    %4771 = vmatpush1.bf16.msra.mxu0 %v4731
    %4772 = vmatprep.subr.bf16.mxu0 0
    %4773 = vmatpush1.bf16.msra.mxu0 %v4732
    %4774 = vmatprep.subr.bf16.mxu0 0
    %4775 = vmatpush1.bf16.msra.mxu0 %v4733
    %4776 = vmatprep.subr.bf16.mxu0 0
    %4777 = vmatpush1.bf16.msra.mxu0 %v4734
    %4778 = vmatprep.subr.bf16.mxu0 0
    %4779 = vmatpush1.bf16.msra.mxu0 %v4735
    %4780 = vmatprep.subr.bf16.mxu0 0
    %4781 = vmatpush1.bf16.msra.mxu0 %v4736
    %4782 = vmatprep.subr.bf16.mxu0 0
    %4783 = vmatpush1.bf16.msra.mxu0 %v4737
    %4784 = vmatprep.subr.bf16.mxu0 0
    %4785 = vmatpush1.bf16.msra.mxu0 %v4738
    %4786 = vmatprep.subr.bf16.mxu0 0
    %4787 = vmatpush1.bf16.msra.mxu0 %v4739
    %4788 = vmatprep.mubr.bf16.mxu0 %v4652
    %4789 = vmatmul.mubr.bf16.gmra.mrb[0].mxu0 %v4651
    %v4790 = vpop.f32.mrb[0].mxu0
    %v4791 = vadd.f32 %v4658, %v4790
    %v4792 = vpop.f32.mrb[0].mxu0
    %v4793 = vpop.f32.mrb[0].mxu0
    %v4794 = vadd.f32 %v4658, %v4793
    %v4795 = vpop.f32.mrb[0].mxu0
    %4796 = vdwg.mxu0
    %v4797 = vmax.f32 %v4791, 0.0
    %v4798 = vmax.f32 %v4794, 0.0
    %v4799 = vld [vmem:[#allocation34] sm:$0xf]
    %v4800 = vpack.c.bf16 %v4798, %v4797
    %vm4801 = vcmask 121856
    %v4803 = vsel %vm4801, %v4799, 0
    %vm4805 = vcmask 1047552
    %v4806 = vsel %vm1846, 4294967295, 65535
    %v4807 = vsel %vm4805, %v4806, 0
    %v4809 = vand.u32 %v4800, %v4807
    %4811 = vmatprep.subr.bf16.mxu0 0
    %4812 = vmatpush1.bf16.msra.mxu0 %v4809
    %4813 = vmatprep.subr.bf16.mxu0 0
    %4814 = vmatpush1.bf16.msra.mxu0 0
    %4815 = vmatprep.subr.bf16.mxu0 0
    %4816 = vmatpush1.bf16.msra.mxu0 0
    %4817 = vmatprep.subr.bf16.mxu0 0
    %4818 = vmatpush1.bf16.msra.mxu0 0
    %4819 = vmatprep.subr.bf16.mxu0 0
    %4820 = vmatpush1.bf16.msra.mxu0 0
    %4821 = vmatprep.subr.bf16.mxu0 0
    %4822 = vmatpush1.bf16.msra.mxu0 0
    %4823 = vmatprep.subr.bf16.mxu0 0
    %4824 = vmatpush1.bf16.msra.mxu0 0
    %4825 = vmatprep.subr.bf16.mxu0 0
    %4826 = vmatpush1.bf16.msra.mxu0 0
    %4827 = vmatprep.subr.bf16.mxu0 0
    %4828 = vmatpush1.bf16.msra.mxu0 0
    %4829 = vmatprep.subr.bf16.mxu0 0
    %4830 = vmatpush1.bf16.msra.mxu0 0
    %4831 = vmatprep.subr.bf16.mxu0 0
    %4832 = vmatpush1.bf16.msra.mxu0 0
    %4833 = vmatprep.subr.bf16.mxu0 0
    %4834 = vmatpush1.bf16.msra.mxu0 0
    %4835 = vmatprep.subr.bf16.mxu0 0
    %4836 = vmatpush1.bf16.msra.mxu0 0
    %4837 = vmatprep.subr.bf16.mxu0 0
    %4838 = vmatpush1.bf16.msra.mxu0 0
    %4839 = vmatprep.subr.bf16.mxu0 0
    %4840 = vmatpush1.bf16.msra.mxu0 0
    %4841 = vmatprep.subr.bf16.mxu0 0
    %4842 = vmatpush1.bf16.msra.mxu0 0
    %4843 = vmatprep.mubr.bf16.mxu0 0
    %4844 = vmatmul.mubr.bf16.gmra.mrb[0].mxu0 %v4803
    %v4845 = vpop.f32.mrb[0].mxu0
    %v4846 = vadd.f32 0.0, %v4845
    %v4847 = vpop.f32.mrb[0].mxu0
    %v4848 = vpop.f32.mrb[0].mxu0
    %v4849 = vpop.f32.mrb[0].mxu0
    %4850 = vdwg.mxu0
    %v4851 = vld [vmem:[#allocation30] sm:$0xf]
    %v4852 = vld [vmem:[#allocation30 + $0x4] sm:$0xf]
    %v4853 = vld [vmem:[#allocation30 + $0x8] sm:$0xf]
    %v4854 = vld [vmem:[#allocation30 + $0xc] sm:$0xf]
    %v4855 = vld [vmem:[#allocation30 + $0x10] sm:$0xf]
    %v4856 = vld [vmem:[#allocation30 + $0x14] sm:$0xf]
    %v4857 = vld [vmem:[#allocation30 + $0x18] sm:$0xf]
    %v4858 = vld [vmem:[#allocation30 + $0x1c] sm:$0xf]
    %v4859 = vld [vmem:[#allocation30 + $0x20] sm:$0xf]
    %v4860 = vld [vmem:[#allocation30 + $0x24] sm:$0xf]
    %v4861 = vld [vmem:[#allocation30 + $0x28] sm:$0xf]
    %v4862 = vld [vmem:[#allocation30 + $0x2c] sm:$0xf]
    %v4863 = vld [vmem:[#allocation30 + $0x30] sm:$0xf]
    %v4864 = vld [vmem:[#allocation30 + $0x34] sm:$0xf]
    %v4865 = vld [vmem:[#allocation30 + $0x38] sm:$0xf]
    %v4866 = vld [vmem:[#allocation30 + $0x3c] sm:$0xf]
    %v4867 = vpack.c.bf16 %v4846, %v4846
    %v4868 = vld [vmem:[#allocation28] sm:$0x1]
    %v4870 = vlaneseq
    %v4871 = vshrl.u32 %v4870, 7
    %v4872 = vsub.s32 0, %v4871
    %v4873 = vrot.slane %v4868, %v4872
    %v4891 = vunpack.c.l.b16 %v4851
    %v4892 = vunpack.c.l.b16 %v4852
    %v4893 = vunpack.c.l.b16 %v4853
    %v4894 = vunpack.c.l.b16 %v4854
    %v4895 = vunpack.c.l.b16 %v4855
    %v4896 = vunpack.c.l.b16 %v4856
    %v4897 = vunpack.c.l.b16 %v4857
    %v4898 = vunpack.c.l.b16 %v4858
    %v4899 = vunpack.c.l.b16 %v4859
    %v4900 = vunpack.c.l.b16 %v4860
    %v4901 = vunpack.c.l.b16 %v4861
    %v4902 = vunpack.c.l.b16 %v4862
    %v4903 = vunpack.c.l.b16 %v4863
    %v4904 = vunpack.c.l.b16 %v4864
    %v4905 = vunpack.c.l.b16 %v4865
    %v4906 = vunpack.c.l.b16 %v4866
    %v4907 = vpack.c.b16 %v4892, %v4891
    %v4908 = vpack.c.b16 %v4894, %v4893
    %v4909 = vpack.c.b16 %v4896, %v4895
    %v4910 = vpack.c.b16 %v4898, %v4897
    %v4911 = vpack.c.b16 %v4900, %v4899
    %v4912 = vpack.c.b16 %v4902, %v4901
    %v4913 = vpack.c.b16 %v4904, %v4903
    %v4914 = vpack.c.b16 %v4906, %v4905
    %4923 = vmatprep.subr.bf16.mxu0 0
    %4924 = vmatpush1.bf16.msra.mxu0 %v4907
    %4925 = vmatprep.subr.bf16.mxu0 0
    %4926 = vmatpush1.bf16.msra.mxu0 %v4908
    %4927 = vmatprep.subr.bf16.mxu0 0
    %4928 = vmatpush1.bf16.msra.mxu0 %v4909
    %4929 = vmatprep.subr.bf16.mxu0 0
    %4930 = vmatpush1.bf16.msra.mxu0 %v4910
    %4931 = vmatprep.subr.bf16.mxu0 0
    %4932 = vmatpush1.bf16.msra.mxu0 %v4911
    %4933 = vmatprep.subr.bf16.mxu0 0
    %4934 = vmatpush1.bf16.msra.mxu0 %v4912
    %4935 = vmatprep.subr.bf16.mxu0 0
    %4936 = vmatpush1.bf16.msra.mxu0 %v4913
    %4937 = vmatprep.subr.bf16.mxu0 0
    %4938 = vmatpush1.bf16.msra.mxu0 %v4914
    %4939 = vmatprep.subr.bf16.mxu0 0
    %4940 = vmatpush1.bf16.msra.mxu0 0
    %4941 = vmatprep.subr.bf16.mxu0 0
    %4942 = vmatpush1.bf16.msra.mxu0 0
    %4943 = vmatprep.subr.bf16.mxu0 0
    %4944 = vmatpush1.bf16.msra.mxu0 0
    %4945 = vmatprep.subr.bf16.mxu0 0
    %4946 = vmatpush1.bf16.msra.mxu0 0
    %4947 = vmatprep.subr.bf16.mxu0 0
    %4948 = vmatpush1.bf16.msra.mxu0 0
    %4949 = vmatprep.subr.bf16.mxu0 0
    %4950 = vmatpush1.bf16.msra.mxu0 0
    %4951 = vmatprep.subr.bf16.mxu0 0
    %4952 = vmatpush1.bf16.msra.mxu0 0
    %4953 = vmatprep.subr.bf16.mxu0 0
    %4954 = vmatpush1.bf16.msra.mxu0 0
    %4955 = vmatprep.mubr.bf16.mxu0 0
    %4956 = vmatmul.mubr.bf16.gmra.mrb[0].mxu0 %v4867
    %v4957 = vpop.f32.mrb[0].mxu0
    %v4958 = vadd.f32 %v4873, %v4957
    %v4959 = vpop.f32.mrb[0].mxu0
    %v4960 = vpop.f32.mrb[0].mxu0
    %v4961 = vpop.f32.mrb[0].mxu0
    %4962 = vdwg.mxu0
    %v4963 = vmax.f32 %v4958, 0.0
    %v4964 = vld [vmem:[%s43] sm:$0xf]
    %v4965 = vld [vmem:[%s43 + $0x4] sm:$0xf]
    %v4966 = vld [vmem:[%s43 + $0x8] sm:$0xf]
    %v4967 = vld [vmem:[%s43 + $0xc] sm:$0xf]
    %v4968 = vld [vmem:[%s43 + $0x10] sm:$0xf]
    %v4969 = vld [vmem:[%s43 + $0x14] sm:$0xf]
    %v4970 = vld [vmem:[%s43 + $0x18] sm:$0xf]
    %v4971 = vld [vmem:[%s43 + $0x1c] sm:$0xf]
    %v4972 = vld [vmem:[%s43 + $0x20] sm:$0xf]
    %v4973 = vld [vmem:[%s43 + $0x24] sm:$0xf]
    %v4974 = vld [vmem:[%s43 + $0x28] sm:$0xf]
    %v4975 = vld [vmem:[%s43 + $0x2c] sm:$0xf]
    %v4976 = vld [vmem:[%s43 + $0x30] sm:$0xf]
    %v4977 = vld [vmem:[%s43 + $0x34] sm:$0xf]
    %v4978 = vld [vmem:[%s43 + $0x38] sm:$0xf]
    %v4979 = vld [vmem:[%s43 + $0x3c] sm:$0xf]
    %v4980 = vpack.c.bf16 %v4963, %v4963
    %v4981 = vld [vmem:[#allocation31] sm:$0x1]
    %v4983 = vlaneseq
    %v4984 = vshrl.u32 %v4983, 7
    %v4985 = vsub.s32 0, %v4984
    %v4986 = vrot.slane %v4981, %v4985
    %v5004 = vunpack.c.l.b16 %v4964
    %v5005 = vunpack.c.l.b16 %v4965
    %v5006 = vunpack.c.l.b16 %v4966
    %v5007 = vunpack.c.l.b16 %v4967
    %v5008 = vunpack.c.l.b16 %v4968
    %v5009 = vunpack.c.l.b16 %v4969
    %v5010 = vunpack.c.l.b16 %v4970
    %v5011 = vunpack.c.l.b16 %v4971
    %v5012 = vunpack.c.l.b16 %v4972
    %v5013 = vunpack.c.l.b16 %v4973
    %v5014 = vunpack.c.l.b16 %v4974
    %v5015 = vunpack.c.l.b16 %v4975
    %v5016 = vunpack.c.l.b16 %v4976
    %v5017 = vunpack.c.l.b16 %v4977
    %v5018 = vunpack.c.l.b16 %v4978
    %v5019 = vunpack.c.l.b16 %v4979
    %v5020 = vpack.c.b16 %v5005, %v5004
    %v5021 = vpack.c.b16 %v5007, %v5006
    %v5022 = vpack.c.b16 %v5009, %v5008
    %v5023 = vpack.c.b16 %v5011, %v5010
    %v5024 = vpack.c.b16 %v5013, %v5012
    %v5025 = vpack.c.b16 %v5015, %v5014
    %v5026 = vpack.c.b16 %v5017, %v5016
    %v5027 = vpack.c.b16 %v5019, %v5018
    %5036 = vmatprep.subr.bf16.mxu0 0
    %5037 = vmatpush1.bf16.msra.mxu0 %v5020
    %5038 = vmatprep.subr.bf16.mxu0 0
    %5039 = vmatpush1.bf16.msra.mxu0 %v5021
    %5040 = vmatprep.subr.bf16.mxu0 0
    %5041 = vmatpush1.bf16.msra.mxu0 %v5022
    %5042 = vmatprep.subr.bf16.mxu0 0
    %5043 = vmatpush1.bf16.msra.mxu0 %v5023
    %5044 = vmatprep.subr.bf16.mxu0 0
    %5045 = vmatpush1.bf16.msra.mxu0 %v5024
    %5046 = vmatprep.subr.bf16.mxu0 0
    %5047 = vmatpush1.bf16.msra.mxu0 %v5025
    %5048 = vmatprep.subr.bf16.mxu0 0
    %5049 = vmatpush1.bf16.msra.mxu0 %v5026
    %5050 = vmatprep.subr.bf16.mxu0 0
    %5051 = vmatpush1.bf16.msra.mxu0 %v5027
    %5052 = vmatprep.subr.bf16.mxu0 0
    %5053 = vmatpush1.bf16.msra.mxu0 0
    %5054 = vmatprep.subr.bf16.mxu0 0
    %5055 = vmatpush1.bf16.msra.mxu0 0
    %5056 = vmatprep.subr.bf16.mxu0 0
    %5057 = vmatpush1.bf16.msra.mxu0 0
    %5058 = vmatprep.subr.bf16.mxu0 0
    %5059 = vmatpush1.bf16.msra.mxu0 0
    %5060 = vmatprep.subr.bf16.mxu0 0
    %5061 = vmatpush1.bf16.msra.mxu0 0
    %5062 = vmatprep.subr.bf16.mxu0 0
    %5063 = vmatpush1.bf16.msra.mxu0 0
    %5064 = vmatprep.subr.bf16.mxu0 0
    %5065 = vmatpush1.bf16.msra.mxu0 0
    %5066 = vmatprep.subr.bf16.mxu0 0
    %5067 = vmatpush1.bf16.msra.mxu0 0
    %5068 = vmatprep.mubr.bf16.mxu0 0
    %5069 = vmatmul.mubr.bf16.gmra.mrb[0].mxu0 %v4980
    %v5070 = vpop.f32.mrb[0].mxu0
    %v5071 = vadd.f32 %v4986, %v5070
    %v5072 = vpop.f32.mrb[0].mxu0
    %v5073 = vpop.f32.mrb[0].mxu0
    %v5074 = vpop.f32.mrb[0].mxu0
    %5075 = vdwg.mxu0
    %v5076 = vmax.f32 %v5071, 0.0
    %v5077 = vld [vmem:[%s47] sm:$0xf]
    %v5078 = vld [vmem:[%s47 + $0x4] sm:$0xf]
    %v5079 = vld [vmem:[%s47 + $0x8] sm:$0xf]
    %v5080 = vld [vmem:[%s47 + $0xc] sm:$0xf]
    %v5081 = vld [vmem:[%s47 + $0x10] sm:$0xf]
    %v5082 = vld [vmem:[%s47 + $0x14] sm:$0xf]
    %v5083 = vld [vmem:[%s47 + $0x18] sm:$0xf]
    %v5084 = vld [vmem:[%s47 + $0x1c] sm:$0xf]
    %v5085 = vpack.c.bf16 %v5076, %v5076
    %v5086 = vld [vmem:[#allocation33] sm:$0x1]
    %v5088 = vlaneseq
    %v5089 = vshrl.u32 %v5088, 7
    %v5090 = vsub.s32 0, %v5089
    %v5091 = vrot.slane %v5086, %v5090
    %v5101 = vunpack.c.l.b16 %v5077
    %v5102 = vunpack.c.l.b16 %v5078
    %v5103 = vunpack.c.l.b16 %v5079
    %v5104 = vunpack.c.l.b16 %v5080
    %v5105 = vunpack.c.l.b16 %v5081
    %v5106 = vunpack.c.l.b16 %v5082
    %v5107 = vunpack.c.l.b16 %v5083
    %v5108 = vunpack.c.l.b16 %v5084
    %v5109 = vpack.c.b16 %v5102, %v5101
    %v5110 = vpack.c.b16 %v5104, %v5103
    %v5111 = vpack.c.b16 %v5106, %v5105
    %v5112 = vpack.c.b16 %v5108, %v5107
    %vm5117 = vcmask 523264
    %v5119 = vsel %vm5117, %v5085, 0
    %5121 = vmatprep.subr.bf16.mxu0 0
    %5122 = vmatpush1.bf16.msra.mxu0 %v5109
    %5123 = vmatprep.subr.bf16.mxu0 0
    %5124 = vmatpush1.bf16.msra.mxu0 %v5110
    %5125 = vmatprep.subr.bf16.mxu0 0
    %5126 = vmatpush1.bf16.msra.mxu0 %v5111
    %5127 = vmatprep.subr.bf16.mxu0 0
    %5128 = vmatpush1.bf16.msra.mxu0 %v5112
    %5129 = vmatprep.subr.bf16.mxu0 0
    %5130 = vmatpush1.bf16.msra.mxu0 0
    %5131 = vmatprep.subr.bf16.mxu0 0
    %5132 = vmatpush1.bf16.msra.mxu0 0
    %5133 = vmatprep.subr.bf16.mxu0 0
    %5134 = vmatpush1.bf16.msra.mxu0 0
    %5135 = vmatprep.subr.bf16.mxu0 0
    %5136 = vmatpush1.bf16.msra.mxu0 0
    %5137 = vmatprep.subr.bf16.mxu0 0
    %5138 = vmatpush1.bf16.msra.mxu0 0
    %5139 = vmatprep.subr.bf16.mxu0 0
    %5140 = vmatpush1.bf16.msra.mxu0 0
    %5141 = vmatprep.subr.bf16.mxu0 0
    %5142 = vmatpush1.bf16.msra.mxu0 0
    %5143 = vmatprep.subr.bf16.mxu0 0
    %5144 = vmatpush1.bf16.msra.mxu0 0
    %5145 = vmatprep.subr.bf16.mxu0 0
    %5146 = vmatpush1.bf16.msra.mxu0 0
    %5147 = vmatprep.subr.bf16.mxu0 0
    %5148 = vmatpush1.bf16.msra.mxu0 0
    %5149 = vmatprep.subr.bf16.mxu0 0
    %5150 = vmatpush1.bf16.msra.mxu0 0
    %5151 = vmatprep.subr.bf16.mxu0 0
    %5152 = vmatpush1.bf16.msra.mxu0 0
    %5153 = vmatprep.mubr.bf16.mxu0 0
    %5154 = vmatmul.mubr.bf16.gmra.mrb[0].mxu0 %v5119
    %v5155 = vpop.f32.mrb[0].mxu0
    %v5156 = vadd.f32 %v5091, %v5155
    %v5157 = vpop.f32.mrb[0].mxu0
    %v5158 = vpop.f32.mrb[0].mxu0
    %v5159 = vpop.f32.mrb[0].mxu0
    %5160 = vdwg.mxu0
    %v5161 = vld [vmem:[#allocation2] sm:$0xff]
    %v5162 = vld [vmem:[#allocation2 + $0x8] sm:$0xff]
    %v5163 = vld [vmem:[#allocation2 + $0x10] sm:$0xff]
    %v5164 = vld [vmem:[#allocation2 + $0x18] sm:$0xff]
    %v5165 = vld [vmem:[#allocation2 + $0x20] sm:$0xff]
    %v5166 = vld [vmem:[#allocation2 + $0x28] sm:$0xff]
    %v5167 = vld [vmem:[#allocation2 + $0x30] sm:$0xff]
    %v5168 = vld [vmem:[#allocation2 + $0x38] sm:$0xff]
    %v5169 = vld [vmem:[#allocation2 + $0x40] sm:$0xff]
    %v5170 = vld [vmem:[#allocation2 + $0x48] sm:$0xff]
    %v5171 = vld [vmem:[#allocation2 + $0x50] sm:$0xff]
    %v5172 = vld [vmem:[#allocation2 + $0x58] sm:$0xff]
    %v5173 = vld [vmem:[#allocation2 + $0x60] sm:$0xff]
    %v5174 = vld [vmem:[#allocation2 + $0x68] sm:$0xff]
    %v5175 = vld [vmem:[#allocation2 + $0x70] sm:$0xff]
    %v5176 = vld [vmem:[#allocation2 + $0x78] sm:$0x3f]
    %v5177 = vld [vmem:[#allocation40] sm:$0xff]
    %v5178 = vld [vmem:[#allocation40 + $0x8] sm:$0xff]
    %v5179 = vld [vmem:[#allocation40 + $0x10] sm:$0xff]
    %v5180 = vld [vmem:[#allocation40 + $0x18] sm:$0xff]
    %v5181 = vld [vmem:[#allocation40 + $0x20] sm:$0xff]
    %v5182 = vld [vmem:[#allocation40 + $0x28] sm:$0xff]
    %v5183 = vld [vmem:[#allocation40 + $0x30] sm:$0xff]
    %v5184 = vld [vmem:[#allocation40 + $0x38] sm:$0xff]
    %v5185 = vld [vmem:[#allocation40 + $0x40] sm:$0xff]
    %v5186 = vld [vmem:[#allocation40 + $0x48] sm:$0x33]
    %v5187 = vld [vmem:[#allocation40 + $0x50] sm:$0x33]
    %v5188 = vld [vmem:[#allocation40 + $0x58] sm:$0x33]
    %v5189 = vpack.c.bf16 %v5162, %v5161
    %v5190 = vpack.c.bf16 %v5164, %v5163
    %v5191 = vpack.c.bf16 %v5166, %v5165
    %v5192 = vpack.c.bf16 %v5168, %v5167
    %v5193 = vpack.c.bf16 %v5170, %v5169
    %v5194 = vpack.c.bf16 %v5172, %v5171
    %v5195 = vpack.c.bf16 %v5174, %v5173
    %v5196 = vpack.c.bf16 %v5176, %v5175
    %v5197 = vld [vmem:[#allocation2 + $0x1] sm:$0xff]
    %v5198 = vld [vmem:[#allocation2 + $0x9] sm:$0xff]
    %v5199 = vld [vmem:[#allocation2 + $0x11] sm:$0xff]
    %v5200 = vld [vmem:[#allocation2 + $0x19] sm:$0xff]
    %v5201 = vld [vmem:[#allocation2 + $0x21] sm:$0xff]
    %v5202 = vld [vmem:[#allocation2 + $0x29] sm:$0xff]
    %v5203 = vld [vmem:[#allocation2 + $0x31] sm:$0xff]
    %v5204 = vld [vmem:[#allocation2 + $0x39] sm:$0xff]
    %v5205 = vld [vmem:[#allocation2 + $0x41] sm:$0xff]
    %v5206 = vld [vmem:[#allocation2 + $0x49] sm:$0xff]
    %v5207 = vld [vmem:[#allocation2 + $0x51] sm:$0xff]
    %v5208 = vld [vmem:[#allocation2 + $0x59] sm:$0xff]
    %v5209 = vld [vmem:[#allocation2 + $0x61] sm:$0xff]
    %v5210 = vld [vmem:[#allocation2 + $0x69] sm:$0xff]
    %v5211 = vld [vmem:[#allocation2 + $0x71] sm:$0xff]
    %v5212 = vld [vmem:[#allocation2 + $0x79] sm:$0x3f]
    %v5213 = vld [vmem:[#allocation40 + $0x48] sm:$0xcc]
    %v5214 = vld [vmem:[#allocation40 + $0x50] sm:$0xcc]
    %v5215 = vld [vmem:[#allocation40 + $0x58] sm:$0xcc]
    %v5216 = vld [vmem:[#allocation40 + $0x60] sm:$0xff]
    %v5217 = vld [vmem:[#allocation40 + $0x68] sm:$0xff]
    %v5218 = vld [vmem:[#allocation40 + $0x70] sm:$0xff]
    %v5219 = vld [vmem:[#allocation40 + $0x78] sm:$0xff]
    %v5220 = vld [vmem:[#allocation40 + $0x80] sm:$0xff]
    %v5221 = vld [vmem:[#allocation40 + $0x88] sm:$0xff]
    %v5222 = vld [vmem:[#allocation40 + $0x90] sm:$0xff]
    %v5223 = vld [vmem:[#allocation40 + $0x98] sm:$0xff]
    %v5224 = vld [vmem:[#allocation40 + $0xa0] sm:$0xff]
    %v5225 = vpack.c.bf16 %v5198, %v5197
    %v5226 = vpack.c.bf16 %v5200, %v5199
    %v5227 = vpack.c.bf16 %v5202, %v5201
    %v5228 = vpack.c.bf16 %v5204, %v5203
    %v5229 = vpack.c.bf16 %v5206, %v5205
    %v5230 = vpack.c.bf16 %v5208, %v5207
    %v5231 = vpack.c.bf16 %v5210, %v5209
    %v5232 = vpack.c.bf16 %v5212, %v5211
    %v5245 = vunpack.c.l.b16 %v5213
    %v5246 = vunpack.c.h.b16 %v5213
    %v5247 = vunpack.c.l.b16 %v5214
    %v5248 = vunpack.c.h.b16 %v5214
    %v5249 = vunpack.c.l.b16 %v5215
    %v5250 = vunpack.c.h.b16 %v5215
    %v5251 = vunpack.c.l.b16 %v5216
    %v5252 = vunpack.c.h.b16 %v5216
    %v5253 = vunpack.c.l.b16 %v5217
    %v5254 = vunpack.c.h.b16 %v5217
    %v5255 = vunpack.c.l.b16 %v5218
    %v5256 = vunpack.c.h.b16 %v5218
    %v5257 = vunpack.c.l.b16 %v5219
    %v5258 = vunpack.c.h.b16 %v5219
    %v5259 = vunpack.c.l.b16 %v5220
    %v5260 = vunpack.c.h.b16 %v5220
    %v5261 = vunpack.c.l.b16 %v5221
    %v5262 = vunpack.c.h.b16 %v5221
    %v5263 = vunpack.c.l.b16 %v5222
    %v5264 = vunpack.c.h.b16 %v5222
    %v5265 = vunpack.c.l.b16 %v5223
    %v5266 = vunpack.c.h.b16 %v5223
    %v5267 = vunpack.c.l.b16 %v5224
    %v5268 = vunpack.c.h.b16 %v5224
    %v5269 = vpack.c.b16 %v5251, %v5245
    %v5270 = vpack.c.b16 %v5252, %v5246
    %v5271 = vpack.c.b16 %v5253, %v5247
    %v5272 = vpack.c.b16 %v5254, %v5248
    %v5273 = vpack.c.b16 %v5255, %v5249
    %v5274 = vpack.c.b16 %v5256, %v5250
    %v5275 = vpack.c.b16 %v5263, %v5257
    %v5276 = vpack.c.b16 %v5264, %v5258
    %v5277 = vpack.c.b16 %v5265, %v5259
    %v5278 = vpack.c.b16 %v5266, %v5260
    %v5279 = vpack.c.b16 %v5267, %v5261
    %v5280 = vpack.c.b16 %v5268, %v5262
    %vm5281 = vcmask 1045504
    %v5282 = vrot.slane %v5269, 2
    %v5283 = vrot.slane %v5275, 2
    %v5284 = vsel %vm5281, %v5282, %v5283
    %v5285 = vrot.slane %v5270, 2
    %v5286 = vrot.slane %v5276, 2
    %v5287 = vsel %vm5281, %v5285, %v5286
    %v5288 = vrot.slane %v5271, 2
    %v5289 = vrot.slane %v5277, 2
    %v5290 = vsel %vm5281, %v5288, %v5289
    %v5291 = vrot.slane %v5272, 2
    %v5292 = vrot.slane %v5278, 2
    %v5293 = vsel %vm5281, %v5291, %v5292
    %v5294 = vrot.slane %v5273, 2
    %v5295 = vrot.slane %v5279, 2
    %v5296 = vsel %vm5281, %v5294, %v5295
    %v5297 = vrot.slane %v5274, 2
    %v5298 = vrot.slane %v5280, 2
    %v5299 = vsel %vm5281, %v5297, %v5298
    %v5307 = vsel %vm903, %v5225, 0
    %v5310 = vsel %vm903, %v5226, 0
    %v5313 = vsel %vm903, %v5227, 0
    %v5316 = vsel %vm903, %v5228, 0
    %v5319 = vsel %vm903, %v5229, 0
    %v5322 = vsel %vm903, %v5230, 0
    %v5325 = vsel %vm903, %v5231, 0
    %v5328 = vsel %vm903, %v5232, 0
    %vm5330 = vcmask 1045504
    %v5332 = vsel %vm5330, %v5283, 0
    %v5335 = vsel %vm5330, %v5286, 0
    %v5338 = vsel %vm5330, %v5289, 0
    %v5341 = vsel %vm5330, %v5292, 0
    %v5344 = vsel %vm5330, %v5295, 0
    %v5347 = vsel %vm5330, %v5298, 0
    %5349 = vmatprep.subr.bf16.mxu0 %v5287
    %5350 = vmatpush1.bf16.msra.mxu0 %v5284
    %5351 = vmatprep.subr.bf16.mxu0 %v5335
    %5352 = vmatpush1.bf16.msra.mxu0 %v5332
    %5353 = vmatprep.subr.bf16.mxu0 0
    %5354 = vmatpush1.bf16.msra.mxu0 0
    %5355 = vmatprep.subr.bf16.mxu0 0
    %5356 = vmatpush1.bf16.msra.mxu0 0
    %5357 = vmatprep.subr.bf16.mxu0 0
    %5358 = vmatpush1.bf16.msra.mxu0 0
    %5359 = vmatprep.subr.bf16.mxu0 0
    %5360 = vmatpush1.bf16.msra.mxu0 0
    %5361 = vmatprep.subr.bf16.mxu0 0
    %5362 = vmatpush1.bf16.msra.mxu0 0
    %5363 = vmatprep.subr.bf16.mxu0 0
    %5364 = vmatpush1.bf16.msra.mxu0 0
    %5365 = vmatprep.subr.bf16.mxu0 0
    %5366 = vmatpush1.bf16.msra.mxu0 0
    %5367 = vmatprep.subr.bf16.mxu0 0
    %5368 = vmatpush1.bf16.msra.mxu0 0
    %5369 = vmatprep.subr.bf16.mxu0 0
    %5370 = vmatpush1.bf16.msra.mxu0 0
    %5371 = vmatprep.subr.bf16.mxu0 0
    %5372 = vmatpush1.bf16.msra.mxu0 0
    %5373 = vmatprep.subr.bf16.mxu0 0
    %5374 = vmatpush1.bf16.msra.mxu0 0
    %5375 = vmatprep.subr.bf16.mxu0 0
    %5376 = vmatpush1.bf16.msra.mxu0 0
    %5377 = vmatprep.subr.bf16.mxu0 0
    %5378 = vmatpush1.bf16.msra.mxu0 0
    %5379 = vmatprep.subr.bf16.mxu0 0
    %5380 = vmatpush1.bf16.msra.mxu0 0
    %5381 = vmatprep.mubr.bf16.mxu0 0
    %5382 = vmatmul.mubr.bf16.gmra.mrb[0].mxu0 %v5307
    %v5383 = vpop.f32.mrb[0].mxu0
    %v5384 = vadd.f32 0.0, %v5383
    %v5385 = vpop.f32.mrb[0].mxu0
    %v5386 = vadd.f32 0.0, %v5385
    %v5387 = vpop.f32.mrb[0].mxu0
    %v5388 = vadd.f32 0.0, %v5387
    %v5389 = vpop.f32.mrb[0].mxu0
    %v5390 = vadd.f32 0.0, %v5389
    %5391 = vmatprep.mubr.bf16.mxu0 0
    %5392 = vmatmul.mubr.bf16.gmra.mrb[0].mxu0 %v5310
    %v5393 = vpop.f32.mrb[0].mxu0
    %v5394 = vadd.f32 0.0, %v5393
    %v5395 = vpop.f32.mrb[0].mxu0
    %v5396 = vadd.f32 0.0, %v5395
    %v5397 = vpop.f32.mrb[0].mxu0
    %v5398 = vadd.f32 0.0, %v5397
    %v5399 = vpop.f32.mrb[0].mxu0
    %v5400 = vadd.f32 0.0, %v5399
    %5401 = vmatprep.mubr.bf16.mxu0 0
    %5402 = vmatmul.mubr.bf16.gmra.mrb[0].mxu0 %v5313
    %v5403 = vpop.f32.mrb[0].mxu0
    %v5404 = vadd.f32 0.0, %v5403
    %v5405 = vpop.f32.mrb[0].mxu0
    %v5406 = vadd.f32 0.0, %v5405
    %v5407 = vpop.f32.mrb[0].mxu0
    %v5408 = vadd.f32 0.0, %v5407
    %v5409 = vpop.f32.mrb[0].mxu0
    %v5410 = vadd.f32 0.0, %v5409
    %5411 = vmatprep.mubr.bf16.mxu0 0
    %5412 = vmatmul.mubr.bf16.gmra.mrb[0].mxu0 %v5316
    %v5413 = vpop.f32.mrb[0].mxu0
    %v5414 = vadd.f32 0.0, %v5413
    %v5415 = vpop.f32.mrb[0].mxu0
    %v5416 = vadd.f32 0.0, %v5415
    %v5417 = vpop.f32.mrb[0].mxu0
    %v5418 = vadd.f32 0.0, %v5417
    %v5419 = vpop.f32.mrb[0].mxu0
    %v5420 = vadd.f32 0.0, %v5419
    %5421 = vmatprep.mubr.bf16.mxu0 0
    %5422 = vmatmul.mubr.bf16.gmra.mrb[0].mxu0 %v5319
    %v5423 = vpop.f32.mrb[0].mxu0
    %v5424 = vadd.f32 0.0, %v5423
    %v5425 = vpop.f32.mrb[0].mxu0
    %v5426 = vadd.f32 0.0, %v5425
    %v5427 = vpop.f32.mrb[0].mxu0
    %v5428 = vadd.f32 0.0, %v5427
    %v5429 = vpop.f32.mrb[0].mxu0
    %v5430 = vadd.f32 0.0, %v5429
    %5431 = vmatprep.mubr.bf16.mxu0 0
    %5432 = vmatmul.mubr.bf16.gmra.mrb[0].mxu0 %v5322
    %v5433 = vpop.f32.mrb[0].mxu0
    %v5434 = vadd.f32 0.0, %v5433
    %v5435 = vpop.f32.mrb[0].mxu0
    %v5436 = vadd.f32 0.0, %v5435
    %v5437 = vpop.f32.mrb[0].mxu0
    %v5438 = vadd.f32 0.0, %v5437
    %v5439 = vpop.f32.mrb[0].mxu0
    %v5440 = vadd.f32 0.0, %v5439
    %5441 = vmatprep.mubr.bf16.mxu0 0
    %5442 = vmatmul.mubr.bf16.gmra.mrb[0].mxu0 %v5325
    %v5443 = vpop.f32.mrb[0].mxu0
    %v5444 = vadd.f32 0.0, %v5443
    %v5445 = vpop.f32.mrb[0].mxu0
    %v5446 = vadd.f32 0.0, %v5445
    %v5447 = vpop.f32.mrb[0].mxu0
    %v5448 = vadd.f32 0.0, %v5447
    %v5449 = vpop.f32.mrb[0].mxu0
    %v5450 = vadd.f32 0.0, %v5449
    %5451 = vmatprep.mubr.bf16.mxu0 0
    %5452 = vmatmul.mubr.bf16.gmra.mrb[0].mxu0 %v5328
    %v5453 = vpop.f32.mrb[0].mxu0
    %v5454 = vadd.f32 0.0, %v5453
    %v5455 = vpop.f32.mrb[0].mxu0
    %v5456 = vadd.f32 0.0, %v5455
    %v5457 = vpop.f32.mrb[0].mxu0
    %v5458 = vadd.f32 0.0, %v5457
    %v5459 = vpop.f32.mrb[0].mxu0
    %v5460 = vadd.f32 0.0, %v5459
    %5461 = vdwg.mxu0
    %5462 = vmatprep.subr.bf16.mxu0 %v5293
    %5463 = vmatpush1.bf16.msra.mxu0 %v5290
    %5464 = vmatprep.subr.bf16.mxu0 %v5341
    %5465 = vmatpush1.bf16.msra.mxu0 %v5338
    %5466 = vmatprep.subr.bf16.mxu0 0
    %5467 = vmatpush1.bf16.msra.mxu0 0
    %5468 = vmatprep.subr.bf16.mxu0 0
    %5469 = vmatpush1.bf16.msra.mxu0 0
    %5470 = vmatprep.subr.bf16.mxu0 0
    %5471 = vmatpush1.bf16.msra.mxu0 0
    %5472 = vmatprep.subr.bf16.mxu0 0
    %5473 = vmatpush1.bf16.msra.mxu0 0
    %5474 = vmatprep.subr.bf16.mxu0 0
    %5475 = vmatpush1.bf16.msra.mxu0 0
    %5476 = vmatprep.subr.bf16.mxu0 0
    %5477 = vmatpush1.bf16.msra.mxu0 0
    %5478 = vmatprep.subr.bf16.mxu0 0
    %5479 = vmatpush1.bf16.msra.mxu0 0
    %5480 = vmatprep.subr.bf16.mxu0 0
    %5481 = vmatpush1.bf16.msra.mxu0 0
    %5482 = vmatprep.subr.bf16.mxu0 0
    %5483 = vmatpush1.bf16.msra.mxu0 0
    %5484 = vmatprep.subr.bf16.mxu0 0
    %5485 = vmatpush1.bf16.msra.mxu0 0
    %5486 = vmatprep.subr.bf16.mxu0 0
    %5487 = vmatpush1.bf16.msra.mxu0 0
    %5488 = vmatprep.subr.bf16.mxu0 0
    %5489 = vmatpush1.bf16.msra.mxu0 0
    %5490 = vmatprep.subr.bf16.mxu0 0
    %5491 = vmatpush1.bf16.msra.mxu0 0
    %5492 = vmatprep.subr.bf16.mxu0 0
    %5493 = vmatpush1.bf16.msra.mxu0 0
    %5494 = vmatprep.mubr.bf16.mxu0 0
    %5495 = vmatmul.mubr.bf16.gmra.mrb[0].mxu0 %v5307
    %v5496 = vpop.f32.mrb[0].mxu0
    %v5497 = vadd.f32 0.0, %v5496
    %v5498 = vpop.f32.mrb[0].mxu0
    %v5499 = vadd.f32 0.0, %v5498
    %v5500 = vpop.f32.mrb[0].mxu0
    %v5501 = vadd.f32 0.0, %v5500
    %v5502 = vpop.f32.mrb[0].mxu0
    %v5503 = vadd.f32 0.0, %v5502
    %5504 = vmatprep.mubr.bf16.mxu0 0
    %5505 = vmatmul.mubr.bf16.gmra.mrb[0].mxu0 %v5310
    %v5506 = vpop.f32.mrb[0].mxu0
    %v5507 = vadd.f32 0.0, %v5506
    %v5508 = vpop.f32.mrb[0].mxu0
    %v5509 = vadd.f32 0.0, %v5508
    %v5510 = vpop.f32.mrb[0].mxu0
    %v5511 = vadd.f32 0.0, %v5510
    %v5512 = vpop.f32.mrb[0].mxu0
    %v5513 = vadd.f32 0.0, %v5512
    %5514 = vmatprep.mubr.bf16.mxu0 0
    %5515 = vmatmul.mubr.bf16.gmra.mrb[0].mxu0 %v5313
    %v5516 = vpop.f32.mrb[0].mxu0
    %v5517 = vadd.f32 0.0, %v5516
    %v5518 = vpop.f32.mrb[0].mxu0
    %v5519 = vadd.f32 0.0, %v5518
    %v5520 = vpop.f32.mrb[0].mxu0
    %v5521 = vadd.f32 0.0, %v5520
    %v5522 = vpop.f32.mrb[0].mxu0
    %v5523 = vadd.f32 0.0, %v5522
    %5524 = vmatprep.mubr.bf16.mxu0 0
    %5525 = vmatmul.mubr.bf16.gmra.mrb[0].mxu0 %v5316
    %v5526 = vpop.f32.mrb[0].mxu0
    %v5527 = vadd.f32 0.0, %v5526
    %v5528 = vpop.f32.mrb[0].mxu0
    %v5529 = vadd.f32 0.0, %v5528
    %v5530 = vpop.f32.mrb[0].mxu0
    %v5531 = vadd.f32 0.0, %v5530
    %v5532 = vpop.f32.mrb[0].mxu0
    %v5533 = vadd.f32 0.0, %v5532
    %5534 = vmatprep.mubr.bf16.mxu0 0
    %5535 = vmatmul.mubr.bf16.gmra.mrb[0].mxu0 %v5319
    %v5536 = vpop.f32.mrb[0].mxu0
    %v5537 = vadd.f32 0.0, %v5536
    %v5538 = vpop.f32.mrb[0].mxu0
    %v5539 = vadd.f32 0.0, %v5538
    %v5540 = vpop.f32.mrb[0].mxu0
    %v5541 = vadd.f32 0.0, %v5540
    %v5542 = vpop.f32.mrb[0].mxu0
    %v5543 = vadd.f32 0.0, %v5542
    %5544 = vmatprep.mubr.bf16.mxu0 0
    %5545 = vmatmul.mubr.bf16.gmra.mrb[0].mxu0 %v5322
    %v5546 = vpop.f32.mrb[0].mxu0
    %v5547 = vadd.f32 0.0, %v5546
    %v5548 = vpop.f32.mrb[0].mxu0
    %v5549 = vadd.f32 0.0, %v5548
    %v5550 = vpop.f32.mrb[0].mxu0
    %v5551 = vadd.f32 0.0, %v5550
    %v5552 = vpop.f32.mrb[0].mxu0
    %v5553 = vadd.f32 0.0, %v5552
    %5554 = vmatprep.mubr.bf16.mxu0 0
    %5555 = vmatmul.mubr.bf16.gmra.mrb[0].mxu0 %v5325
    %v5556 = vpop.f32.mrb[0].mxu0
    %v5557 = vadd.f32 0.0, %v5556
    %v5558 = vpop.f32.mrb[0].mxu0
    %v5559 = vadd.f32 0.0, %v5558
    %v5560 = vpop.f32.mrb[0].mxu0
    %v5561 = vadd.f32 0.0, %v5560
    %v5562 = vpop.f32.mrb[0].mxu0
    %v5563 = vadd.f32 0.0, %v5562
    %5564 = vmatprep.mubr.bf16.mxu0 0
    %5565 = vmatmul.mubr.bf16.gmra.mrb[0].mxu0 %v5328
    %v5566 = vpop.f32.mrb[0].mxu0
    %v5567 = vadd.f32 0.0, %v5566
    %v5568 = vpop.f32.mrb[0].mxu0
    %v5569 = vadd.f32 0.0, %v5568
    %v5570 = vpop.f32.mrb[0].mxu0
    %v5571 = vadd.f32 0.0, %v5570
    %v5572 = vpop.f32.mrb[0].mxu0
    %v5573 = vadd.f32 0.0, %v5572
    %5574 = vdwg.mxu0
    %5575 = vmatprep.subr.bf16.mxu0 %v5299
    %5576 = vmatpush1.bf16.msra.mxu0 %v5296
    %5577 = vmatprep.subr.bf16.mxu0 %v5347
    %5578 = vmatpush1.bf16.msra.mxu0 %v5344
    %5579 = vmatprep.subr.bf16.mxu0 0
    %5580 = vmatpush1.bf16.msra.mxu0 0
    %5581 = vmatprep.subr.bf16.mxu0 0
    %5582 = vmatpush1.bf16.msra.mxu0 0
    %5583 = vmatprep.subr.bf16.mxu0 0
    %5584 = vmatpush1.bf16.msra.mxu0 0
    %5585 = vmatprep.subr.bf16.mxu0 0
    %5586 = vmatpush1.bf16.msra.mxu0 0
    %5587 = vmatprep.subr.bf16.mxu0 0
    %5588 = vmatpush1.bf16.msra.mxu0 0
    %5589 = vmatprep.subr.bf16.mxu0 0
    %5590 = vmatpush1.bf16.msra.mxu0 0
    %5591 = vmatprep.subr.bf16.mxu0 0
    %5592 = vmatpush1.bf16.msra.mxu0 0
    %5593 = vmatprep.subr.bf16.mxu0 0
    %5594 = vmatpush1.bf16.msra.mxu0 0
    %5595 = vmatprep.subr.bf16.mxu0 0
    %5596 = vmatpush1.bf16.msra.mxu0 0
    %5597 = vmatprep.subr.bf16.mxu0 0
    %5598 = vmatpush1.bf16.msra.mxu0 0
    %5599 = vmatprep.subr.bf16.mxu0 0
    %5600 = vmatpush1.bf16.msra.mxu0 0
    %5601 = vmatprep.subr.bf16.mxu0 0
    %5602 = vmatpush1.bf16.msra.mxu0 0
    %5603 = vmatprep.subr.bf16.mxu0 0
    %5604 = vmatpush1.bf16.msra.mxu0 0
    %5605 = vmatprep.subr.bf16.mxu0 0
    %5606 = vmatpush1.bf16.msra.mxu0 0
    %5607 = vmatprep.mubr.bf16.mxu0 0
    %5608 = vmatmul.mubr.bf16.gmra.mrb[0].mxu0 %v5307
    %v5609 = vpop.f32.mrb[0].mxu0
    %v5610 = vadd.f32 0.0, %v5609
    %v5611 = vpop.f32.mrb[0].mxu0
    %v5612 = vadd.f32 0.0, %v5611
    %v5613 = vpop.f32.mrb[0].mxu0
    %v5614 = vadd.f32 0.0, %v5613
    %v5615 = vpop.f32.mrb[0].mxu0
    %v5616 = vadd.f32 0.0, %v5615
    %5617 = vmatprep.mubr.bf16.mxu0 0
    %5618 = vmatmul.mubr.bf16.gmra.mrb[0].mxu0 %v5310
    %v5619 = vpop.f32.mrb[0].mxu0
    %v5620 = vadd.f32 0.0, %v5619
    %v5621 = vpop.f32.mrb[0].mxu0
    %v5622 = vadd.f32 0.0, %v5621
    %v5623 = vpop.f32.mrb[0].mxu0
    %v5624 = vadd.f32 0.0, %v5623
    %v5625 = vpop.f32.mrb[0].mxu0
    %v5626 = vadd.f32 0.0, %v5625
    %5627 = vmatprep.mubr.bf16.mxu0 0
    %5628 = vmatmul.mubr.bf16.gmra.mrb[0].mxu0 %v5313
    %v5629 = vpop.f32.mrb[0].mxu0
    %v5630 = vadd.f32 0.0, %v5629
    %v5631 = vpop.f32.mrb[0].mxu0
    %v5632 = vadd.f32 0.0, %v5631
    %v5633 = vpop.f32.mrb[0].mxu0
    %v5634 = vadd.f32 0.0, %v5633
    %v5635 = vpop.f32.mrb[0].mxu0
    %v5636 = vadd.f32 0.0, %v5635
    %5637 = vmatprep.mubr.bf16.mxu0 0
    %5638 = vmatmul.mubr.bf16.gmra.mrb[0].mxu0 %v5316
    %v5639 = vpop.f32.mrb[0].mxu0
    %v5640 = vadd.f32 0.0, %v5639
    %v5641 = vpop.f32.mrb[0].mxu0
    %v5642 = vadd.f32 0.0, %v5641
    %v5643 = vpop.f32.mrb[0].mxu0
    %v5644 = vadd.f32 0.0, %v5643
    %v5645 = vpop.f32.mrb[0].mxu0
    %v5646 = vadd.f32 0.0, %v5645
    %5647 = vmatprep.mubr.bf16.mxu0 0
    %5648 = vmatmul.mubr.bf16.gmra.mrb[0].mxu0 %v5319
    %v5649 = vpop.f32.mrb[0].mxu0
    %v5650 = vadd.f32 0.0, %v5649
    %v5651 = vpop.f32.mrb[0].mxu0
    %v5652 = vadd.f32 0.0, %v5651
    %v5653 = vpop.f32.mrb[0].mxu0
    %v5654 = vadd.f32 0.0, %v5653
    %v5655 = vpop.f32.mrb[0].mxu0
    %v5656 = vadd.f32 0.0, %v5655
    %5657 = vmatprep.mubr.bf16.mxu0 0
    %5658 = vmatmul.mubr.bf16.gmra.mrb[0].mxu0 %v5322
    %v5659 = vpop.f32.mrb[0].mxu0
    %v5660 = vadd.f32 0.0, %v5659
    %v5661 = vpop.f32.mrb[0].mxu0
    %v5662 = vadd.f32 0.0, %v5661
    %v5663 = vpop.f32.mrb[0].mxu0
    %v5664 = vadd.f32 0.0, %v5663
    %v5665 = vpop.f32.mrb[0].mxu0
    %v5666 = vadd.f32 0.0, %v5665
    %5667 = vmatprep.mubr.bf16.mxu0 0
    %5668 = vmatmul.mubr.bf16.gmra.mrb[0].mxu0 %v5325
    %v5669 = vpop.f32.mrb[0].mxu0
    %v5670 = vadd.f32 0.0, %v5669
    %v5671 = vpop.f32.mrb[0].mxu0
    %v5672 = vadd.f32 0.0, %v5671
    %v5673 = vpop.f32.mrb[0].mxu0
    %v5674 = vadd.f32 0.0, %v5673
    %v5675 = vpop.f32.mrb[0].mxu0
    %v5676 = vadd.f32 0.0, %v5675
    %5677 = vmatprep.mubr.bf16.mxu0 0
    %5678 = vmatmul.mubr.bf16.gmra.mrb[0].mxu0 %v5328
    %v5679 = vpop.f32.mrb[0].mxu0
    %v5680 = vadd.f32 0.0, %v5679
    %v5681 = vpop.f32.mrb[0].mxu0
    %v5682 = vadd.f32 0.0, %v5681
    %v5683 = vpop.f32.mrb[0].mxu0
    %v5684 = vadd.f32 0.0, %v5683
    %v5685 = vpop.f32.mrb[0].mxu0
    %v5686 = vadd.f32 0.0, %v5685
    %5687 = vdwg.mxu0
    %v5700 = vunpack.c.l.b16 %v5177
    %v5701 = vunpack.c.h.b16 %v5177
    %v5702 = vunpack.c.l.b16 %v5178
    %v5703 = vunpack.c.h.b16 %v5178
    %v5704 = vunpack.c.l.b16 %v5179
    %v5705 = vunpack.c.h.b16 %v5179
    %v5706 = vunpack.c.l.b16 %v5180
    %v5707 = vunpack.c.h.b16 %v5180
    %v5708 = vunpack.c.l.b16 %v5181
    %v5709 = vunpack.c.h.b16 %v5181
    %v5710 = vunpack.c.l.b16 %v5182
    %v5711 = vunpack.c.h.b16 %v5182
    %v5712 = vunpack.c.l.b16 %v5183
    %v5713 = vunpack.c.h.b16 %v5183
    %v5714 = vunpack.c.l.b16 %v5184
    %v5715 = vunpack.c.h.b16 %v5184
    %v5716 = vunpack.c.l.b16 %v5185
    %v5717 = vunpack.c.h.b16 %v5185
    %v5718 = vunpack.c.l.b16 %v5186
    %v5719 = vunpack.c.h.b16 %v5186
    %v5720 = vunpack.c.l.b16 %v5187
    %v5721 = vunpack.c.h.b16 %v5187
    %v5722 = vunpack.c.l.b16 %v5188
    %v5723 = vunpack.c.h.b16 %v5188
    %v5724 = vpack.c.b16 %v5706, %v5700
    %v5725 = vpack.c.b16 %v5707, %v5701
    %v5726 = vpack.c.b16 %v5708, %v5702
    %v5727 = vpack.c.b16 %v5709, %v5703
    %v5728 = vpack.c.b16 %v5710, %v5704
    %v5729 = vpack.c.b16 %v5711, %v5705
    %v5730 = vpack.c.b16 %v5718, %v5712
    %v5731 = vpack.c.b16 %v5719, %v5713
    %v5732 = vpack.c.b16 %v5720, %v5714
    %v5733 = vpack.c.b16 %v5721, %v5715
    %v5734 = vpack.c.b16 %v5722, %v5716
    %v5735 = vpack.c.b16 %v5723, %v5717
    %v5743 = vsel %vm903, %v5189, 0
    %v5746 = vsel %vm903, %v5190, 0
    %v5749 = vsel %vm903, %v5191, 0
    %v5752 = vsel %vm903, %v5192, 0
    %v5755 = vsel %vm903, %v5193, 0
    %v5758 = vsel %vm903, %v5194, 0
    %v5761 = vsel %vm903, %v5195, 0
    %v5764 = vsel %vm903, %v5196, 0
    %v5767 = vsel %vm5330, %v5730, 0
    %v5770 = vsel %vm5330, %v5731, 0
    %v5773 = vsel %vm5330, %v5732, 0
    %v5776 = vsel %vm5330, %v5733, 0
    %v5779 = vsel %vm5330, %v5734, 0
    %v5782 = vsel %vm5330, %v5735, 0
    %5784 = vmatprep.subr.bf16.mxu0 %v5725
    %5785 = vmatpush1.bf16.msra.mxu0 %v5724
    %5786 = vmatprep.subr.bf16.mxu0 %v5770
    %5787 = vmatpush1.bf16.msra.mxu0 %v5767
    %5788 = vmatprep.subr.bf16.mxu0 0
    %5789 = vmatpush1.bf16.msra.mxu0 0
    %5790 = vmatprep.subr.bf16.mxu0 0
    %5791 = vmatpush1.bf16.msra.mxu0 0
    %5792 = vmatprep.subr.bf16.mxu0 0
    %5793 = vmatpush1.bf16.msra.mxu0 0
    %5794 = vmatprep.subr.bf16.mxu0 0
    %5795 = vmatpush1.bf16.msra.mxu0 0
    %5796 = vmatprep.subr.bf16.mxu0 0
    %5797 = vmatpush1.bf16.msra.mxu0 0
    %5798 = vmatprep.subr.bf16.mxu0 0
    %5799 = vmatpush1.bf16.msra.mxu0 0
    %5800 = vmatprep.subr.bf16.mxu0 0
    %5801 = vmatpush1.bf16.msra.mxu0 0
    %5802 = vmatprep.subr.bf16.mxu0 0
    %5803 = vmatpush1.bf16.msra.mxu0 0
    %5804 = vmatprep.subr.bf16.mxu0 0
    %5805 = vmatpush1.bf16.msra.mxu0 0
    %5806 = vmatprep.subr.bf16.mxu0 0
    %5807 = vmatpush1.bf16.msra.mxu0 0
    %5808 = vmatprep.subr.bf16.mxu0 0
    %5809 = vmatpush1.bf16.msra.mxu0 0
    %5810 = vmatprep.subr.bf16.mxu0 0
    %5811 = vmatpush1.bf16.msra.mxu0 0
    %5812 = vmatprep.subr.bf16.mxu0 0
    %5813 = vmatpush1.bf16.msra.mxu0 0
    %5814 = vmatprep.subr.bf16.mxu0 0
    %5815 = vmatpush1.bf16.msra.mxu0 0
    %5816 = vmatprep.mubr.bf16.mxu0 0
    %5817 = vmatmul.mubr.bf16.gmra.mrb[0].mxu0 %v5743
    %v5818 = vpop.f32.mrb[0].mxu0
    %v5819 = vadd.f32 %v5384, %v5818
    %v5820 = vpop.f32.mrb[0].mxu0
    %v5821 = vadd.f32 %v5386, %v5820
    %v5822 = vpop.f32.mrb[0].mxu0
    %v5823 = vadd.f32 %v5388, %v5822
    %v5824 = vpop.f32.mrb[0].mxu0
    %v5825 = vadd.f32 %v5390, %v5824
    %5826 = vmatprep.mubr.bf16.mxu0 0
    %5827 = vmatmul.mubr.bf16.gmra.mrb[0].mxu0 %v5746
    %v5828 = vpop.f32.mrb[0].mxu0
    %v5829 = vadd.f32 %v5394, %v5828
    %v5830 = vpop.f32.mrb[0].mxu0
    %v5831 = vadd.f32 %v5396, %v5830
    %v5832 = vpop.f32.mrb[0].mxu0
    %v5833 = vadd.f32 %v5398, %v5832
    %v5834 = vpop.f32.mrb[0].mxu0
    %v5835 = vadd.f32 %v5400, %v5834
    %5836 = vmatprep.mubr.bf16.mxu0 0
    %5837 = vmatmul.mubr.bf16.gmra.mrb[0].mxu0 %v5749
    %v5838 = vpop.f32.mrb[0].mxu0
    %v5839 = vadd.f32 %v5404, %v5838
    %v5840 = vpop.f32.mrb[0].mxu0
    %v5841 = vadd.f32 %v5406, %v5840
    %v5842 = vpop.f32.mrb[0].mxu0
    %v5843 = vadd.f32 %v5408, %v5842
    %v5844 = vpop.f32.mrb[0].mxu0
    %v5845 = vadd.f32 %v5410, %v5844
    %5846 = vmatprep.mubr.bf16.mxu0 0
    %5847 = vmatmul.mubr.bf16.gmra.mrb[0].mxu0 %v5752
    %v5848 = vpop.f32.mrb[0].mxu0
    %v5849 = vadd.f32 %v5414, %v5848
    %v5850 = vpop.f32.mrb[0].mxu0
    %v5851 = vadd.f32 %v5416, %v5850
    %v5852 = vpop.f32.mrb[0].mxu0
    %v5853 = vadd.f32 %v5418, %v5852
    %v5854 = vpop.f32.mrb[0].mxu0
    %v5855 = vadd.f32 %v5420, %v5854
    %5856 = vmatprep.mubr.bf16.mxu0 0
    %5857 = vmatmul.mubr.bf16.gmra.mrb[0].mxu0 %v5755
    %v5858 = vpop.f32.mrb[0].mxu0
    %v5859 = vadd.f32 %v5424, %v5858
    %v5860 = vpop.f32.mrb[0].mxu0
    %v5861 = vadd.f32 %v5426, %v5860
    %v5862 = vpop.f32.mrb[0].mxu0
    %v5863 = vadd.f32 %v5428, %v5862
    %v5864 = vpop.f32.mrb[0].mxu0
    %v5865 = vadd.f32 %v5430, %v5864
    %5866 = vmatprep.mubr.bf16.mxu0 0
    %5867 = vmatmul.mubr.bf16.gmra.mrb[0].mxu0 %v5758
    %v5868 = vpop.f32.mrb[0].mxu0
    %v5869 = vadd.f32 %v5434, %v5868
    %v5870 = vpop.f32.mrb[0].mxu0
    %v5871 = vadd.f32 %v5436, %v5870
    %v5872 = vpop.f32.mrb[0].mxu0
    %v5873 = vadd.f32 %v5438, %v5872
    %v5874 = vpop.f32.mrb[0].mxu0
    %v5875 = vadd.f32 %v5440, %v5874
    %5876 = vmatprep.mubr.bf16.mxu0 0
    %5877 = vmatmul.mubr.bf16.gmra.mrb[0].mxu0 %v5761
    %v5878 = vpop.f32.mrb[0].mxu0
    %v5879 = vadd.f32 %v5444, %v5878
    %v5880 = vpop.f32.mrb[0].mxu0
    %v5881 = vadd.f32 %v5446, %v5880
    %v5882 = vpop.f32.mrb[0].mxu0
    %v5883 = vadd.f32 %v5448, %v5882
    %v5884 = vpop.f32.mrb[0].mxu0
    %v5885 = vadd.f32 %v5450, %v5884
    %5886 = vmatprep.mubr.bf16.mxu0 0
    %5887 = vmatmul.mubr.bf16.gmra.mrb[0].mxu0 %v5764
    %v5888 = vpop.f32.mrb[0].mxu0
    %v5889 = vadd.f32 %v5454, %v5888
    %v5890 = vpop.f32.mrb[0].mxu0
    %v5891 = vadd.f32 %v5456, %v5890
    %v5892 = vpop.f32.mrb[0].mxu0
    %v5893 = vadd.f32 %v5458, %v5892
    %v5894 = vpop.f32.mrb[0].mxu0
    %v5895 = vadd.f32 %v5460, %v5894
    %5896 = vdwg.mxu0
    %5897 = vmatprep.subr.bf16.mxu0 %v5727
    %5898 = vmatpush1.bf16.msra.mxu0 %v5726
    %5899 = vmatprep.subr.bf16.mxu0 %v5776
    %5900 = vmatpush1.bf16.msra.mxu0 %v5773
    %5901 = vmatprep.subr.bf16.mxu0 0
    %5902 = vmatpush1.bf16.msra.mxu0 0
    %5903 = vmatprep.subr.bf16.mxu0 0
    %5904 = vmatpush1.bf16.msra.mxu0 0
    %5905 = vmatprep.subr.bf16.mxu0 0
    %5906 = vmatpush1.bf16.msra.mxu0 0
    %5907 = vmatprep.subr.bf16.mxu0 0
    %5908 = vmatpush1.bf16.msra.mxu0 0
    %5909 = vmatprep.subr.bf16.mxu0 0
    %5910 = vmatpush1.bf16.msra.mxu0 0
    %5911 = vmatprep.subr.bf16.mxu0 0
    %5912 = vmatpush1.bf16.msra.mxu0 0
    %5913 = vmatprep.subr.bf16.mxu0 0
    %5914 = vmatpush1.bf16.msra.mxu0 0
    %5915 = vmatprep.subr.bf16.mxu0 0
    %5916 = vmatpush1.bf16.msra.mxu0 0
    %5917 = vmatprep.subr.bf16.mxu0 0
    %5918 = vmatpush1.bf16.msra.mxu0 0
    %5919 = vmatprep.subr.bf16.mxu0 0
    %5920 = vmatpush1.bf16.msra.mxu0 0
    %5921 = vmatprep.subr.bf16.mxu0 0
    %5922 = vmatpush1.bf16.msra.mxu0 0
    %5923 = vmatprep.subr.bf16.mxu0 0
    %5924 = vmatpush1.bf16.msra.mxu0 0
    %5925 = vmatprep.subr.bf16.mxu0 0
    %5926 = vmatpush1.bf16.msra.mxu0 0
    %5927 = vmatprep.subr.bf16.mxu0 0
    %5928 = vmatpush1.bf16.msra.mxu0 0
    %5929 = vmatprep.mubr.bf16.mxu0 0
    %5930 = vmatmul.mubr.bf16.gmra.mrb[0].mxu0 %v5743
    %v5931 = vpop.f32.mrb[0].mxu0
    %v5932 = vadd.f32 %v5497, %v5931
    %v5933 = vpop.f32.mrb[0].mxu0
    %v5934 = vadd.f32 %v5499, %v5933
    %v5935 = vpop.f32.mrb[0].mxu0
    %v5936 = vadd.f32 %v5501, %v5935
    %v5937 = vpop.f32.mrb[0].mxu0
    %v5938 = vadd.f32 %v5503, %v5937
    %5939 = vmatprep.mubr.bf16.mxu0 0
    %5940 = vmatmul.mubr.bf16.gmra.mrb[0].mxu0 %v5746
    %v5941 = vpop.f32.mrb[0].mxu0
    %v5942 = vadd.f32 %v5507, %v5941
    %v5943 = vpop.f32.mrb[0].mxu0
    %v5944 = vadd.f32 %v5509, %v5943
    %v5945 = vpop.f32.mrb[0].mxu0
    %v5946 = vadd.f32 %v5511, %v5945
    %v5947 = vpop.f32.mrb[0].mxu0
    %v5948 = vadd.f32 %v5513, %v5947
    %5949 = vmatprep.mubr.bf16.mxu0 0
    %5950 = vmatmul.mubr.bf16.gmra.mrb[0].mxu0 %v5749
    %v5951 = vpop.f32.mrb[0].mxu0
    %v5952 = vadd.f32 %v5517, %v5951
    %v5953 = vpop.f32.mrb[0].mxu0
    %v5954 = vadd.f32 %v5519, %v5953
    %v5955 = vpop.f32.mrb[0].mxu0
    %v5956 = vadd.f32 %v5521, %v5955
    %v5957 = vpop.f32.mrb[0].mxu0
    %v5958 = vadd.f32 %v5523, %v5957
    %5959 = vmatprep.mubr.bf16.mxu0 0
    %5960 = vmatmul.mubr.bf16.gmra.mrb[0].mxu0 %v5752
    %v5961 = vpop.f32.mrb[0].mxu0
    %v5962 = vadd.f32 %v5527, %v5961
    %v5963 = vpop.f32.mrb[0].mxu0
    %v5964 = vadd.f32 %v5529, %v5963
    %v5965 = vpop.f32.mrb[0].mxu0
    %v5966 = vadd.f32 %v5531, %v5965
    %v5967 = vpop.f32.mrb[0].mxu0
    %v5968 = vadd.f32 %v5533, %v5967
    %5969 = vmatprep.mubr.bf16.mxu0 0
    %5970 = vmatmul.mubr.bf16.gmra.mrb[0].mxu0 %v5755
    %v5971 = vpop.f32.mrb[0].mxu0
    %v5972 = vadd.f32 %v5537, %v5971
    %v5973 = vpop.f32.mrb[0].mxu0
    %v5974 = vadd.f32 %v5539, %v5973
    %v5975 = vpop.f32.mrb[0].mxu0
    %v5976 = vadd.f32 %v5541, %v5975
    %v5977 = vpop.f32.mrb[0].mxu0
    %v5978 = vadd.f32 %v5543, %v5977
    %5979 = vmatprep.mubr.bf16.mxu0 0
    %5980 = vmatmul.mubr.bf16.gmra.mrb[0].mxu0 %v5758
    %v5981 = vpop.f32.mrb[0].mxu0
    %v5982 = vadd.f32 %v5547, %v5981
    %v5983 = vpop.f32.mrb[0].mxu0
    %v5984 = vadd.f32 %v5549, %v5983
    %v5985 = vpop.f32.mrb[0].mxu0
    %v5986 = vadd.f32 %v5551, %v5985
    %v5987 = vpop.f32.mrb[0].mxu0
    %v5988 = vadd.f32 %v5553, %v5987
    %5989 = vmatprep.mubr.bf16.mxu0 0
    %5990 = vmatmul.mubr.bf16.gmra.mrb[0].mxu0 %v5761
    %v5991 = vpop.f32.mrb[0].mxu0
    %v5992 = vadd.f32 %v5557, %v5991
    %v5993 = vpop.f32.mrb[0].mxu0
    %v5994 = vadd.f32 %v5559, %v5993
    %v5995 = vpop.f32.mrb[0].mxu0
    %v5996 = vadd.f32 %v5561, %v5995
    %v5997 = vpop.f32.mrb[0].mxu0
    %v5998 = vadd.f32 %v5563, %v5997
    %5999 = vmatprep.mubr.bf16.mxu0 0
    %6000 = vmatmul.mubr.bf16.gmra.mrb[0].mxu0 %v5764
    %v6001 = vpop.f32.mrb[0].mxu0
    %v6002 = vadd.f32 %v5567, %v6001
    %v6003 = vpop.f32.mrb[0].mxu0
    %v6004 = vadd.f32 %v5569, %v6003
    %v6005 = vpop.f32.mrb[0].mxu0
    %v6006 = vadd.f32 %v5571, %v6005
    %v6007 = vpop.f32.mrb[0].mxu0
    %v6008 = vadd.f32 %v5573, %v6007
    %6009 = vdwg.mxu0
    %6010 = vmatprep.subr.bf16.mxu0 %v5729
    %6011 = vmatpush1.bf16.msra.mxu0 %v5728
    %6012 = vmatprep.subr.bf16.mxu0 %v5782
    %6013 = vmatpush1.bf16.msra.mxu0 %v5779
    %6014 = vmatprep.subr.bf16.mxu0 0
    %6015 = vmatpush1.bf16.msra.mxu0 0
    %6016 = vmatprep.subr.bf16.mxu0 0
    %6017 = vmatpush1.bf16.msra.mxu0 0
    %6018 = vmatprep.subr.bf16.mxu0 0
    %6019 = vmatpush1.bf16.msra.mxu0 0
    %6020 = vmatprep.subr.bf16.mxu0 0
    %6021 = vmatpush1.bf16.msra.mxu0 0
    %6022 = vmatprep.subr.bf16.mxu0 0
    %6023 = vmatpush1.bf16.msra.mxu0 0
    %6024 = vmatprep.subr.bf16.mxu0 0
    %6025 = vmatpush1.bf16.msra.mxu0 0
    %6026 = vmatprep.subr.bf16.mxu0 0
    %6027 = vmatpush1.bf16.msra.mxu0 0
    %6028 = vmatprep.subr.bf16.mxu0 0
    %6029 = vmatpush1.bf16.msra.mxu0 0
    %6030 = vmatprep.subr.bf16.mxu0 0
    %6031 = vmatpush1.bf16.msra.mxu0 0
    %6032 = vmatprep.subr.bf16.mxu0 0
    %6033 = vmatpush1.bf16.msra.mxu0 0
    %6034 = vmatprep.subr.bf16.mxu0 0
    %6035 = vmatpush1.bf16.msra.mxu0 0
    %6036 = vmatprep.subr.bf16.mxu0 0
    %6037 = vmatpush1.bf16.msra.mxu0 0
    %6038 = vmatprep.subr.bf16.mxu0 0
    %6039 = vmatpush1.bf16.msra.mxu0 0
    %6040 = vmatprep.subr.bf16.mxu0 0
    %6041 = vmatpush1.bf16.msra.mxu0 0
    %6042 = vmatprep.mubr.bf16.mxu0 0
    %6043 = vmatmul.mubr.bf16.gmra.mrb[0].mxu0 %v5743
    %v6044 = vpop.f32.mrb[0].mxu0
    %v6045 = vadd.f32 %v5610, %v6044
    %v6046 = vpop.f32.mrb[0].mxu0
    %v6047 = vadd.f32 %v5612, %v6046
    %v6048 = vpop.f32.mrb[0].mxu0
    %v6049 = vadd.f32 %v5614, %v6048
    %v6050 = vpop.f32.mrb[0].mxu0
    %v6051 = vadd.f32 %v5616, %v6050
    %6052 = vmatprep.mubr.bf16.mxu0 0
    %6053 = vmatmul.mubr.bf16.gmra.mrb[0].mxu0 %v5746
    %v6054 = vpop.f32.mrb[0].mxu0
    %v6055 = vadd.f32 %v5620, %v6054
    %v6056 = vpop.f32.mrb[0].mxu0
    %v6057 = vadd.f32 %v5622, %v6056
    %v6058 = vpop.f32.mrb[0].mxu0
    %v6059 = vadd.f32 %v5624, %v6058
    %v6060 = vpop.f32.mrb[0].mxu0
    %v6061 = vadd.f32 %v5626, %v6060
    %6062 = vmatprep.mubr.bf16.mxu0 0
    %6063 = vmatmul.mubr.bf16.gmra.mrb[0].mxu0 %v5749
    %v6064 = vpop.f32.mrb[0].mxu0
    %v6065 = vadd.f32 %v5630, %v6064
    %v6066 = vpop.f32.mrb[0].mxu0
    %v6067 = vadd.f32 %v5632, %v6066
    %v6068 = vpop.f32.mrb[0].mxu0
    %v6069 = vadd.f32 %v5634, %v6068
    %v6070 = vpop.f32.mrb[0].mxu0
    %v6071 = vadd.f32 %v5636, %v6070
    %6072 = vmatprep.mubr.bf16.mxu0 0
    %6073 = vmatmul.mubr.bf16.gmra.mrb[0].mxu0 %v5752
    %v6074 = vpop.f32.mrb[0].mxu0
    %v6075 = vadd.f32 %v5640, %v6074
    %v6076 = vpop.f32.mrb[0].mxu0
    %v6077 = vadd.f32 %v5642, %v6076
    %v6078 = vpop.f32.mrb[0].mxu0
    %v6079 = vadd.f32 %v5644, %v6078
    %v6080 = vpop.f32.mrb[0].mxu0
    %v6081 = vadd.f32 %v5646, %v6080
    %6082 = vmatprep.mubr.bf16.mxu0 0
    %6083 = vmatmul.mubr.bf16.gmra.mrb[0].mxu0 %v5755
    %v6084 = vpop.f32.mrb[0].mxu0
    %v6085 = vadd.f32 %v5650, %v6084
    %v6086 = vpop.f32.mrb[0].mxu0
    %v6087 = vadd.f32 %v5652, %v6086
    %v6088 = vpop.f32.mrb[0].mxu0
    %v6089 = vadd.f32 %v5654, %v6088
    %v6090 = vpop.f32.mrb[0].mxu0
    %v6091 = vadd.f32 %v5656, %v6090
    %6092 = vmatprep.mubr.bf16.mxu0 0
    %6093 = vmatmul.mubr.bf16.gmra.mrb[0].mxu0 %v5758
    %v6094 = vpop.f32.mrb[0].mxu0
    %v6095 = vadd.f32 %v5660, %v6094
    %v6096 = vpop.f32.mrb[0].mxu0
    %v6097 = vadd.f32 %v5662, %v6096
    %v6098 = vpop.f32.mrb[0].mxu0
    %v6099 = vadd.f32 %v5664, %v6098
    %v6100 = vpop.f32.mrb[0].mxu0
    %v6101 = vadd.f32 %v5666, %v6100
    %6102 = vmatprep.mubr.bf16.mxu0 0
    %6103 = vmatmul.mubr.bf16.gmra.mrb[0].mxu0 %v5761
    %v6104 = vpop.f32.mrb[0].mxu0
    %v6105 = vadd.f32 %v5670, %v6104
    %v6106 = vpop.f32.mrb[0].mxu0
    %v6107 = vadd.f32 %v5672, %v6106
    %v6108 = vpop.f32.mrb[0].mxu0
    %v6109 = vadd.f32 %v5674, %v6108
    %v6110 = vpop.f32.mrb[0].mxu0
    %v6111 = vadd.f32 %v5676, %v6110
    %6112 = vmatprep.mubr.bf16.mxu0 0
    %6113 = vmatmul.mubr.bf16.gmra.mrb[0].mxu0 %v5764
    %v6114 = vpop.f32.mrb[0].mxu0
    %v6115 = vadd.f32 %v5680, %v6114
    %v6116 = vpop.f32.mrb[0].mxu0
    %v6117 = vadd.f32 %v5682, %v6116
    %v6118 = vpop.f32.mrb[0].mxu0
    %v6119 = vadd.f32 %v5684, %v6118
    %v6120 = vpop.f32.mrb[0].mxu0
    %v6121 = vadd.f32 %v5686, %v6120
    %6122 = vdwg.mxu0
    %v6123 = vld [vmem:[#allocation2 + $0x2] sm:$0xff]
    %v6124 = vld [vmem:[#allocation2 + $0xa] sm:$0xff]
    %v6125 = vld [vmem:[#allocation2 + $0x12] sm:$0xff]
    %v6126 = vld [vmem:[#allocation2 + $0x1a] sm:$0xff]
    %v6127 = vld [vmem:[#allocation2 + $0x22] sm:$0xff]
    %v6128 = vld [vmem:[#allocation2 + $0x2a] sm:$0xff]
    %v6129 = vld [vmem:[#allocation2 + $0x32] sm:$0xff]
    %v6130 = vld [vmem:[#allocation2 + $0x3a] sm:$0xff]
    %v6131 = vld [vmem:[#allocation2 + $0x42] sm:$0xff]
    %v6132 = vld [vmem:[#allocation2 + $0x4a] sm:$0xff]
    %v6133 = vld [vmem:[#allocation2 + $0x52] sm:$0xff]
    %v6134 = vld [vmem:[#allocation2 + $0x5a] sm:$0xff]
    %v6135 = vld [vmem:[#allocation2 + $0x62] sm:$0xff]
    %v6136 = vld [vmem:[#allocation2 + $0x6a] sm:$0xff]
    %v6137 = vld [vmem:[#allocation2 + $0x72] sm:$0xff]
    %v6138 = vld [vmem:[#allocation2 + $0x7a] sm:$0x3f]
    %v6139 = vld [vmem:[#allocation40 + $0xa8] sm:$0xff]
    %v6140 = vld [vmem:[#allocation40 + $0xb0] sm:$0xff]
    %v6141 = vld [vmem:[#allocation40 + $0xb8] sm:$0xff]
    %v6142 = vld [vmem:[#allocation40 + $0xc0] sm:$0xff]
    %v6143 = vld [vmem:[#allocation40 + $0xc8] sm:$0xff]
    %v6144 = vld [vmem:[#allocation40 + $0xd0] sm:$0xff]
    %v6145 = vld [vmem:[#allocation40 + $0xd8] sm:$0xff]
    %v6146 = vld [vmem:[#allocation40 + $0xe0] sm:$0xff]
    %v6147 = vld [vmem:[#allocation40 + $0xe8] sm:$0xff]
    %v6148 = vld [vmem:[#allocation40 + $0xf0] sm:$0x33]
    %v6149 = vld [vmem:[#allocation40 + $0xf8] sm:$0x33]
    %v6150 = vld [vmem:[#allocation40 + $0x100] sm:$0x33]
    %v6151 = vpack.c.bf16 %v6124, %v6123
    %v6152 = vpack.c.bf16 %v6126, %v6125
    %v6153 = vpack.c.bf16 %v6128, %v6127
    %v6154 = vpack.c.bf16 %v6130, %v6129
    %v6155 = vpack.c.bf16 %v6132, %v6131
    %v6156 = vpack.c.bf16 %v6134, %v6133
    %v6157 = vpack.c.bf16 %v6136, %v6135
    %v6158 = vpack.c.bf16 %v6138, %v6137
    %v6171 = vunpack.c.l.b16 %v6139
    %v6172 = vunpack.c.h.b16 %v6139
    %v6173 = vunpack.c.l.b16 %v6140
    %v6174 = vunpack.c.h.b16 %v6140
    %v6175 = vunpack.c.l.b16 %v6141
    %v6176 = vunpack.c.h.b16 %v6141
    %v6177 = vunpack.c.l.b16 %v6142
    %v6178 = vunpack.c.h.b16 %v6142
    %v6179 = vunpack.c.l.b16 %v6143
    %v6180 = vunpack.c.h.b16 %v6143
    %v6181 = vunpack.c.l.b16 %v6144
    %v6182 = vunpack.c.h.b16 %v6144
    %v6183 = vunpack.c.l.b16 %v6145
    %v6184 = vunpack.c.h.b16 %v6145
    %v6185 = vunpack.c.l.b16 %v6146
    %v6186 = vunpack.c.h.b16 %v6146
    %v6187 = vunpack.c.l.b16 %v6147
    %v6188 = vunpack.c.h.b16 %v6147
    %v6189 = vunpack.c.l.b16 %v6148
    %v6190 = vunpack.c.h.b16 %v6148
    %v6191 = vunpack.c.l.b16 %v6149
    %v6192 = vunpack.c.h.b16 %v6149
    %v6193 = vunpack.c.l.b16 %v6150
    %v6194 = vunpack.c.h.b16 %v6150
    %v6195 = vpack.c.b16 %v6177, %v6171
    %v6196 = vpack.c.b16 %v6178, %v6172
    %v6197 = vpack.c.b16 %v6179, %v6173
    %v6198 = vpack.c.b16 %v6180, %v6174
    %v6199 = vpack.c.b16 %v6181, %v6175
    %v6200 = vpack.c.b16 %v6182, %v6176
    %v6201 = vpack.c.b16 %v6189, %v6183
    %v6202 = vpack.c.b16 %v6190, %v6184
    %v6203 = vpack.c.b16 %v6191, %v6185
    %v6204 = vpack.c.b16 %v6192, %v6186
    %v6205 = vpack.c.b16 %v6193, %v6187
    %v6206 = vpack.c.b16 %v6194, %v6188
    %v6214 = vsel %vm903, %v6151, 0
    %v6217 = vsel %vm903, %v6152, 0
    %v6220 = vsel %vm903, %v6153, 0
    %v6223 = vsel %vm903, %v6154, 0
    %v6226 = vsel %vm903, %v6155, 0
    %v6229 = vsel %vm903, %v6156, 0
    %v6232 = vsel %vm903, %v6157, 0
    %v6235 = vsel %vm903, %v6158, 0
    %v6238 = vsel %vm5330, %v6201, 0
    %v6241 = vsel %vm5330, %v6202, 0
    %v6244 = vsel %vm5330, %v6203, 0
    %v6247 = vsel %vm5330, %v6204, 0
    %v6250 = vsel %vm5330, %v6205, 0
    %v6253 = vsel %vm5330, %v6206, 0
    %6255 = vmatprep.subr.bf16.mxu0 %v6196
    %6256 = vmatpush1.bf16.msra.mxu0 %v6195
    %6257 = vmatprep.subr.bf16.mxu0 %v6241
    %6258 = vmatpush1.bf16.msra.mxu0 %v6238
    %6259 = vmatprep.subr.bf16.mxu0 0
    %6260 = vmatpush1.bf16.msra.mxu0 0
    %6261 = vmatprep.subr.bf16.mxu0 0
    %6262 = vmatpush1.bf16.msra.mxu0 0
    %6263 = vmatprep.subr.bf16.mxu0 0
    %6264 = vmatpush1.bf16.msra.mxu0 0
    %6265 = vmatprep.subr.bf16.mxu0 0
    %6266 = vmatpush1.bf16.msra.mxu0 0
    %6267 = vmatprep.subr.bf16.mxu0 0
    %6268 = vmatpush1.bf16.msra.mxu0 0
    %6269 = vmatprep.subr.bf16.mxu0 0
    %6270 = vmatpush1.bf16.msra.mxu0 0
    %6271 = vmatprep.subr.bf16.mxu0 0
    %6272 = vmatpush1.bf16.msra.mxu0 0
    %6273 = vmatprep.subr.bf16.mxu0 0
    %6274 = vmatpush1.bf16.msra.mxu0 0
    %6275 = vmatprep.subr.bf16.mxu0 0
    %6276 = vmatpush1.bf16.msra.mxu0 0
    %6277 = vmatprep.subr.bf16.mxu0 0
    %6278 = vmatpush1.bf16.msra.mxu0 0
    %6279 = vmatprep.subr.bf16.mxu0 0
    %6280 = vmatpush1.bf16.msra.mxu0 0
    %6281 = vmatprep.subr.bf16.mxu0 0
    %6282 = vmatpush1.bf16.msra.mxu0 0
    %6283 = vmatprep.subr.bf16.mxu0 0
    %6284 = vmatpush1.bf16.msra.mxu0 0
    %6285 = vmatprep.subr.bf16.mxu0 0
    %6286 = vmatpush1.bf16.msra.mxu0 0
    %6287 = vmatprep.mubr.bf16.mxu0 0
    %6288 = vmatmul.mubr.bf16.gmra.mrb[0].mxu0 %v6214
    %v6289 = vpop.f32.mrb[0].mxu0
    %v6290 = vadd.f32 0.0, %v6289
    %v6291 = vpop.f32.mrb[0].mxu0
    %v6292 = vadd.f32 0.0, %v6291
    %v6293 = vpop.f32.mrb[0].mxu0
    %v6294 = vadd.f32 0.0, %v6293
    %v6295 = vpop.f32.mrb[0].mxu0
    %v6296 = vadd.f32 0.0, %v6295
    %6297 = vmatprep.mubr.bf16.mxu0 0
    %6298 = vmatmul.mubr.bf16.gmra.mrb[0].mxu0 %v6217
    %v6299 = vpop.f32.mrb[0].mxu0
    %v6300 = vadd.f32 0.0, %v6299
    %v6301 = vpop.f32.mrb[0].mxu0
    %v6302 = vadd.f32 0.0, %v6301
    %v6303 = vpop.f32.mrb[0].mxu0
    %v6304 = vadd.f32 0.0, %v6303
    %v6305 = vpop.f32.mrb[0].mxu0
    %v6306 = vadd.f32 0.0, %v6305
    %6307 = vmatprep.mubr.bf16.mxu0 0
    %6308 = vmatmul.mubr.bf16.gmra.mrb[0].mxu0 %v6220
    %v6309 = vpop.f32.mrb[0].mxu0
    %v6310 = vadd.f32 0.0, %v6309
    %v6311 = vpop.f32.mrb[0].mxu0
    %v6312 = vadd.f32 0.0, %v6311
    %v6313 = vpop.f32.mrb[0].mxu0
    %v6314 = vadd.f32 0.0, %v6313
    %v6315 = vpop.f32.mrb[0].mxu0
    %v6316 = vadd.f32 0.0, %v6315
    %6317 = vmatprep.mubr.bf16.mxu0 0
    %6318 = vmatmul.mubr.bf16.gmra.mrb[0].mxu0 %v6223
    %v6319 = vpop.f32.mrb[0].mxu0
    %v6320 = vadd.f32 0.0, %v6319
    %v6321 = vpop.f32.mrb[0].mxu0
    %v6322 = vadd.f32 0.0, %v6321
    %v6323 = vpop.f32.mrb[0].mxu0
    %v6324 = vadd.f32 0.0, %v6323
    %v6325 = vpop.f32.mrb[0].mxu0
    %v6326 = vadd.f32 0.0, %v6325
    %6327 = vmatprep.mubr.bf16.mxu0 0
    %6328 = vmatmul.mubr.bf16.gmra.mrb[0].mxu0 %v6226
    %v6329 = vpop.f32.mrb[0].mxu0
    %v6330 = vadd.f32 0.0, %v6329
    %v6331 = vpop.f32.mrb[0].mxu0
    %v6332 = vadd.f32 0.0, %v6331
    %v6333 = vpop.f32.mrb[0].mxu0
    %v6334 = vadd.f32 0.0, %v6333
    %v6335 = vpop.f32.mrb[0].mxu0
    %v6336 = vadd.f32 0.0, %v6335
    %6337 = vmatprep.mubr.bf16.mxu0 0
    %6338 = vmatmul.mubr.bf16.gmra.mrb[0].mxu0 %v6229
    %v6339 = vpop.f32.mrb[0].mxu0
    %v6340 = vadd.f32 0.0, %v6339
    %v6341 = vpop.f32.mrb[0].mxu0
    %v6342 = vadd.f32 0.0, %v6341
    %v6343 = vpop.f32.mrb[0].mxu0
    %v6344 = vadd.f32 0.0, %v6343
    %v6345 = vpop.f32.mrb[0].mxu0
    %v6346 = vadd.f32 0.0, %v6345
    %6347 = vmatprep.mubr.bf16.mxu0 0
    %6348 = vmatmul.mubr.bf16.gmra.mrb[0].mxu0 %v6232
    %v6349 = vpop.f32.mrb[0].mxu0
    %v6350 = vadd.f32 0.0, %v6349
    %v6351 = vpop.f32.mrb[0].mxu0
    %v6352 = vadd.f32 0.0, %v6351
    %v6353 = vpop.f32.mrb[0].mxu0
    %v6354 = vadd.f32 0.0, %v6353
    %v6355 = vpop.f32.mrb[0].mxu0
    %v6356 = vadd.f32 0.0, %v6355
    %6357 = vmatprep.mubr.bf16.mxu0 0
    %6358 = vmatmul.mubr.bf16.gmra.mrb[0].mxu0 %v6235
    %v6359 = vpop.f32.mrb[0].mxu0
    %v6360 = vadd.f32 0.0, %v6359
    %v6361 = vpop.f32.mrb[0].mxu0
    %v6362 = vadd.f32 0.0, %v6361
    %v6363 = vpop.f32.mrb[0].mxu0
    %v6364 = vadd.f32 0.0, %v6363
    %v6365 = vpop.f32.mrb[0].mxu0
    %v6366 = vadd.f32 0.0, %v6365
    %6367 = vdwg.mxu0
    %6368 = vmatprep.subr.bf16.mxu0 %v6198
    %6369 = vmatpush1.bf16.msra.mxu0 %v6197
    %6370 = vmatprep.subr.bf16.mxu0 %v6247
    %6371 = vmatpush1.bf16.msra.mxu0 %v6244
    %6372 = vmatprep.subr.bf16.mxu0 0
    %6373 = vmatpush1.bf16.msra.mxu0 0
    %6374 = vmatprep.subr.bf16.mxu0 0
    %6375 = vmatpush1.bf16.msra.mxu0 0
    %6376 = vmatprep.subr.bf16.mxu0 0
    %6377 = vmatpush1.bf16.msra.mxu0 0
    %6378 = vmatprep.subr.bf16.mxu0 0
    %6379 = vmatpush1.bf16.msra.mxu0 0
    %6380 = vmatprep.subr.bf16.mxu0 0
    %6381 = vmatpush1.bf16.msra.mxu0 0
    %6382 = vmatprep.subr.bf16.mxu0 0
    %6383 = vmatpush1.bf16.msra.mxu0 0
    %6384 = vmatprep.subr.bf16.mxu0 0
    %6385 = vmatpush1.bf16.msra.mxu0 0
    %6386 = vmatprep.subr.bf16.mxu0 0
    %6387 = vmatpush1.bf16.msra.mxu0 0
    %6388 = vmatprep.subr.bf16.mxu0 0
    %6389 = vmatpush1.bf16.msra.mxu0 0
    %6390 = vmatprep.subr.bf16.mxu0 0
    %6391 = vmatpush1.bf16.msra.mxu0 0
    %6392 = vmatprep.subr.bf16.mxu0 0
    %6393 = vmatpush1.bf16.msra.mxu0 0
    %6394 = vmatprep.subr.bf16.mxu0 0
    %6395 = vmatpush1.bf16.msra.mxu0 0
    %6396 = vmatprep.subr.bf16.mxu0 0
    %6397 = vmatpush1.bf16.msra.mxu0 0
    %6398 = vmatprep.subr.bf16.mxu0 0
    %6399 = vmatpush1.bf16.msra.mxu0 0
    %6400 = vmatprep.mubr.bf16.mxu0 0
    %6401 = vmatmul.mubr.bf16.gmra.mrb[0].mxu0 %v6214
    %v6402 = vpop.f32.mrb[0].mxu0
    %v6403 = vadd.f32 0.0, %v6402
    %v6404 = vpop.f32.mrb[0].mxu0
    %v6405 = vadd.f32 0.0, %v6404
    %v6406 = vpop.f32.mrb[0].mxu0
    %v6407 = vadd.f32 0.0, %v6406
    %v6408 = vpop.f32.mrb[0].mxu0
    %v6409 = vadd.f32 0.0, %v6408
    %6410 = vmatprep.mubr.bf16.mxu0 0
    %6411 = vmatmul.mubr.bf16.gmra.mrb[0].mxu0 %v6217
    %v6412 = vpop.f32.mrb[0].mxu0
    %v6413 = vadd.f32 0.0, %v6412
    %v6414 = vpop.f32.mrb[0].mxu0
    %v6415 = vadd.f32 0.0, %v6414
    %v6416 = vpop.f32.mrb[0].mxu0
    %v6417 = vadd.f32 0.0, %v6416
    %v6418 = vpop.f32.mrb[0].mxu0
    %v6419 = vadd.f32 0.0, %v6418
    %6420 = vmatprep.mubr.bf16.mxu0 0
    %6421 = vmatmul.mubr.bf16.gmra.mrb[0].mxu0 %v6220
    %v6422 = vpop.f32.mrb[0].mxu0
    %v6423 = vadd.f32 0.0, %v6422
    %v6424 = vpop.f32.mrb[0].mxu0
    %v6425 = vadd.f32 0.0, %v6424
    %v6426 = vpop.f32.mrb[0].mxu0
    %v6427 = vadd.f32 0.0, %v6426
    %v6428 = vpop.f32.mrb[0].mxu0
    %v6429 = vadd.f32 0.0, %v6428
    %6430 = vmatprep.mubr.bf16.mxu0 0
    %6431 = vmatmul.mubr.bf16.gmra.mrb[0].mxu0 %v6223
    %v6432 = vpop.f32.mrb[0].mxu0
    %v6433 = vadd.f32 0.0, %v6432
    %v6434 = vpop.f32.mrb[0].mxu0
    %v6435 = vadd.f32 0.0, %v6434
    %v6436 = vpop.f32.mrb[0].mxu0
    %v6437 = vadd.f32 0.0, %v6436
    %v6438 = vpop.f32.mrb[0].mxu0
    %v6439 = vadd.f32 0.0, %v6438
    %6440 = vmatprep.mubr.bf16.mxu0 0
    %6441 = vmatmul.mubr.bf16.gmra.mrb[0].mxu0 %v6226
    %v6442 = vpop.f32.mrb[0].mxu0
    %v6443 = vadd.f32 0.0, %v6442
    %v6444 = vpop.f32.mrb[0].mxu0
    %v6445 = vadd.f32 0.0, %v6444
    %v6446 = vpop.f32.mrb[0].mxu0
    %v6447 = vadd.f32 0.0, %v6446
    %v6448 = vpop.f32.mrb[0].mxu0
    %v6449 = vadd.f32 0.0, %v6448
    %6450 = vmatprep.mubr.bf16.mxu0 0
    %6451 = vmatmul.mubr.bf16.gmra.mrb[0].mxu0 %v6229
    %v6452 = vpop.f32.mrb[0].mxu0
    %v6453 = vadd.f32 0.0, %v6452
    %v6454 = vpop.f32.mrb[0].mxu0
    %v6455 = vadd.f32 0.0, %v6454
    %v6456 = vpop.f32.mrb[0].mxu0
    %v6457 = vadd.f32 0.0, %v6456
    %v6458 = vpop.f32.mrb[0].mxu0
    %v6459 = vadd.f32 0.0, %v6458
    %6460 = vmatprep.mubr.bf16.mxu0 0
    %6461 = vmatmul.mubr.bf16.gmra.mrb[0].mxu0 %v6232
    %v6462 = vpop.f32.mrb[0].mxu0
    %v6463 = vadd.f32 0.0, %v6462
    %v6464 = vpop.f32.mrb[0].mxu0
    %v6465 = vadd.f32 0.0, %v6464
    %v6466 = vpop.f32.mrb[0].mxu0
    %v6467 = vadd.f32 0.0, %v6466
    %v6468 = vpop.f32.mrb[0].mxu0
    %v6469 = vadd.f32 0.0, %v6468
    %6470 = vmatprep.mubr.bf16.mxu0 0
    %6471 = vmatmul.mubr.bf16.gmra.mrb[0].mxu0 %v6235
    %v6472 = vpop.f32.mrb[0].mxu0
    %v6473 = vadd.f32 0.0, %v6472
    %v6474 = vpop.f32.mrb[0].mxu0
    %v6475 = vadd.f32 0.0, %v6474
    %v6476 = vpop.f32.mrb[0].mxu0
    %v6477 = vadd.f32 0.0, %v6476
    %v6478 = vpop.f32.mrb[0].mxu0
    %v6479 = vadd.f32 0.0, %v6478
    %6480 = vdwg.mxu0
    %6481 = vmatprep.subr.bf16.mxu0 %v6200
    %6482 = vmatpush1.bf16.msra.mxu0 %v6199
    %6483 = vmatprep.subr.bf16.mxu0 %v6253
    %6484 = vmatpush1.bf16.msra.mxu0 %v6250
    %6485 = vmatprep.subr.bf16.mxu0 0
    %6486 = vmatpush1.bf16.msra.mxu0 0
    %6487 = vmatprep.subr.bf16.mxu0 0
    %6488 = vmatpush1.bf16.msra.mxu0 0
    %6489 = vmatprep.subr.bf16.mxu0 0
    %6490 = vmatpush1.bf16.msra.mxu0 0
    %6491 = vmatprep.subr.bf16.mxu0 0
    %6492 = vmatpush1.bf16.msra.mxu0 0
    %6493 = vmatprep.subr.bf16.mxu0 0
    %6494 = vmatpush1.bf16.msra.mxu0 0
    %6495 = vmatprep.subr.bf16.mxu0 0
    %6496 = vmatpush1.bf16.msra.mxu0 0
    %6497 = vmatprep.subr.bf16.mxu0 0
    %6498 = vmatpush1.bf16.msra.mxu0 0
    %6499 = vmatprep.subr.bf16.mxu0 0
    %6500 = vmatpush1.bf16.msra.mxu0 0
    %6501 = vmatprep.subr.bf16.mxu0 0
    %6502 = vmatpush1.bf16.msra.mxu0 0
    %6503 = vmatprep.subr.bf16.mxu0 0
    %6504 = vmatpush1.bf16.msra.mxu0 0
    %6505 = vmatprep.subr.bf16.mxu0 0
    %6506 = vmatpush1.bf16.msra.mxu0 0
    %6507 = vmatprep.subr.bf16.mxu0 0
    %6508 = vmatpush1.bf16.msra.mxu0 0
    %6509 = vmatprep.subr.bf16.mxu0 0
    %6510 = vmatpush1.bf16.msra.mxu0 0
    %6511 = vmatprep.subr.bf16.mxu0 0
    %6512 = vmatpush1.bf16.msra.mxu0 0
    %6513 = vmatprep.mubr.bf16.mxu0 0
    %6514 = vmatmul.mubr.bf16.gmra.mrb[0].mxu0 %v6214
    %v6515 = vpop.f32.mrb[0].mxu0
    %v6516 = vadd.f32 0.0, %v6515
    %v6517 = vpop.f32.mrb[0].mxu0
    %v6518 = vadd.f32 0.0, %v6517
    %v6519 = vpop.f32.mrb[0].mxu0
    %v6520 = vadd.f32 0.0, %v6519
    %v6521 = vpop.f32.mrb[0].mxu0
    %v6522 = vadd.f32 0.0, %v6521
    %6523 = vmatprep.mubr.bf16.mxu0 0
    %6524 = vmatmul.mubr.bf16.gmra.mrb[0].mxu0 %v6217
    %v6525 = vpop.f32.mrb[0].mxu0
    %v6526 = vadd.f32 0.0, %v6525
    %v6527 = vpop.f32.mrb[0].mxu0
    %v6528 = vadd.f32 0.0, %v6527
    %v6529 = vpop.f32.mrb[0].mxu0
    %v6530 = vadd.f32 0.0, %v6529
    %v6531 = vpop.f32.mrb[0].mxu0
    %v6532 = vadd.f32 0.0, %v6531
    %6533 = vmatprep.mubr.bf16.mxu0 0
    %6534 = vmatmul.mubr.bf16.gmra.mrb[0].mxu0 %v6220
    %v6535 = vpop.f32.mrb[0].mxu0
    %v6536 = vadd.f32 0.0, %v6535
    %v6537 = vpop.f32.mrb[0].mxu0
    %v6538 = vadd.f32 0.0, %v6537
    %v6539 = vpop.f32.mrb[0].mxu0
    %v6540 = vadd.f32 0.0, %v6539
    %v6541 = vpop.f32.mrb[0].mxu0
    %v6542 = vadd.f32 0.0, %v6541
    %6543 = vmatprep.mubr.bf16.mxu0 0
    %6544 = vmatmul.mubr.bf16.gmra.mrb[0].mxu0 %v6223
    %v6545 = vpop.f32.mrb[0].mxu0
    %v6546 = vadd.f32 0.0, %v6545
    %v6547 = vpop.f32.mrb[0].mxu0
    %v6548 = vadd.f32 0.0, %v6547
    %v6549 = vpop.f32.mrb[0].mxu0
    %v6550 = vadd.f32 0.0, %v6549
    %v6551 = vpop.f32.mrb[0].mxu0
    %v6552 = vadd.f32 0.0, %v6551
    %6553 = vmatprep.mubr.bf16.mxu0 0
    %6554 = vmatmul.mubr.bf16.gmra.mrb[0].mxu0 %v6226
    %v6555 = vpop.f32.mrb[0].mxu0
    %v6556 = vadd.f32 0.0, %v6555
    %v6557 = vpop.f32.mrb[0].mxu0
    %v6558 = vadd.f32 0.0, %v6557
    %v6559 = vpop.f32.mrb[0].mxu0
    %v6560 = vadd.f32 0.0, %v6559
    %v6561 = vpop.f32.mrb[0].mxu0
    %v6562 = vadd.f32 0.0, %v6561
    %6563 = vmatprep.mubr.bf16.mxu0 0
    %6564 = vmatmul.mubr.bf16.gmra.mrb[0].mxu0 %v6229
    %v6565 = vpop.f32.mrb[0].mxu0
    %v6566 = vadd.f32 0.0, %v6565
    %v6567 = vpop.f32.mrb[0].mxu0
    %v6568 = vadd.f32 0.0, %v6567
    %v6569 = vpop.f32.mrb[0].mxu0
    %v6570 = vadd.f32 0.0, %v6569
    %v6571 = vpop.f32.mrb[0].mxu0
    %v6572 = vadd.f32 0.0, %v6571
    %6573 = vmatprep.mubr.bf16.mxu0 0
    %6574 = vmatmul.mubr.bf16.gmra.mrb[0].mxu0 %v6232
    %v6575 = vpop.f32.mrb[0].mxu0
    %v6576 = vadd.f32 0.0, %v6575
    %v6577 = vpop.f32.mrb[0].mxu0
    %v6578 = vadd.f32 0.0, %v6577
    %v6579 = vpop.f32.mrb[0].mxu0
    %v6580 = vadd.f32 0.0, %v6579
    %v6581 = vpop.f32.mrb[0].mxu0
    %v6582 = vadd.f32 0.0, %v6581
    %6583 = vmatprep.mubr.bf16.mxu0 0
    %6584 = vmatmul.mubr.bf16.gmra.mrb[0].mxu0 %v6235
    %v6585 = vpop.f32.mrb[0].mxu0
    %v6586 = vadd.f32 0.0, %v6585
    %v6587 = vpop.f32.mrb[0].mxu0
    %v6588 = vadd.f32 0.0, %v6587
    %v6589 = vpop.f32.mrb[0].mxu0
    %v6590 = vadd.f32 0.0, %v6589
    %v6591 = vpop.f32.mrb[0].mxu0
    %v6592 = vadd.f32 0.0, %v6591
    %6593 = vdwg.mxu0
    %v6594 = vadd.f32 %v5819, %v6290
    %v6595 = vadd.f32 %v5821, %v6292
    %v6596 = vadd.f32 %v5932, %v6403
    %v6597 = vadd.f32 %v5934, %v6405
    %v6598 = vadd.f32 %v6045, %v6516
    %v6599 = vadd.f32 %v6047, %v6518
    %v6600 = vadd.f32 %v5823, %v6294
    %v6601 = vadd.f32 %v5825, %v6296
    %v6602 = vadd.f32 %v5936, %v6407
    %v6603 = vadd.f32 %v5938, %v6409
    %v6604 = vadd.f32 %v6049, %v6520
    %v6605 = vadd.f32 %v6051, %v6522
    %v6606 = vadd.f32 %v5829, %v6300
    %v6607 = vadd.f32 %v5831, %v6302
    %v6608 = vadd.f32 %v5942, %v6413
    %v6609 = vadd.f32 %v5944, %v6415
    %v6610 = vadd.f32 %v6055, %v6526
    %v6611 = vadd.f32 %v6057, %v6528
    %v6612 = vadd.f32 %v5833, %v6304
    %v6613 = vadd.f32 %v5835, %v6306
    %v6614 = vadd.f32 %v5946, %v6417
    %v6615 = vadd.f32 %v5948, %v6419
    %v6616 = vadd.f32 %v6059, %v6530
    %v6617 = vadd.f32 %v6061, %v6532
    %v6618 = vadd.f32 %v5839, %v6310
    %v6619 = vadd.f32 %v5841, %v6312
    %v6620 = vadd.f32 %v5952, %v6423
    %v6621 = vadd.f32 %v5954, %v6425
    %v6622 = vadd.f32 %v6065, %v6536
    %v6623 = vadd.f32 %v6067, %v6538
    %v6624 = vadd.f32 %v5843, %v6314
    %v6625 = vadd.f32 %v5845, %v6316
    %v6626 = vadd.f32 %v5956, %v6427
    %v6627 = vadd.f32 %v5958, %v6429
    %v6628 = vadd.f32 %v6069, %v6540
    %v6629 = vadd.f32 %v6071, %v6542
    %v6630 = vadd.f32 %v5849, %v6320
    %v6631 = vadd.f32 %v5851, %v6322
    %v6632 = vadd.f32 %v5962, %v6433
    %v6633 = vadd.f32 %v5964, %v6435
    %v6634 = vadd.f32 %v6075, %v6546
    %v6635 = vadd.f32 %v6077, %v6548
    %v6636 = vadd.f32 %v5853, %v6324
    %v6637 = vadd.f32 %v5855, %v6326
    %v6638 = vadd.f32 %v5966, %v6437
    %v6639 = vadd.f32 %v5968, %v6439
    %v6640 = vadd.f32 %v6079, %v6550
    %v6641 = vadd.f32 %v6081, %v6552
    %v6642 = vadd.f32 %v5859, %v6330
    %v6643 = vadd.f32 %v5861, %v6332
    %v6644 = vadd.f32 %v5972, %v6443
    %v6645 = vadd.f32 %v5974, %v6445
    %v6646 = vadd.f32 %v6085, %v6556
    %v6647 = vadd.f32 %v6087, %v6558
    %v6648 = vadd.f32 %v5863, %v6334
    %v6649 = vadd.f32 %v5865, %v6336
    %v6650 = vadd.f32 %v5976, %v6447
    %v6651 = vadd.f32 %v5978, %v6449
    %v6652 = vadd.f32 %v6089, %v6560
    %v6653 = vadd.f32 %v6091, %v6562
    %v6654 = vadd.f32 %v5869, %v6340
    %v6655 = vadd.f32 %v5871, %v6342
    %v6656 = vadd.f32 %v5982, %v6453
    %v6657 = vadd.f32 %v5984, %v6455
    %v6658 = vadd.f32 %v6095, %v6566
    %v6659 = vadd.f32 %v6097, %v6568
    %v6660 = vadd.f32 %v5873, %v6344
    %v6661 = vadd.f32 %v5875, %v6346
    %v6662 = vadd.f32 %v5986, %v6457
    %v6663 = vadd.f32 %v5988, %v6459
    %v6664 = vadd.f32 %v6099, %v6570
    %v6665 = vadd.f32 %v6101, %v6572
    %v6666 = vadd.f32 %v5879, %v6350
    %v6667 = vadd.f32 %v5881, %v6352
    %v6668 = vadd.f32 %v5992, %v6463
    %v6669 = vadd.f32 %v5994, %v6465
    %v6670 = vadd.f32 %v6105, %v6576
    %v6671 = vadd.f32 %v6107, %v6578
    %v6672 = vadd.f32 %v5883, %v6354
    %v6673 = vadd.f32 %v5885, %v6356
    %v6674 = vadd.f32 %v5996, %v6467
    %v6675 = vadd.f32 %v5998, %v6469
    %v6676 = vadd.f32 %v6109, %v6580
    %v6677 = vadd.f32 %v6111, %v6582
    %v6678 = vadd.f32 %v5889, %v6360
    %v6679 = vadd.f32 %v5891, %v6362
    %v6680 = vadd.f32 %v6002, %v6473
    %v6681 = vadd.f32 %v6004, %v6475
    %v6682 = vadd.f32 %v6115, %v6586
    %v6683 = vadd.f32 %v6117, %v6588
    %v6684 = vadd.f32 %v5893, %v6364
    %v6685 = vadd.f32 %v5895, %v6366
    %v6686 = vadd.f32 %v6006, %v6477
    %v6687 = vadd.f32 %v6008, %v6479
    %v6688 = vadd.f32 %v6119, %v6590
    %v6689 = vadd.f32 %v6121, %v6592
    %v6690 = vmax.f32 %v6594, %v6597
    %v6691 = vmax.f32 %v6595, %v6598
    %v6692 = vmax.f32 %v6596, %v6599
    %v6693 = vmax.f32 %v6600, %v6603
    %v6694 = vmax.f32 %v6601, %v6604
    %v6695 = vmax.f32 %v6602, %v6605
    %v6696 = vmax.f32 %v6606, %v6609
    %v6697 = vmax.f32 %v6607, %v6610
    %v6698 = vmax.f32 %v6608, %v6611
    %v6699 = vmax.f32 %v6612, %v6615
    %v6700 = vmax.f32 %v6613, %v6616
    %v6701 = vmax.f32 %v6614, %v6617
    %v6702 = vmax.f32 %v6618, %v6621
    %v6703 = vmax.f32 %v6619, %v6622
    %v6704 = vmax.f32 %v6620, %v6623
    %v6705 = vmax.f32 %v6624, %v6627
    %v6706 = vmax.f32 %v6625, %v6628
    %v6707 = vmax.f32 %v6626, %v6629
    %v6708 = vmax.f32 %v6630, %v6633
    %v6709 = vmax.f32 %v6631, %v6634
    %v6710 = vmax.f32 %v6632, %v6635
    %v6711 = vmax.f32 %v6636, %v6639
    %v6712 = vmax.f32 %v6637, %v6640
    %v6713 = vmax.f32 %v6638, %v6641
    %v6714 = vmax.f32 %v6642, %v6645
    %v6715 = vmax.f32 %v6643, %v6646
    %v6716 = vmax.f32 %v6644, %v6647
    %v6717 = vmax.f32 %v6648, %v6651
    %v6718 = vmax.f32 %v6649, %v6652
    %v6719 = vmax.f32 %v6650, %v6653
    %v6720 = vmax.f32 %v6654, %v6657
    %v6721 = vmax.f32 %v6655, %v6658
    %v6722 = vmax.f32 %v6656, %v6659
    %v6723 = vmax.f32 %v6660, %v6663
    %v6724 = vmax.f32 %v6661, %v6664
    %v6725 = vmax.f32 %v6662, %v6665
    %v6726 = vmax.f32 %v6666, %v6669
    %v6727 = vmax.f32 %v6667, %v6670
    %v6728 = vmax.f32 %v6668, %v6671
    %v6729 = vmax.f32 %v6672, %v6675
    %v6730 = vmax.f32 %v6673, %v6676
    %v6731 = vmax.f32 %v6674, %v6677
    %v6732 = vmax.f32 %v6678, %v6681
    %v6733 = vmax.f32 %v6679, %v6682
    %v6734 = vmax.f32 %v6680, %v6683
    %v6735 = vmax.f32 %v6684, %v6687
    %v6736 = vmax.f32 %v6685, %v6688
    %v6737 = vmax.f32 %v6686, %v6689
    %v6738 = vld [vmem:[#allocation37] sm:$0xf]
    %v6739 = vld [vmem:[#allocation37 + $0x4] sm:$0xf]
    %v6740 = vld [vmem:[#allocation37 + $0x8] sm:$0xf]
    %v6741 = vld [vmem:[#allocation37 + $0xc] sm:$0xf]
    %v6742 = vld [vmem:[#allocation37 + $0x10] sm:$0xf]
    %v6743 = vld [vmem:[#allocation37 + $0x14] sm:$0xf]
    %v6744 = vpack.c.bf16 %v6693, %v6690
    %v6745 = vpack.c.bf16 %v6694, %v6691
    %v6746 = vpack.c.bf16 %v6695, %v6692
    %v6747 = vpack.c.bf16 %v6699, %v6696
    %v6748 = vpack.c.bf16 %v6700, %v6697
    %v6749 = vpack.c.bf16 %v6701, %v6698
    %v6750 = vpack.c.bf16 %v6705, %v6702
    %v6751 = vpack.c.bf16 %v6706, %v6703
    %v6752 = vpack.c.bf16 %v6707, %v6704
    %v6753 = vpack.c.bf16 %v6711, %v6708
    %v6754 = vpack.c.bf16 %v6712, %v6709
    %v6755 = vpack.c.bf16 %v6713, %v6710
    %v6756 = vpack.c.bf16 %v6717, %v6714
    %v6757 = vpack.c.bf16 %v6718, %v6715
    %v6758 = vpack.c.bf16 %v6719, %v6716
    %v6759 = vpack.c.bf16 %v6723, %v6720
    %v6760 = vpack.c.bf16 %v6724, %v6721
    %v6761 = vpack.c.bf16 %v6725, %v6722
    %v6762 = vpack.c.bf16 %v6729, %v6726
    %v6763 = vpack.c.bf16 %v6730, %v6727
    %v6764 = vpack.c.bf16 %v6731, %v6728
    %v6765 = vpack.c.bf16 %v6735, %v6732
    %v6766 = vpack.c.bf16 %v6736, %v6733
    %v6767 = vpack.c.bf16 %v6737, %v6734
    %v6774 = vunpack.c.l.b16 %v6738
    %v6775 = vunpack.c.l.b16 %v6739
    %v6776 = vunpack.c.l.b16 %v6740
    %v6777 = vunpack.c.l.b16 %v6741
    %v6778 = vunpack.c.l.b16 %v6742
    %v6779 = vunpack.c.l.b16 %v6743
    %v6780 = vpack.c.b16 %v6775, %v6774
    %v6781 = vpack.c.b16 %v6777, %v6776
    %v6782 = vpack.c.b16 %v6779, %v6778
    %vm6783 = vcmask 1031168
    %v6785 = vsel %vm6783, %v6780, 0
    %v6788 = vsel %vm6783, %v6781, 0
    %v6791 = vsel %vm6783, %v6782, 0
    %v6794 = vsel %vm1846, %v6765, 0
    %v6797 = vsel %vm1846, %v6766, 0
    %v6800 = vsel %vm1846, %v6767, 0
    %6802 = vmatprep.subr.bf16.mxu0 %v6745
    %6803 = vmatpush1.bf16.msra.mxu0 %v6744
    %6804 = vmatprep.subr.bf16.mxu0 %v6748
    %6805 = vmatpush1.bf16.msra.mxu0 %v6747
    %6806 = vmatprep.subr.bf16.mxu0 %v6751
    %6807 = vmatpush1.bf16.msra.mxu0 %v6750
    %6808 = vmatprep.subr.bf16.mxu0 %v6754
    %6809 = vmatpush1.bf16.msra.mxu0 %v6753
    %6810 = vmatprep.subr.bf16.mxu0 %v6757
    %6811 = vmatpush1.bf16.msra.mxu0 %v6756
    %6812 = vmatprep.subr.bf16.mxu0 %v6760
    %6813 = vmatpush1.bf16.msra.mxu0 %v6759
    %6814 = vmatprep.subr.bf16.mxu0 %v6763
    %6815 = vmatpush1.bf16.msra.mxu0 %v6762
    %6816 = vmatprep.subr.bf16.mxu0 %v6797
    %6817 = vmatpush1.bf16.msra.mxu0 %v6794
    %6818 = vmatprep.subr.bf16.mxu0 0
    %6819 = vmatpush1.bf16.msra.mxu0 0
    %6820 = vmatprep.subr.bf16.mxu0 0
    %6821 = vmatpush1.bf16.msra.mxu0 0
    %6822 = vmatprep.subr.bf16.mxu0 0
    %6823 = vmatpush1.bf16.msra.mxu0 0
    %6824 = vmatprep.subr.bf16.mxu0 0
    %6825 = vmatpush1.bf16.msra.mxu0 0
    %6826 = vmatprep.subr.bf16.mxu0 0
    %6827 = vmatpush1.bf16.msra.mxu0 0
    %6828 = vmatprep.subr.bf16.mxu0 0
    %6829 = vmatpush1.bf16.msra.mxu0 0
    %6830 = vmatprep.subr.bf16.mxu0 0
    %6831 = vmatpush1.bf16.msra.mxu0 0
    %6832 = vmatprep.subr.bf16.mxu0 0
    %6833 = vmatpush1.bf16.msra.mxu0 0
    %6834 = vmatprep.mubr.bf16.mxu0 0
    %6835 = vmatmul.mubr.bf16.gmra.mrb[0].mxu0 %v6785
    %v6836 = vpop.f32.mrb[0].mxu0
    %v6837 = vadd.f32 0.0, %v6836
    %v6838 = vpop.f32.mrb[0].mxu0
    %v6839 = vadd.f32 0.0, %v6838
    %v6840 = vpop.f32.mrb[0].mxu0
    %v6841 = vadd.f32 0.0, %v6840
    %v6842 = vpop.f32.mrb[0].mxu0
    %v6843 = vadd.f32 0.0, %v6842
    %6844 = vmatprep.mubr.bf16.mxu0 0
    %6845 = vmatmul.mubr.bf16.gmra.mrb[0].mxu0 %v6788
    %v6846 = vpop.f32.mrb[0].mxu0
    %v6847 = vadd.f32 0.0, %v6846
    %v6848 = vpop.f32.mrb[0].mxu0
    %v6849 = vadd.f32 0.0, %v6848
    %v6850 = vpop.f32.mrb[0].mxu0
    %v6851 = vadd.f32 0.0, %v6850
    %v6852 = vpop.f32.mrb[0].mxu0
    %v6853 = vadd.f32 0.0, %v6852
    %6854 = vmatprep.mubr.bf16.mxu0 0
    %6855 = vmatmul.mubr.bf16.gmra.mrb[0].mxu0 %v6791
    %v6856 = vpop.f32.mrb[0].mxu0
    %v6857 = vadd.f32 0.0, %v6856
    %v6858 = vpop.f32.mrb[0].mxu0
    %v6859 = vadd.f32 0.0, %v6858
    %v6860 = vpop.f32.mrb[0].mxu0
    %v6861 = vadd.f32 0.0, %v6860
    %v6862 = vpop.f32.mrb[0].mxu0
    %v6863 = vadd.f32 0.0, %v6862
    %6864 = vdwg.mxu0
    %6865 = vmatprep.subr.bf16.mxu0 0
    %6866 = vmatpush1.bf16.msra.mxu0 %v6746
    %6867 = vmatprep.subr.bf16.mxu0 0
    %6868 = vmatpush1.bf16.msra.mxu0 %v6749
    %6869 = vmatprep.subr.bf16.mxu0 0
    %6870 = vmatpush1.bf16.msra.mxu0 %v6752
    %6871 = vmatprep.subr.bf16.mxu0 0
    %6872 = vmatpush1.bf16.msra.mxu0 %v6755
    %6873 = vmatprep.subr.bf16.mxu0 0
    %6874 = vmatpush1.bf16.msra.mxu0 %v6758
    %6875 = vmatprep.subr.bf16.mxu0 0
    %6876 = vmatpush1.bf16.msra.mxu0 %v6761
    %6877 = vmatprep.subr.bf16.mxu0 0
    %6878 = vmatpush1.bf16.msra.mxu0 %v6764
    %6879 = vmatprep.subr.bf16.mxu0 0
    %6880 = vmatpush1.bf16.msra.mxu0 %v6800
    %6881 = vmatprep.subr.bf16.mxu0 0
    %6882 = vmatpush1.bf16.msra.mxu0 0
    %6883 = vmatprep.subr.bf16.mxu0 0
    %6884 = vmatpush1.bf16.msra.mxu0 0
    %6885 = vmatprep.subr.bf16.mxu0 0
    %6886 = vmatpush1.bf16.msra.mxu0 0
    %6887 = vmatprep.subr.bf16.mxu0 0
    %6888 = vmatpush1.bf16.msra.mxu0 0
    %6889 = vmatprep.subr.bf16.mxu0 0
    %6890 = vmatpush1.bf16.msra.mxu0 0
    %6891 = vmatprep.subr.bf16.mxu0 0
    %6892 = vmatpush1.bf16.msra.mxu0 0
    %6893 = vmatprep.subr.bf16.mxu0 0
    %6894 = vmatpush1.bf16.msra.mxu0 0
    %6895 = vmatprep.subr.bf16.mxu0 0
    %6896 = vmatpush1.bf16.msra.mxu0 0
    %6897 = vmatprep.mubr.bf16.mxu0 0
    %6898 = vmatmul.mubr.bf16.gmra.mrb[0].mxu0 %v6785
    %v6899 = vpop.f32.mrb[0].mxu0
    %v6900 = vadd.f32 0.0, %v6899
    %v6901 = vpop.f32.mrb[0].mxu0
    %v6902 = vpop.f32.mrb[0].mxu0
    %v6903 = vadd.f32 0.0, %v6902
    %v6904 = vpop.f32.mrb[0].mxu0
    %6905 = vmatprep.mubr.bf16.mxu0 0
    %6906 = vmatmul.mubr.bf16.gmra.mrb[0].mxu0 %v6788
    %v6907 = vpop.f32.mrb[0].mxu0
    %v6908 = vadd.f32 0.0, %v6907
    %v6909 = vpop.f32.mrb[0].mxu0
    %v6910 = vpop.f32.mrb[0].mxu0
    %v6911 = vadd.f32 0.0, %v6910
    %v6912 = vpop.f32.mrb[0].mxu0
    %6913 = vmatprep.mubr.bf16.mxu0 0
    %6914 = vmatmul.mubr.bf16.gmra.mrb[0].mxu0 %v6791
    %v6915 = vpop.f32.mrb[0].mxu0
    %v6916 = vadd.f32 0.0, %v6915
    %v6917 = vpop.f32.mrb[0].mxu0
    %v6918 = vpop.f32.mrb[0].mxu0
    %v6919 = vadd.f32 0.0, %v6918
    %v6920 = vpop.f32.mrb[0].mxu0
    %6921 = vdwg.mxu0
    %v6922 = vld [vmem:[#allocation39] sm:$0xf]
    %v6923 = vld [vmem:[#allocation39 + $0x4] sm:$0xf]
    %v6924 = vld [vmem:[#allocation39 + $0x8] sm:$0xf]
    %v6925 = vld [vmem:[#allocation39 + $0xc] sm:$0xf]
    %v6926 = vld [vmem:[#allocation39 + $0x10] sm:$0xf]
    %v6927 = vld [vmem:[#allocation39 + $0x14] sm:$0xf]
    %v6934 = vunpack.c.l.b16 %v6922
    %v6935 = vunpack.c.l.b16 %v6923
    %v6936 = vunpack.c.l.b16 %v6924
    %v6937 = vunpack.c.l.b16 %v6925
    %v6938 = vunpack.c.l.b16 %v6926
    %v6939 = vunpack.c.l.b16 %v6927
    %v6940 = vpack.c.b16 %v6935, %v6934
    %v6941 = vpack.c.b16 %v6937, %v6936
    %v6942 = vpack.c.b16 %v6939, %v6938
    %v6944 = vsel %vm6783, %v6940, 0
    %v6947 = vsel %vm6783, %v6941, 0
    %v6950 = vsel %vm6783, %v6942, 0
    %6952 = vmatprep.subr.bf16.mxu0 %v6745
    %6953 = vmatpush1.bf16.msra.mxu0 %v6744
    %6954 = vmatprep.subr.bf16.mxu0 %v6748
    %6955 = vmatpush1.bf16.msra.mxu0 %v6747
    %6956 = vmatprep.subr.bf16.mxu0 %v6751
    %6957 = vmatpush1.bf16.msra.mxu0 %v6750
    %6958 = vmatprep.subr.bf16.mxu0 %v6754
    %6959 = vmatpush1.bf16.msra.mxu0 %v6753
    %6960 = vmatprep.subr.bf16.mxu0 %v6757
    %6961 = vmatpush1.bf16.msra.mxu0 %v6756
    %6962 = vmatprep.subr.bf16.mxu0 %v6760
    %6963 = vmatpush1.bf16.msra.mxu0 %v6759
    %6964 = vmatprep.subr.bf16.mxu0 %v6763
    %6965 = vmatpush1.bf16.msra.mxu0 %v6762
    %6966 = vmatprep.subr.bf16.mxu0 %v6797
    %6967 = vmatpush1.bf16.msra.mxu0 %v6794
    %6968 = vmatprep.subr.bf16.mxu0 0
    %6969 = vmatpush1.bf16.msra.mxu0 0
    %6970 = vmatprep.subr.bf16.mxu0 0
    %6971 = vmatpush1.bf16.msra.mxu0 0
    %6972 = vmatprep.subr.bf16.mxu0 0
    %6973 = vmatpush1.bf16.msra.mxu0 0
    %6974 = vmatprep.subr.bf16.mxu0 0
    %6975 = vmatpush1.bf16.msra.mxu0 0
    %6976 = vmatprep.subr.bf16.mxu0 0
    %6977 = vmatpush1.bf16.msra.mxu0 0
    %6978 = vmatprep.subr.bf16.mxu0 0
    %6979 = vmatpush1.bf16.msra.mxu0 0
    %6980 = vmatprep.subr.bf16.mxu0 0
    %6981 = vmatpush1.bf16.msra.mxu0 0
    %6982 = vmatprep.subr.bf16.mxu0 0
    %6983 = vmatpush1.bf16.msra.mxu0 0
    %6984 = vmatprep.mubr.bf16.mxu0 0
    %6985 = vmatmul.mubr.bf16.gmra.mrb[0].mxu0 %v6944
    %v6986 = vpop.f32.mrb[0].mxu0
    %v6987 = vadd.f32 0.0, %v6986
    %v6988 = vpop.f32.mrb[0].mxu0
    %v6989 = vadd.f32 0.0, %v6988
    %v6990 = vpop.f32.mrb[0].mxu0
    %v6991 = vadd.f32 0.0, %v6990
    %v6992 = vpop.f32.mrb[0].mxu0
    %v6993 = vadd.f32 0.0, %v6992
    %6994 = vmatprep.mubr.bf16.mxu0 0
    %6995 = vmatmul.mubr.bf16.gmra.mrb[0].mxu0 %v6947
    %v6996 = vpop.f32.mrb[0].mxu0
    %v6997 = vadd.f32 0.0, %v6996
    %v6998 = vpop.f32.mrb[0].mxu0
    %v6999 = vadd.f32 0.0, %v6998
    %v7000 = vpop.f32.mrb[0].mxu0
    %v7001 = vadd.f32 0.0, %v7000
    %v7002 = vpop.f32.mrb[0].mxu0
    %v7003 = vadd.f32 0.0, %v7002
    %7004 = vmatprep.mubr.bf16.mxu0 0
    %7005 = vmatmul.mubr.bf16.gmra.mrb[0].mxu0 %v6950
    %v7006 = vpop.f32.mrb[0].mxu0
    %v7007 = vadd.f32 0.0, %v7006
    %v7008 = vpop.f32.mrb[0].mxu0
    %v7009 = vadd.f32 0.0, %v7008
    %v7010 = vpop.f32.mrb[0].mxu0
    %v7011 = vadd.f32 0.0, %v7010
    %v7012 = vpop.f32.mrb[0].mxu0
    %v7013 = vadd.f32 0.0, %v7012
    %7014 = vdwg.mxu0
    %7015 = vmatprep.subr.bf16.mxu0 0
    %7016 = vmatpush1.bf16.msra.mxu0 %v6746
    %7017 = vmatprep.subr.bf16.mxu0 0
    %7018 = vmatpush1.bf16.msra.mxu0 %v6749
    %7019 = vmatprep.subr.bf16.mxu0 0
    %7020 = vmatpush1.bf16.msra.mxu0 %v6752
    %7021 = vmatprep.subr.bf16.mxu0 0
    %7022 = vmatpush1.bf16.msra.mxu0 %v6755
    %7023 = vmatprep.subr.bf16.mxu0 0
    %7024 = vmatpush1.bf16.msra.mxu0 %v6758
    %7025 = vmatprep.subr.bf16.mxu0 0
    %7026 = vmatpush1.bf16.msra.mxu0 %v6761
    %7027 = vmatprep.subr.bf16.mxu0 0
    %7028 = vmatpush1.bf16.msra.mxu0 %v6764
    %7029 = vmatprep.subr.bf16.mxu0 0
    %7030 = vmatpush1.bf16.msra.mxu0 %v6800
    %7031 = vmatprep.subr.bf16.mxu0 0
    %7032 = vmatpush1.bf16.msra.mxu0 0
    %7033 = vmatprep.subr.bf16.mxu0 0
    %7034 = vmatpush1.bf16.msra.mxu0 0
    %7035 = vmatprep.subr.bf16.mxu0 0
    %7036 = vmatpush1.bf16.msra.mxu0 0
    %7037 = vmatprep.subr.bf16.mxu0 0
    %7038 = vmatpush1.bf16.msra.mxu0 0
    %7039 = vmatprep.subr.bf16.mxu0 0
    %7040 = vmatpush1.bf16.msra.mxu0 0
    %7041 = vmatprep.subr.bf16.mxu0 0
    %7042 = vmatpush1.bf16.msra.mxu0 0
    %7043 = vmatprep.subr.bf16.mxu0 0
    %7044 = vmatpush1.bf16.msra.mxu0 0
    %7045 = vmatprep.subr.bf16.mxu0 0
    %7046 = vmatpush1.bf16.msra.mxu0 0
    %7047 = vmatprep.mubr.bf16.mxu0 0
    %7048 = vmatmul.mubr.bf16.gmra.mrb[0].mxu0 %v6944
    %v7049 = vpop.f32.mrb[0].mxu0
    %v7050 = vadd.f32 0.0, %v7049
    %v7051 = vpop.f32.mrb[0].mxu0
    %v7052 = vpop.f32.mrb[0].mxu0
    %v7053 = vadd.f32 0.0, %v7052
    %v7054 = vpop.f32.mrb[0].mxu0
    %7055 = vmatprep.mubr.bf16.mxu0 0
    %7056 = vmatmul.mubr.bf16.gmra.mrb[0].mxu0 %v6947
    %v7057 = vpop.f32.mrb[0].mxu0
    %v7058 = vadd.f32 0.0, %v7057
    %v7059 = vpop.f32.mrb[0].mxu0
    %v7060 = vpop.f32.mrb[0].mxu0
    %v7061 = vadd.f32 0.0, %v7060
    %v7062 = vpop.f32.mrb[0].mxu0
    %7063 = vmatprep.mubr.bf16.mxu0 0
    %7064 = vmatmul.mubr.bf16.gmra.mrb[0].mxu0 %v6950
    %v7065 = vpop.f32.mrb[0].mxu0
    %v7066 = vadd.f32 0.0, %v7065
    %v7067 = vpop.f32.mrb[0].mxu0
    %v7068 = vpop.f32.mrb[0].mxu0
    %v7069 = vadd.f32 0.0, %v7068
    %v7070 = vpop.f32.mrb[0].mxu0
    %7071 = vdwg.mxu0
    %v7072 = vmax.f32 %v6837, %v6987
    %v7073 = vmax.f32 %v6839, %v6989
    %v7074 = vmax.f32 %v6900, %v7050
    %v7075 = vmax.f32 %v6841, %v6991
    %v7076 = vmax.f32 %v6843, %v6993
    %v7077 = vmax.f32 %v6903, %v7053
    %v7078 = vmax.f32 %v6847, %v6997
    %v7079 = vmax.f32 %v6849, %v6999
    %v7080 = vmax.f32 %v6908, %v7058
    %v7081 = vmax.f32 %v6851, %v7001
    %v7082 = vmax.f32 %v6853, %v7003
    %v7083 = vmax.f32 %v6911, %v7061
    %v7084 = vmax.f32 %v6857, %v7007
    %v7085 = vmax.f32 %v6859, %v7009
    %v7086 = vmax.f32 %v6916, %v7066
    %v7087 = vmax.f32 %v6861, %v7011
    %v7088 = vmax.f32 %v6863, %v7013
    %v7089 = vmax.f32 %v6919, %v7069
    %v7090 = vld [vmem:[#allocation36] sm:$0x7]
    %v7092 = vlaneseq
    %v7093 = vshrl.u32 %v7092, 7
    %v7094 = vsub.s32 0, %v7093
    %v7095 = vrot.slane %v7090, %v7094
    %v7096 = vlaneseq
    %v7097 = vshrl.u32 %v7096, 7
    %v7098 = vsub.s32 1, %v7097
    %v7099 = vrot.slane %v7090, %v7098
    %v7100 = vlaneseq
    %v7101 = vshrl.u32 %v7100, 7
    %v7102 = vsub.s32 2, %v7101
    %v7103 = vrot.slane %v7090, %v7102
    %v7107 = vadd.f32 %v7072, %v7095
    %v7108 = vadd.f32 %v7073, %v7099
    %v7109 = vadd.f32 %v7074, %v7103
    %v7110 = vadd.f32 %v7075, %v7095
    %v7111 = vadd.f32 %v7076, %v7099
    %v7112 = vadd.f32 %v7077, %v7103
    %v7113 = vadd.f32 %v7078, %v7095
    %v7114 = vadd.f32 %v7079, %v7099
    %v7115 = vadd.f32 %v7080, %v7103
    %v7116 = vadd.f32 %v7081, %v7095
    %v7117 = vadd.f32 %v7082, %v7099
    %v7118 = vadd.f32 %v7083, %v7103
    %v7119 = vadd.f32 %v7084, %v7095
    %v7120 = vadd.f32 %v7085, %v7099
    %v7121 = vadd.f32 %v7086, %v7103
    %v7122 = vadd.f32 %v7087, %v7095
    %v7123 = vadd.f32 %v7088, %v7099
    %v7124 = vadd.f32 %v7089, %v7103
    %v7125 = vmax.f32 %v7107, 0.0
    %v7126 = vmax.f32 %v7108, 0.0
    %v7127 = vmax.f32 %v7109, 0.0
    %v7128 = vmax.f32 %v7110, 0.0
    %v7129 = vmax.f32 %v7111, 0.0
    %v7130 = vmax.f32 %v7112, 0.0
    %v7131 = vmax.f32 %v7113, 0.0
    %v7132 = vmax.f32 %v7114, 0.0
    %v7133 = vmax.f32 %v7115, 0.0
    %v7134 = vmax.f32 %v7116, 0.0
    %v7135 = vmax.f32 %v7117, 0.0
    %v7136 = vmax.f32 %v7118, 0.0
    %v7137 = vmax.f32 %v7119, 0.0
    %v7138 = vmax.f32 %v7120, 0.0
    %v7139 = vmax.f32 %v7121, 0.0
    %v7140 = vmax.f32 %v7122, 0.0
    %v7141 = vmax.f32 %v7123, 0.0
    %v7142 = vmax.f32 %v7124, 0.0
    %7143 = vst [vmem:[#allocation6] sm:$0xff] %v7125
    %7144 = vst [vmem:[#allocation6 + $0x8] sm:$0xff] %v7126
    %7145 = vst [vmem:[#allocation6 + $0x10] sm:$0xff] %v7127
    %7146 = vst [vmem:[#allocation6 + $0x18] sm:$0xff] %v7128
    %7147 = vst [vmem:[#allocation6 + $0x20] sm:$0xff] %v7129
    %7148 = vst [vmem:[#allocation6 + $0x28] sm:$0xff] %v7130
    %7149 = vst [vmem:[#allocation6 + $0x30] sm:$0xff] %v7131
    %7150 = vst [vmem:[#allocation6 + $0x38] sm:$0xff] %v7132
    %7151 = vst [vmem:[#allocation6 + $0x40] sm:$0xff] %v7133
    %7152 = vst [vmem:[#allocation6 + $0x48] sm:$0xff] %v7134
    %7153 = vst [vmem:[#allocation6 + $0x50] sm:$0xff] %v7135
    %7154 = vst [vmem:[#allocation6 + $0x58] sm:$0xff] %v7136
    %7155 = vst [vmem:[#allocation6 + $0x60] sm:$0xff] %v7137
    %7156 = vst [vmem:[#allocation6 + $0x68] sm:$0xff] %v7138
    %7157 = vst [vmem:[#allocation6 + $0x70] sm:$0xff] %v7139
    %7158 = vst [vmem:[#allocation6 + $0x78] sm:$0xff] %v7140
    %7159 = vst [vmem:[#allocation6 + $0x80] sm:$0xff] %v7141
    %7160 = vst [vmem:[#allocation6 + $0x88] sm:$0xff] %v7142
    %v7161 = vld [vmem:[#allocation6] sm:$0xff]
    %v7162 = vld [vmem:[#allocation6 + $0x8] sm:$0xff]
    %v7163 = vld [vmem:[#allocation6 + $0x10] sm:$0xff]
    %v7164 = vld [vmem:[#allocation6 + $0x18] sm:$0xff]
    %v7165 = vld [vmem:[#allocation6 + $0x20] sm:$0xff]
    %v7166 = vld [vmem:[#allocation6 + $0x28] sm:$0xff]
    %v7167 = vld [vmem:[#allocation6 + $0x30] sm:$0xff]
    %v7168 = vld [vmem:[#allocation6 + $0x38] sm:$0xff]
    %v7169 = vld [vmem:[#allocation6 + $0x40] sm:$0xff]
    %v7170 = vld [vmem:[#allocation6 + $0x48] sm:$0xff]
    %v7171 = vld [vmem:[#allocation6 + $0x50] sm:$0xff]
    %v7172 = vld [vmem:[#allocation6 + $0x58] sm:$0xff]
    %v7173 = vld [vmem:[#allocation6 + $0x60] sm:$0xff]
    %v7174 = vld [vmem:[#allocation6 + $0x68] sm:$0xff]
    %v7175 = vld [vmem:[#allocation6 + $0x70] sm:$0xff]
    %v7176 = vld [vmem:[#allocation6 + $0x78] sm:$0x3f]
    %v7177 = vld [vmem:[#allocation6 + $0x80] sm:$0x3f]
    %v7178 = vld [vmem:[#allocation6 + $0x88] sm:$0x3f]
    %v7179 = vld [vmem:[#allocation6] sm:$0xfe]
    %v7180 = vld [vmem:[#allocation6 + $0x8] sm:$0xfe]
    %v7181 = vld [vmem:[#allocation6 + $0x10] sm:$0xfe]
    %v7182 = vld [vmem:[#allocation6 + $0x78] sm:$0x7f]
    %v7183 = vld [vmem:[#allocation6 + $0x80] sm:$0x7f]
    %v7184 = vld [vmem:[#allocation6 + $0x88] sm:$0x7f]
    %v7185 = vld [vmem:[#allocation6] sm:$0xfc]
    %v7186 = vld [vmem:[#allocation6 + $0x8] sm:$0xfc]
    %v7187 = vld [vmem:[#allocation6 + $0x10] sm:$0xfc]
    %v7188 = vld [vmem:[#allocation6 + $0x78] sm:$0xff]
    %v7189 = vld [vmem:[#allocation6 + $0x80] sm:$0xff]
    %v7190 = vld [vmem:[#allocation6 + $0x88] sm:$0xff]
    %v7209 = vrot.slane %v7179, 1
    %v7210 = vrot.slane %v7164, 1
    %v7211 = vsel %vm1846, %v7209, %v7210
    %v7212 = vrot.slane %v7180, 1
    %v7213 = vrot.slane %v7165, 1
    %v7214 = vsel %vm1846, %v7212, %v7213
    %v7215 = vrot.slane %v7181, 1
    %v7216 = vrot.slane %v7166, 1
    %v7217 = vsel %vm1846, %v7215, %v7216
    %v7218 = vrot.slane %v7167, 1
    %v7219 = vsel %vm1846, %v7210, %v7218
    %v7220 = vrot.slane %v7168, 1
    %v7221 = vsel %vm1846, %v7213, %v7220
    %v7222 = vrot.slane %v7169, 1
    %v7223 = vsel %vm1846, %v7216, %v7222
    %v7224 = vrot.slane %v7170, 1
    %v7225 = vsel %vm1846, %v7218, %v7224
    %v7226 = vrot.slane %v7171, 1
    %v7227 = vsel %vm1846, %v7220, %v7226
    %v7228 = vrot.slane %v7172, 1
    %v7229 = vsel %vm1846, %v7222, %v7228
    %v7230 = vrot.slane %v7173, 1
    %v7231 = vsel %vm1846, %v7224, %v7230
    %v7232 = vrot.slane %v7174, 1
    %v7233 = vsel %vm1846, %v7226, %v7232
    %v7234 = vrot.slane %v7175, 1
    %v7235 = vsel %vm1846, %v7228, %v7234
    %v7236 = vrot.slane %v7182, 1
    %v7237 = vsel %vm1846, %v7230, %v7236
    %v7238 = vrot.slane %v7183, 1
    %v7239 = vsel %vm1846, %v7232, %v7238
    %v7240 = vrot.slane %v7184, 1
    %v7241 = vsel %vm1846, %v7234, %v7240
    %v7266 = vrot.slane %v7185, 2
    %v7267 = vrot.slane %v7164, 2
    %v7268 = vsel %vm5330, %v7266, %v7267
    %v7269 = vrot.slane %v7186, 2
    %v7270 = vrot.slane %v7165, 2
    %v7271 = vsel %vm5330, %v7269, %v7270
    %v7272 = vrot.slane %v7187, 2
    %v7273 = vrot.slane %v7166, 2
    %v7274 = vsel %vm5330, %v7272, %v7273
    %v7275 = vrot.slane %v7167, 2
    %v7276 = vsel %vm5330, %v7267, %v7275
    %v7277 = vrot.slane %v7168, 2
    %v7278 = vsel %vm5330, %v7270, %v7277
    %v7279 = vrot.slane %v7169, 2
    %v7280 = vsel %vm5330, %v7273, %v7279
    %v7281 = vrot.slane %v7170, 2
    %v7282 = vsel %vm5330, %v7275, %v7281
    %v7283 = vrot.slane %v7171, 2
    %v7284 = vsel %vm5330, %v7277, %v7283
    %v7285 = vrot.slane %v7172, 2
    %v7286 = vsel %vm5330, %v7279, %v7285
    %v7287 = vrot.slane %v7173, 2
    %v7288 = vsel %vm5330, %v7281, %v7287
    %v7289 = vrot.slane %v7174, 2
    %v7290 = vsel %vm5330, %v7283, %v7289
    %v7291 = vrot.slane %v7175, 2
    %v7292 = vsel %vm5330, %v7285, %v7291
    %v7293 = vrot.slane %v7188, 2
    %v7294 = vsel %vm5330, %v7287, %v7293
    %v7295 = vrot.slane %v7189, 2
    %v7296 = vsel %vm5330, %v7289, %v7295
    %v7297 = vrot.slane %v7190, 2
    %v7298 = vsel %vm5330, %v7291, %v7297
    %v7317 = vld [vmem:[%s65] sm:$0xff]
    %v7318 = vld [vmem:[%s65 + $0x8] sm:$0xff]
    %v7319 = vld [vmem:[%s65 + $0x10] sm:$0xff]
    %v7320 = vld [vmem:[%s65 + $0x18] sm:$0xff]
    %v7321 = vld [vmem:[%s65 + $0x20] sm:$0xff]
    %v7322 = vld [vmem:[%s65 + $0x28] sm:$0xff]
    %v7323 = vld [vmem:[%s65 + $0x30] sm:$0xff]
    %v7324 = vld [vmem:[%s65 + $0x38] sm:$0xff]
    %v7325 = vld [vmem:[%s65 + $0x40] sm:$0xff]
    %v7326 = vld [vmem:[%s65 + $0x48] sm:$0xff]
    %v7327 = vld [vmem:[%s65 + $0x50] sm:$0xff]
    %v7328 = vld [vmem:[%s65 + $0x58] sm:$0xff]
    %v7329 = vld [vmem:[%s65 + $0x60] sm:$0xff]
    %v7330 = vld [vmem:[%s65 + $0x68] sm:$0xff]
    %v7331 = vld [vmem:[%s65 + $0x70] sm:$0xff]
    %v7332 = vld [vmem:[%s65 + $0x78] sm:$0xff]
    %v7333 = vld [vmem:[%s65 + $0x80] sm:$0xff]
    %v7334 = vld [vmem:[%s65 + $0x88] sm:$0xff]
    %v7335 = vld [vmem:[%s65 + $0x90] sm:$0xff]
    %v7336 = vld [vmem:[%s65 + $0x98] sm:$0xff]
    %v7337 = vld [vmem:[%s65 + $0xa0] sm:$0xff]
    %v7338 = vld [vmem:[%s65 + $0xa8] sm:$0xff]
    %v7339 = vld [vmem:[%s65 + $0xb0] sm:$0xff]
    %v7340 = vld [vmem:[%s65 + $0xb8] sm:$0xff]
    %v7341 = vld [vmem:[%s65 + $0xc0] sm:$0xff]
    %v7342 = vld [vmem:[%s65 + $0xc8] sm:$0xff]
    %v7343 = vld [vmem:[%s65 + $0xd0] sm:$0xff]
    %v7344 = vld [vmem:[%s65 + $0xd8] sm:$0xff]
    %v7345 = vld [vmem:[%s65 + $0xe0] sm:$0xff]
    %v7346 = vld [vmem:[%s65 + $0xe8] sm:$0xff]
    %v7347 = vld [vmem:[%s65 + $0xf0] sm:$0xff]
    %v7348 = vld [vmem:[%s65 + $0xf8] sm:$0xff]
    %v7349 = vld [vmem:[%s65 + $0x100] sm:$0xff]
    %v7350 = vld [vmem:[%s65 + $0x108] sm:$0xff]
    %v7351 = vld [vmem:[%s65 + $0x110] sm:$0xff]
    %v7352 = vld [vmem:[%s65 + $0x118] sm:$0xff]
    %v7353 = vld [vmem:[%s65 + $0x120] sm:$0xff]
    %v7354 = vld [vmem:[%s65 + $0x128] sm:$0xff]
    %v7355 = vld [vmem:[%s65 + $0x130] sm:$0xff]
    %v7356 = vld [vmem:[%s65 + $0x138] sm:$0xff]
    %v7357 = vld [vmem:[%s65 + $0x140] sm:$0xff]
    %v7358 = vld [vmem:[%s65 + $0x148] sm:$0xff]
    %v7359 = vld [vmem:[%s65 + $0x150] sm:$0xff]
    %v7360 = vld [vmem:[%s65 + $0x158] sm:$0xff]
    %v7361 = vld [vmem:[%s65 + $0x160] sm:$0xff]
    %v7362 = vld [vmem:[%s65 + $0x168] sm:$0xff]
    %v7363 = vld [vmem:[%s65 + $0x170] sm:$0xff]
    %v7364 = vld [vmem:[%s65 + $0x178] sm:$0xff]
    %v7365 = vld [vmem:[%s65 + $0x180] sm:$0xff]
    %v7366 = vld [vmem:[%s65 + $0x188] sm:$0xff]
    %v7367 = vld [vmem:[%s65 + $0x190] sm:$0xff]
    %v7368 = vld [vmem:[%s65 + $0x198] sm:$0xff]
    %v7369 = vld [vmem:[%s65 + $0x1a0] sm:$0xff]
    %v7370 = vld [vmem:[%s65 + $0x1a8] sm:$0xff]
    %v7371 = vld [vmem:[%s65 + $0x1b0] sm:$0xff]
    %v7372 = vld [vmem:[%s65 + $0x1b8] sm:$0xff]
    %v7373 = vld [vmem:[%s65 + $0x1c0] sm:$0xff]
    %v7374 = vld [vmem:[%s65 + $0x1c8] sm:$0xff]
    %v7375 = vld [vmem:[%s65 + $0x1d0] sm:$0xff]
    %v7376 = vld [vmem:[%s65 + $0x1d8] sm:$0xff]
    %v7377 = vld [vmem:[%s65 + $0x1e0] sm:$0xff]
    %v7378 = vld [vmem:[%s65 + $0x1e8] sm:$0xff]
    %v7379 = vld [vmem:[%s65 + $0x1f0] sm:$0xff]
    %v7380 = vld [vmem:[%s65 + $0x1f8] sm:$0xff]
    %v7381 = vld [vmem:[%s65 + $0x200] sm:$0xff]
    %v7382 = vld [vmem:[%s65 + $0x208] sm:$0xff]
    %v7383 = vld [vmem:[%s65 + $0x210] sm:$0xff]
    %v7384 = vld [vmem:[%s65 + $0x218] sm:$0xff]
    %v7385 = vld [vmem:[%s65 + $0x220] sm:$0xff]
    %v7386 = vld [vmem:[%s65 + $0x228] sm:$0xff]
    %v7387 = vld [vmem:[%s65 + $0x230] sm:$0xff]
    %v7388 = vld [vmem:[%s65 + $0x238] sm:$0xff]
    %v7389 = vld [vmem:[%s65 + $0x240] sm:$0xff]
    %v7390 = vld [vmem:[%s65 + $0x248] sm:$0xff]
    %v7391 = vld [vmem:[%s65 + $0x250] sm:$0xff]
    %v7392 = vld [vmem:[%s65 + $0x258] sm:$0xff]
    %v7393 = vld [vmem:[%s65 + $0x260] sm:$0xff]
    %v7394 = vld [vmem:[%s65 + $0x268] sm:$0xff]
    %v7395 = vld [vmem:[%s65 + $0x270] sm:$0xff]
    %v7396 = vld [vmem:[%s65 + $0x278] sm:$0xff]
    %v7397 = vld [vmem:[%s65 + $0x280] sm:$0xff]
    %v7398 = vld [vmem:[%s65 + $0x288] sm:$0xff]
    %v7399 = vld [vmem:[%s65 + $0x290] sm:$0xff]
    %v7400 = vld [vmem:[%s65 + $0x298] sm:$0xff]
    %v7401 = vld [vmem:[%s65 + $0x2a0] sm:$0xff]
    %v7402 = vld [vmem:[%s65 + $0x2a8] sm:$0xff]
    %v7403 = vld [vmem:[%s65 + $0x2b0] sm:$0xff]
    %v7404 = vld [vmem:[%s65 + $0x2b8] sm:$0xff]
    %v7405 = vld [vmem:[%s65 + $0x2c0] sm:$0xff]
    %v7406 = vld [vmem:[%s65 + $0x2c8] sm:$0xff]
    %v7407 = vld [vmem:[%s65 + $0x2d0] sm:$0xff]
    %v7408 = vld [vmem:[%s65 + $0x2d8] sm:$0xff]
    %v7409 = vld [vmem:[%s65 + $0x2e0] sm:$0xff]
    %v7410 = vld [vmem:[%s65 + $0x2e8] sm:$0xff]
    %v7411 = vld [vmem:[%s65 + $0x2f0] sm:$0xff]
    %v7412 = vld [vmem:[%s65 + $0x2f8] sm:$0xff]
    %v7413 = vld [vmem:[%s65 + $0x300] sm:$0xff]
    %v7414 = vld [vmem:[%s65 + $0x308] sm:$0xff]
    %v7415 = vld [vmem:[%s65 + $0x310] sm:$0xff]
    %v7416 = vld [vmem:[%s65 + $0x318] sm:$0xff]
    %v7417 = vld [vmem:[%s65 + $0x320] sm:$0xff]
    %v7418 = vld [vmem:[%s65 + $0x328] sm:$0xff]
    %v7419 = vld [vmem:[%s65 + $0x330] sm:$0xff]
    %v7420 = vld [vmem:[%s65 + $0x338] sm:$0xff]
    %v7421 = vld [vmem:[%s65 + $0x340] sm:$0xff]
    %v7422 = vld [vmem:[%s65 + $0x348] sm:$0xff]
    %v7423 = vld [vmem:[%s65 + $0x350] sm:$0xff]
    %v7424 = vld [vmem:[%s65 + $0x358] sm:$0xff]
    %v7425 = vld [vmem:[%s65 + $0x360] sm:$0xff]
    %v7426 = vld [vmem:[%s65 + $0x368] sm:$0xff]
    %v7427 = vld [vmem:[%s65 + $0x370] sm:$0xff]
    %v7428 = vld [vmem:[%s65 + $0x378] sm:$0xff]
    %v7429 = vld [vmem:[%s65 + $0x380] sm:$0xff]
    %v7430 = vld [vmem:[%s65 + $0x388] sm:$0xff]
    %v7431 = vld [vmem:[%s65 + $0x390] sm:$0xff]
    %v7432 = vld [vmem:[%s65 + $0x398] sm:$0xff]
    %v7433 = vld [vmem:[%s65 + $0x3a0] sm:$0xff]
    %v7434 = vld [vmem:[%s65 + $0x3a8] sm:$0xff]
    %v7435 = vld [vmem:[%s65 + $0x3b0] sm:$0xff]
    %v7436 = vld [vmem:[%s65 + $0x3b8] sm:$0xff]
    %v7437 = vld [vmem:[%s65 + $0x3c0] sm:$0xff]
    %v7438 = vld [vmem:[%s65 + $0x3c8] sm:$0xff]
    %v7439 = vld [vmem:[%s65 + $0x3d0] sm:$0xff]
    %v7440 = vld [vmem:[%s65 + $0x3d8] sm:$0xff]
    %v7441 = vld [vmem:[%s65 + $0x3e0] sm:$0xff]
    %v7442 = vld [vmem:[%s65 + $0x3e8] sm:$0xff]
    %v7443 = vld [vmem:[%s65 + $0x3f0] sm:$0xff]
    %v7444 = vld [vmem:[%s65 + $0x3f8] sm:$0xff]
    %v7445 = vld [vmem:[%s65 + $0x400] sm:$0xff]
    %v7446 = vld [vmem:[%s65 + $0x408] sm:$0xff]
    %v7447 = vld [vmem:[%s65 + $0x410] sm:$0xff]
    %v7448 = vld [vmem:[%s65 + $0x418] sm:$0xff]
    %v7449 = vld [vmem:[%s65 + $0x420] sm:$0xff]
    %v7450 = vld [vmem:[%s65 + $0x428] sm:$0xff]
    %v7451 = vld [vmem:[%s65 + $0x430] sm:$0xff]
    %v7452 = vld [vmem:[%s65 + $0x438] sm:$0xff]
    %v7453 = vld [vmem:[%s65 + $0x440] sm:$0xff]
    %v7454 = vld [vmem:[%s65 + $0x448] sm:$0xff]
    %v7455 = vld [vmem:[%s65 + $0x450] sm:$0xff]
    %v7456 = vld [vmem:[%s65 + $0x458] sm:$0xff]
    %v7457 = vld [vmem:[%s65 + $0x460] sm:$0xff]
    %v7458 = vld [vmem:[%s65 + $0x468] sm:$0xff]
    %v7459 = vld [vmem:[%s65 + $0x470] sm:$0xff]
    %v7460 = vld [vmem:[%s65 + $0x478] sm:$0xff]
    %v7461 = vpack.c.bf16 %v7164, %v7161
    %v7462 = vpack.c.bf16 %v7165, %v7162
    %v7463 = vpack.c.bf16 %v7166, %v7163
    %v7464 = vpack.c.bf16 %v7219, %v7211
    %v7465 = vpack.c.bf16 %v7221, %v7214
    %v7466 = vpack.c.bf16 %v7223, %v7217
    %v7467 = vpack.c.bf16 %v7276, %v7268
    %v7468 = vpack.c.bf16 %v7278, %v7271
    %v7469 = vpack.c.bf16 %v7280, %v7274
    %v7470 = vpack.c.bf16 %v7170, %v7167
    %v7471 = vpack.c.bf16 %v7171, %v7168
    %v7472 = vpack.c.bf16 %v7172, %v7169
    %v7473 = vpack.c.bf16 %v7231, %v7225
    %v7474 = vpack.c.bf16 %v7233, %v7227
    %v7475 = vpack.c.bf16 %v7235, %v7229
    %v7476 = vpack.c.bf16 %v7288, %v7282
    %v7477 = vpack.c.bf16 %v7290, %v7284
    %v7478 = vpack.c.bf16 %v7292, %v7286
    %v7479 = vpack.c.bf16 %v7176, %v7173
    %v7480 = vpack.c.bf16 %v7177, %v7174
    %v7481 = vpack.c.bf16 %v7178, %v7175
    %v7482 = vpack.c.bf16 %v7236, %v7237
    %v7483 = vpack.c.bf16 %v7238, %v7239
    %v7484 = vpack.c.bf16 %v7240, %v7241
    %v7485 = vpack.c.bf16 %v7293, %v7294
    %v7486 = vpack.c.bf16 %v7295, %v7296
    %v7487 = vpack.c.bf16 %v7297, %v7298
    %v7632 = vunpack.c.l.b16 %v7317
    %v7633 = vunpack.c.h.b16 %v7317
    %v7634 = vunpack.c.l.b16 %v7318
    %v7635 = vunpack.c.h.b16 %v7318
    %v7636 = vunpack.c.l.b16 %v7319
    %v7637 = vunpack.c.h.b16 %v7319
    %v7638 = vunpack.c.l.b16 %v7320
    %v7639 = vunpack.c.h.b16 %v7320
    %v7640 = vunpack.c.l.b16 %v7321
    %v7641 = vunpack.c.h.b16 %v7321
    %v7642 = vunpack.c.l.b16 %v7322
    %v7643 = vunpack.c.h.b16 %v7322
    %v7644 = vunpack.c.l.b16 %v7323
    %v7645 = vunpack.c.h.b16 %v7323
    %v7646 = vunpack.c.l.b16 %v7324
    %v7647 = vunpack.c.h.b16 %v7324
    %v7648 = vunpack.c.l.b16 %v7325
    %v7649 = vunpack.c.h.b16 %v7325
    %v7650 = vunpack.c.l.b16 %v7326
    %v7651 = vunpack.c.h.b16 %v7326
    %v7652 = vunpack.c.l.b16 %v7327
    %v7653 = vunpack.c.h.b16 %v7327
    %v7654 = vunpack.c.l.b16 %v7328
    %v7655 = vunpack.c.h.b16 %v7328
    %v7656 = vunpack.c.l.b16 %v7329
    %v7657 = vunpack.c.h.b16 %v7329
    %v7658 = vunpack.c.l.b16 %v7330
    %v7659 = vunpack.c.h.b16 %v7330
    %v7660 = vunpack.c.l.b16 %v7331
    %v7661 = vunpack.c.h.b16 %v7331
    %v7662 = vunpack.c.l.b16 %v7332
    %v7663 = vunpack.c.h.b16 %v7332
    %v7664 = vunpack.c.l.b16 %v7333
    %v7665 = vunpack.c.h.b16 %v7333
    %v7666 = vunpack.c.l.b16 %v7334
    %v7667 = vunpack.c.h.b16 %v7334
    %v7668 = vunpack.c.l.b16 %v7335
    %v7669 = vunpack.c.h.b16 %v7335
    %v7670 = vunpack.c.l.b16 %v7336
    %v7671 = vunpack.c.h.b16 %v7336
    %v7672 = vunpack.c.l.b16 %v7337
    %v7673 = vunpack.c.h.b16 %v7337
    %v7674 = vunpack.c.l.b16 %v7338
    %v7675 = vunpack.c.h.b16 %v7338
    %v7676 = vunpack.c.l.b16 %v7339
    %v7677 = vunpack.c.h.b16 %v7339
    %v7678 = vunpack.c.l.b16 %v7340
    %v7679 = vunpack.c.h.b16 %v7340
    %v7680 = vunpack.c.l.b16 %v7341
    %v7681 = vunpack.c.h.b16 %v7341
    %v7682 = vunpack.c.l.b16 %v7342
    %v7683 = vunpack.c.h.b16 %v7342
    %v7684 = vunpack.c.l.b16 %v7343
    %v7685 = vunpack.c.h.b16 %v7343
    %v7686 = vunpack.c.l.b16 %v7344
    %v7687 = vunpack.c.h.b16 %v7344
    %v7688 = vunpack.c.l.b16 %v7345
    %v7689 = vunpack.c.h.b16 %v7345
    %v7690 = vunpack.c.l.b16 %v7346
    %v7691 = vunpack.c.h.b16 %v7346
    %v7692 = vunpack.c.l.b16 %v7347
    %v7693 = vunpack.c.h.b16 %v7347
    %v7694 = vunpack.c.l.b16 %v7348
    %v7695 = vunpack.c.h.b16 %v7348
    %v7696 = vunpack.c.l.b16 %v7349
    %v7697 = vunpack.c.h.b16 %v7349
    %v7698 = vunpack.c.l.b16 %v7350
    %v7699 = vunpack.c.h.b16 %v7350
    %v7700 = vunpack.c.l.b16 %v7351
    %v7701 = vunpack.c.h.b16 %v7351
    %v7702 = vunpack.c.l.b16 %v7352
    %v7703 = vunpack.c.h.b16 %v7352
    %v7704 = vunpack.c.l.b16 %v7353
    %v7705 = vunpack.c.h.b16 %v7353
    %v7706 = vunpack.c.l.b16 %v7354
    %v7707 = vunpack.c.h.b16 %v7354
    %v7708 = vunpack.c.l.b16 %v7355
    %v7709 = vunpack.c.h.b16 %v7355
    %v7710 = vunpack.c.l.b16 %v7356
    %v7711 = vunpack.c.h.b16 %v7356
    %v7712 = vunpack.c.l.b16 %v7357
    %v7713 = vunpack.c.h.b16 %v7357
    %v7714 = vunpack.c.l.b16 %v7358
    %v7715 = vunpack.c.h.b16 %v7358
    %v7716 = vunpack.c.l.b16 %v7359
    %v7717 = vunpack.c.h.b16 %v7359
    %v7718 = vunpack.c.l.b16 %v7360
    %v7719 = vunpack.c.h.b16 %v7360
    %v7720 = vunpack.c.l.b16 %v7361
    %v7721 = vunpack.c.h.b16 %v7361
    %v7722 = vunpack.c.l.b16 %v7362
    %v7723 = vunpack.c.h.b16 %v7362
    %v7724 = vunpack.c.l.b16 %v7363
    %v7725 = vunpack.c.h.b16 %v7363
    %v7726 = vunpack.c.l.b16 %v7364
    %v7727 = vunpack.c.h.b16 %v7364
    %v7728 = vunpack.c.l.b16 %v7365
    %v7729 = vunpack.c.h.b16 %v7365
    %v7730 = vunpack.c.l.b16 %v7366
    %v7731 = vunpack.c.h.b16 %v7366
    %v7732 = vunpack.c.l.b16 %v7367
    %v7733 = vunpack.c.h.b16 %v7367
    %v7734 = vunpack.c.l.b16 %v7368
    %v7735 = vunpack.c.h.b16 %v7368
    %v7736 = vunpack.c.l.b16 %v7369
    %v7737 = vunpack.c.h.b16 %v7369
    %v7738 = vunpack.c.l.b16 %v7370
    %v7739 = vunpack.c.h.b16 %v7370
    %v7740 = vunpack.c.l.b16 %v7371
    %v7741 = vunpack.c.h.b16 %v7371
    %v7742 = vunpack.c.l.b16 %v7372
    %v7743 = vunpack.c.h.b16 %v7372
    %v7744 = vunpack.c.l.b16 %v7373
    %v7745 = vunpack.c.h.b16 %v7373
    %v7746 = vunpack.c.l.b16 %v7374
    %v7747 = vunpack.c.h.b16 %v7374
    %v7748 = vunpack.c.l.b16 %v7375
    %v7749 = vunpack.c.h.b16 %v7375
    %v7750 = vunpack.c.l.b16 %v7376
    %v7751 = vunpack.c.h.b16 %v7376
    %v7752 = vunpack.c.l.b16 %v7377
    %v7753 = vunpack.c.h.b16 %v7377
    %v7754 = vunpack.c.l.b16 %v7378
    %v7755 = vunpack.c.h.b16 %v7378
    %v7756 = vunpack.c.l.b16 %v7379
    %v7757 = vunpack.c.h.b16 %v7379
    %v7758 = vunpack.c.l.b16 %v7380
    %v7759 = vunpack.c.h.b16 %v7380
    %v7760 = vunpack.c.l.b16 %v7381
    %v7761 = vunpack.c.h.b16 %v7381
    %v7762 = vunpack.c.l.b16 %v7382
    %v7763 = vunpack.c.h.b16 %v7382
    %v7764 = vunpack.c.l.b16 %v7383
    %v7765 = vunpack.c.h.b16 %v7383
    %v7766 = vunpack.c.l.b16 %v7384
    %v7767 = vunpack.c.h.b16 %v7384
    %v7768 = vunpack.c.l.b16 %v7385
    %v7769 = vunpack.c.h.b16 %v7385
    %v7770 = vunpack.c.l.b16 %v7386
    %v7771 = vunpack.c.h.b16 %v7386
    %v7772 = vunpack.c.l.b16 %v7387
    %v7773 = vunpack.c.h.b16 %v7387
    %v7774 = vunpack.c.l.b16 %v7388
    %v7775 = vunpack.c.h.b16 %v7388
    %v7776 = vunpack.c.l.b16 %v7389
    %v7777 = vunpack.c.h.b16 %v7389
    %v7778 = vunpack.c.l.b16 %v7390
    %v7779 = vunpack.c.h.b16 %v7390
    %v7780 = vunpack.c.l.b16 %v7391
    %v7781 = vunpack.c.h.b16 %v7391
    %v7782 = vunpack.c.l.b16 %v7392
    %v7783 = vunpack.c.h.b16 %v7392
    %v7784 = vunpack.c.l.b16 %v7393
    %v7785 = vunpack.c.h.b16 %v7393
    %v7786 = vunpack.c.l.b16 %v7394
    %v7787 = vunpack.c.h.b16 %v7394
    %v7788 = vunpack.c.l.b16 %v7395
    %v7789 = vunpack.c.h.b16 %v7395
    %v7790 = vunpack.c.l.b16 %v7396
    %v7791 = vunpack.c.h.b16 %v7396
    %v7792 = vunpack.c.l.b16 %v7397
    %v7793 = vunpack.c.h.b16 %v7397
    %v7794 = vunpack.c.l.b16 %v7398
    %v7795 = vunpack.c.h.b16 %v7398
    %v7796 = vunpack.c.l.b16 %v7399
    %v7797 = vunpack.c.h.b16 %v7399
    %v7798 = vunpack.c.l.b16 %v7400
    %v7799 = vunpack.c.h.b16 %v7400
    %v7800 = vunpack.c.l.b16 %v7401
    %v7801 = vunpack.c.h.b16 %v7401
    %v7802 = vunpack.c.l.b16 %v7402
    %v7803 = vunpack.c.h.b16 %v7402
    %v7804 = vunpack.c.l.b16 %v7403
    %v7805 = vunpack.c.h.b16 %v7403
    %v7806 = vunpack.c.l.b16 %v7404
    %v7807 = vunpack.c.h.b16 %v7404
    %v7808 = vunpack.c.l.b16 %v7405
    %v7809 = vunpack.c.h.b16 %v7405
    %v7810 = vunpack.c.l.b16 %v7406
    %v7811 = vunpack.c.h.b16 %v7406
    %v7812 = vunpack.c.l.b16 %v7407
    %v7813 = vunpack.c.h.b16 %v7407
    %v7814 = vunpack.c.l.b16 %v7408
    %v7815 = vunpack.c.h.b16 %v7408
    %v7816 = vunpack.c.l.b16 %v7409
    %v7817 = vunpack.c.h.b16 %v7409
    %v7818 = vunpack.c.l.b16 %v7410
    %v7819 = vunpack.c.h.b16 %v7410
    %v7820 = vunpack.c.l.b16 %v7411
    %v7821 = vunpack.c.h.b16 %v7411
    %v7822 = vunpack.c.l.b16 %v7412
    %v7823 = vunpack.c.h.b16 %v7412
    %v7824 = vunpack.c.l.b16 %v7413
    %v7825 = vunpack.c.h.b16 %v7413
    %v7826 = vunpack.c.l.b16 %v7414
    %v7827 = vunpack.c.h.b16 %v7414
    %v7828 = vunpack.c.l.b16 %v7415
    %v7829 = vunpack.c.h.b16 %v7415
    %v7830 = vunpack.c.l.b16 %v7416
    %v7831 = vunpack.c.h.b16 %v7416
    %v7832 = vunpack.c.l.b16 %v7417
    %v7833 = vunpack.c.h.b16 %v7417
    %v7834 = vunpack.c.l.b16 %v7418
    %v7835 = vunpack.c.h.b16 %v7418
    %v7836 = vunpack.c.l.b16 %v7419
    %v7837 = vunpack.c.h.b16 %v7419
    %v7838 = vunpack.c.l.b16 %v7420
    %v7839 = vunpack.c.h.b16 %v7420
    %v7840 = vunpack.c.l.b16 %v7421
    %v7841 = vunpack.c.h.b16 %v7421
    %v7842 = vunpack.c.l.b16 %v7422
    %v7843 = vunpack.c.h.b16 %v7422
    %v7844 = vunpack.c.l.b16 %v7423
    %v7845 = vunpack.c.h.b16 %v7423
    %v7846 = vunpack.c.l.b16 %v7424
    %v7847 = vunpack.c.h.b16 %v7424
    %v7848 = vunpack.c.l.b16 %v7425
    %v7849 = vunpack.c.h.b16 %v7425
    %v7850 = vunpack.c.l.b16 %v7426
    %v7851 = vunpack.c.h.b16 %v7426
    %v7852 = vunpack.c.l.b16 %v7427
    %v7853 = vunpack.c.h.b16 %v7427
    %v7854 = vunpack.c.l.b16 %v7428
    %v7855 = vunpack.c.h.b16 %v7428
    %v7856 = vunpack.c.l.b16 %v7429
    %v7857 = vunpack.c.h.b16 %v7429
    %v7858 = vunpack.c.l.b16 %v7430
    %v7859 = vunpack.c.h.b16 %v7430
    %v7860 = vunpack.c.l.b16 %v7431
    %v7861 = vunpack.c.h.b16 %v7431
    %v7862 = vunpack.c.l.b16 %v7432
    %v7863 = vunpack.c.h.b16 %v7432
    %v7864 = vunpack.c.l.b16 %v7433
    %v7865 = vunpack.c.h.b16 %v7433
    %v7866 = vunpack.c.l.b16 %v7434
    %v7867 = vunpack.c.h.b16 %v7434
    %v7868 = vunpack.c.l.b16 %v7435
    %v7869 = vunpack.c.h.b16 %v7435
    %v7870 = vunpack.c.l.b16 %v7436
    %v7871 = vunpack.c.h.b16 %v7436
    %v7872 = vunpack.c.l.b16 %v7437
    %v7873 = vunpack.c.h.b16 %v7437
    %v7874 = vunpack.c.l.b16 %v7438
    %v7875 = vunpack.c.h.b16 %v7438
    %v7876 = vunpack.c.l.b16 %v7439
    %v7877 = vunpack.c.h.b16 %v7439
    %v7878 = vunpack.c.l.b16 %v7440
    %v7879 = vunpack.c.h.b16 %v7440
    %v7880 = vunpack.c.l.b16 %v7441
    %v7881 = vunpack.c.h.b16 %v7441
    %v7882 = vunpack.c.l.b16 %v7442
    %v7883 = vunpack.c.h.b16 %v7442
    %v7884 = vunpack.c.l.b16 %v7443
    %v7885 = vunpack.c.h.b16 %v7443
    %v7886 = vunpack.c.l.b16 %v7444
    %v7887 = vunpack.c.h.b16 %v7444
    %v7888 = vunpack.c.l.b16 %v7445
    %v7889 = vunpack.c.h.b16 %v7445
    %v7890 = vunpack.c.l.b16 %v7446
    %v7891 = vunpack.c.h.b16 %v7446
    %v7892 = vunpack.c.l.b16 %v7447
    %v7893 = vunpack.c.h.b16 %v7447
    %v7894 = vunpack.c.l.b16 %v7448
    %v7895 = vunpack.c.h.b16 %v7448
    %v7896 = vunpack.c.l.b16 %v7449
    %v7897 = vunpack.c.h.b16 %v7449
    %v7898 = vunpack.c.l.b16 %v7450
    %v7899 = vunpack.c.h.b16 %v7450
    %v7900 = vunpack.c.l.b16 %v7451
    %v7901 = vunpack.c.h.b16 %v7451
    %v7902 = vunpack.c.l.b16 %v7452
    %v7903 = vunpack.c.h.b16 %v7452
    %v7904 = vunpack.c.l.b16 %v7453
    %v7905 = vunpack.c.h.b16 %v7453
    %v7906 = vunpack.c.l.b16 %v7454
    %v7907 = vunpack.c.h.b16 %v7454
    %v7908 = vunpack.c.l.b16 %v7455
    %v7909 = vunpack.c.h.b16 %v7455
    %v7910 = vunpack.c.l.b16 %v7456
    %v7911 = vunpack.c.h.b16 %v7456
    %v7912 = vunpack.c.l.b16 %v7457
    %v7913 = vunpack.c.h.b16 %v7457
    %v7914 = vunpack.c.l.b16 %v7458
    %v7915 = vunpack.c.h.b16 %v7458
    %v7916 = vunpack.c.l.b16 %v7459
    %v7917 = vunpack.c.h.b16 %v7459
    %v7918 = vunpack.c.l.b16 %v7460
    %v7919 = vunpack.c.h.b16 %v7460
    %v7920 = vpack.c.b16 %v7634, %v7632
    %v7921 = vpack.c.b16 %v7635, %v7633
    %v7922 = vpack.c.b16 %v7638, %v7636
    %v7923 = vpack.c.b16 %v7639, %v7637
    %v7924 = vpack.c.b16 %v7642, %v7640
    %v7925 = vpack.c.b16 %v7643, %v7641
    %v7926 = vpack.c.b16 %v7646, %v7644
    %v7927 = vpack.c.b16 %v7647, %v7645
    %v7928 = vpack.c.b16 %v7650, %v7648
    %v7929 = vpack.c.b16 %v7651, %v7649
    %v7930 = vpack.c.b16 %v7654, %v7652
    %v7931 = vpack.c.b16 %v7655, %v7653
    %v7932 = vpack.c.b16 %v7658, %v7656
    %v7933 = vpack.c.b16 %v7659, %v7657
    %v7934 = vpack.c.b16 %v7662, %v7660
    %v7935 = vpack.c.b16 %v7663, %v7661
    %v7936 = vpack.c.b16 %v7666, %v7664
    %v7937 = vpack.c.b16 %v7667, %v7665
    %v7938 = vpack.c.b16 %v7670, %v7668
    %v7939 = vpack.c.b16 %v7671, %v7669
    %v7940 = vpack.c.b16 %v7674, %v7672
    %v7941 = vpack.c.b16 %v7675, %v7673
    %v7942 = vpack.c.b16 %v7678, %v7676
    %v7943 = vpack.c.b16 %v7679, %v7677
    %v7944 = vpack.c.b16 %v7682, %v7680
    %v7945 = vpack.c.b16 %v7683, %v7681
    %v7946 = vpack.c.b16 %v7686, %v7684
    %v7947 = vpack.c.b16 %v7687, %v7685
    %v7948 = vpack.c.b16 %v7690, %v7688
    %v7949 = vpack.c.b16 %v7691, %v7689
    %v7950 = vpack.c.b16 %v7694, %v7692
    %v7951 = vpack.c.b16 %v7695, %v7693
    %v7952 = vpack.c.b16 %v7698, %v7696
    %v7953 = vpack.c.b16 %v7699, %v7697
    %v7954 = vpack.c.b16 %v7702, %v7700
    %v7955 = vpack.c.b16 %v7703, %v7701
    %v7956 = vpack.c.b16 %v7706, %v7704
    %v7957 = vpack.c.b16 %v7707, %v7705
    %v7958 = vpack.c.b16 %v7710, %v7708
    %v7959 = vpack.c.b16 %v7711, %v7709
    %v7960 = vpack.c.b16 %v7714, %v7712
    %v7961 = vpack.c.b16 %v7715, %v7713
    %v7962 = vpack.c.b16 %v7718, %v7716
    %v7963 = vpack.c.b16 %v7719, %v7717
    %v7964 = vpack.c.b16 %v7722, %v7720
    %v7965 = vpack.c.b16 %v7723, %v7721
    %v7966 = vpack.c.b16 %v7726, %v7724
    %v7967 = vpack.c.b16 %v7727, %v7725
    %v7968 = vpack.c.b16 %v7730, %v7728
    %v7969 = vpack.c.b16 %v7731, %v7729
    %v7970 = vpack.c.b16 %v7734, %v7732
    %v7971 = vpack.c.b16 %v7735, %v7733
    %v7972 = vpack.c.b16 %v7738, %v7736
    %v7973 = vpack.c.b16 %v7739, %v7737
    %v7974 = vpack.c.b16 %v7742, %v7740
    %v7975 = vpack.c.b16 %v7743, %v7741
    %v7976 = vpack.c.b16 %v7746, %v7744
    %v7977 = vpack.c.b16 %v7747, %v7745
    %v7978 = vpack.c.b16 %v7750, %v7748
    %v7979 = vpack.c.b16 %v7751, %v7749
    %v7980 = vpack.c.b16 %v7754, %v7752
    %v7981 = vpack.c.b16 %v7755, %v7753
    %v7982 = vpack.c.b16 %v7758, %v7756
    %v7983 = vpack.c.b16 %v7759, %v7757
    %v7984 = vpack.c.b16 %v7762, %v7760
    %v7985 = vpack.c.b16 %v7763, %v7761
    %v7986 = vpack.c.b16 %v7766, %v7764
    %v7987 = vpack.c.b16 %v7767, %v7765
    %v7988 = vpack.c.b16 %v7770, %v7768
    %v7989 = vpack.c.b16 %v7771, %v7769
    %v7990 = vpack.c.b16 %v7774, %v7772
    %v7991 = vpack.c.b16 %v7775, %v7773
    %v7992 = vpack.c.b16 %v7778, %v7776
    %v7993 = vpack.c.b16 %v7779, %v7777
    %v7994 = vpack.c.b16 %v7782, %v7780
    %v7995 = vpack.c.b16 %v7783, %v7781
    %v7996 = vpack.c.b16 %v7786, %v7784
    %v7997 = vpack.c.b16 %v7787, %v7785
    %v7998 = vpack.c.b16 %v7790, %v7788
    %v7999 = vpack.c.b16 %v7791, %v7789
    %v8000 = vpack.c.b16 %v7794, %v7792
    %v8001 = vpack.c.b16 %v7795, %v7793
    %v8002 = vpack.c.b16 %v7798, %v7796
    %v8003 = vpack.c.b16 %v7799, %v7797
    %v8004 = vpack.c.b16 %v7802, %v7800
    %v8005 = vpack.c.b16 %v7803, %v7801
    %v8006 = vpack.c.b16 %v7806, %v7804
    %v8007 = vpack.c.b16 %v7807, %v7805
    %v8008 = vpack.c.b16 %v7810, %v7808
    %v8009 = vpack.c.b16 %v7811, %v7809
    %v8010 = vpack.c.b16 %v7814, %v7812
    %v8011 = vpack.c.b16 %v7815, %v7813
    %v8012 = vpack.c.b16 %v7818, %v7816
    %v8013 = vpack.c.b16 %v7819, %v7817
    %v8014 = vpack.c.b16 %v7822, %v7820
    %v8015 = vpack.c.b16 %v7823, %v7821
    %v8016 = vpack.c.b16 %v7826, %v7824
    %v8017 = vpack.c.b16 %v7827, %v7825
    %v8018 = vpack.c.b16 %v7830, %v7828
    %v8019 = vpack.c.b16 %v7831, %v7829
    %v8020 = vpack.c.b16 %v7834, %v7832
    %v8021 = vpack.c.b16 %v7835, %v7833
    %v8022 = vpack.c.b16 %v7838, %v7836
    %v8023 = vpack.c.b16 %v7839, %v7837
    %v8024 = vpack.c.b16 %v7842, %v7840
    %v8025 = vpack.c.b16 %v7843, %v7841
    %v8026 = vpack.c.b16 %v7846, %v7844
    %v8027 = vpack.c.b16 %v7847, %v7845
    %v8028 = vpack.c.b16 %v7850, %v7848
    %v8029 = vpack.c.b16 %v7851, %v7849
    %v8030 = vpack.c.b16 %v7854, %v7852
    %v8031 = vpack.c.b16 %v7855, %v7853
    %v8032 = vpack.c.b16 %v7858, %v7856
    %v8033 = vpack.c.b16 %v7859, %v7857
    %v8034 = vpack.c.b16 %v7862, %v7860
    %v8035 = vpack.c.b16 %v7863, %v7861
    %v8036 = vpack.c.b16 %v7866, %v7864
    %v8037 = vpack.c.b16 %v7867, %v7865
    %v8038 = vpack.c.b16 %v7870, %v7868
    %v8039 = vpack.c.b16 %v7871, %v7869
    %v8040 = vpack.c.b16 %v7874, %v7872
    %v8041 = vpack.c.b16 %v7875, %v7873
    %v8042 = vpack.c.b16 %v7878, %v7876
    %v8043 = vpack.c.b16 %v7879, %v7877
    %v8044 = vpack.c.b16 %v7882, %v7880
    %v8045 = vpack.c.b16 %v7883, %v7881
    %v8046 = vpack.c.b16 %v7886, %v7884
    %v8047 = vpack.c.b16 %v7887, %v7885
    %v8048 = vpack.c.b16 %v7890, %v7888
    %v8049 = vpack.c.b16 %v7891, %v7889
    %v8050 = vpack.c.b16 %v7894, %v7892
    %v8051 = vpack.c.b16 %v7895, %v7893
    %v8052 = vpack.c.b16 %v7898, %v7896
    %v8053 = vpack.c.b16 %v7899, %v7897
    %v8054 = vpack.c.b16 %v7902, %v7900
    %v8055 = vpack.c.b16 %v7903, %v7901
    %v8056 = vpack.c.b16 %v7906, %v7904
    %v8057 = vpack.c.b16 %v7907, %v7905
    %v8058 = vpack.c.b16 %v7910, %v7908
    %v8059 = vpack.c.b16 %v7911, %v7909
    %v8060 = vpack.c.b16 %v7914, %v7912
    %v8061 = vpack.c.b16 %v7915, %v7913
    %v8062 = vpack.c.b16 %v7918, %v7916
    %v8063 = vpack.c.b16 %v7919, %v7917
    %8208 = vmatprep.subr.bf16.mxu0 %v7921
    %8209 = vmatpush1.bf16.msra.mxu0 %v7920
    %8210 = vmatprep.subr.bf16.mxu0 %v7923
    %8211 = vmatpush1.bf16.msra.mxu0 %v7922
    %8212 = vmatprep.subr.bf16.mxu0 %v7925
    %8213 = vmatpush1.bf16.msra.mxu0 %v7924
    %8214 = vmatprep.subr.bf16.mxu0 %v7927
    %8215 = vmatpush1.bf16.msra.mxu0 %v7926
    %8216 = vmatprep.subr.bf16.mxu0 %v7929
    %8217 = vmatpush1.bf16.msra.mxu0 %v7928
    %8218 = vmatprep.subr.bf16.mxu0 %v7931
    %8219 = vmatpush1.bf16.msra.mxu0 %v7930
    %8220 = vmatprep.subr.bf16.mxu0 %v7933
    %8221 = vmatpush1.bf16.msra.mxu0 %v7932
    %8222 = vmatprep.subr.bf16.mxu0 %v7935
    %8223 = vmatpush1.bf16.msra.mxu0 %v7934
    %8224 = vmatprep.subr.bf16.mxu0 %v7937
    %8225 = vmatpush1.bf16.msra.mxu0 %v7936
    %8226 = vmatprep.subr.bf16.mxu0 %v7939
    %8227 = vmatpush1.bf16.msra.mxu0 %v7938
    %8228 = vmatprep.subr.bf16.mxu0 %v7941
    %8229 = vmatpush1.bf16.msra.mxu0 %v7940
    %8230 = vmatprep.subr.bf16.mxu0 %v7943
    %8231 = vmatpush1.bf16.msra.mxu0 %v7942
    %8232 = vmatprep.subr.bf16.mxu0 %v7945
    %8233 = vmatpush1.bf16.msra.mxu0 %v7944
    %8234 = vmatprep.subr.bf16.mxu0 %v7947
    %8235 = vmatpush1.bf16.msra.mxu0 %v7946
    %8236 = vmatprep.subr.bf16.mxu0 %v7949
    %8237 = vmatpush1.bf16.msra.mxu0 %v7948
    %8238 = vmatprep.subr.bf16.mxu0 %v7951
    %8239 = vmatpush1.bf16.msra.mxu0 %v7950
    %8240 = vmatprep.mubr.bf16.mxu0 %v7462
    %8241 = vmatmul.mubr.bf16.gmra.mrb[0].mxu0 %v7461
    %v8242 = vpop.f32.mrb[0].mxu0
    %v8243 = vadd.f32 0.0, %v8242
    %v8244 = vpop.f32.mrb[0].mxu0
    %v8245 = vadd.f32 0.0, %v8244
    %v8246 = vpop.f32.mrb[0].mxu0
    %v8247 = vadd.f32 0.0, %v8246
    %v8248 = vpop.f32.mrb[0].mxu0
    %v8249 = vadd.f32 0.0, %v8248
    %8250 = vmatprep.mubr.bf16.mxu0 %v7471
    %8251 = vmatmul.mubr.bf16.gmra.mrb[0].mxu0 %v7470
    %v8252 = vpop.f32.mrb[0].mxu0
    %v8253 = vadd.f32 0.0, %v8252
    %v8254 = vpop.f32.mrb[0].mxu0
    %v8255 = vadd.f32 0.0, %v8254
    %v8256 = vpop.f32.mrb[0].mxu0
    %v8257 = vadd.f32 0.0, %v8256
    %v8258 = vpop.f32.mrb[0].mxu0
    %v8259 = vadd.f32 0.0, %v8258
    %8260 = vmatprep.mubr.bf16.mxu0 %v7480
    %8261 = vmatmul.mubr.bf16.gmra.mrb[0].mxu0 %v7479
    %v8262 = vpop.f32.mrb[0].mxu0
    %v8263 = vadd.f32 0.0, %v8262
    %v8264 = vpop.f32.mrb[0].mxu0
    %v8265 = vadd.f32 0.0, %v8264
    %v8266 = vpop.f32.mrb[0].mxu0
    %v8267 = vadd.f32 0.0, %v8266
    %v8268 = vpop.f32.mrb[0].mxu0
    %v8269 = vadd.f32 0.0, %v8268
    %8270 = vdwg.mxu0
    %8271 = vmatprep.subr.bf16.mxu0 %v7953
    %8272 = vmatpush1.bf16.msra.mxu0 %v7952
    %8273 = vmatprep.subr.bf16.mxu0 %v7955
    %8274 = vmatpush1.bf16.msra.mxu0 %v7954
    %8275 = vmatprep.subr.bf16.mxu0 %v7957
    %8276 = vmatpush1.bf16.msra.mxu0 %v7956
    %8277 = vmatprep.subr.bf16.mxu0 %v7959
    %8278 = vmatpush1.bf16.msra.mxu0 %v7958
    %8279 = vmatprep.subr.bf16.mxu0 %v7961
    %8280 = vmatpush1.bf16.msra.mxu0 %v7960
    %8281 = vmatprep.subr.bf16.mxu0 %v7963
    %8282 = vmatpush1.bf16.msra.mxu0 %v7962
    %8283 = vmatprep.subr.bf16.mxu0 %v7965
    %8284 = vmatpush1.bf16.msra.mxu0 %v7964
    %8285 = vmatprep.subr.bf16.mxu0 %v7967
    %8286 = vmatpush1.bf16.msra.mxu0 %v7966
    %8287 = vmatprep.subr.bf16.mxu0 %v7969
    %8288 = vmatpush1.bf16.msra.mxu0 %v7968
    %8289 = vmatprep.subr.bf16.mxu0 %v7971
    %8290 = vmatpush1.bf16.msra.mxu0 %v7970
    %8291 = vmatprep.subr.bf16.mxu0 %v7973
    %8292 = vmatpush1.bf16.msra.mxu0 %v7972
    %8293 = vmatprep.subr.bf16.mxu0 %v7975
    %8294 = vmatpush1.bf16.msra.mxu0 %v7974
    %8295 = vmatprep.subr.bf16.mxu0 %v7977
    %8296 = vmatpush1.bf16.msra.mxu0 %v7976
    %8297 = vmatprep.subr.bf16.mxu0 %v7979
    %8298 = vmatpush1.bf16.msra.mxu0 %v7978
    %8299 = vmatprep.subr.bf16.mxu0 %v7981
    %8300 = vmatpush1.bf16.msra.mxu0 %v7980
    %8301 = vmatprep.subr.bf16.mxu0 %v7983
    %8302 = vmatpush1.bf16.msra.mxu0 %v7982
    %8303 = vmatprep.mubr.bf16.mxu0 %v7464
    %8304 = vmatmul.mubr.bf16.gmra.mrb[0].mxu0 %v7463
    %v8305 = vpop.f32.mrb[0].mxu0
    %v8306 = vadd.f32 %v8243, %v8305
    %v8307 = vpop.f32.mrb[0].mxu0
    %v8308 = vadd.f32 %v8245, %v8307
    %v8309 = vpop.f32.mrb[0].mxu0
    %v8310 = vadd.f32 %v8247, %v8309
    %v8311 = vpop.f32.mrb[0].mxu0
    %v8312 = vadd.f32 %v8249, %v8311
    %8313 = vmatprep.mubr.bf16.mxu0 %v7473
    %8314 = vmatmul.mubr.bf16.gmra.mrb[0].mxu0 %v7472
    %v8315 = vpop.f32.mrb[0].mxu0
    %v8316 = vadd.f32 %v8253, %v8315
    %v8317 = vpop.f32.mrb[0].mxu0
    %v8318 = vadd.f32 %v8255, %v8317
    %v8319 = vpop.f32.mrb[0].mxu0
    %v8320 = vadd.f32 %v8257, %v8319
    %v8321 = vpop.f32.mrb[0].mxu0
    %v8322 = vadd.f32 %v8259, %v8321
    %8323 = vmatprep.mubr.bf16.mxu0 %v7482
    %8324 = vmatmul.mubr.bf16.gmra.mrb[0].mxu0 %v7481
    %v8325 = vpop.f32.mrb[0].mxu0
    %v8326 = vadd.f32 %v8263, %v8325
    %v8327 = vpop.f32.mrb[0].mxu0
    %v8328 = vadd.f32 %v8265, %v8327
    %v8329 = vpop.f32.mrb[0].mxu0
    %v8330 = vadd.f32 %v8267, %v8329
    %v8331 = vpop.f32.mrb[0].mxu0
    %v8332 = vadd.f32 %v8269, %v8331
    %8333 = vdwg.mxu0
    %8334 = vmatprep.subr.bf16.mxu0 %v7985
    %8335 = vmatpush1.bf16.msra.mxu0 %v7984
    %8336 = vmatprep.subr.bf16.mxu0 %v7987
    %8337 = vmatpush1.bf16.msra.mxu0 %v7986
    %8338 = vmatprep.subr.bf16.mxu0 %v7989
    %8339 = vmatpush1.bf16.msra.mxu0 %v7988
    %8340 = vmatprep.subr.bf16.mxu0 %v7991
    %8341 = vmatpush1.bf16.msra.mxu0 %v7990
    %8342 = vmatprep.subr.bf16.mxu0 %v7993
    %8343 = vmatpush1.bf16.msra.mxu0 %v7992
    %8344 = vmatprep.subr.bf16.mxu0 %v7995
    %8345 = vmatpush1.bf16.msra.mxu0 %v7994
    %8346 = vmatprep.subr.bf16.mxu0 %v7997
    %8347 = vmatpush1.bf16.msra.mxu0 %v7996
    %8348 = vmatprep.subr.bf16.mxu0 %v7999
    %8349 = vmatpush1.bf16.msra.mxu0 %v7998
    %8350 = vmatprep.subr.bf16.mxu0 %v8001
    %8351 = vmatpush1.bf16.msra.mxu0 %v8000
    %8352 = vmatprep.subr.bf16.mxu0 %v8003
    %8353 = vmatpush1.bf16.msra.mxu0 %v8002
    %8354 = vmatprep.subr.bf16.mxu0 %v8005
    %8355 = vmatpush1.bf16.msra.mxu0 %v8004
    %8356 = vmatprep.subr.bf16.mxu0 %v8007
    %8357 = vmatpush1.bf16.msra.mxu0 %v8006
    %8358 = vmatprep.subr.bf16.mxu0 %v8009
    %8359 = vmatpush1.bf16.msra.mxu0 %v8008
    %8360 = vmatprep.subr.bf16.mxu0 %v8011
    %8361 = vmatpush1.bf16.msra.mxu0 %v8010
    %8362 = vmatprep.subr.bf16.mxu0 %v8013
    %8363 = vmatpush1.bf16.msra.mxu0 %v8012
    %8364 = vmatprep.subr.bf16.mxu0 %v8015
    %8365 = vmatpush1.bf16.msra.mxu0 %v8014
    %8366 = vmatprep.mubr.bf16.mxu0 %v7466
    %8367 = vmatmul.mubr.bf16.gmra.mrb[0].mxu0 %v7465
    %v8368 = vpop.f32.mrb[0].mxu0
    %v8369 = vadd.f32 %v8306, %v8368
    %v8370 = vpop.f32.mrb[0].mxu0
    %v8371 = vadd.f32 %v8308, %v8370
    %v8372 = vpop.f32.mrb[0].mxu0
    %v8373 = vadd.f32 %v8310, %v8372
    %v8374 = vpop.f32.mrb[0].mxu0
    %v8375 = vadd.f32 %v8312, %v8374
    %8376 = vmatprep.mubr.bf16.mxu0 %v7475
    %8377 = vmatmul.mubr.bf16.gmra.mrb[0].mxu0 %v7474
    %v8378 = vpop.f32.mrb[0].mxu0
    %v8379 = vadd.f32 %v8316, %v8378
    %v8380 = vpop.f32.mrb[0].mxu0
    %v8381 = vadd.f32 %v8318, %v8380
    %v8382 = vpop.f32.mrb[0].mxu0
    %v8383 = vadd.f32 %v8320, %v8382
    %v8384 = vpop.f32.mrb[0].mxu0
    %v8385 = vadd.f32 %v8322, %v8384
    %8386 = vmatprep.mubr.bf16.mxu0 %v7484
    %8387 = vmatmul.mubr.bf16.gmra.mrb[0].mxu0 %v7483
    %v8388 = vpop.f32.mrb[0].mxu0
    %v8389 = vadd.f32 %v8326, %v8388
    %v8390 = vpop.f32.mrb[0].mxu0
    %v8391 = vadd.f32 %v8328, %v8390
    %v8392 = vpop.f32.mrb[0].mxu0
    %v8393 = vadd.f32 %v8330, %v8392
    %v8394 = vpop.f32.mrb[0].mxu0
    %v8395 = vadd.f32 %v8332, %v8394
    %8396 = vdwg.mxu0
    %8397 = vmatprep.subr.bf16.mxu0 %v8017
    %8398 = vmatpush1.bf16.msra.mxu0 %v8016
    %8399 = vmatprep.subr.bf16.mxu0 %v8019
    %8400 = vmatpush1.bf16.msra.mxu0 %v8018
    %8401 = vmatprep.subr.bf16.mxu0 %v8021
    %8402 = vmatpush1.bf16.msra.mxu0 %v8020
    %8403 = vmatprep.subr.bf16.mxu0 %v8023
    %8404 = vmatpush1.bf16.msra.mxu0 %v8022
    %8405 = vmatprep.subr.bf16.mxu0 %v8025
    %8406 = vmatpush1.bf16.msra.mxu0 %v8024
    %8407 = vmatprep.subr.bf16.mxu0 %v8027
    %8408 = vmatpush1.bf16.msra.mxu0 %v8026
    %8409 = vmatprep.subr.bf16.mxu0 %v8029
    %8410 = vmatpush1.bf16.msra.mxu0 %v8028
    %8411 = vmatprep.subr.bf16.mxu0 %v8031
    %8412 = vmatpush1.bf16.msra.mxu0 %v8030
    %8413 = vmatprep.subr.bf16.mxu0 %v8033
    %8414 = vmatpush1.bf16.msra.mxu0 %v8032
    %8415 = vmatprep.subr.bf16.mxu0 %v8035
    %8416 = vmatpush1.bf16.msra.mxu0 %v8034
    %8417 = vmatprep.subr.bf16.mxu0 %v8037
    %8418 = vmatpush1.bf16.msra.mxu0 %v8036
    %8419 = vmatprep.subr.bf16.mxu0 %v8039
    %8420 = vmatpush1.bf16.msra.mxu0 %v8038
    %8421 = vmatprep.subr.bf16.mxu0 %v8041
    %8422 = vmatpush1.bf16.msra.mxu0 %v8040
    %8423 = vmatprep.subr.bf16.mxu0 %v8043
    %8424 = vmatpush1.bf16.msra.mxu0 %v8042
    %8425 = vmatprep.subr.bf16.mxu0 %v8045
    %8426 = vmatpush1.bf16.msra.mxu0 %v8044
    %8427 = vmatprep.subr.bf16.mxu0 %v8047
    %8428 = vmatpush1.bf16.msra.mxu0 %v8046
    %8429 = vmatprep.mubr.bf16.mxu0 %v7468
    %8430 = vmatmul.mubr.bf16.gmra.mrb[0].mxu0 %v7467
    %v8431 = vpop.f32.mrb[0].mxu0
    %v8432 = vadd.f32 %v8369, %v8431
    %v8433 = vpop.f32.mrb[0].mxu0
    %v8434 = vadd.f32 %v8371, %v8433
    %v8435 = vpop.f32.mrb[0].mxu0
    %v8436 = vadd.f32 %v8373, %v8435
    %v8437 = vpop.f32.mrb[0].mxu0
    %v8438 = vadd.f32 %v8375, %v8437
    %8439 = vmatprep.mubr.bf16.mxu0 %v7477
    %8440 = vmatmul.mubr.bf16.gmra.mrb[0].mxu0 %v7476
    %v8441 = vpop.f32.mrb[0].mxu0
    %v8442 = vadd.f32 %v8379, %v8441
    %v8443 = vpop.f32.mrb[0].mxu0
    %v8444 = vadd.f32 %v8381, %v8443
    %v8445 = vpop.f32.mrb[0].mxu0
    %v8446 = vadd.f32 %v8383, %v8445
    %v8447 = vpop.f32.mrb[0].mxu0
    %v8448 = vadd.f32 %v8385, %v8447
    %8449 = vmatprep.mubr.bf16.mxu0 %v7486
    %8450 = vmatmul.mubr.bf16.gmra.mrb[0].mxu0 %v7485
    %v8451 = vpop.f32.mrb[0].mxu0
    %v8452 = vadd.f32 %v8389, %v8451
    %v8453 = vpop.f32.mrb[0].mxu0
    %v8454 = vadd.f32 %v8391, %v8453
    %v8455 = vpop.f32.mrb[0].mxu0
    %v8456 = vadd.f32 %v8393, %v8455
    %v8457 = vpop.f32.mrb[0].mxu0
    %v8458 = vadd.f32 %v8395, %v8457
    %8459 = vdwg.mxu0
    %8460 = vmatprep.subr.bf16.mxu0 %v8049
    %8461 = vmatpush1.bf16.msra.mxu0 %v8048
    %8462 = vmatprep.subr.bf16.mxu0 %v8051
    %8463 = vmatpush1.bf16.msra.mxu0 %v8050
    %8464 = vmatprep.subr.bf16.mxu0 %v8053
    %8465 = vmatpush1.bf16.msra.mxu0 %v8052
    %8466 = vmatprep.subr.bf16.mxu0 %v8055
    %8467 = vmatpush1.bf16.msra.mxu0 %v8054
    %8468 = vmatprep.subr.bf16.mxu0 %v8057
    %8469 = vmatpush1.bf16.msra.mxu0 %v8056
    %8470 = vmatprep.subr.bf16.mxu0 %v8059
    %8471 = vmatpush1.bf16.msra.mxu0 %v8058
    %8472 = vmatprep.subr.bf16.mxu0 %v8061
    %8473 = vmatpush1.bf16.msra.mxu0 %v8060
    %8474 = vmatprep.subr.bf16.mxu0 %v8063
    %8475 = vmatpush1.bf16.msra.mxu0 %v8062
    %8476 = vmatprep.subr.bf16.mxu0 0
    %8477 = vmatpush1.bf16.msra.mxu0 0
    %8478 = vmatprep.subr.bf16.mxu0 0
    %8479 = vmatpush1.bf16.msra.mxu0 0
    %8480 = vmatprep.subr.bf16.mxu0 0
    %8481 = vmatpush1.bf16.msra.mxu0 0
    %8482 = vmatprep.subr.bf16.mxu0 0
    %8483 = vmatpush1.bf16.msra.mxu0 0
    %8484 = vmatprep.subr.bf16.mxu0 0
    %8485 = vmatpush1.bf16.msra.mxu0 0
    %8486 = vmatprep.subr.bf16.mxu0 0
    %8487 = vmatpush1.bf16.msra.mxu0 0
    %8488 = vmatprep.subr.bf16.mxu0 0
    %8489 = vmatpush1.bf16.msra.mxu0 0
    %8490 = vmatprep.subr.bf16.mxu0 0
    %8491 = vmatpush1.bf16.msra.mxu0 0
    %8492 = vmatprep.mubr.bf16.mxu0 0
    %8493 = vmatmul.mubr.bf16.gmra.mrb[0].mxu0 %v7469
    %v8494 = vpop.f32.mrb[0].mxu0
    %v8495 = vadd.f32 %v8432, %v8494
    %v8496 = vpop.f32.mrb[0].mxu0
    %v8497 = vadd.f32 %v8434, %v8496
    %v8498 = vpop.f32.mrb[0].mxu0
    %v8499 = vadd.f32 %v8436, %v8498
    %v8500 = vpop.f32.mrb[0].mxu0
    %v8501 = vadd.f32 %v8438, %v8500
    %8502 = vmatprep.mubr.bf16.mxu0 0
    %8503 = vmatmul.mubr.bf16.gmra.mrb[0].mxu0 %v7478
    %v8504 = vpop.f32.mrb[0].mxu0
    %v8505 = vadd.f32 %v8442, %v8504
    %v8506 = vpop.f32.mrb[0].mxu0
    %v8507 = vadd.f32 %v8444, %v8506
    %v8508 = vpop.f32.mrb[0].mxu0
    %v8509 = vadd.f32 %v8446, %v8508
    %v8510 = vpop.f32.mrb[0].mxu0
    %v8511 = vadd.f32 %v8448, %v8510
    %8512 = vmatprep.mubr.bf16.mxu0 0
    %8513 = vmatmul.mubr.bf16.gmra.mrb[0].mxu0 %v7487
    %v8514 = vpop.f32.mrb[0].mxu0
    %v8515 = vadd.f32 %v8452, %v8514
    %v8516 = vpop.f32.mrb[0].mxu0
    %v8517 = vadd.f32 %v8454, %v8516
    %v8518 = vpop.f32.mrb[0].mxu0
    %v8519 = vadd.f32 %v8456, %v8518
    %v8520 = vpop.f32.mrb[0].mxu0
    %v8521 = vadd.f32 %v8458, %v8520
    %8522 = vdwg.mxu0
    %v8523 = vmax.f32 %v8495, %v8497
    %v8524 = vmax.f32 %v8499, %v8501
    %v8525 = vmax.f32 %v8505, %v8507
    %v8526 = vmax.f32 %v8509, %v8511
    %v8527 = vmax.f32 %v8515, %v8517
    %v8528 = vmax.f32 %v8519, %v8521
    %v8529 = vld [vmem:[#allocation43] sm:$0xf]
    %v8530 = vld [vmem:[#allocation43 + $0x4] sm:$0xf]
    %v8531 = vpack.c.bf16 %v8524, %v8523
    %v8532 = vpack.c.bf16 %v8526, %v8525
    %v8533 = vpack.c.bf16 %v8528, %v8527
    %v8536 = vunpack.c.l.b16 %v8529
    %v8537 = vunpack.c.l.b16 %v8530
    %v8538 = vpack.c.b16 %v8537, %v8536
    %v8540 = vsel %vm4501, %v8538, 0
    %v8543 = vsel %vm1846, %v8533, 0
    %8545 = vmatprep.subr.bf16.mxu0 0
    %8546 = vmatpush1.bf16.msra.mxu0 %v8531
    %8547 = vmatprep.subr.bf16.mxu0 0
    %8548 = vmatpush1.bf16.msra.mxu0 %v8532
    %8549 = vmatprep.subr.bf16.mxu0 0
    %8550 = vmatpush1.bf16.msra.mxu0 %v8543
    %8551 = vmatprep.subr.bf16.mxu0 0
    %8552 = vmatpush1.bf16.msra.mxu0 0
    %8553 = vmatprep.subr.bf16.mxu0 0
    %8554 = vmatpush1.bf16.msra.mxu0 0
    %8555 = vmatprep.subr.bf16.mxu0 0
    %8556 = vmatpush1.bf16.msra.mxu0 0
    %8557 = vmatprep.subr.bf16.mxu0 0
    %8558 = vmatpush1.bf16.msra.mxu0 0
    %8559 = vmatprep.subr.bf16.mxu0 0
    %8560 = vmatpush1.bf16.msra.mxu0 0
    %8561 = vmatprep.subr.bf16.mxu0 0
    %8562 = vmatpush1.bf16.msra.mxu0 0
    %8563 = vmatprep.subr.bf16.mxu0 0
    %8564 = vmatpush1.bf16.msra.mxu0 0
    %8565 = vmatprep.subr.bf16.mxu0 0
    %8566 = vmatpush1.bf16.msra.mxu0 0
    %8567 = vmatprep.subr.bf16.mxu0 0
    %8568 = vmatpush1.bf16.msra.mxu0 0
    %8569 = vmatprep.subr.bf16.mxu0 0
    %8570 = vmatpush1.bf16.msra.mxu0 0
    %8571 = vmatprep.subr.bf16.mxu0 0
    %8572 = vmatpush1.bf16.msra.mxu0 0
    %8573 = vmatprep.subr.bf16.mxu0 0
    %8574 = vmatpush1.bf16.msra.mxu0 0
    %8575 = vmatprep.subr.bf16.mxu0 0
    %8576 = vmatpush1.bf16.msra.mxu0 0
    %8577 = vmatprep.mubr.bf16.mxu0 0
    %8578 = vmatmul.mubr.bf16.gmra.mrb[0].mxu0 %v8540
    %v8579 = vpop.f32.mrb[0].mxu0
    %v8580 = vadd.f32 0.0, %v8579
    %v8581 = vpop.f32.mrb[0].mxu0
    %v8582 = vpop.f32.mrb[0].mxu0
    %v8583 = vadd.f32 0.0, %v8582
    %v8584 = vpop.f32.mrb[0].mxu0
    %8585 = vdwg.mxu0
    %v8586 = vld [vmem:[#allocation45] sm:$0xf]
    %v8587 = vld [vmem:[#allocation45 + $0x4] sm:$0xf]
    %v8590 = vunpack.c.l.b16 %v8586
    %v8591 = vunpack.c.l.b16 %v8587
    %v8592 = vpack.c.b16 %v8591, %v8590
    %v8594 = vsel %vm4501, %v8592, 0
    %8596 = vmatprep.subr.bf16.mxu0 0
    %8597 = vmatpush1.bf16.msra.mxu0 %v8531
    %8598 = vmatprep.subr.bf16.mxu0 0
    %8599 = vmatpush1.bf16.msra.mxu0 %v8532
    %8600 = vmatprep.subr.bf16.mxu0 0
    %8601 = vmatpush1.bf16.msra.mxu0 %v8543
    %8602 = vmatprep.subr.bf16.mxu0 0
    %8603 = vmatpush1.bf16.msra.mxu0 0
    %8604 = vmatprep.subr.bf16.mxu0 0
    %8605 = vmatpush1.bf16.msra.mxu0 0
    %8606 = vmatprep.subr.bf16.mxu0 0
    %8607 = vmatpush1.bf16.msra.mxu0 0
    %8608 = vmatprep.subr.bf16.mxu0 0
    %8609 = vmatpush1.bf16.msra.mxu0 0
    %8610 = vmatprep.subr.bf16.mxu0 0
    %8611 = vmatpush1.bf16.msra.mxu0 0
    %8612 = vmatprep.subr.bf16.mxu0 0
    %8613 = vmatpush1.bf16.msra.mxu0 0
    %8614 = vmatprep.subr.bf16.mxu0 0
    %8615 = vmatpush1.bf16.msra.mxu0 0
    %8616 = vmatprep.subr.bf16.mxu0 0
    %8617 = vmatpush1.bf16.msra.mxu0 0
    %8618 = vmatprep.subr.bf16.mxu0 0
    %8619 = vmatpush1.bf16.msra.mxu0 0
    %8620 = vmatprep.subr.bf16.mxu0 0
    %8621 = vmatpush1.bf16.msra.mxu0 0
    %8622 = vmatprep.subr.bf16.mxu0 0
    %8623 = vmatpush1.bf16.msra.mxu0 0
    %8624 = vmatprep.subr.bf16.mxu0 0
    %8625 = vmatpush1.bf16.msra.mxu0 0
    %8626 = vmatprep.subr.bf16.mxu0 0
    %8627 = vmatpush1.bf16.msra.mxu0 0
    %8628 = vmatprep.mubr.bf16.mxu0 0
    %8629 = vmatmul.mubr.bf16.gmra.mrb[0].mxu0 %v8594
    %v8630 = vpop.f32.mrb[0].mxu0
    %v8631 = vadd.f32 0.0, %v8630
    %v8632 = vpop.f32.mrb[0].mxu0
    %v8633 = vpop.f32.mrb[0].mxu0
    %v8634 = vadd.f32 0.0, %v8633
    %v8635 = vpop.f32.mrb[0].mxu0
    %8636 = vdwg.mxu0
    %v8637 = vmax.f32 %v8580, %v8631
    %v8638 = vmax.f32 %v8583, %v8634
    %v8639 = vld [vmem:[#allocation42] sm:$0x1]
    %v8641 = vlaneseq
    %v8642 = vshrl.u32 %v8641, 7
    %v8643 = vsub.s32 0, %v8642
    %v8644 = vrot.slane %v8639, %v8643
    %v8646 = vadd.f32 %v8637, %v8644
    %v8647 = vadd.f32 %v8638, %v8644
    %v8648 = vmax.f32 %v8646, 0.0
    %v8649 = vmax.f32 %v8647, 0.0
    %v8650 = vld [vmem:[#allocation46] sm:$0xf]
    %v8651 = vpack.c.bf16 %v8649, %v8648
    %vm8652 = vcmask 130048
    %v8654 = vsel %vm8652, %v8650, 0
    %8656 = vmatprep.subr.bf16.mxu0 0
    %8657 = vmatpush1.bf16.msra.mxu0 %v8651
    %8658 = vmatprep.subr.bf16.mxu0 0
    %8659 = vmatpush1.bf16.msra.mxu0 0
    %8660 = vmatprep.subr.bf16.mxu0 0
    %8661 = vmatpush1.bf16.msra.mxu0 0
    %8662 = vmatprep.subr.bf16.mxu0 0
    %8663 = vmatpush1.bf16.msra.mxu0 0
    %8664 = vmatprep.subr.bf16.mxu0 0
    %8665 = vmatpush1.bf16.msra.mxu0 0
    %8666 = vmatprep.subr.bf16.mxu0 0
    %8667 = vmatpush1.bf16.msra.mxu0 0
    %8668 = vmatprep.subr.bf16.mxu0 0
    %8669 = vmatpush1.bf16.msra.mxu0 0
    %8670 = vmatprep.subr.bf16.mxu0 0
    %8671 = vmatpush1.bf16.msra.mxu0 0
    %8672 = vmatprep.subr.bf16.mxu0 0
    %8673 = vmatpush1.bf16.msra.mxu0 0
    %8674 = vmatprep.subr.bf16.mxu0 0
    %8675 = vmatpush1.bf16.msra.mxu0 0
    %8676 = vmatprep.subr.bf16.mxu0 0
    %8677 = vmatpush1.bf16.msra.mxu0 0
    %8678 = vmatprep.subr.bf16.mxu0 0
    %8679 = vmatpush1.bf16.msra.mxu0 0
    %8680 = vmatprep.subr.bf16.mxu0 0
    %8681 = vmatpush1.bf16.msra.mxu0 0
    %8682 = vmatprep.subr.bf16.mxu0 0
    %8683 = vmatpush1.bf16.msra.mxu0 0
    %8684 = vmatprep.subr.bf16.mxu0 0
    %8685 = vmatpush1.bf16.msra.mxu0 0
    %8686 = vmatprep.subr.bf16.mxu0 0
    %8687 = vmatpush1.bf16.msra.mxu0 0
    %8688 = vmatprep.mubr.bf16.mxu0 0
    %8689 = vmatmul.mubr.bf16.gmra.mrb[0].mxu0 %v8654
    %v8690 = vpop.f32.mrb[0].mxu0
    %v8691 = vadd.f32 0.0, %v8690
    %v8692 = vpop.f32.mrb[0].mxu0
    %v8693 = vpop.f32.mrb[0].mxu0
    %v8694 = vpop.f32.mrb[0].mxu0
    %8695 = vdwg.mxu0
    %v8696 = vld [vmem:[#allocation48] sm:$0xf]
    %v8698 = vsel %vm8652, %v8696, 0
    %8700 = vmatprep.subr.bf16.mxu0 0
    %8701 = vmatpush1.bf16.msra.mxu0 %v8651
    %8702 = vmatprep.subr.bf16.mxu0 0
    %8703 = vmatpush1.bf16.msra.mxu0 0
    %8704 = vmatprep.subr.bf16.mxu0 0
    %8705 = vmatpush1.bf16.msra.mxu0 0
    %8706 = vmatprep.subr.bf16.mxu0 0
    %8707 = vmatpush1.bf16.msra.mxu0 0
    %8708 = vmatprep.subr.bf16.mxu0 0
    %8709 = vmatpush1.bf16.msra.mxu0 0
    %8710 = vmatprep.subr.bf16.mxu0 0
    %8711 = vmatpush1.bf16.msra.mxu0 0
    %8712 = vmatprep.subr.bf16.mxu0 0
    %8713 = vmatpush1.bf16.msra.mxu0 0
    %8714 = vmatprep.subr.bf16.mxu0 0
    %8715 = vmatpush1.bf16.msra.mxu0 0
    %8716 = vmatprep.subr.bf16.mxu0 0
    %8717 = vmatpush1.bf16.msra.mxu0 0
    %8718 = vmatprep.subr.bf16.mxu0 0
    %8719 = vmatpush1.bf16.msra.mxu0 0
    %8720 = vmatprep.subr.bf16.mxu0 0
    %8721 = vmatpush1.bf16.msra.mxu0 0
    %8722 = vmatprep.subr.bf16.mxu0 0
    %8723 = vmatpush1.bf16.msra.mxu0 0
    %8724 = vmatprep.subr.bf16.mxu0 0
    %8725 = vmatpush1.bf16.msra.mxu0 0
    %8726 = vmatprep.subr.bf16.mxu0 0
    %8727 = vmatpush1.bf16.msra.mxu0 0
    %8728 = vmatprep.subr.bf16.mxu0 0
    %8729 = vmatpush1.bf16.msra.mxu0 0
    %8730 = vmatprep.subr.bf16.mxu0 0
    %8731 = vmatpush1.bf16.msra.mxu0 0
    %8732 = vmatprep.mubr.bf16.mxu0 0
    %8733 = vmatmul.mubr.bf16.gmra.mrb[0].mxu0 %v8698
    %v8734 = vpop.f32.mrb[0].mxu0
    %v8735 = vadd.f32 0.0, %v8734
    %v8736 = vpop.f32.mrb[0].mxu0
    %v8737 = vpop.f32.mrb[0].mxu0
    %v8738 = vpop.f32.mrb[0].mxu0
    %8739 = vdwg.mxu0
    %v8740 = vld [vmem:[%s73] sm:$0xf]
    %v8741 = vld [vmem:[%s73 + $0x4] sm:$0xf]
    %v8742 = vld [vmem:[%s73 + $0x8] sm:$0xf]
    %v8743 = vld [vmem:[%s73 + $0xc] sm:$0xf]
    %v8744 = vld [vmem:[%s73 + $0x10] sm:$0xf]
    %v8745 = vld [vmem:[%s73 + $0x14] sm:$0xf]
    %v8746 = vld [vmem:[%s73 + $0x18] sm:$0xf]
    %v8747 = vld [vmem:[%s73 + $0x1c] sm:$0xf]
    %v8748 = vld [vmem:[%s73 + $0x20] sm:$0xf]
    %v8749 = vld [vmem:[%s73 + $0x24] sm:$0xf]
    %v8750 = vld [vmem:[%s73 + $0x28] sm:$0xf]
    %v8751 = vld [vmem:[%s73 + $0x2c] sm:$0xf]
    %v8752 = vld [vmem:[%s73 + $0x30] sm:$0xf]
    %v8753 = vld [vmem:[%s73 + $0x34] sm:$0xf]
    %v8754 = vld [vmem:[%s73 + $0x38] sm:$0xf]
    %v8755 = vld [vmem:[%s73 + $0x3c] sm:$0xf]
    %v8756 = vld [vmem:[%s73 + $0x40] sm:$0xf]
    %v8757 = vld [vmem:[%s73 + $0x44] sm:$0xf]
    %v8758 = vld [vmem:[%s73 + $0x48] sm:$0xf]
    %v8759 = vld [vmem:[%s73 + $0x4c] sm:$0xf]
    %v8760 = vld [vmem:[%s73 + $0x50] sm:$0xf]
    %v8761 = vld [vmem:[%s73 + $0x54] sm:$0xf]
    %v8762 = vld [vmem:[%s73 + $0x58] sm:$0xf]
    %v8763 = vld [vmem:[%s73 + $0x5c] sm:$0xf]
    %v8764 = vld [vmem:[%s73 + $0x60] sm:$0xf]
    %v8765 = vld [vmem:[%s73 + $0x64] sm:$0xf]
    %v8766 = vld [vmem:[%s73 + $0x68] sm:$0xf]
    %v8767 = vld [vmem:[%s73 + $0x6c] sm:$0xf]
    %v8768 = vld [vmem:[%s73 + $0x70] sm:$0xf]
    %v8769 = vld [vmem:[%s73 + $0x74] sm:$0xf]
    %v8770 = vld [vmem:[%s73 + $0x78] sm:$0xf]
    %v8771 = vld [vmem:[%s73 + $0x7c] sm:$0xf]
    %v8772 = vpack.c.bf16 %v8691, %v8691
    %v8773 = vpack.c.bf16 %v8735, %v8735
    %v8774 = vld [vmem:[#allocation49] sm:$0x1]
    %v8776 = vlaneseq
    %v8777 = vshrl.u32 %v8776, 7
    %v8778 = vsub.s32 0, %v8777
    %v8779 = vrot.slane %v8774, %v8778
    %v8813 = vunpack.c.l.b16 %v8740
    %v8814 = vunpack.c.l.b16 %v8741
    %v8815 = vunpack.c.l.b16 %v8742
    %v8816 = vunpack.c.l.b16 %v8743
    %v8817 = vunpack.c.l.b16 %v8744
    %v8818 = vunpack.c.l.b16 %v8745
    %v8819 = vunpack.c.l.b16 %v8746
    %v8820 = vunpack.c.l.b16 %v8747
    %v8821 = vunpack.c.l.b16 %v8748
    %v8822 = vunpack.c.l.b16 %v8749
    %v8823 = vunpack.c.l.b16 %v8750
    %v8824 = vunpack.c.l.b16 %v8751
    %v8825 = vunpack.c.l.b16 %v8752
    %v8826 = vunpack.c.l.b16 %v8753
    %v8827 = vunpack.c.l.b16 %v8754
    %v8828 = vunpack.c.l.b16 %v8755
    %v8829 = vunpack.c.l.b16 %v8756
    %v8830 = vunpack.c.l.b16 %v8757
    %v8831 = vunpack.c.l.b16 %v8758
    %v8832 = vunpack.c.l.b16 %v8759
    %v8833 = vunpack.c.l.b16 %v8760
    %v8834 = vunpack.c.l.b16 %v8761
    %v8835 = vunpack.c.l.b16 %v8762
    %v8836 = vunpack.c.l.b16 %v8763
    %v8837 = vunpack.c.l.b16 %v8764
    %v8838 = vunpack.c.l.b16 %v8765
    %v8839 = vunpack.c.l.b16 %v8766
    %v8840 = vunpack.c.l.b16 %v8767
    %v8841 = vunpack.c.l.b16 %v8768
    %v8842 = vunpack.c.l.b16 %v8769
    %v8843 = vunpack.c.l.b16 %v8770
    %v8844 = vunpack.c.l.b16 %v8771
    %v8845 = vpack.c.b16 %v8814, %v8813
    %v8846 = vpack.c.b16 %v8816, %v8815
    %v8847 = vpack.c.b16 %v8818, %v8817
    %v8848 = vpack.c.b16 %v8820, %v8819
    %v8849 = vpack.c.b16 %v8822, %v8821
    %v8850 = vpack.c.b16 %v8824, %v8823
    %v8851 = vpack.c.b16 %v8826, %v8825
    %v8852 = vpack.c.b16 %v8828, %v8827
    %v8853 = vpack.c.b16 %v8830, %v8829
    %v8854 = vpack.c.b16 %v8832, %v8831
    %v8855 = vpack.c.b16 %v8834, %v8833
    %v8856 = vpack.c.b16 %v8836, %v8835
    %v8857 = vpack.c.b16 %v8838, %v8837
    %v8858 = vpack.c.b16 %v8840, %v8839
    %v8859 = vpack.c.b16 %v8842, %v8841
    %v8860 = vpack.c.b16 %v8844, %v8843
    %8877 = vmatprep.subr.bf16.mxu0 0
    %8878 = vmatpush1.bf16.msra.mxu0 %v8845
    %8879 = vmatprep.subr.bf16.mxu0 0
    %8880 = vmatpush1.bf16.msra.mxu0 %v8846
    %8881 = vmatprep.subr.bf16.mxu0 0
    %8882 = vmatpush1.bf16.msra.mxu0 %v8847
    %8883 = vmatprep.subr.bf16.mxu0 0
    %8884 = vmatpush1.bf16.msra.mxu0 %v8848
    %8885 = vmatprep.subr.bf16.mxu0 0
    %8886 = vmatpush1.bf16.msra.mxu0 %v8849
    %8887 = vmatprep.subr.bf16.mxu0 0
    %8888 = vmatpush1.bf16.msra.mxu0 %v8850
    %8889 = vmatprep.subr.bf16.mxu0 0
    %8890 = vmatpush1.bf16.msra.mxu0 %v8851
    %8891 = vmatprep.subr.bf16.mxu0 0
    %8892 = vmatpush1.bf16.msra.mxu0 %v8852
    %8893 = vmatprep.subr.bf16.mxu0 0
    %8894 = vmatpush1.bf16.msra.mxu0 %v8853
    %8895 = vmatprep.subr.bf16.mxu0 0
    %8896 = vmatpush1.bf16.msra.mxu0 %v8854
    %8897 = vmatprep.subr.bf16.mxu0 0
    %8898 = vmatpush1.bf16.msra.mxu0 %v8855
    %8899 = vmatprep.subr.bf16.mxu0 0
    %8900 = vmatpush1.bf16.msra.mxu0 %v8856
    %8901 = vmatprep.subr.bf16.mxu0 0
    %8902 = vmatpush1.bf16.msra.mxu0 %v8857
    %8903 = vmatprep.subr.bf16.mxu0 0
    %8904 = vmatpush1.bf16.msra.mxu0 %v8858
    %8905 = vmatprep.subr.bf16.mxu0 0
    %8906 = vmatpush1.bf16.msra.mxu0 %v8859
    %8907 = vmatprep.subr.bf16.mxu0 0
    %8908 = vmatpush1.bf16.msra.mxu0 %v8860
    %8909 = vmatprep.mubr.bf16.mxu0 %v8773
    %8910 = vmatmul.mubr.bf16.gmra.mrb[0].mxu0 %v8772
    %v8911 = vpop.f32.mrb[0].mxu0
    %v8912 = vadd.f32 %v8779, %v8911
    %v8913 = vpop.f32.mrb[0].mxu0
    %v8914 = vpop.f32.mrb[0].mxu0
    %v8915 = vpop.f32.mrb[0].mxu0
    %8916 = vdwg.mxu0
    %v8917 = vmax.f32 %v8912, 0.0
    %v8918 = vld [vmem:[%s77] sm:$0xf]
    %v8919 = vld [vmem:[%s77 + $0x4] sm:$0xf]
    %v8920 = vpack.c.bf16 %v8917, %v8917
    %v8921 = vld [vmem:[#allocation51] sm:$0x1]
    %v8923 = vlaneseq
    %v8924 = vshrl.u32 %v8923, 7
    %v8925 = vsub.s32 0, %v8924
    %v8926 = vrot.slane %v8921, %v8925
    %v8930 = vunpack.c.l.b16 %v8918
    %v8931 = vunpack.c.l.b16 %v8919
    %v8932 = vpack.c.b16 %v8931, %v8930
    %v8935 = vsel %vm8652, %v8920, 0
    %8937 = vmatprep.subr.bf16.mxu0 0
    %8938 = vmatpush1.bf16.msra.mxu0 %v8932
    %8939 = vmatprep.subr.bf16.mxu0 0
    %8940 = vmatpush1.bf16.msra.mxu0 0
    %8941 = vmatprep.subr.bf16.mxu0 0
    %8942 = vmatpush1.bf16.msra.mxu0 0
    %8943 = vmatprep.subr.bf16.mxu0 0
    %8944 = vmatpush1.bf16.msra.mxu0 0
    %8945 = vmatprep.subr.bf16.mxu0 0
    %8946 = vmatpush1.bf16.msra.mxu0 0
    %8947 = vmatprep.subr.bf16.mxu0 0
    %8948 = vmatpush1.bf16.msra.mxu0 0
    %8949 = vmatprep.subr.bf16.mxu0 0
    %8950 = vmatpush1.bf16.msra.mxu0 0
    %8951 = vmatprep.subr.bf16.mxu0 0
    %8952 = vmatpush1.bf16.msra.mxu0 0
    %8953 = vmatprep.subr.bf16.mxu0 0
    %8954 = vmatpush1.bf16.msra.mxu0 0
    %8955 = vmatprep.subr.bf16.mxu0 0
    %8956 = vmatpush1.bf16.msra.mxu0 0
    %8957 = vmatprep.subr.bf16.mxu0 0
    %8958 = vmatpush1.bf16.msra.mxu0 0
    %8959 = vmatprep.subr.bf16.mxu0 0
    %8960 = vmatpush1.bf16.msra.mxu0 0
    %8961 = vmatprep.subr.bf16.mxu0 0
    %8962 = vmatpush1.bf16.msra.mxu0 0
    %8963 = vmatprep.subr.bf16.mxu0 0
    %8964 = vmatpush1.bf16.msra.mxu0 0
    %8965 = vmatprep.subr.bf16.mxu0 0
    %8966 = vmatpush1.bf16.msra.mxu0 0
    %8967 = vmatprep.subr.bf16.mxu0 0
    %8968 = vmatpush1.bf16.msra.mxu0 0
    %8969 = vmatprep.mubr.bf16.mxu0 0
    %8970 = vmatmul.mubr.bf16.gmra.mrb[0].mxu0 %v8935
    %v8971 = vpop.f32.mrb[0].mxu0
    %v8972 = vadd.f32 %v8926, %v8971
    %v8973 = vpop.f32.mrb[0].mxu0
    %v8974 = vpop.f32.mrb[0].mxu0
    %v8975 = vpop.f32.mrb[0].mxu0
    %8976 = vdwg.mxu0
    %vm8977 = vcmask 64512
    %8978 = vst.msk [vmem:[#allocation7] sm:$0xff] %vm8977, %v8972
    %v8979 = vld [vmem:[%s9] sm:$0x3]
    %v8980 = vpack.c.bf16 %v5156, %v5156
    %v8982 = vsel %vm8977, %v8979, 0
    %vm8984 = vcmask 1043456
    %v8986 = vsel %vm8984, %v8980, 0
    %8988 = vmatprep.subr.bf16.mxu0 0
    %8989 = vmatpush1.bf16.msra.mxu0 %v8986
    %8990 = vmatprep.subr.bf16.mxu0 0
    %8991 = vmatpush1.bf16.msra.mxu0 0
    %8992 = vmatprep.subr.bf16.mxu0 0
    %8993 = vmatpush1.bf16.msra.mxu0 0
    %8994 = vmatprep.subr.bf16.mxu0 0
    %8995 = vmatpush1.bf16.msra.mxu0 0
    %8996 = vmatprep.subr.bf16.mxu0 0
    %8997 = vmatpush1.bf16.msra.mxu0 0
    %8998 = vmatprep.subr.bf16.mxu0 0
    %8999 = vmatpush1.bf16.msra.mxu0 0
    %9000 = vmatprep.subr.bf16.mxu0 0
    %9001 = vmatpush1.bf16.msra.mxu0 0
    %9002 = vmatprep.subr.bf16.mxu0 0
    %9003 = vmatpush1.bf16.msra.mxu0 0
    %9004 = vmatprep.subr.bf16.mxu0 0
    %9005 = vmatpush1.bf16.msra.mxu0 0
    %9006 = vmatprep.subr.bf16.mxu0 0
    %9007 = vmatpush1.bf16.msra.mxu0 0
    %9008 = vmatprep.subr.bf16.mxu0 0
    %9009 = vmatpush1.bf16.msra.mxu0 0
    %9010 = vmatprep.subr.bf16.mxu0 0
    %9011 = vmatpush1.bf16.msra.mxu0 0
    %9012 = vmatprep.subr.bf16.mxu0 0
    %9013 = vmatpush1.bf16.msra.mxu0 0
    %9014 = vmatprep.subr.bf16.mxu0 0
    %9015 = vmatpush1.bf16.msra.mxu0 0
    %9016 = vmatprep.subr.bf16.mxu0 0
    %9017 = vmatpush1.bf16.msra.mxu0 0
    %9018 = vmatprep.subr.bf16.mxu0 0
    %9019 = vmatpush1.bf16.msra.mxu0 0
    %9020 = vmatprep.mubr.bf16.mxu0 0
    %9021 = vmatmul.mubr.bf16.gmra.mrb[0].mxu0 %v8982
    %v9022 = vpop.f32.mrb[0].mxu0
    %v9023 = vadd.f32 0.0, %v9022
    %v9024 = vpop.f32.mrb[0].mxu0
    %v9025 = vpop.f32.mrb[0].mxu0
    %v9026 = vpop.f32.mrb[0].mxu0
    %9027 = vdwg.mxu0
    %v9028 = vld [vmem:[#allocation12] sm:$0x3]
    %v9030 = vsel %vm8977, %v9028, 0
    %9032 = vmatprep.subr.bf16.mxu0 0
    %9033 = vmatpush1.bf16.msra.mxu0 %v8986
    %9034 = vmatprep.subr.bf16.mxu0 0
    %9035 = vmatpush1.bf16.msra.mxu0 0
    %9036 = vmatprep.subr.bf16.mxu0 0
    %9037 = vmatpush1.bf16.msra.mxu0 0
    %9038 = vmatprep.subr.bf16.mxu0 0
    %9039 = vmatpush1.bf16.msra.mxu0 0
    %9040 = vmatprep.subr.bf16.mxu0 0
    %9041 = vmatpush1.bf16.msra.mxu0 0
    %9042 = vmatprep.subr.bf16.mxu0 0
    %9043 = vmatpush1.bf16.msra.mxu0 0
    %9044 = vmatprep.subr.bf16.mxu0 0
    %9045 = vmatpush1.bf16.msra.mxu0 0
    %9046 = vmatprep.subr.bf16.mxu0 0
    %9047 = vmatpush1.bf16.msra.mxu0 0
    %9048 = vmatprep.subr.bf16.mxu0 0
    %9049 = vmatpush1.bf16.msra.mxu0 0
    %9050 = vmatprep.subr.bf16.mxu0 0
    %9051 = vmatpush1.bf16.msra.mxu0 0
    %9052 = vmatprep.subr.bf16.mxu0 0
    %9053 = vmatpush1.bf16.msra.mxu0 0
    %9054 = vmatprep.subr.bf16.mxu0 0
    %9055 = vmatpush1.bf16.msra.mxu0 0
    %9056 = vmatprep.subr.bf16.mxu0 0
    %9057 = vmatpush1.bf16.msra.mxu0 0
    %9058 = vmatprep.subr.bf16.mxu0 0
    %9059 = vmatpush1.bf16.msra.mxu0 0
    %9060 = vmatprep.subr.bf16.mxu0 0
    %9061 = vmatpush1.bf16.msra.mxu0 0
    %9062 = vmatprep.subr.bf16.mxu0 0
    %9063 = vmatpush1.bf16.msra.mxu0 0
    %9064 = vmatprep.mubr.bf16.mxu0 0
    %9065 = vmatmul.mubr.bf16.gmra.mrb[0].mxu0 %v9030
    %v9066 = vpop.f32.mrb[0].mxu0
    %v9067 = vadd.f32 0.0, %v9066
    %v9068 = vpop.f32.mrb[0].mxu0
    %v9069 = vpop.f32.mrb[0].mxu0
    %v9070 = vpop.f32.mrb[0].mxu0
    %9071 = vdwg.mxu0
    %v9072 = vld [vmem:[#allocation7] sm:$0xf]
    %v9073 = vld [vmem:[%s3] sm:$0xf]
    %v9074 = vpack.c.bf16 %v9072, %v9072
    %v9075 = vld [vmem:[#allocation7 + $0x4] sm:$0xf]
    %v9076 = vld [vmem:[%s3 + $0x4] sm:$0xf]
    %v9077 = vpack.c.bf16 %v9075, %v9075
    %v9079 = vsel %vm8977, %v9077, 0
    %v9082 = vsel %vm8984, %v9076, 0
    %9084 = vmatprep.subr.bf16.mxu0 0
    %9085 = vmatpush1.bf16.msra.mxu0 %v9082
    %9086 = vmatprep.subr.bf16.mxu0 0
    %9087 = vmatpush1.bf16.msra.mxu0 0
    %9088 = vmatprep.subr.bf16.mxu0 0
    %9089 = vmatpush1.bf16.msra.mxu0 0
    %9090 = vmatprep.subr.bf16.mxu0 0
    %9091 = vmatpush1.bf16.msra.mxu0 0
    %9092 = vmatprep.subr.bf16.mxu0 0
    %9093 = vmatpush1.bf16.msra.mxu0 0
    %9094 = vmatprep.subr.bf16.mxu0 0
    %9095 = vmatpush1.bf16.msra.mxu0 0
    %9096 = vmatprep.subr.bf16.mxu0 0
    %9097 = vmatpush1.bf16.msra.mxu0 0
    %9098 = vmatprep.subr.bf16.mxu0 0
    %9099 = vmatpush1.bf16.msra.mxu0 0
    %9100 = vmatprep.subr.bf16.mxu0 0
    %9101 = vmatpush1.bf16.msra.mxu0 0
    %9102 = vmatprep.subr.bf16.mxu0 0
    %9103 = vmatpush1.bf16.msra.mxu0 0
    %9104 = vmatprep.subr.bf16.mxu0 0
    %9105 = vmatpush1.bf16.msra.mxu0 0
    %9106 = vmatprep.subr.bf16.mxu0 0
    %9107 = vmatpush1.bf16.msra.mxu0 0
    %9108 = vmatprep.subr.bf16.mxu0 0
    %9109 = vmatpush1.bf16.msra.mxu0 0
    %9110 = vmatprep.subr.bf16.mxu0 0
    %9111 = vmatpush1.bf16.msra.mxu0 0
    %9112 = vmatprep.subr.bf16.mxu0 0
    %9113 = vmatpush1.bf16.msra.mxu0 0
    %9114 = vmatprep.subr.bf16.mxu0 0
    %9115 = vmatpush1.bf16.msra.mxu0 0
    %9116 = vmatprep.mubr.bf16.mxu0 0
    %9117 = vmatmul.mubr.bf16.gmra.mrb[0].mxu0 %v9079
    %v9118 = vpop.f32.mrb[0].mxu0
    %v9119 = vadd.f32 0.0, %v9118
    %v9120 = vpop.f32.mrb[0].mxu0
    %v9121 = vpop.f32.mrb[0].mxu0
    %v9122 = vpop.f32.mrb[0].mxu0
    %9123 = vdwg.mxu0
    %v9125 = vsel %vm8977, %v9074, 0
    %v9128 = vsel %vm8984, %v9073, 0
    %9130 = vmatprep.subr.bf16.mxu0 0
    %9131 = vmatpush1.bf16.msra.mxu0 %v9128
    %9132 = vmatprep.subr.bf16.mxu0 0
    %9133 = vmatpush1.bf16.msra.mxu0 0
    %9134 = vmatprep.subr.bf16.mxu0 0
    %9135 = vmatpush1.bf16.msra.mxu0 0
    %9136 = vmatprep.subr.bf16.mxu0 0
    %9137 = vmatpush1.bf16.msra.mxu0 0
    %9138 = vmatprep.subr.bf16.mxu0 0
    %9139 = vmatpush1.bf16.msra.mxu0 0
    %9140 = vmatprep.subr.bf16.mxu0 0
    %9141 = vmatpush1.bf16.msra.mxu0 0
    %9142 = vmatprep.subr.bf16.mxu0 0
    %9143 = vmatpush1.bf16.msra.mxu0 0
    %9144 = vmatprep.subr.bf16.mxu0 0
    %9145 = vmatpush1.bf16.msra.mxu0 0
    %9146 = vmatprep.subr.bf16.mxu0 0
    %9147 = vmatpush1.bf16.msra.mxu0 0
    %9148 = vmatprep.subr.bf16.mxu0 0
    %9149 = vmatpush1.bf16.msra.mxu0 0
    %9150 = vmatprep.subr.bf16.mxu0 0
    %9151 = vmatpush1.bf16.msra.mxu0 0
    %9152 = vmatprep.subr.bf16.mxu0 0
    %9153 = vmatpush1.bf16.msra.mxu0 0
    %9154 = vmatprep.subr.bf16.mxu0 0
    %9155 = vmatpush1.bf16.msra.mxu0 0
    %9156 = vmatprep.subr.bf16.mxu0 0
    %9157 = vmatpush1.bf16.msra.mxu0 0
    %9158 = vmatprep.subr.bf16.mxu0 0
    %9159 = vmatpush1.bf16.msra.mxu0 0
    %9160 = vmatprep.subr.bf16.mxu0 0
    %9161 = vmatpush1.bf16.msra.mxu0 0
    %9162 = vmatprep.mubr.bf16.mxu0 0
    %9163 = vmatmul.mubr.bf16.gmra.mrb[0].mxu0 %v9125
    %v9164 = vpop.f32.mrb[0].mxu0
    %v9165 = vadd.f32 %v9119, %v9164
    %v9166 = vpop.f32.mrb[0].mxu0
    %v9167 = vpop.f32.mrb[0].mxu0
    %v9168 = vpop.f32.mrb[0].mxu0
    %9169 = vdwg.mxu0
    %v9170 = vld [vmem:[%s3 + $0x8] sm:$0xf]
    %v9171 = vld [vmem:[%s3 + $0xc] sm:$0x1]
    %v9172 = vpack.c.bf16 %v9023, %v9023
    %v9175 = vunpack.c.l.b16 %v9170
    %v9176 = vunpack.c.l.b16 %v9171
    %v9177 = vpack.c.b16 %v9176, %v9175
    %vm9178 = vcmask 80896
    %v9180 = vsel %vm9178, %v9172, 0
    %v9183 = vsel %vm1164, %v9177, 0
    %9185 = vmatprep.subr.bf16.mxu0 0
    %9186 = vmatpush1.bf16.msra.mxu0 %v9183
    %9187 = vmatprep.subr.bf16.mxu0 0
    %9188 = vmatpush1.bf16.msra.mxu0 0
    %9189 = vmatprep.subr.bf16.mxu0 0
    %9190 = vmatpush1.bf16.msra.mxu0 0
    %9191 = vmatprep.subr.bf16.mxu0 0
    %9192 = vmatpush1.bf16.msra.mxu0 0
    %9193 = vmatprep.subr.bf16.mxu0 0
    %9194 = vmatpush1.bf16.msra.mxu0 0
    %9195 = vmatprep.subr.bf16.mxu0 0
    %9196 = vmatpush1.bf16.msra.mxu0 0
    %9197 = vmatprep.subr.bf16.mxu0 0
    %9198 = vmatpush1.bf16.msra.mxu0 0
    %9199 = vmatprep.subr.bf16.mxu0 0
    %9200 = vmatpush1.bf16.msra.mxu0 0
    %9201 = vmatprep.subr.bf16.mxu0 0
    %9202 = vmatpush1.bf16.msra.mxu0 0
    %9203 = vmatprep.subr.bf16.mxu0 0
    %9204 = vmatpush1.bf16.msra.mxu0 0
    %9205 = vmatprep.subr.bf16.mxu0 0
    %9206 = vmatpush1.bf16.msra.mxu0 0
    %9207 = vmatprep.subr.bf16.mxu0 0
    %9208 = vmatpush1.bf16.msra.mxu0 0
    %9209 = vmatprep.subr.bf16.mxu0 0
    %9210 = vmatpush1.bf16.msra.mxu0 0
    %9211 = vmatprep.subr.bf16.mxu0 0
    %9212 = vmatpush1.bf16.msra.mxu0 0
    %9213 = vmatprep.subr.bf16.mxu0 0
    %9214 = vmatpush1.bf16.msra.mxu0 0
    %9215 = vmatprep.subr.bf16.mxu0 0
    %9216 = vmatpush1.bf16.msra.mxu0 0
    %9217 = vmatprep.mubr.bf16.mxu0 0
    %9218 = vmatmul.mubr.bf16.gmra.mrb[0].mxu0 %v9180
    %v9219 = vpop.f32.mrb[0].mxu0
    %v9220 = vadd.f32 0.0, %v9219
    %v9221 = vpop.f32.mrb[0].mxu0
    %v9222 = vpop.f32.mrb[0].mxu0
    %v9223 = vpop.f32.mrb[0].mxu0
    %9224 = vdwg.mxu0
    %v9225 = vadd.f32 %v9165, %v9220
    %v9226 = vld [vmem:[%s3 + $0xc] sm:$0xe]
    %v9227 = vld [vmem:[%s3 + $0x10] sm:$0x3]
    %v9228 = vpack.c.bf16 %v9067, %v9067
    %v9231 = vunpack.c.l.b16 %v9226
    %v9232 = vunpack.c.l.b16 %v9227
    %v9233 = vpack.c.b16 %v9232, %v9231
    %v9234 = vrot.slane %v9233, 1
    %v9236 = vsel %vm9178, %v9228, 0
    %v9239 = vsel %vm1164, %v9234, 0
    %9241 = vmatprep.subr.bf16.mxu0 0
    %9242 = vmatpush1.bf16.msra.mxu0 %v9239
    %9243 = vmatprep.subr.bf16.mxu0 0
    %9244 = vmatpush1.bf16.msra.mxu0 0
    %9245 = vmatprep.subr.bf16.mxu0 0
    %9246 = vmatpush1.bf16.msra.mxu0 0
    %9247 = vmatprep.subr.bf16.mxu0 0
    %9248 = vmatpush1.bf16.msra.mxu0 0
    %9249 = vmatprep.subr.bf16.mxu0 0
    %9250 = vmatpush1.bf16.msra.mxu0 0
    %9251 = vmatprep.subr.bf16.mxu0 0
    %9252 = vmatpush1.bf16.msra.mxu0 0
    %9253 = vmatprep.subr.bf16.mxu0 0
    %9254 = vmatpush1.bf16.msra.mxu0 0
    %9255 = vmatprep.subr.bf16.mxu0 0
    %9256 = vmatpush1.bf16.msra.mxu0 0
    %9257 = vmatprep.subr.bf16.mxu0 0
    %9258 = vmatpush1.bf16.msra.mxu0 0
    %9259 = vmatprep.subr.bf16.mxu0 0
    %9260 = vmatpush1.bf16.msra.mxu0 0
    %9261 = vmatprep.subr.bf16.mxu0 0
    %9262 = vmatpush1.bf16.msra.mxu0 0
    %9263 = vmatprep.subr.bf16.mxu0 0
    %9264 = vmatpush1.bf16.msra.mxu0 0
    %9265 = vmatprep.subr.bf16.mxu0 0
    %9266 = vmatpush1.bf16.msra.mxu0 0
    %9267 = vmatprep.subr.bf16.mxu0 0
    %9268 = vmatpush1.bf16.msra.mxu0 0
    %9269 = vmatprep.subr.bf16.mxu0 0
    %9270 = vmatpush1.bf16.msra.mxu0 0
    %9271 = vmatprep.subr.bf16.mxu0 0
    %9272 = vmatpush1.bf16.msra.mxu0 0
    %9273 = vmatprep.mubr.bf16.mxu0 0
    %9274 = vmatmul.mubr.bf16.gmra.mrb[0].mxu0 %v9236
    %v9275 = vpop.f32.mrb[0].mxu0
    %v9276 = vadd.f32 0.0, %v9275
    %v9277 = vpop.f32.mrb[0].mxu0
    %v9278 = vpop.f32.mrb[0].mxu0
    %v9279 = vpop.f32.mrb[0].mxu0
    %9280 = vdwg.mxu0
    %v9281 = vadd.f32 %v9225, %v9276
    %v9282 = vld [vmem:[#allocation8] sm:$0x1]
    %v9284 = vlaneseq
    %v9285 = vshrl.u32 %v9284, 7
    %v9286 = vsub.s32 0, %v9285
    %v9287 = vrot.slane %v9282, %v9286
    %v9289 = vadd.f32 %v9281, %v9287
    %v9290 = vmax.f32 %v9289, 0.0
    %v9291 = vld [vmem:[%s7] sm:$0xf]
    %v9292 = vpack.c.bf16 %v9290, %v9290
    %v9293 = vld [vmem:[#allocation10] sm:$0x1]
    %v9295 = vlaneseq
    %v9296 = vshrl.u32 %v9295, 7
    %v9297 = vsub.s32 0, %v9296
    %v9298 = vrot.slane %v9293, %v9297
    %v9301 = vsel %vm8977, %v9292, 0
    %v9304 = vsel %vm8984, %v9291, 0
    %9306 = vmatprep.subr.bf16.mxu0 0
    %9307 = vmatpush1.bf16.msra.mxu0 %v9304
    %9308 = vmatprep.subr.bf16.mxu0 0
    %9309 = vmatpush1.bf16.msra.mxu0 0
    %9310 = vmatprep.subr.bf16.mxu0 0
    %9311 = vmatpush1.bf16.msra.mxu0 0
    %9312 = vmatprep.subr.bf16.mxu0 0
    %9313 = vmatpush1.bf16.msra.mxu0 0
    %9314 = vmatprep.subr.bf16.mxu0 0
    %9315 = vmatpush1.bf16.msra.mxu0 0
    %9316 = vmatprep.subr.bf16.mxu0 0
    %9317 = vmatpush1.bf16.msra.mxu0 0
    %9318 = vmatprep.subr.bf16.mxu0 0
    %9319 = vmatpush1.bf16.msra.mxu0 0
    %9320 = vmatprep.subr.bf16.mxu0 0
    %9321 = vmatpush1.bf16.msra.mxu0 0
    %9322 = vmatprep.subr.bf16.mxu0 0
    %9323 = vmatpush1.bf16.msra.mxu0 0
    %9324 = vmatprep.subr.bf16.mxu0 0
    %9325 = vmatpush1.bf16.msra.mxu0 0
    %9326 = vmatprep.subr.bf16.mxu0 0
    %9327 = vmatpush1.bf16.msra.mxu0 0
    %9328 = vmatprep.subr.bf16.mxu0 0
    %9329 = vmatpush1.bf16.msra.mxu0 0
    %9330 = vmatprep.subr.bf16.mxu0 0
    %9331 = vmatpush1.bf16.msra.mxu0 0
    %9332 = vmatprep.subr.bf16.mxu0 0
    %9333 = vmatpush1.bf16.msra.mxu0 0
    %9334 = vmatprep.subr.bf16.mxu0 0
    %9335 = vmatpush1.bf16.msra.mxu0 0
    %9336 = vmatprep.subr.bf16.mxu0 0
    %9337 = vmatpush1.bf16.msra.mxu0 0
    %9338 = vmatprep.mubr.bf16.mxu0 0
    %9339 = vmatmul.mubr.bf16.gmra.mrb[0].mxu0 %v9301
    %v9340 = vpop.f32.mrb[0].mxu0
    %v9341 = vadd.f32 %v9298, %v9340
    %v9342 = vpop.f32.mrb[0].mxu0
    %v9343 = vpop.f32.mrb[0].mxu0
    %v9344 = vpop.f32.mrb[0].mxu0
    %9345 = vdwg.mxu0
    %vm9346 = vcmask 11264
    %9347 = vst.msk [vmem:[%s93] sm:$0xf] %vm9346, %v9341
    // Predicated region
    $region310: #{lugianet_forward.1} parent=1 // pred_check
      _
    $region311: #{lugianet_forward.1} parent=1 // pred_check_branch
      %9349 = sbr.rel (0) target = $region313
    $region312: #{lugianet_forward.1} parent=1 // pred_region
      _
    $region313: #{lugianet_forward.1} parent=1 // pred_fallthru
      _
    // Predicated region
    $region314: #{lugianet_forward.1} parent=1 // pred_check
      _
    $region315: #{lugianet_forward.1} parent=1 // pred_check_branch
      %9351 = sbr.rel (0) target = $region317
    $region316: #{lugianet_forward.1} parent=1 // pred_region
      _
    $region317: #{lugianet_forward.1} parent=1 // pred_fallthru
      _
    %9352 = vsyncpa [#allocation9], 1
    %9353 = vsyncpa [#allocation11], 1
    %9354 = vsyncpa [#allocation14], 1
    %9355 = vsyncpa [#allocation17], 1
    %9356 = vsyncpa [#allocation20], 1
    %9357 = vsyncpa [#allocation23], 1
    %9358 = vsyncpa [#allocation26], 1
    %9359 = vsyncpa [#allocation29], 1
    %9360 = vsyncpa [#allocation32], 1
    %9361 = vsyncpa [#allocation35], 1
    %9362 = vsyncpa [#allocation38], 1
    %9363 = vsyncpa [#allocation41], 1
    %9364 = vsyncpa [#allocation44], 1
    %9365 = vsyncpa [#allocation47], 1
    %9366 = vsyncpa [#allocation50], 1
    %9367 = vsyncpa [#allocation53], 1

</llo_original>
